<compile_context>
chip_gen: v6e
topology: v6e:2x2x1
jax: 0.10.0
libtpu: 0.0.40
codegen_flags: <defaults>
</compile_context>

<pallas_src>
import functools

import jax
import jax.numpy as jnp
from jax import lax
from jax.experimental import pallas as pl
from jax.experimental.pallas import tpu as pltpu

NEG_INF = -1e9
LN_EPS = 1e-6


def _layer_norm(x, g, b):
    mu = jnp.mean(x, axis=-1, keepdims=True)
    var = jnp.mean((x - mu) ** 2, axis=-1, keepdims=True)
    return g * (x - mu) * lax.rsqrt(var + LN_EPS) + b


def _mha(q_in, kv_in, wq, bq, wk, bk, wv, bv, wo, bo, bias, num_heads, cdt):
    """Multi-head attention, all heads batched into one dot_general.

    q_in: (Bb, Tq, D) f32, kv_in: (Bb, Tk, D), bias: additive f32 broadcastable to
    (Bb, H, Tq, Tk).  Matmul operands are cast to `cdt` (bf16 or f32), accumulation f32.
    """
    Bb, Tq, D = q_in.shape
    Tk = kv_in.shape[1]
    H = num_heads
    dk = D // H
    scale = 1.0 / jnp.sqrt(jnp.float32(dk))

    q2 = q_in.reshape(Bb * Tq, D).astype(cdt)
    kv2 = q2 if kv_in is q_in else kv_in.reshape(Bb * Tk, D).astype(cdt)

    # Projections on (Bb*T, D) rows (batch folded into the MXU M dimension).
    q = (jnp.dot(q2, wq, preferred_element_type=jnp.float32) + bq) * scale
    k = jnp.dot(kv2, wk, preferred_element_type=jnp.float32) + bk
    v = jnp.dot(kv2, wv, preferred_element_type=jnp.float32) + bv

    def split_heads(t, n):
        # (Bb*n, H*dk) -> (Bb*H, n, dk)
        return (t.reshape(Bb, n, H, dk).astype(cdt)
                 .transpose(0, 2, 1, 3).reshape(Bb * H, n, dk))

    qh = split_heads(q, Tq)
    kh = split_heads(k, Tk)
    vh = split_heads(v, Tk)

    # Scores for all (batch, head) pairs in one batched matmul.
    scores = jnp.einsum('nqd,nkd->nqk', qh, kh,
                        preferred_element_type=jnp.float32)          # (Bb*H, Tq, Tk)
    scores = scores.reshape(Bb, H, Tq, Tk) + bias                    # masking once
    m = jnp.max(scores, axis=-1, keepdims=True)
    p = jnp.exp(scores - m)
    p = p * pl.reciprocal(jnp.sum(p, axis=-1, keepdims=True), approx=True)

    ctx = jnp.einsum('nqk,nkd->nqd',
                     p.reshape(Bb * H, Tq, Tk).astype(cdt), vh,
                     preferred_element_type=jnp.float32)             # (Bb*H, Tq, dk)
    ctx = (ctx.reshape(Bb, H, Tq, dk).transpose(0, 2, 1, 3)
              .reshape(Bb * Tq, D).astype(cdt))
    out = jnp.dot(ctx, wo, preferred_element_type=jnp.float32) + bo
    return out.reshape(Bb, Tq, D)


def decoder_layer_kernel(
    x_ref, enc_ref, smask_ref, tmask_ref,
    sa_wq, sa_bq, sa_wk, sa_bk, sa_wv, sa_bv, sa_wo, sa_bo,
    ca_wq, ca_bq, ca_wk, ca_bk, ca_wv, ca_bv, ca_wo, ca_bo,
    ff_w1, ff_b1, ff_w2, ff_b2,
    ln0_g, ln0_b, ln1_g, ln1_b, ln2_g, ln2_b,
    o_ref, *, num_heads, compute_dtype):
    cdt = compute_dtype

    x = x_ref[...].astype(jnp.float32)     # (Bb, T, D)
    enc = enc_ref[...]                     # (Bb, S, D) already in compute dtype
    Bb, T, D = x.shape
    S = enc.shape[1]

    # --- masks: built once per grid step as additive f32 biases ---------------------
    # make_subsequent_mask: key index <= query index (lower triangular incl. diagonal)
    row = lax.broadcasted_iota(jnp.int32, (T, T), 0)
    col = lax.broadcasted_iota(jnp.int32, (T, T), 1)
    causal = (col <= row)[None, None]                                # (1, 1, T, T)
    tgt_keep = tmask_ref[...][:, :, None, :] > 0.0                   # (Bb, 1, 1, T)
    self_bias = jnp.where(jnp.logical_and(causal, tgt_keep), 0.0, NEG_INF)   # (Bb,1,T,T)
    cross_bias = jnp.where(smask_ref[...][:, :, None, :] > 0.0, 0.0, NEG_INF)  # (Bb,1,1,S)

    # --- sublayer 0: x + self_attn(LN(x)) --------------------------------------------
    y = _layer_norm(x, ln0_g[...], ln0_b[...])
    x = x + _mha(y, y,
                 sa_wq[...], sa_bq[...], sa_wk[...], sa_bk[...],
                 sa_wv[...], sa_bv[...], sa_wo[...], sa_bo[...],
                 self_bias, num_heads, cdt)

    # --- sublayer 1: x + src_attn(LN(x), enc, enc) ------------------------------------
    y = _layer_norm(x, ln1_g[...], ln1_b[...])
    x = x + _mha(y, enc,
                 ca_wq[...], ca_bq[...], ca_wk[...], ca_bk[...],
                 ca_wv[...], ca_bv[...], ca_wo[...], ca_bo[...],
                 cross_bias, num_heads, cdt)

    # --- sublayer 2: x + FFN(LN(x)) ----------------------------------------------------
    y = _layer_norm(x, ln2_g[...], ln2_b[...])
    y2 = y.reshape(Bb * T, D).astype(cdt)
    h = jnp.maximum(
        jnp.dot(y2, ff_w1[...], preferred_element_type=jnp.float32) + ff_b1[...], 0.0)
    ffn = jnp.dot(h.astype(cdt), ff_w2[...], preferred_element_type=jnp.float32) + ff_b2[...]
    x = x + ffn.reshape(Bb, T, D)

    o_ref[...] = x.astype(o_ref.dtype)


PARAM_ORDER = (
    "sa_wq", "sa_bq", "sa_wk", "sa_bk", "sa_wv", "sa_bv", "sa_wo", "sa_bo",
    "ca_wq", "ca_bq", "ca_wk", "ca_bk", "ca_wv", "ca_bv", "ca_wo", "ca_bo",
    "ff_w1", "ff_b1", "ff_w2", "ff_b2",
    "ln0_g", "ln0_b", "ln1_g", "ln1_b", "ln2_g", "ln2_b",
)
_WEIGHT_NAMES = frozenset(
    ("sa_wq", "sa_wk", "sa_wv", "sa_wo",
     "ca_wq", "ca_wk", "ca_wv", "ca_wo",
     "ff_w1", "ff_w2"))


def _pick_block_b(B, T, target_rows=256):
    """Largest divisor of B such that block_b*T stays near one MXU pass of rows."""
    best = 1
    for cand in range(1, B + 1):
        if B % cand == 0 and cand * T <= max(target_rows, T):
            best = cand
    return best


def transformer_decoder_layer(x, enc, src_mask, tgt_mask, params, num_heads,
                              compute_dtype=jnp.bfloat16, block_b=None,
                              vmem_limit_bytes=32 * 1024 * 1024):
    B, T, D = x.shape
    S = enc.shape[1]
    if block_b is None:
        block_b = _pick_block_b(B, T)
    assert B % block_b == 0
    num_blocks = B // block_b

    # Cast weight matrices (MXU operands) once at the boundary; biases / LN stay f32.
    ordered = []
    for name in PARAM_ORDER:
        p = params[name]
        ordered.append(p.astype(compute_dtype) if name in _WEIGHT_NAMES
                       else p.astype(jnp.float32))

    x = x.astype(jnp.float32)
    enc = enc.astype(compute_dtype)            # only used as a matmul operand
    smask = src_mask.reshape(B, 1, S).astype(jnp.float32)
    tmask = tgt_mask.reshape(B, 1, T).astype(jnp.float32)

    data_specs = [
        pl.BlockSpec((block_b, T, D), lambda b: (b, 0, 0)),   # x
        pl.BlockSpec((block_b, S, D), lambda b: (b, 0, 0)),   # encoder_output
        pl.BlockSpec((block_b, 1, S), lambda b: (b, 0, 0)),   # source_mask
        pl.BlockSpec((block_b, 1, T), lambda b: (b, 0, 0)),   # target_mask
    ]
    # NOTE: default-arg bind of ndim fixes the late-binding lambda bug.
    param_specs = [pl.BlockSpec(p.shape, lambda b, nd=p.ndim: (0,) * nd)
                   for p in ordered]

    kernel = functools.partial(decoder_layer_kernel,
                               num_heads=num_heads, compute_dtype=compute_dtype)
    return pl.pallas_call(
        kernel,
        out_shape=jax.ShapeDtypeStruct((B, T, D), jnp.float32),
        grid=(num_blocks,),
        in_specs=data_specs + param_specs,
        out_specs=pl.BlockSpec((block_b, T, D), lambda b: (b, 0, 0)),
        compiler_params=pltpu.CompilerParams(
            dimension_semantics=("parallel",),
            vmem_limit_bytes=vmem_limit_bytes),
    )(x, enc, smask, tmask, *ordered)


# ------------------------- pure-JAX reference (f32) ---------------------------------
def reference_decoder_layer(x, enc, src_mask, tgt_mask, params, num_heads):
    B, T, D = x.shape
    S = enc.shape[1]
    H = num_heads
    dk = D // H

    def ln(v, g, b):
        mu = v.mean(-1, keepdims=True)
        var = ((v - mu) ** 2).mean(-1, keepdims=True)
        return g * (v - mu) / jnp.sqrt(var + LN_EPS) + b

    def mha(q_in, kv_in, pfx, mask):
        Tq, Tk = q_in.shape[1], kv_in.shape[1]
        q = (q_in @ params[f"{pfx}_wq"] + params[f"{pfx}_bq"]).reshape(B, Tq, H, dk).transpose(0, 2, 1, 3)
        k = (kv_in @ params[f"{pfx}_wk"] + params[f"{pfx}_bk"]).reshape(B, Tk, H, dk).transpose(0, 2, 1, 3)
        v = (kv_in @ params[f"{pfx}_wv"] + params[f"{pfx}_bv"]).reshape(B, Tk, H, dk).transpose(0, 2, 1, 3)
        scores = jnp.einsum('bhqd,bhkd->bhqk', q, k) / jnp.sqrt(float(dk))
        scores = jnp.where(mask, scores, NEG_INF)
        p = jax.nn.softmax(scores, axis=-1)
        ctx = jnp.einsum('bhqk,bhkd->bhqd', p, v).transpose(0, 2, 1, 3).reshape(B, Tq, D)
        return ctx @ params[f"{pfx}_wo"] + params[f"{pfx}_bo"]

    causal = jnp.tril(jnp.ones((T, T), bool))[None, None]
    self_mask = jnp.logical_and(causal, (tgt_mask > 0)[:, None, None, :])
    cross_mask = jnp.broadcast_to((src_mask > 0)[:, None, None, :], (B, 1, T, S))

    y = ln(x, params["ln0_g"], params["ln0_b"])
    x = x + mha(y, y, "sa", self_mask)
    y = ln(x, params["ln1_g"], params["ln1_b"])
    x = x + mha(y, enc, "ca", cross_mask)
    y = ln(x, params["ln2_g"], params["ln2_b"])
    ff = jnp.maximum(y @ params["ff_w1"] + params["ff_b1"], 0.0) @ params["ff_w2"] + params["ff_b2"]
    return x + ff


def init_params(key, d_model, d_ff):
    ks = iter(jax.random.split(key, 32))

    def lin(din, dout):
        w = jax.random.normal(next(ks), (din, dout), jnp.float32) / jnp.sqrt(float(din))
        b = jax.random.normal(next(ks), (1, dout), jnp.float32) * 0.02
        return w, b

    p = {}
    for prefix in ("sa", "ca"):
        for name in ("q", "k", "v", "o"):
            w, b = lin(d_model, d_model)
            p[f"{prefix}_w{name}"] = w
            p[f"{prefix}_b{name}"] = b
    p["ff_w1"], p["ff_b1"] = lin(d_model, d_ff)
    p["ff_w2"], p["ff_b2"] = lin(d_ff, d_model)
    for i in range(3):
        p[f"ln{i}_g"] = jnp.ones((1, d_model), jnp.float32)
        p[f"ln{i}_b"] = jnp.zeros((1, d_model), jnp.float32)
    return p


if __name__ == "__main__":
    B, T, S, D, H, F = 2, 8, 8, 32, 4, 64

    key = jax.random.PRNGKey(0)
    kx, ke, kp = jax.random.split(key, 3)
    x = jax.random.normal(kx, (B, T, D), jnp.float32)
    enc = jax.random.normal(ke, (B, S, D), jnp.float32)
    # source padding mask: last 2 source positions padded; target mask: all valid
    src_mask = jnp.ones((B, S), jnp.float32).at[:, S - 2:].set(0.0)
    tgt_mask = jnp.ones((B, T), jnp.float32)

    params = init_params(kp, D, F)
    ref = reference_decoder_layer(x, enc, src_mask, tgt_mask, params, H)

    # f32-compute path: close agreement with the pure-JAX reference.
    out_f32 = jax.block_until_ready(
        transformer_decoder_layer(x, enc, src_mask, tgt_mask, params, H,
                                  compute_dtype=jnp.float32))
    assert out_f32.shape == (B, T, D)
    assert bool(jnp.all(jnp.isfinite(out_f32)))
    assert float(jnp.max(jnp.abs(out_f32 - ref))) < 5e-2

    # bf16-matmul path (default, perf-oriented): looser agreement.
    out_bf16 = jax.block_until_ready(
        transformer_decoder_layer(x, enc, src_mask, tgt_mask, params, H))
    assert out_bf16.shape == (B, T, D)
    assert bool(jnp.all(jnp.isfinite(out_bf16)))
    assert float(jnp.max(jnp.abs(out_bf16 - ref))) < 0.3

    print("KERNEL_OK")
</pallas_src>

<mosaic_0001>
module attributes {stable_mosaic.version = 11 : i64} {
  func.func @decoder_layer_kernel(%arg0: i32, %arg1: memref<2x8x32xf32, #tpu.memory_space<vmem>>, %arg2: memref<2x8x32xf32, #tpu.memory_space<vmem>>, %arg3: memref<2x1x8xf32, #tpu.memory_space<vmem>>, %arg4: memref<2x1x8xf32, #tpu.memory_space<vmem>>, %arg5: memref<32x32xf32, #tpu.memory_space<vmem>>, %arg6: memref<1x32xf32, #tpu.memory_space<vmem>>, %arg7: memref<32x32xf32, #tpu.memory_space<vmem>>, %arg8: memref<1x32xf32, #tpu.memory_space<vmem>>, %arg9: memref<32x32xf32, #tpu.memory_space<vmem>>, %arg10: memref<1x32xf32, #tpu.memory_space<vmem>>, %arg11: memref<32x32xf32, #tpu.memory_space<vmem>>, %arg12: memref<1x32xf32, #tpu.memory_space<vmem>>, %arg13: memref<32x32xf32, #tpu.memory_space<vmem>>, %arg14: memref<1x32xf32, #tpu.memory_space<vmem>>, %arg15: memref<32x32xf32, #tpu.memory_space<vmem>>, %arg16: memref<1x32xf32, #tpu.memory_space<vmem>>, %arg17: memref<32x32xf32, #tpu.memory_space<vmem>>, %arg18: memref<1x32xf32, #tpu.memory_space<vmem>>, %arg19: memref<32x32xf32, #tpu.memory_space<vmem>>, %arg20: memref<1x32xf32, #tpu.memory_space<vmem>>, %arg21: memref<32x64xf32, #tpu.memory_space<vmem>>, %arg22: memref<1x64xf32, #tpu.memory_space<vmem>>, %arg23: memref<64x32xf32, #tpu.memory_space<vmem>>, %arg24: memref<1x32xf32, #tpu.memory_space<vmem>>, %arg25: memref<1x32xf32, #tpu.memory_space<vmem>>, %arg26: memref<1x32xf32, #tpu.memory_space<vmem>>, %arg27: memref<1x32xf32, #tpu.memory_space<vmem>>, %arg28: memref<1x32xf32, #tpu.memory_space<vmem>>, %arg29: memref<1x32xf32, #tpu.memory_space<vmem>>, %arg30: memref<1x32xf32, #tpu.memory_space<vmem>>, %arg31: memref<2x8x32xf32, #tpu.memory_space<vmem>>) attributes {dimension_semantics = [#tpu.dimension_semantics<parallel>], iteration_bounds = array<i64: 1>, scalar_prefetch = 0 : i64, scratch_operands = 0 : i64, tpu.core_type = #tpu.core_type<tc>, window_params = [{transform_indices = @transform_0, window_bounds = array<i64: 2, 8, 32>}, {transform_indices = @transform_1, window_bounds = array<i64: 2, 8, 32>}, {transform_indices = @transform_2, window_bounds = array<i64: 2, 1, 8>}, {transform_indices = @transform_3, window_bounds = array<i64: 2, 1, 8>}, {pipeline_mode = #tpu.pipeline_mode<synchronous>, transform_indices = @transform_4, window_bounds = array<i64: 32, 32>}, {pipeline_mode = #tpu.pipeline_mode<synchronous>, transform_indices = @transform_5, window_bounds = array<i64: 1, 32>}, {pipeline_mode = #tpu.pipeline_mode<synchronous>, transform_indices = @transform_6, window_bounds = array<i64: 32, 32>}, {pipeline_mode = #tpu.pipeline_mode<synchronous>, transform_indices = @transform_7, window_bounds = array<i64: 1, 32>}, {pipeline_mode = #tpu.pipeline_mode<synchronous>, transform_indices = @transform_8, window_bounds = array<i64: 32, 32>}, {pipeline_mode = #tpu.pipeline_mode<synchronous>, transform_indices = @transform_9, window_bounds = array<i64: 1, 32>}, {pipeline_mode = #tpu.pipeline_mode<synchronous>, transform_indices = @transform_10, window_bounds = array<i64: 32, 32>}, {pipeline_mode = #tpu.pipeline_mode<synchronous>, transform_indices = @transform_11, window_bounds = array<i64: 1, 32>}, {pipeline_mode = #tpu.pipeline_mode<synchronous>, transform_indices = @transform_12, window_bounds = array<i64: 32, 32>}, {pipeline_mode = #tpu.pipeline_mode<synchronous>, transform_indices = @transform_13, window_bounds = array<i64: 1, 32>}, {pipeline_mode = #tpu.pipeline_mode<synchronous>, transform_indices = @transform_14, window_bounds = array<i64: 32, 32>}, {pipeline_mode = #tpu.pipeline_mode<synchronous>, transform_indices = @transform_15, window_bounds = array<i64: 1, 32>}, {pipeline_mode = #tpu.pipeline_mode<synchronous>, transform_indices = @transform_16, window_bounds = array<i64: 32, 32>}, {pipeline_mode = #tpu.pipeline_mode<synchronous>, transform_indices = @transform_17, window_bounds = array<i64: 1, 32>}, {pipeline_mode = #tpu.pipeline_mode<synchronous>, transform_indices = @transform_18, window_bounds = array<i64: 32, 32>}, {pipeline_mode = #tpu.pipeline_mode<synchronous>, transform_indices = @transform_19, window_bounds = array<i64: 1, 32>}, {pipeline_mode = #tpu.pipeline_mode<synchronous>, transform_indices = @transform_20, window_bounds = array<i64: 32, 64>}, {pipeline_mode = #tpu.pipeline_mode<synchronous>, transform_indices = @transform_21, window_bounds = array<i64: 1, 64>}, {pipeline_mode = #tpu.pipeline_mode<synchronous>, transform_indices = @transform_22, window_bounds = array<i64: 64, 32>}, {pipeline_mode = #tpu.pipeline_mode<synchronous>, transform_indices = @transform_23, window_bounds = array<i64: 1, 32>}, {pipeline_mode = #tpu.pipeline_mode<synchronous>, transform_indices = @transform_24, window_bounds = array<i64: 1, 32>}, {pipeline_mode = #tpu.pipeline_mode<synchronous>, transform_indices = @transform_25, window_bounds = array<i64: 1, 32>}, {pipeline_mode = #tpu.pipeline_mode<synchronous>, transform_indices = @transform_26, window_bounds = array<i64: 1, 32>}, {pipeline_mode = #tpu.pipeline_mode<synchronous>, transform_indices = @transform_27, window_bounds = array<i64: 1, 32>}, {pipeline_mode = #tpu.pipeline_mode<synchronous>, transform_indices = @transform_28, window_bounds = array<i64: 1, 32>}, {pipeline_mode = #tpu.pipeline_mode<synchronous>, transform_indices = @transform_29, window_bounds = array<i64: 1, 32>}, {transform_indices = @transform_30, window_bounds = array<i64: 2, 8, 32>}]} {
    %c0 = arith.constant 0 : index
    %c0_0 = arith.constant 0 : index
    %c0_1 = arith.constant 0 : index
    %0 = vector.load %arg1[%c0, %c0_0, %c0_1] : memref<2x8x32xf32, #tpu.memory_space<vmem>>, vector<2x8x32xf32>
    %c0_2 = arith.constant 0 : index
    %c0_3 = arith.constant 0 : index
    %c0_4 = arith.constant 0 : index
    %1 = vector.load %arg2[%c0_2, %c0_3, %c0_4] : memref<2x8x32xf32, #tpu.memory_space<vmem>>, vector<2x8x32xf32>
    %2 = tpu.iota {dimensions = array<i32: 0>} : vector<8x8xi32>
    %3 = tpu.iota {dimensions = array<i32: 1>} : vector<8x8xi32>
    %4 = arith.cmpi sle, %3, %2 : vector<8x8xi32>
    %5 = vector.shape_cast %4 : vector<8x8xi1> to vector<1x1x8x8xi1>
    %c0_5 = arith.constant 0 : index
    %c0_6 = arith.constant 0 : index
    %c0_7 = arith.constant 0 : index
    %6 = vector.load %arg4[%c0_5, %c0_6, %c0_7] : memref<2x1x8xf32, #tpu.memory_space<vmem>>, vector<2x1x8xf32>
    %7 = vector.shape_cast %6 : vector<2x1x8xf32> to vector<2x1x1x8xf32>
    %cst = arith.constant 0.000000e+00 : f32
    %8 = vector.broadcast %cst : f32 to vector<2x1x1x8xf32>
    %9 = arith.cmpf ogt, %7, %8 : vector<2x1x1x8xf32>
    %10 = vector.broadcast %5 : vector<1x1x8x8xi1> to vector<2x1x8x8xi1>
    %11 = vector.broadcast %9 : vector<2x1x1x8xi1> to vector<2x1x8x8xi1>
    %12 = arith.andi %10, %11 : vector<2x1x8x8xi1>
    %cst_8 = arith.constant 0.000000e+00 : f32
    %cst_9 = arith.constant -1.000000e+09 : f32
    %13 = vector.broadcast %cst_8 : f32 to vector<2x1x8x8xf32>
    %14 = vector.broadcast %cst_9 : f32 to vector<2x1x8x8xf32>
    %15 = arith.select %12, %13, %14 : vector<2x1x8x8xi1>, vector<2x1x8x8xf32>
    %c0_10 = arith.constant 0 : index
    %c0_11 = arith.constant 0 : index
    %c0_12 = arith.constant 0 : index
    %16 = vector.load %arg3[%c0_10, %c0_11, %c0_12] : memref<2x1x8xf32, #tpu.memory_space<vmem>>, vector<2x1x8xf32>
    %17 = vector.shape_cast %16 : vector<2x1x8xf32> to vector<2x1x1x8xf32>
    %cst_13 = arith.constant 0.000000e+00 : f32
    %18 = vector.broadcast %cst_13 : f32 to vector<2x1x1x8xf32>
    %19 = arith.cmpf ogt, %17, %18 : vector<2x1x1x8xf32>
    %cst_14 = arith.constant 0.000000e+00 : f32
    %cst_15 = arith.constant -1.000000e+09 : f32
    %20 = vector.broadcast %cst_14 : f32 to vector<2x1x1x8xf32>
    %21 = vector.broadcast %cst_15 : f32 to vector<2x1x1x8xf32>
    %22 = arith.select %19, %20, %21 : vector<2x1x1x8xi1>, vector<2x1x1x8xf32>
    %c0_16 = arith.constant 0 : index
    %c0_17 = arith.constant 0 : index
    %23 = vector.load %arg25[%c0_16, %c0_17] : memref<1x32xf32, #tpu.memory_space<vmem>>, vector<1x32xf32>
    %c0_18 = arith.constant 0 : index
    %c0_19 = arith.constant 0 : index
    %24 = vector.load %arg26[%c0_18, %c0_19] : memref<1x32xf32, #tpu.memory_space<vmem>>, vector<1x32xf32>
    %cst_20 = arith.constant dense<0.000000e+00> : vector<2x8xf32>
    %25 = vector.multi_reduction <add>, %0, %cst_20 [2] : vector<2x8x32xf32> to vector<2x8xf32>
    %26 = vector.shape_cast %25 : vector<2x8xf32> to vector<2x8x1xf32>
    %cst_21 = arith.constant 3.200000e+01 : f32
    %27 = vector.broadcast %cst_21 : f32 to vector<2x8x1xf32>
    %28 = arith.divf %26, %27 : vector<2x8x1xf32>
    %29 = vector.broadcast %28 : vector<2x8x1xf32> to vector<2x8x32xf32>
    %30 = arith.subf %0, %29 : vector<2x8x32xf32>
    %31 = arith.mulf %30, %30 : vector<2x8x32xf32>
    %cst_22 = arith.constant dense<0.000000e+00> : vector<2x8xf32>
    %32 = vector.multi_reduction <add>, %31, %cst_22 [2] : vector<2x8x32xf32> to vector<2x8xf32>
    %33 = vector.shape_cast %32 : vector<2x8xf32> to vector<2x8x1xf32>
    %cst_23 = arith.constant 3.200000e+01 : f32
    %34 = vector.broadcast %cst_23 : f32 to vector<2x8x1xf32>
    %35 = arith.divf %33, %34 : vector<2x8x1xf32>
    %36 = vector.broadcast %28 : vector<2x8x1xf32> to vector<2x8x32xf32>
    %37 = arith.subf %0, %36 : vector<2x8x32xf32>
    %38 = vector.shape_cast %23 : vector<1x32xf32> to vector<1x1x32xf32>
    %39 = vector.broadcast %38 : vector<1x1x32xf32> to vector<2x8x32xf32>
    %40 = arith.mulf %39, %37 : vector<2x8x32xf32>
    %cst_24 = arith.constant 9.99999997E-7 : f32
    %41 = vector.broadcast %cst_24 : f32 to vector<2x8x1xf32>
    %42 = arith.addf %35, %41 : vector<2x8x1xf32>
    %43 = math.rsqrt %42 : vector<2x8x1xf32>
    %44 = vector.broadcast %43 : vector<2x8x1xf32> to vector<2x8x32xf32>
    %45 = arith.mulf %40, %44 : vector<2x8x32xf32>
    %46 = vector.shape_cast %24 : vector<1x32xf32> to vector<1x1x32xf32>
    %47 = vector.broadcast %46 : vector<1x1x32xf32> to vector<2x8x32xf32>
    %48 = arith.addf %45, %47 : vector<2x8x32xf32>
    %c0_25 = arith.constant 0 : index
    %c0_26 = arith.constant 0 : index
    %49 = vector.load %arg5[%c0_25, %c0_26] : memref<32x32xf32, #tpu.memory_space<vmem>>, vector<32x32xf32>
    %c0_27 = arith.constant 0 : index
    %c0_28 = arith.constant 0 : index
    %50 = vector.load %arg6[%c0_27, %c0_28] : memref<1x32xf32, #tpu.memory_space<vmem>>, vector<1x32xf32>
    %c0_29 = arith.constant 0 : index
    %c0_30 = arith.constant 0 : index
    %51 = vector.load %arg7[%c0_29, %c0_30] : memref<32x32xf32, #tpu.memory_space<vmem>>, vector<32x32xf32>
    %c0_31 = arith.constant 0 : index
    %c0_32 = arith.constant 0 : index
    %52 = vector.load %arg8[%c0_31, %c0_32] : memref<1x32xf32, #tpu.memory_space<vmem>>, vector<1x32xf32>
    %c0_33 = arith.constant 0 : index
    %c0_34 = arith.constant 0 : index
    %53 = vector.load %arg9[%c0_33, %c0_34] : memref<32x32xf32, #tpu.memory_space<vmem>>, vector<32x32xf32>
    %c0_35 = arith.constant 0 : index
    %c0_36 = arith.constant 0 : index
    %54 = vector.load %arg10[%c0_35, %c0_36] : memref<1x32xf32, #tpu.memory_space<vmem>>, vector<1x32xf32>
    %c0_37 = arith.constant 0 : index
    %c0_38 = arith.constant 0 : index
    %55 = vector.load %arg11[%c0_37, %c0_38] : memref<32x32xf32, #tpu.memory_space<vmem>>, vector<32x32xf32>
    %c0_39 = arith.constant 0 : index
    %c0_40 = arith.constant 0 : index
    %56 = vector.load %arg12[%c0_39, %c0_40] : memref<1x32xf32, #tpu.memory_space<vmem>>, vector<1x32xf32>
    %cst_41 = arith.constant 8.000000e+00 : f32
    %57 = math.sqrt %cst_41 : f32
    %cst_42 = arith.constant 1.000000e+00 : f32
    %58 = arith.divf %cst_42, %57 : f32
    %59 = vector.shape_cast %48 : vector<2x8x32xf32> to vector<16x32xf32>
    %cst_43 = arith.constant dense<0.000000e+00> : vector<16x32xf32>
    %60 = tpu.matmul %59, %49, %cst_43 {dimension_numbers = #tpu.dot_dimension_numbers<[1], [0], [0], [1], [0, 0, 1, 1], [], []>} : vector<16x32xf32>, vector<32x32xf32>, vector<16x32xf32> -> vector<16x32xf32>
    %61 = vector.broadcast %50 : vector<1x32xf32> to vector<16x32xf32>
    %62 = arith.addf %60, %61 : vector<16x32xf32>
    %63 = vector.broadcast %58 : f32 to vector<16x32xf32>
    %64 = arith.mulf %62, %63 : vector<16x32xf32>
    %cst_44 = arith.constant dense<0.000000e+00> : vector<16x32xf32>
    %65 = tpu.matmul %59, %51, %cst_44 {dimension_numbers = #tpu.dot_dimension_numbers<[1], [0], [0], [1], [0, 0, 1, 1], [], []>} : vector<16x32xf32>, vector<32x32xf32>, vector<16x32xf32> -> vector<16x32xf32>
    %66 = vector.broadcast %52 : vector<1x32xf32> to vector<16x32xf32>
    %67 = arith.addf %65, %66 : vector<16x32xf32>
    %cst_45 = arith.constant dense<0.000000e+00> : vector<16x32xf32>
    %68 = tpu.matmul %59, %53, %cst_45 {dimension_numbers = #tpu.dot_dimension_numbers<[1], [0], [0], [1], [0, 0, 1, 1], [], []>} : vector<16x32xf32>, vector<32x32xf32>, vector<16x32xf32> -> vector<16x32xf32>
    %69 = vector.broadcast %54 : vector<1x32xf32> to vector<16x32xf32>
    %70 = arith.addf %68, %69 : vector<16x32xf32>
    %71 = vector.shape_cast %64 : vector<16x32xf32> to vector<2x8x4x8xf32>
    %72 = tpu.transpose %71, [0, 2, 1, 3] : vector<2x8x4x8xf32> -> vector<2x4x8x8xf32>
    %73 = vector.shape_cast %72 : vector<2x4x8x8xf32> to vector<8x8x8xf32>
    %74 = vector.shape_cast %67 : vector<16x32xf32> to vector<2x8x4x8xf32>
    %75 = tpu.transpose %74, [0, 2, 1, 3] : vector<2x8x4x8xf32> -> vector<2x4x8x8xf32>
    %76 = vector.shape_cast %75 : vector<2x4x8x8xf32> to vector<8x8x8xf32>
    %77 = vector.shape_cast %70 : vector<16x32xf32> to vector<2x8x4x8xf32>
    %78 = tpu.transpose %77, [0, 2, 1, 3] : vector<2x8x4x8xf32> -> vector<2x4x8x8xf32>
    %79 = vector.shape_cast %78 : vector<2x4x8x8xf32> to vector<8x8x8xf32>
    "tpu.trace_start"() <{level = 10 : i32, message = "nqd,nkd->nqk"}> : () -> ()
    %cst_46 = arith.constant dense<0.000000e+00> : vector<8x8x8xf32>
    %80 = tpu.matmul %73, %76, %cst_46 {dimension_numbers = #tpu.dot_dimension_numbers<[2], [2], [1], [1], [0, 0, 0, 1, 1, 1], [0], [0]>} : vector<8x8x8xf32>, vector<8x8x8xf32>, vector<8x8x8xf32> -> vector<8x8x8xf32>
    "tpu.trace_stop"() : () -> ()
    %81 = vector.shape_cast %80 : vector<8x8x8xf32> to vector<2x4x8x8xf32>
    %82 = vector.broadcast %15 : vector<2x1x8x8xf32> to vector<2x4x8x8xf32>
    %83 = arith.addf %81, %82 : vector<2x4x8x8xf32>
    %cst_47 = arith.constant dense<0xFF800000> : vector<2x4x8xf32>
    %84 = vector.multi_reduction <maximumf>, %83, %cst_47 [3] : vector<2x4x8x8xf32> to vector<2x4x8xf32>
    %85 = vector.shape_cast %84 : vector<2x4x8xf32> to vector<2x4x8x1xf32>
    %86 = vector.broadcast %85 : vector<2x4x8x1xf32> to vector<2x4x8x8xf32>
    %87 = arith.subf %83, %86 : vector<2x4x8x8xf32>
    %88 = math.exp %87 : vector<2x4x8x8xf32>
    %cst_48 = arith.constant dense<0.000000e+00> : vector<2x4x8xf32>
    %89 = vector.multi_reduction <add>, %88, %cst_48 [3] : vector<2x4x8x8xf32> to vector<2x4x8xf32>
    %90 = vector.shape_cast %89 : vector<2x4x8xf32> to vector<2x4x8x1xf32>
    %91 = tpu.reciprocal %90 {approx = true} : vector<2x4x8x1xf32> -> vector<2x4x8x1xf32>
    %92 = vector.broadcast %91 : vector<2x4x8x1xf32> to vector<2x4x8x8xf32>
    %93 = arith.mulf %88, %92 : vector<2x4x8x8xf32>
    %94 = vector.shape_cast %93 : vector<2x4x8x8xf32> to vector<8x8x8xf32>
    "tpu.trace_start"() <{level = 10 : i32, message = "nqk,nkd->nqd"}> : () -> ()
    %cst_49 = arith.constant dense<0.000000e+00> : vector<8x8x8xf32>
    %95 = tpu.matmul %94, %79, %cst_49 {dimension_numbers = #tpu.dot_dimension_numbers<[2], [1], [1], [2], [0, 0, 0, 1, 1, 2], [0], [0]>} : vector<8x8x8xf32>, vector<8x8x8xf32>, vector<8x8x8xf32> -> vector<8x8x8xf32>
    "tpu.trace_stop"() : () -> ()
    %96 = vector.shape_cast %95 : vector<8x8x8xf32> to vector<2x4x8x8xf32>
    %97 = tpu.transpose %96, [0, 2, 1, 3] : vector<2x4x8x8xf32> -> vector<2x8x4x8xf32>
    %98 = vector.shape_cast %97 : vector<2x8x4x8xf32> to vector<16x32xf32>
    %cst_50 = arith.constant dense<0.000000e+00> : vector<16x32xf32>
    %99 = tpu.matmul %98, %55, %cst_50 {dimension_numbers = #tpu.dot_dimension_numbers<[1], [0], [0], [1], [0, 0, 1, 1], [], []>} : vector<16x32xf32>, vector<32x32xf32>, vector<16x32xf32> -> vector<16x32xf32>
    %100 = vector.broadcast %56 : vector<1x32xf32> to vector<16x32xf32>
    %101 = arith.addf %99, %100 : vector<16x32xf32>
    %102 = vector.shape_cast %101 : vector<16x32xf32> to vector<2x8x32xf32>
    %103 = arith.addf %0, %102 : vector<2x8x32xf32>
    %c0_51 = arith.constant 0 : index
    %c0_52 = arith.constant 0 : index
    %104 = vector.load %arg27[%c0_51, %c0_52] : memref<1x32xf32, #tpu.memory_space<vmem>>, vector<1x32xf32>
    %c0_53 = arith.constant 0 : index
    %c0_54 = arith.constant 0 : index
    %105 = vector.load %arg28[%c0_53, %c0_54] : memref<1x32xf32, #tpu.memory_space<vmem>>, vector<1x32xf32>
    %cst_55 = arith.constant dense<0.000000e+00> : vector<2x8xf32>
    %106 = vector.multi_reduction <add>, %103, %cst_55 [2] : vector<2x8x32xf32> to vector<2x8xf32>
    %107 = vector.shape_cast %106 : vector<2x8xf32> to vector<2x8x1xf32>
    %cst_56 = arith.constant 3.200000e+01 : f32
    %108 = vector.broadcast %cst_56 : f32 to vector<2x8x1xf32>
    %109 = arith.divf %107, %108 : vector<2x8x1xf32>
    %110 = vector.broadcast %109 : vector<2x8x1xf32> to vector<2x8x32xf32>
    %111 = arith.subf %103, %110 : vector<2x8x32xf32>
    %112 = arith.mulf %111, %111 : vector<2x8x32xf32>
    %cst_57 = arith.constant dense<0.000000e+00> : vector<2x8xf32>
    %113 = vector.multi_reduction <add>, %112, %cst_57 [2] : vector<2x8x32xf32> to vector<2x8xf32>
    %114 = vector.shape_cast %113 : vector<2x8xf32> to vector<2x8x1xf32>
    %cst_58 = arith.constant 3.200000e+01 : f32
    %115 = vector.broadcast %cst_58 : f32 to vector<2x8x1xf32>
    %116 = arith.divf %114, %115 : vector<2x8x1xf32>
    %117 = vector.broadcast %109 : vector<2x8x1xf32> to vector<2x8x32xf32>
    %118 = arith.subf %103, %117 : vector<2x8x32xf32>
    %119 = vector.shape_cast %104 : vector<1x32xf32> to vector<1x1x32xf32>
    %120 = vector.broadcast %119 : vector<1x1x32xf32> to vector<2x8x32xf32>
    %121 = arith.mulf %120, %118 : vector<2x8x32xf32>
    %cst_59 = arith.constant 9.99999997E-7 : f32
    %122 = vector.broadcast %cst_59 : f32 to vector<2x8x1xf32>
    %123 = arith.addf %116, %122 : vector<2x8x1xf32>
    %124 = math.rsqrt %123 : vector<2x8x1xf32>
    %125 = vector.broadcast %124 : vector<2x8x1xf32> to vector<2x8x32xf32>
    %126 = arith.mulf %121, %125 : vector<2x8x32xf32>
    %127 = vector.shape_cast %105 : vector<1x32xf32> to vector<1x1x32xf32>
    %128 = vector.broadcast %127 : vector<1x1x32xf32> to vector<2x8x32xf32>
    %129 = arith.addf %126, %128 : vector<2x8x32xf32>
    %c0_60 = arith.constant 0 : index
    %c0_61 = arith.constant 0 : index
    %130 = vector.load %arg13[%c0_60, %c0_61] : memref<32x32xf32, #tpu.memory_space<vmem>>, vector<32x32xf32>
    %c0_62 = arith.constant 0 : index
    %c0_63 = arith.constant 0 : index
    %131 = vector.load %arg14[%c0_62, %c0_63] : memref<1x32xf32, #tpu.memory_space<vmem>>, vector<1x32xf32>
    %c0_64 = arith.constant 0 : index
    %c0_65 = arith.constant 0 : index
    %132 = vector.load %arg15[%c0_64, %c0_65] : memref<32x32xf32, #tpu.memory_space<vmem>>, vector<32x32xf32>
    %c0_66 = arith.constant 0 : index
    %c0_67 = arith.constant 0 : index
    %133 = vector.load %arg16[%c0_66, %c0_67] : memref<1x32xf32, #tpu.memory_space<vmem>>, vector<1x32xf32>
    %c0_68 = arith.constant 0 : index
    %c0_69 = arith.constant 0 : index
    %134 = vector.load %arg17[%c0_68, %c0_69] : memref<32x32xf32, #tpu.memory_space<vmem>>, vector<32x32xf32>
    %c0_70 = arith.constant 0 : index
    %c0_71 = arith.constant 0 : index
    %135 = vector.load %arg18[%c0_70, %c0_71] : memref<1x32xf32, #tpu.memory_space<vmem>>, vector<1x32xf32>
    %c0_72 = arith.constant 0 : index
    %c0_73 = arith.constant 0 : index
    %136 = vector.load %arg19[%c0_72, %c0_73] : memref<32x32xf32, #tpu.memory_space<vmem>>, vector<32x32xf32>
    %c0_74 = arith.constant 0 : index
    %c0_75 = arith.constant 0 : index
    %137 = vector.load %arg20[%c0_74, %c0_75] : memref<1x32xf32, #tpu.memory_space<vmem>>, vector<1x32xf32>
    %cst_76 = arith.constant 8.000000e+00 : f32
    %138 = math.sqrt %cst_76 : f32
    %cst_77 = arith.constant 1.000000e+00 : f32
    %139 = arith.divf %cst_77, %138 : f32
    %140 = vector.shape_cast %129 : vector<2x8x32xf32> to vector<16x32xf32>
    %141 = vector.shape_cast %1 : vector<2x8x32xf32> to vector<16x32xf32>
    %cst_78 = arith.constant dense<0.000000e+00> : vector<16x32xf32>
    %142 = tpu.matmul %140, %130, %cst_78 {dimension_numbers = #tpu.dot_dimension_numbers<[1], [0], [0], [1], [0, 0, 1, 1], [], []>} : vector<16x32xf32>, vector<32x32xf32>, vector<16x32xf32> -> vector<16x32xf32>
    %143 = vector.broadcast %131 : vector<1x32xf32> to vector<16x32xf32>
    %144 = arith.addf %142, %143 : vector<16x32xf32>
    %145 = vector.broadcast %139 : f32 to vector<16x32xf32>
    %146 = arith.mulf %144, %145 : vector<16x32xf32>
    %cst_79 = arith.constant dense<0.000000e+00> : vector<16x32xf32>
    %147 = tpu.matmul %141, %132, %cst_79 {dimension_numbers = #tpu.dot_dimension_numbers<[1], [0], [0], [1], [0, 0, 1, 1], [], []>} : vector<16x32xf32>, vector<32x32xf32>, vector<16x32xf32> -> vector<16x32xf32>
    %148 = vector.broadcast %133 : vector<1x32xf32> to vector<16x32xf32>
    %149 = arith.addf %147, %148 : vector<16x32xf32>
    %cst_80 = arith.constant dense<0.000000e+00> : vector<16x32xf32>
    %150 = tpu.matmul %141, %134, %cst_80 {dimension_numbers = #tpu.dot_dimension_numbers<[1], [0], [0], [1], [0, 0, 1, 1], [], []>} : vector<16x32xf32>, vector<32x32xf32>, vector<16x32xf32> -> vector<16x32xf32>
    %151 = vector.broadcast %135 : vector<1x32xf32> to vector<16x32xf32>
    %152 = arith.addf %150, %151 : vector<16x32xf32>
    %153 = vector.shape_cast %146 : vector<16x32xf32> to vector<2x8x4x8xf32>
    %154 = tpu.transpose %153, [0, 2, 1, 3] : vector<2x8x4x8xf32> -> vector<2x4x8x8xf32>
    %155 = vector.shape_cast %154 : vector<2x4x8x8xf32> to vector<8x8x8xf32>
    %156 = vector.shape_cast %149 : vector<16x32xf32> to vector<2x8x4x8xf32>
    %157 = tpu.transpose %156, [0, 2, 1, 3] : vector<2x8x4x8xf32> -> vector<2x4x8x8xf32>
    %158 = vector.shape_cast %157 : vector<2x4x8x8xf32> to vector<8x8x8xf32>
    %159 = vector.shape_cast %152 : vector<16x32xf32> to vector<2x8x4x8xf32>
    %160 = tpu.transpose %159, [0, 2, 1, 3] : vector<2x8x4x8xf32> -> vector<2x4x8x8xf32>
    %161 = vector.shape_cast %160 : vector<2x4x8x8xf32> to vector<8x8x8xf32>
    "tpu.trace_start"() <{level = 10 : i32, message = "nqd,nkd->nqk"}> : () -> ()
    %cst_81 = arith.constant dense<0.000000e+00> : vector<8x8x8xf32>
    %162 = tpu.matmul %155, %158, %cst_81 {dimension_numbers = #tpu.dot_dimension_numbers<[2], [2], [1], [1], [0, 0, 0, 1, 1, 1], [0], [0]>} : vector<8x8x8xf32>, vector<8x8x8xf32>, vector<8x8x8xf32> -> vector<8x8x8xf32>
    "tpu.trace_stop"() : () -> ()
    %163 = vector.shape_cast %162 : vector<8x8x8xf32> to vector<2x4x8x8xf32>
    %164 = vector.broadcast %22 : vector<2x1x1x8xf32> to vector<2x4x8x8xf32>
    %165 = arith.addf %163, %164 : vector<2x4x8x8xf32>
    %cst_82 = arith.constant dense<0xFF800000> : vector<2x4x8xf32>
    %166 = vector.multi_reduction <maximumf>, %165, %cst_82 [3] : vector<2x4x8x8xf32> to vector<2x4x8xf32>
    %167 = vector.shape_cast %166 : vector<2x4x8xf32> to vector<2x4x8x1xf32>
    %168 = vector.broadcast %167 : vector<2x4x8x1xf32> to vector<2x4x8x8xf32>
    %169 = arith.subf %165, %168 : vector<2x4x8x8xf32>
    %170 = math.exp %169 : vector<2x4x8x8xf32>
    %cst_83 = arith.constant dense<0.000000e+00> : vector<2x4x8xf32>
    %171 = vector.multi_reduction <add>, %170, %cst_83 [3] : vector<2x4x8x8xf32> to vector<2x4x8xf32>
    %172 = vector.shape_cast %171 : vector<2x4x8xf32> to vector<2x4x8x1xf32>
    %173 = tpu.reciprocal %172 {approx = true} : vector<2x4x8x1xf32> -> vector<2x4x8x1xf32>
    %174 = vector.broadcast %173 : vector<2x4x8x1xf32> to vector<2x4x8x8xf32>
    %175 = arith.mulf %170, %174 : vector<2x4x8x8xf32>
    %176 = vector.shape_cast %175 : vector<2x4x8x8xf32> to vector<8x8x8xf32>
    "tpu.trace_start"() <{level = 10 : i32, message = "nqk,nkd->nqd"}> : () -> ()
    %cst_84 = arith.constant dense<0.000000e+00> : vector<8x8x8xf32>
    %177 = tpu.matmul %176, %161, %cst_84 {dimension_numbers = #tpu.dot_dimension_numbers<[2], [1], [1], [2], [0, 0, 0, 1, 1, 2], [0], [0]>} : vector<8x8x8xf32>, vector<8x8x8xf32>, vector<8x8x8xf32> -> vector<8x8x8xf32>
    "tpu.trace_stop"() : () -> ()
    %178 = vector.shape_cast %177 : vector<8x8x8xf32> to vector<2x4x8x8xf32>
    %179 = tpu.transpose %178, [0, 2, 1, 3] : vector<2x4x8x8xf32> -> vector<2x8x4x8xf32>
    %180 = vector.shape_cast %179 : vector<2x8x4x8xf32> to vector<16x32xf32>
    %cst_85 = arith.constant dense<0.000000e+00> : vector<16x32xf32>
    %181 = tpu.matmul %180, %136, %cst_85 {dimension_numbers = #tpu.dot_dimension_numbers<[1], [0], [0], [1], [0, 0, 1, 1], [], []>} : vector<16x32xf32>, vector<32x32xf32>, vector<16x32xf32> -> vector<16x32xf32>
    %182 = vector.broadcast %137 : vector<1x32xf32> to vector<16x32xf32>
    %183 = arith.addf %181, %182 : vector<16x32xf32>
    %184 = vector.shape_cast %183 : vector<16x32xf32> to vector<2x8x32xf32>
    %185 = arith.addf %103, %184 : vector<2x8x32xf32>
    %c0_86 = arith.constant 0 : index
    %c0_87 = arith.constant 0 : index
    %186 = vector.load %arg29[%c0_86, %c0_87] : memref<1x32xf32, #tpu.memory_space<vmem>>, vector<1x32xf32>
    %c0_88 = arith.constant 0 : index
    %c0_89 = arith.constant 0 : index
    %187 = vector.load %arg30[%c0_88, %c0_89] : memref<1x32xf32, #tpu.memory_space<vmem>>, vector<1x32xf32>
    %cst_90 = arith.constant dense<0.000000e+00> : vector<2x8xf32>
    %188 = vector.multi_reduction <add>, %185, %cst_90 [2] : vector<2x8x32xf32> to vector<2x8xf32>
    %189 = vector.shape_cast %188 : vector<2x8xf32> to vector<2x8x1xf32>
    %cst_91 = arith.constant 3.200000e+01 : f32
    %190 = vector.broadcast %cst_91 : f32 to vector<2x8x1xf32>
    %191 = arith.divf %189, %190 : vector<2x8x1xf32>
    %192 = vector.broadcast %191 : vector<2x8x1xf32> to vector<2x8x32xf32>
    %193 = arith.subf %185, %192 : vector<2x8x32xf32>
    %194 = arith.mulf %193, %193 : vector<2x8x32xf32>
    %cst_92 = arith.constant dense<0.000000e+00> : vector<2x8xf32>
    %195 = vector.multi_reduction <add>, %194, %cst_92 [2] : vector<2x8x32xf32> to vector<2x8xf32>
    %196 = vector.shape_cast %195 : vector<2x8xf32> to vector<2x8x1xf32>
    %cst_93 = arith.constant 3.200000e+01 : f32
    %197 = vector.broadcast %cst_93 : f32 to vector<2x8x1xf32>
    %198 = arith.divf %196, %197 : vector<2x8x1xf32>
    %199 = vector.broadcast %191 : vector<2x8x1xf32> to vector<2x8x32xf32>
    %200 = arith.subf %185, %199 : vector<2x8x32xf32>
    %201 = vector.shape_cast %186 : vector<1x32xf32> to vector<1x1x32xf32>
    %202 = vector.broadcast %201 : vector<1x1x32xf32> to vector<2x8x32xf32>
    %203 = arith.mulf %202, %200 : vector<2x8x32xf32>
    %cst_94 = arith.constant 9.99999997E-7 : f32
    %204 = vector.broadcast %cst_94 : f32 to vector<2x8x1xf32>
    %205 = arith.addf %198, %204 : vector<2x8x1xf32>
    %206 = math.rsqrt %205 : vector<2x8x1xf32>
    %207 = vector.broadcast %206 : vector<2x8x1xf32> to vector<2x8x32xf32>
    %208 = arith.mulf %203, %207 : vector<2x8x32xf32>
    %209 = vector.shape_cast %187 : vector<1x32xf32> to vector<1x1x32xf32>
    %210 = vector.broadcast %209 : vector<1x1x32xf32> to vector<2x8x32xf32>
    %211 = arith.addf %208, %210 : vector<2x8x32xf32>
    %212 = vector.shape_cast %211 : vector<2x8x32xf32> to vector<16x32xf32>
    %c0_95 = arith.constant 0 : index
    %c0_96 = arith.constant 0 : index
    %213 = vector.load %arg21[%c0_95, %c0_96] : memref<32x64xf32, #tpu.memory_space<vmem>>, vector<32x64xf32>
    %cst_97 = arith.constant dense<0.000000e+00> : vector<16x64xf32>
    %214 = tpu.matmul %212, %213, %cst_97 {dimension_numbers = #tpu.dot_dimension_numbers<[1], [0], [0], [1], [0, 0, 1, 1], [], []>} : vector<16x32xf32>, vector<32x64xf32>, vector<16x64xf32> -> vector<16x64xf32>
    %c0_98 = arith.constant 0 : index
    %c0_99 = arith.constant 0 : index
    %215 = vector.load %arg22[%c0_98, %c0_99] : memref<1x64xf32, #tpu.memory_space<vmem>>, vector<1x64xf32>
    %216 = vector.broadcast %215 : vector<1x64xf32> to vector<16x64xf32>
    %217 = arith.addf %214, %216 : vector<16x64xf32>
    %cst_100 = arith.constant 0.000000e+00 : f32
    %218 = vector.broadcast %cst_100 : f32 to vector<16x64xf32>
    %219 = arith.maximumf %217, %218 : vector<16x64xf32>
    %c0_101 = arith.constant 0 : index
    %c0_102 = arith.constant 0 : index
    %220 = vector.load %arg23[%c0_101, %c0_102] : memref<64x32xf32, #tpu.memory_space<vmem>>, vector<64x32xf32>
    %cst_103 = arith.constant dense<0.000000e+00> : vector<16x32xf32>
    %221 = tpu.matmul %219, %220, %cst_103 {dimension_numbers = #tpu.dot_dimension_numbers<[1], [0], [0], [1], [0, 0, 1, 1], [], []>} : vector<16x64xf32>, vector<64x32xf32>, vector<16x32xf32> -> vector<16x32xf32>
    %c0_104 = arith.constant 0 : index
    %c0_105 = arith.constant 0 : index
    %222 = vector.load %arg24[%c0_104, %c0_105] : memref<1x32xf32, #tpu.memory_space<vmem>>, vector<1x32xf32>
    %223 = vector.broadcast %222 : vector<1x32xf32> to vector<16x32xf32>
    %224 = arith.addf %221, %223 : vector<16x32xf32>
    %225 = vector.shape_cast %224 : vector<16x32xf32> to vector<2x8x32xf32>
    %226 = arith.addf %185, %225 : vector<2x8x32xf32>
    %c0_106 = arith.constant 0 : index
    %c0_107 = arith.constant 0 : index
    %c0_108 = arith.constant 0 : index
    %227 = vector.load %arg31[%c0_106, %c0_107, %c0_108] : memref<2x8x32xf32, #tpu.memory_space<vmem>>, vector<2x8x32xf32>
    tpu.vector_store %arg31[%c0_106, %c0_107, %c0_108], %226 {strides = array<i32>} : memref<2x8x32xf32, #tpu.memory_space<vmem>>, vector<2x8x32xf32>,
    return
  }
  func.func @transform_0(%arg0: i32) -> (i32, i32, i32) {
    %c0_i32 = arith.constant 0 : i32
    %c0_i32_0 = arith.constant 0 : i32
    %c0_i32_1 = arith.constant 0 : i32
    return %arg0, %c0_i32, %c0_i32_0 : i32, i32, i32
  }
  func.func @transform_1(%arg0: i32) -> (i32, i32, i32) {
    %c0_i32 = arith.constant 0 : i32
    %c0_i32_0 = arith.constant 0 : i32
    %c0_i32_1 = arith.constant 0 : i32
    return %arg0, %c0_i32, %c0_i32_0 : i32, i32, i32
  }
  func.func @transform_2(%arg0: i32) -> (i32, i32, i32) {
    %c0_i32 = arith.constant 0 : i32
    %c0_i32_0 = arith.constant 0 : i32
    %c0_i32_1 = arith.constant 0 : i32
    return %arg0, %c0_i32, %c0_i32_0 : i32, i32, i32
  }
  func.func @transform_3(%arg0: i32) -> (i32, i32, i32) {
    %c0_i32 = arith.constant 0 : i32
    %c0_i32_0 = arith.constant 0 : i32
    %c0_i32_1 = arith.constant 0 : i32
    return %arg0, %c0_i32, %c0_i32_0 : i32, i32, i32
  }
  func.func @transform_4(%arg0: i32) -> (i32, i32) {
    %c0_i32 = arith.constant 0 : i32
    %c0_i32_0 = arith.constant 0 : i32
    %c0_i32_1 = arith.constant 0 : i32
    return %c0_i32, %c0_i32_0 : i32, i32
  }
  func.func @transform_5(%arg0: i32) -> (i32, i32) {
    %c0_i32 = arith.constant 0 : i32
    %c0_i32_0 = arith.constant 0 : i32
    %c0_i32_1 = arith.constant 0 : i32
    return %c0_i32, %c0_i32_0 : i32, i32
  }
  func.func @transform_6(%arg0: i32) -> (i32, i32) {
    %c0_i32 = arith.constant 0 : i32
    %c0_i32_0 = arith.constant 0 : i32
    %c0_i32_1 = arith.constant 0 : i32
    return %c0_i32, %c0_i32_0 : i32, i32
  }
  func.func @transform_7(%arg0: i32) -> (i32, i32) {
    %c0_i32 = arith.constant 0 : i32
    %c0_i32_0 = arith.constant 0 : i32
    %c0_i32_1 = arith.constant 0 : i32
    return %c0_i32, %c0_i32_0 : i32, i32
  }
  func.func @transform_8(%arg0: i32) -> (i32, i32) {
    %c0_i32 = arith.constant 0 : i32
    %c0_i32_0 = arith.constant 0 : i32
    %c0_i32_1 = arith.constant 0 : i32
    return %c0_i32, %c0_i32_0 : i32, i32
  }
  func.func @transform_9(%arg0: i32) -> (i32, i32) {
    %c0_i32 = arith.constant 0 : i32
    %c0_i32_0 = arith.constant 0 : i32
    %c0_i32_1 = arith.constant 0 : i32
    return %c0_i32, %c0_i32_0 : i32, i32
  }
  func.func @transform_10(%arg0: i32) -> (i32, i32) {
    %c0_i32 = arith.constant 0 : i32
    %c0_i32_0 = arith.constant 0 : i32
    %c0_i32_1 = arith.constant 0 : i32
    return %c0_i32, %c0_i32_0 : i32, i32
  }
  func.func @transform_11(%arg0: i32) -> (i32, i32) {
    %c0_i32 = arith.constant 0 : i32
    %c0_i32_0 = arith.constant 0 : i32
    %c0_i32_1 = arith.constant 0 : i32
    return %c0_i32, %c0_i32_0 : i32, i32
  }
  func.func @transform_12(%arg0: i32) -> (i32, i32) {
    %c0_i32 = arith.constant 0 : i32
    %c0_i32_0 = arith.constant 0 : i32
    %c0_i32_1 = arith.constant 0 : i32
    return %c0_i32, %c0_i32_0 : i32, i32
  }
  func.func @transform_13(%arg0: i32) -> (i32, i32) {
    %c0_i32 = arith.constant 0 : i32
    %c0_i32_0 = arith.constant 0 : i32
    %c0_i32_1 = arith.constant 0 : i32
    return %c0_i32, %c0_i32_0 : i32, i32
  }
  func.func @transform_14(%arg0: i32) -> (i32, i32) {
    %c0_i32 = arith.constant 0 : i32
    %c0_i32_0 = arith.constant 0 : i32
    %c0_i32_1 = arith.constant 0 : i32
    return %c0_i32, %c0_i32_0 : i32, i32
  }
  func.func @transform_15(%arg0: i32) -> (i32, i32) {
    %c0_i32 = arith.constant 0 : i32
    %c0_i32_0 = arith.constant 0 : i32
    %c0_i32_1 = arith.constant 0 : i32
    return %c0_i32, %c0_i32_0 : i32, i32
  }
  func.func @transform_16(%arg0: i32) -> (i32, i32) {
    %c0_i32 = arith.constant 0 : i32
    %c0_i32_0 = arith.constant 0 : i32
    %c0_i32_1 = arith.constant 0 : i32
    return %c0_i32, %c0_i32_0 : i32, i32
  }
  func.func @transform_17(%arg0: i32) -> (i32, i32) {
    %c0_i32 = arith.constant 0 : i32
    %c0_i32_0 = arith.constant 0 : i32
    %c0_i32_1 = arith.constant 0 : i32
    return %c0_i32, %c0_i32_0 : i32, i32
  }
  func.func @transform_18(%arg0: i32) -> (i32, i32) {
    %c0_i32 = arith.constant 0 : i32
    %c0_i32_0 = arith.constant 0 : i32
    %c0_i32_1 = arith.constant 0 : i32
    return %c0_i32, %c0_i32_0 : i32, i32
  }
  func.func @transform_19(%arg0: i32) -> (i32, i32) {
    %c0_i32 = arith.constant 0 : i32
    %c0_i32_0 = arith.constant 0 : i32
    %c0_i32_1 = arith.constant 0 : i32
    return %c0_i32, %c0_i32_0 : i32, i32
  }
  func.func @transform_20(%arg0: i32) -> (i32, i32) {
    %c0_i32 = arith.constant 0 : i32
    %c0_i32_0 = arith.constant 0 : i32
    %c0_i32_1 = arith.constant 0 : i32
    return %c0_i32, %c0_i32_0 : i32, i32
  }
  func.func @transform_21(%arg0: i32) -> (i32, i32) {
    %c0_i32 = arith.constant 0 : i32
    %c0_i32_0 = arith.constant 0 : i32
    %c0_i32_1 = arith.constant 0 : i32
    return %c0_i32, %c0_i32_0 : i32, i32
  }
  func.func @transform_22(%arg0: i32) -> (i32, i32) {
    %c0_i32 = arith.constant 0 : i32
    %c0_i32_0 = arith.constant 0 : i32
    %c0_i32_1 = arith.constant 0 : i32
    return %c0_i32, %c0_i32_0 : i32, i32
  }
  func.func @transform_23(%arg0: i32) -> (i32, i32) {
    %c0_i32 = arith.constant 0 : i32
    %c0_i32_0 = arith.constant 0 : i32
    %c0_i32_1 = arith.constant 0 : i32
    return %c0_i32, %c0_i32_0 : i32, i32
  }
  func.func @transform_24(%arg0: i32) -> (i32, i32) {
    %c0_i32 = arith.constant 0 : i32
    %c0_i32_0 = arith.constant 0 : i32
    %c0_i32_1 = arith.constant 0 : i32
    return %c0_i32, %c0_i32_0 : i32, i32
  }
  func.func @transform_25(%arg0: i32) -> (i32, i32) {
    %c0_i32 = arith.constant 0 : i32
    %c0_i32_0 = arith.constant 0 : i32
    %c0_i32_1 = arith.constant 0 : i32
    return %c0_i32, %c0_i32_0 : i32, i32
  }
  func.func @transform_26(%arg0: i32) -> (i32, i32) {
    %c0_i32 = arith.constant 0 : i32
    %c0_i32_0 = arith.constant 0 : i32
    %c0_i32_1 = arith.constant 0 : i32
    return %c0_i32, %c0_i32_0 : i32, i32
  }
  func.func @transform_27(%arg0: i32) -> (i32, i32) {
    %c0_i32 = arith.constant 0 : i32
    %c0_i32_0 = arith.constant 0 : i32
    %c0_i32_1 = arith.constant 0 : i32
    return %c0_i32, %c0_i32_0 : i32, i32
  }
  func.func @transform_28(%arg0: i32) -> (i32, i32) {
    %c0_i32 = arith.constant 0 : i32
    %c0_i32_0 = arith.constant 0 : i32
    %c0_i32_1 = arith.constant 0 : i32
    return %c0_i32, %c0_i32_0 : i32, i32
  }
  func.func @transform_29(%arg0: i32) -> (i32, i32) {
    %c0_i32 = arith.constant 0 : i32
    %c0_i32_0 = arith.constant 0 : i32
    %c0_i32_1 = arith.constant 0 : i32
    return %c0_i32, %c0_i32_0 : i32, i32
  }
  func.func @transform_30(%arg0: i32) -> (i32, i32, i32) {
    %c0_i32 = arith.constant 0 : i32
    %c0_i32_0 = arith.constant 0 : i32
    %c0_i32_1 = arith.constant 0 : i32
    return %arg0, %c0_i32, %c0_i32_0 : i32, i32, i32
  }
}

</mosaic_0001>

<llo_original>
// kernel: tpu_custom_call.1
$region0: #{tpu_custom_call.1}
  #allocation0 [shape = 'u32[]', space=smem, size = 0x4, offset = 0x4, fixed_abs, tag = 'smem constant byte address 0x4 - core index']
  #allocation1 [shape = 'u32[144,128]{1,0:T(1,128)}', space=vmem, size = 0x12000, scoped, tag = 'internal scratch']
  %s0 = inlined_call_operand.smem [shape: u32[31], index: -1, kind: input, shape index: {}]
  %s1 = sld [smem:[%s0]]
  %s2 = scalar_lea.smem %s0, 1
  %s3 = sld [smem:[%s2]]
  %s4 = scalar_lea.smem %s0, 2
  %s5 = sld [smem:[%s4]]
  %s6 = scalar_lea.smem %s0, 3
  %s7 = sld [smem:[%s6]]
  %s8 = scalar_lea.smem %s0, 4
  %s9 = sld [smem:[%s8]]
  %s10 = scalar_lea.smem %s0, 5
  %s11 = sld [smem:[%s10]]
  %s12 = scalar_lea.smem %s0, 6
  %s13 = sld [smem:[%s12]]
  %s14 = scalar_lea.smem %s0, 7
  %s15 = sld [smem:[%s14]]
  %s16 = scalar_lea.smem %s0, 8
  %s17 = sld [smem:[%s16]]
  %s18 = scalar_lea.smem %s0, 9
  %s19 = sld [smem:[%s18]]
  %s20 = scalar_lea.smem %s0, 10
  %s21 = sld [smem:[%s20]]
  %s22 = scalar_lea.smem %s0, 11
  %s23 = sld [smem:[%s22]]
  %s24 = scalar_lea.smem %s0, 12
  %s25 = sld [smem:[%s24]]
  %s26 = scalar_lea.smem %s0, 13
  %s27 = sld [smem:[%s26]]
  %s28 = scalar_lea.smem %s0, 14
  %s29 = sld [smem:[%s28]]
  %s30 = scalar_lea.smem %s0, 15
  %s31 = sld [smem:[%s30]]
  %s32 = scalar_lea.smem %s0, 16
  %s33 = sld [smem:[%s32]]
  %s34 = scalar_lea.smem %s0, 17
  %s35 = sld [smem:[%s34]]
  %s36 = scalar_lea.smem %s0, 18
  %s37 = sld [smem:[%s36]]
  %s38 = scalar_lea.smem %s0, 19
  %s39 = sld [smem:[%s38]]
  %s40 = scalar_lea.smem %s0, 20
  %s41 = sld [smem:[%s40]]
  %s42 = scalar_lea.smem %s0, 21
  %s43 = sld [smem:[%s42]]
  %s44 = scalar_lea.smem %s0, 22
  %s45 = sld [smem:[%s44]]
  %s46 = scalar_lea.smem %s0, 23
  %s47 = sld [smem:[%s46]]
  %s48 = scalar_lea.smem %s0, 24
  %s49 = sld [smem:[%s48]]
  %s50 = scalar_lea.smem %s0, 25
  %s51 = sld [smem:[%s50]]
  %s52 = scalar_lea.smem %s0, 26
  %s53 = sld [smem:[%s52]]
  %s54 = scalar_lea.smem %s0, 27
  %s55 = sld [smem:[%s54]]
  %s56 = scalar_lea.smem %s0, 28
  %s57 = sld [smem:[%s56]]
  %s58 = scalar_lea.smem %s0, 29
  %s59 = sld [smem:[%s58]]
  %s60 = scalar_lea.smem %s0, 30
  %s61 = sld [smem:[%s60]]
  %s62 = sld [smem:[#allocation0]]
  $region182: #{tpu_custom_call.1} parent=0
    _
  %s64 = ssub.s32 1, %s62
  %s65 = scalar_select 0, %s64, %s62
  $region1: #{tpu_custom_call.1} parent=0
    #allocation2 [shape = 'u8[8192]{0}', space=vmem, size = 0x2000, scoped, tag = 'input window, operand 0, single buffered']
    #allocation3 [shape = 's32[1]{0}', space=sflag, size = 0x4, scoped, tag = 'scoped memory for tpu_custom_call.1']
    #allocation4 [shape = 's32[1]{0}', space=sflag, size = 0x4, scoped, tag = 'scoped memory for tpu_custom_call.1']
    #allocation5 [shape = 'u8[8192]{0}', space=vmem, size = 0x2000, scoped, tag = 'input window, operand 1, single buffered']
    #allocation6 [shape = 's32[1]{0}', space=sflag, size = 0x4, scoped, tag = 'scoped memory for tpu_custom_call.1']
    #allocation7 [shape = 'u8[16384]{0}', space=vmem, size = 0x4000, scoped, tag = 'input window, operand 10, single buffered']
    #allocation8 [shape = 'u8[16384]{0}', space=vmem, size = 0x4000, scoped, tag = 'input window, operand 12, single buffered']
    #allocation9 [shape = 's32[1]{0}', space=sflag, size = 0x4, scoped, tag = 'scoped memory for tpu_custom_call.1']
    #allocation10 [shape = 'u8[512]{0}', space=vmem, size = 0x400, scoped, tag = 'input window, operand 13, single buffered']
    #allocation11 [shape = 'u8[16384]{0}', space=vmem, size = 0x4000, scoped, tag = 'input window, operand 14, single buffered']
    #allocation12 [shape = 's32[1]{0}', space=sflag, size = 0x4, scoped, tag = 'scoped memory for tpu_custom_call.1']
    #allocation13 [shape = 'u8[512]{0}', space=vmem, size = 0x400, scoped, tag = 'input window, operand 15, single buffered']
    #allocation14 [shape = 'u8[16384]{0}', space=vmem, size = 0x4000, scoped, tag = 'input window, operand 16, single buffered']
    #allocation15 [shape = 's32[1]{0}', space=sflag, size = 0x4, scoped, tag = 'scoped memory for tpu_custom_call.1']
    #allocation16 [shape = 'u8[512]{0}', space=vmem, size = 0x400, scoped, tag = 'input window, operand 17, single buffered']
    #allocation17 [shape = 'u8[16384]{0}', space=vmem, size = 0x4000, scoped, tag = 'input window, operand 18, single buffered']
    #allocation18 [shape = 's32[1]{0}', space=sflag, size = 0x4, scoped, tag = 'scoped memory for tpu_custom_call.1']
    #allocation19 [shape = 'u8[512]{0}', space=vmem, size = 0x400, scoped, tag = 'input window, operand 19, single buffered']
    #allocation20 [shape = 'u8[16384]{0}', space=vmem, size = 0x4000, scoped, tag = 'input window, operand 20, single buffered']
    #allocation21 [shape = 's32[1]{0}', space=sflag, size = 0x4, scoped, tag = 'scoped memory for tpu_custom_call.1']
    #allocation22 [shape = 'u8[512]{0}', space=vmem, size = 0x400, scoped, tag = 'input window, operand 21, single buffered']
    #allocation23 [shape = 'u8[8192]{0}', space=vmem, size = 0x2000, scoped, tag = 'output window, operand 0, single buffered']
    %66 = vsyncpa [#allocation3], 0
    %67 = vsyncpa [#allocation6], 0
    %68 = vsyncpa [#allocation9], 0
    %69 = vsyncpa [#allocation12], 0
    %70 = vsyncpa [#allocation15], 0
    %71 = vsyncpa [#allocation18], 0
    %72 = vsyncpa [#allocation21], 0
    %73 = vsyncpa [#allocation4], 0
    // Predicated region
    $region2: #{tpu_custom_call.1} parent=1 // pred_check
      _
    $region3: #{tpu_custom_call.1} parent=1 // pred_check_branch
      %75 = sbr.rel (0) target = $region5
    $region4: #{tpu_custom_call.1} parent=1 // pred_region
      %s77 = ssub.s32 256, 256
      %78 = vsyncadd [#allocation3], %s77
      %s79 = sshll.u32 [#allocation2], 4
      %s80 = int_to_ptr.vmem [resolvable:$true] %s79
      %85 = dma.hbm_to_vmem [thread:$0]  %s1, 256, %s80, [#allocation3], 128, 128, 8
    $region5: #{tpu_custom_call.1} parent=1 // pred_fallthru
      _
    // Predicated region
    $region6: #{tpu_custom_call.1} parent=1 // pred_check
      _
    $region7: #{tpu_custom_call.1} parent=1 // pred_check_branch
      %87 = sbr.rel (0) target = $region9
    $region8: #{tpu_custom_call.1} parent=1 // pred_region
      %s89 = ssub.s32 256, 256
      %90 = vsyncadd [#allocation6], %s89
      %s91 = sshll.u32 [#allocation5], 4
      %s92 = int_to_ptr.vmem [resolvable:$true] %s91
      %97 = dma.hbm_to_vmem [thread:$0]  %s3, 256, %s92, [#allocation6], 128, 128, 8
    $region9: #{tpu_custom_call.1} parent=1 // pred_fallthru
      _
    // Predicated region
    $region10: #{tpu_custom_call.1} parent=1 // pred_check
      _
    $region11: #{tpu_custom_call.1} parent=1 // pred_check_branch
      %99 = sbr.rel (0) target = $region13
    $region12: #{tpu_custom_call.1} parent=1 // pred_region
      _
    $region13: #{tpu_custom_call.1} parent=1 // pred_fallthru
      _
    // Predicated region
    $region14: #{tpu_custom_call.1} parent=1 // pred_check
      _
    $region15: #{tpu_custom_call.1} parent=1 // pred_check_branch
      %101 = sbr.rel (0) target = $region17
    $region16: #{tpu_custom_call.1} parent=1 // pred_region
      _
    $region17: #{tpu_custom_call.1} parent=1 // pred_fallthru
      _
    // Predicated region
    $region18: #{tpu_custom_call.1} parent=1 // pred_check
      _
    $region19: #{tpu_custom_call.1} parent=1 // pred_check_branch
      %103 = sbr.rel (0) target = $region21
    $region20: #{tpu_custom_call.1} parent=1 // pred_region
      _
    $region21: #{tpu_custom_call.1} parent=1 // pred_fallthru
      _
    // Predicated region
    $region22: #{tpu_custom_call.1} parent=1 // pred_check
      _
    $region23: #{tpu_custom_call.1} parent=1 // pred_check_branch
      %105 = sbr.rel (0) target = $region25
    $region24: #{tpu_custom_call.1} parent=1 // pred_region
      _
    $region25: #{tpu_custom_call.1} parent=1 // pred_fallthru
      _
    // Predicated region
    $region26: #{tpu_custom_call.1} parent=1 // pred_check
      _
    $region27: #{tpu_custom_call.1} parent=1 // pred_check_branch
      %107 = sbr.rel (0) target = $region29
    $region28: #{tpu_custom_call.1} parent=1 // pred_region
      _
    $region29: #{tpu_custom_call.1} parent=1 // pred_fallthru
      _
    // Predicated region
    $region30: #{tpu_custom_call.1} parent=1 // pred_check
      _
    $region31: #{tpu_custom_call.1} parent=1 // pred_check_branch
      %109 = sbr.rel (0) target = $region33
    $region32: #{tpu_custom_call.1} parent=1 // pred_region
      _
    $region33: #{tpu_custom_call.1} parent=1 // pred_fallthru
      _
    // Predicated region
    $region34: #{tpu_custom_call.1} parent=1 // pred_check
      _
    $region35: #{tpu_custom_call.1} parent=1 // pred_check_branch
      %111 = sbr.rel (0) target = $region37
    $region36: #{tpu_custom_call.1} parent=1 // pred_region
      _
    $region37: #{tpu_custom_call.1} parent=1 // pred_fallthru
      _
    // Predicated region
    $region38: #{tpu_custom_call.1} parent=1 // pred_check
      _
    $region39: #{tpu_custom_call.1} parent=1 // pred_check_branch
      %113 = sbr.rel (0) target = $region41
    $region40: #{tpu_custom_call.1} parent=1 // pred_region
      _
    $region41: #{tpu_custom_call.1} parent=1 // pred_fallthru
      _
    // Predicated region
    $region42: #{tpu_custom_call.1} parent=1 // pred_check
      _
    $region43: #{tpu_custom_call.1} parent=1 // pred_check_branch
      %115 = sbr.rel (0) target = $region45
    $region44: #{tpu_custom_call.1} parent=1 // pred_region
      %s117 = ssub.s32 512, 512
      %118 = vsyncadd [#allocation6], %s117
      %s119 = sshll.u32 [#allocation7], 4
      %s120 = int_to_ptr.vmem [resolvable:$true] %s119
      %125 = dma.hbm_to_vmem [thread:$0]  %s21, 512, %s120, [#allocation6], 128, 128, 8
    $region45: #{tpu_custom_call.1} parent=1 // pred_fallthru
      _
    // Predicated region
    $region46: #{tpu_custom_call.1} parent=1 // pred_check
      _
    $region47: #{tpu_custom_call.1} parent=1 // pred_check_branch
      %127 = sbr.rel (0) target = $region49
    $region48: #{tpu_custom_call.1} parent=1 // pred_region
      _
    $region49: #{tpu_custom_call.1} parent=1 // pred_fallthru
      _
    // Predicated region
    $region50: #{tpu_custom_call.1} parent=1 // pred_check
      _
    $region51: #{tpu_custom_call.1} parent=1 // pred_check_branch
      %129 = sbr.rel (0) target = $region53
    $region52: #{tpu_custom_call.1} parent=1 // pred_region
      %s131 = ssub.s32 512, 512
      %132 = vsyncadd [#allocation9], %s131
      %s133 = sshll.u32 [#allocation8], 4
      %s134 = int_to_ptr.vmem [resolvable:$true] %s133
      %139 = dma.hbm_to_vmem [thread:$0]  %s25, 512, %s134, [#allocation9], 128, 128, 8
    $region53: #{tpu_custom_call.1} parent=1 // pred_fallthru
      _
    // Predicated region
    $region54: #{tpu_custom_call.1} parent=1 // pred_check
      _
    $region55: #{tpu_custom_call.1} parent=1 // pred_check_branch
      %141 = sbr.rel (0) target = $region57
    $region56: #{tpu_custom_call.1} parent=1 // pred_region
      %s143 = ssub.s32 16, 16
      %144 = vsyncadd [#allocation9], %s143
      %s146 = sshll.u32 [#allocation10], 4
      %s147 = int_to_ptr.vmem [resolvable:$true] %s146
      %149 = dma.hbm_to_vmem [thread:$0]  %s27, 16, %s147, [#allocation9]
    $region57: #{tpu_custom_call.1} parent=1 // pred_fallthru
      _
    // Predicated region
    $region58: #{tpu_custom_call.1} parent=1 // pred_check
      _
    $region59: #{tpu_custom_call.1} parent=1 // pred_check_branch
      %151 = sbr.rel (0) target = $region61
    $region60: #{tpu_custom_call.1} parent=1 // pred_region
      %s153 = ssub.s32 512, 512
      %154 = vsyncadd [#allocation12], %s153
      %s155 = sshll.u32 [#allocation11], 4
      %s156 = int_to_ptr.vmem [resolvable:$true] %s155
      %161 = dma.hbm_to_vmem [thread:$0]  %s29, 512, %s156, [#allocation12], 128, 128, 8
    $region61: #{tpu_custom_call.1} parent=1 // pred_fallthru
      _
    // Predicated region
    $region62: #{tpu_custom_call.1} parent=1 // pred_check
      _
    $region63: #{tpu_custom_call.1} parent=1 // pred_check_branch
      %163 = sbr.rel (0) target = $region65
    $region64: #{tpu_custom_call.1} parent=1 // pred_region
      %s165 = ssub.s32 16, 16
      %166 = vsyncadd [#allocation12], %s165
      %s168 = sshll.u32 [#allocation13], 4
      %s169 = int_to_ptr.vmem [resolvable:$true] %s168
      %171 = dma.hbm_to_vmem [thread:$0]  %s31, 16, %s169, [#allocation12]
    $region65: #{tpu_custom_call.1} parent=1 // pred_fallthru
      _
    // Predicated region
    $region66: #{tpu_custom_call.1} parent=1 // pred_check
      _
    $region67: #{tpu_custom_call.1} parent=1 // pred_check_branch
      %173 = sbr.rel (0) target = $region69
    $region68: #{tpu_custom_call.1} parent=1 // pred_region
      %s175 = ssub.s32 512, 512
      %176 = vsyncadd [#allocation15], %s175
      %s177 = sshll.u32 [#allocation14], 4
      %s178 = int_to_ptr.vmem [resolvable:$true] %s177
      %183 = dma.hbm_to_vmem [thread:$0]  %s33, 512, %s178, [#allocation15], 128, 128, 8
    $region69: #{tpu_custom_call.1} parent=1 // pred_fallthru
      _
    // Predicated region
    $region70: #{tpu_custom_call.1} parent=1 // pred_check
      _
    $region71: #{tpu_custom_call.1} parent=1 // pred_check_branch
      %185 = sbr.rel (0) target = $region73
    $region72: #{tpu_custom_call.1} parent=1 // pred_region
      %s187 = ssub.s32 16, 16
      %188 = vsyncadd [#allocation15], %s187
      %s190 = sshll.u32 [#allocation16], 4
      %s191 = int_to_ptr.vmem [resolvable:$true] %s190
      %193 = dma.hbm_to_vmem [thread:$0]  %s35, 16, %s191, [#allocation15]
    $region73: #{tpu_custom_call.1} parent=1 // pred_fallthru
      _
    // Predicated region
    $region74: #{tpu_custom_call.1} parent=1 // pred_check
      _
    $region75: #{tpu_custom_call.1} parent=1 // pred_check_branch
      %195 = sbr.rel (0) target = $region77
    $region76: #{tpu_custom_call.1} parent=1 // pred_region
      %s197 = ssub.s32 512, 512
      %198 = vsyncadd [#allocation18], %s197
      %s199 = sshll.u32 [#allocation17], 4
      %s200 = int_to_ptr.vmem [resolvable:$true] %s199
      %205 = dma.hbm_to_vmem [thread:$0]  %s37, 512, %s200, [#allocation18], 128, 128, 8
    $region77: #{tpu_custom_call.1} parent=1 // pred_fallthru
      _
    // Predicated region
    $region78: #{tpu_custom_call.1} parent=1 // pred_check
      _
    $region79: #{tpu_custom_call.1} parent=1 // pred_check_branch
      %207 = sbr.rel (0) target = $region81
    $region80: #{tpu_custom_call.1} parent=1 // pred_region
      %s209 = ssub.s32 16, 16
      %210 = vsyncadd [#allocation18], %s209
      %s212 = sshll.u32 [#allocation19], 4
      %s213 = int_to_ptr.vmem [resolvable:$true] %s212
      %215 = dma.hbm_to_vmem [thread:$0]  %s39, 16, %s213, [#allocation18]
    $region81: #{tpu_custom_call.1} parent=1 // pred_fallthru
      _
    // Predicated region
    $region82: #{tpu_custom_call.1} parent=1 // pred_check
      _
    $region83: #{tpu_custom_call.1} parent=1 // pred_check_branch
      %217 = sbr.rel (0) target = $region85
    $region84: #{tpu_custom_call.1} parent=1 // pred_region
      %s219 = ssub.s32 512, 512
      %220 = vsyncadd [#allocation21], %s219
      %s221 = sshll.u32 [#allocation20], 4
      %s222 = int_to_ptr.vmem [resolvable:$true] %s221
      %227 = dma.hbm_to_vmem [thread:$0]  %s41, 512, %s222, [#allocation21], 128, 128, 8
    $region85: #{tpu_custom_call.1} parent=1 // pred_fallthru
      _
    // Predicated region
    $region86: #{tpu_custom_call.1} parent=1 // pred_check
      _
    $region87: #{tpu_custom_call.1} parent=1 // pred_check_branch
      %229 = sbr.rel (0) target = $region89
    $region88: #{tpu_custom_call.1} parent=1 // pred_region
      %s231 = ssub.s32 16, 16
      %232 = vsyncadd [#allocation21], %s231
      %s234 = sshll.u32 [#allocation22], 4
      %s235 = int_to_ptr.vmem [resolvable:$true] %s234
      %237 = dma.hbm_to_vmem [thread:$0]  %s43, 16, %s235, [#allocation21]
    $region89: #{tpu_custom_call.1} parent=1 // pred_fallthru
      _
    // Predicated region
    $region90: #{tpu_custom_call.1} parent=1 // pred_check
      _
    $region91: #{tpu_custom_call.1} parent=1 // pred_check_branch
      %239 = sbr.rel (0) target = $region93
    $region92: #{tpu_custom_call.1} parent=1 // pred_region
      _
    $region93: #{tpu_custom_call.1} parent=1 // pred_fallthru
      _
    // Predicated region
    $region94: #{tpu_custom_call.1} parent=1 // pred_check
      _
    $region95: #{tpu_custom_call.1} parent=1 // pred_check_branch
      %241 = sbr.rel (0) target = $region97
    $region96: #{tpu_custom_call.1} parent=1 // pred_region
      _
    $region97: #{tpu_custom_call.1} parent=1 // pred_fallthru
      _
    // Predicated region
    $region98: #{tpu_custom_call.1} parent=1 // pred_check
      _
    $region99: #{tpu_custom_call.1} parent=1 // pred_check_branch
      %243 = sbr.rel (0) target = $region101
    $region100: #{tpu_custom_call.1} parent=1 // pred_region
      _
    $region101: #{tpu_custom_call.1} parent=1 // pred_fallthru
      _
    // Predicated region
    $region102: #{tpu_custom_call.1} parent=1 // pred_check
      _
    $region103: #{tpu_custom_call.1} parent=1 // pred_check_branch
      %245 = sbr.rel (0) target = $region105
    $region104: #{tpu_custom_call.1} parent=1 // pred_region
      _
    $region105: #{tpu_custom_call.1} parent=1 // pred_fallthru
      _
    // Predicated region
    $region106: #{tpu_custom_call.1} parent=1 // pred_check
      _
    $region107: #{tpu_custom_call.1} parent=1 // pred_check_branch
      %247 = sbr.rel (0) target = $region109
    $region108: #{tpu_custom_call.1} parent=1 // pred_region
      _
    $region109: #{tpu_custom_call.1} parent=1 // pred_fallthru
      _
    // Predicated region
    $region110: #{tpu_custom_call.1} parent=1 // pred_check
      _
    $region111: #{tpu_custom_call.1} parent=1 // pred_check_branch
      %249 = sbr.rel (0) target = $region113
    $region112: #{tpu_custom_call.1} parent=1 // pred_region
      _
    $region113: #{tpu_custom_call.1} parent=1 // pred_fallthru
      _
    // Predicated region
    $region114: #{tpu_custom_call.1} parent=1 // pred_check
      _
    $region115: #{tpu_custom_call.1} parent=1 // pred_check_branch
      %251 = sbr.rel (0) target = $region117
    $region116: #{tpu_custom_call.1} parent=1 // pred_region
      _
    $region117: #{tpu_custom_call.1} parent=1 // pred_fallthru
      _
    // Predicated region
    $region118: #{tpu_custom_call.1} parent=1 // pred_check
      _
    $region119: #{tpu_custom_call.1} parent=1 // pred_check_branch
      %253 = sbr.rel (0) target = $region121
    $region120: #{tpu_custom_call.1} parent=1 // pred_region
      _
    $region121: #{tpu_custom_call.1} parent=1 // pred_fallthru
      _
    // Predicated region
    $region122: #{tpu_custom_call.1} parent=1 // pred_check
      _
    $region123: #{tpu_custom_call.1} parent=1 // pred_check_branch
      %255 = sbr.rel (0) target = $region125
    $region124: #{tpu_custom_call.1} parent=1 // pred_region
      %256 = dma.done [#allocation3], 256
    $region125: #{tpu_custom_call.1} parent=1 // pred_fallthru
      _
    // Predicated region
    $region126: #{tpu_custom_call.1} parent=1 // pred_check
      _
    $region127: #{tpu_custom_call.1} parent=1 // pred_check_branch
      %258 = sbr.rel (0) target = $region129
    $region128: #{tpu_custom_call.1} parent=1 // pred_region
      %259 = dma.done [#allocation6], 256
    $region129: #{tpu_custom_call.1} parent=1 // pred_fallthru
      _
    // Predicated region
    $region130: #{tpu_custom_call.1} parent=1 // pred_check
      _
    $region131: #{tpu_custom_call.1} parent=1 // pred_check_branch
      %261 = sbr.rel (0) target = $region133
    $region132: #{tpu_custom_call.1} parent=1 // pred_region
      %262 = dma.done [#allocation6], 512
    $region133: #{tpu_custom_call.1} parent=1 // pred_fallthru
      _
    // Predicated region
    $region134: #{tpu_custom_call.1} parent=1 // pred_check
      _
    $region135: #{tpu_custom_call.1} parent=1 // pred_check_branch
      %264 = sbr.rel (0) target = $region137
    $region136: #{tpu_custom_call.1} parent=1 // pred_region
      %265 = dma.done [#allocation9], 512
    $region137: #{tpu_custom_call.1} parent=1 // pred_fallthru
      _
    // Predicated region
    $region138: #{tpu_custom_call.1} parent=1 // pred_check
      _
    $region139: #{tpu_custom_call.1} parent=1 // pred_check_branch
      %267 = sbr.rel (0) target = $region141
    $region140: #{tpu_custom_call.1} parent=1 // pred_region
      %268 = dma.done [#allocation9], 16
    $region141: #{tpu_custom_call.1} parent=1 // pred_fallthru
      _
    // Predicated region
    $region142: #{tpu_custom_call.1} parent=1 // pred_check
      _
    $region143: #{tpu_custom_call.1} parent=1 // pred_check_branch
      %270 = sbr.rel (0) target = $region145
    $region144: #{tpu_custom_call.1} parent=1 // pred_region
      %271 = dma.done [#allocation12], 512
    $region145: #{tpu_custom_call.1} parent=1 // pred_fallthru
      _
    // Predicated region
    $region146: #{tpu_custom_call.1} parent=1 // pred_check
      _
    $region147: #{tpu_custom_call.1} parent=1 // pred_check_branch
      %273 = sbr.rel (0) target = $region149
    $region148: #{tpu_custom_call.1} parent=1 // pred_region
      %274 = dma.done [#allocation12], 16
    $region149: #{tpu_custom_call.1} parent=1 // pred_fallthru
      _
    // Predicated region
    $region150: #{tpu_custom_call.1} parent=1 // pred_check
      _
    $region151: #{tpu_custom_call.1} parent=1 // pred_check_branch
      %276 = sbr.rel (0) target = $region153
    $region152: #{tpu_custom_call.1} parent=1 // pred_region
      %277 = dma.done [#allocation15], 512
    $region153: #{tpu_custom_call.1} parent=1 // pred_fallthru
      _
    // Predicated region
    $region154: #{tpu_custom_call.1} parent=1 // pred_check
      _
    $region155: #{tpu_custom_call.1} parent=1 // pred_check_branch
      %279 = sbr.rel (0) target = $region157
    $region156: #{tpu_custom_call.1} parent=1 // pred_region
      %280 = dma.done [#allocation15], 16
    $region157: #{tpu_custom_call.1} parent=1 // pred_fallthru
      _
    // Predicated region
    $region158: #{tpu_custom_call.1} parent=1 // pred_check
      _
    $region159: #{tpu_custom_call.1} parent=1 // pred_check_branch
      %282 = sbr.rel (0) target = $region161
    $region160: #{tpu_custom_call.1} parent=1 // pred_region
      %283 = dma.done [#allocation18], 512
    $region161: #{tpu_custom_call.1} parent=1 // pred_fallthru
      _
    // Predicated region
    $region162: #{tpu_custom_call.1} parent=1 // pred_check
      _
    $region163: #{tpu_custom_call.1} parent=1 // pred_check_branch
      %285 = sbr.rel (0) target = $region165
    $region164: #{tpu_custom_call.1} parent=1 // pred_region
      %286 = dma.done [#allocation18], 16
    $region165: #{tpu_custom_call.1} parent=1 // pred_fallthru
      _
    // Predicated region
    $region166: #{tpu_custom_call.1} parent=1 // pred_check
      _
    $region167: #{tpu_custom_call.1} parent=1 // pred_check_branch
      %288 = sbr.rel (0) target = $region169
    $region168: #{tpu_custom_call.1} parent=1 // pred_region
      %289 = dma.done [#allocation21], 512
    $region169: #{tpu_custom_call.1} parent=1 // pred_fallthru
      _
    // Predicated region
    $region170: #{tpu_custom_call.1} parent=1 // pred_check
      _
    $region171: #{tpu_custom_call.1} parent=1 // pred_check_branch
      %291 = sbr.rel (0) target = $region173
    $region172: #{tpu_custom_call.1} parent=1 // pred_region
      %292 = dma.done [#allocation21], 16
    $region173: #{tpu_custom_call.1} parent=1 // pred_fallthru
      _
    %v293 = vld [vmem:[#allocation2] sm:$0xff]
    %v294 = vld [vmem:[#allocation2 + $0x8] sm:$0xff]
    %v295 = vld [vmem:[#allocation5] sm:$0xff]
    %v296 = vld [vmem:[#allocation5 + $0x8] sm:$0xff]
    %v297 = vlaneseq
    %v298 = vshrl.u32 %v297, 7
    %v299 = vlaneseq
    %v300 = vand.u32 %v299, 127
    %vm301 = vcmp.le.s32.totalorder %v300, %v298
    %v302 = vld [vmem:[%s7] sm:$0x1]
    %v303 = vld [vmem:[%s7 + $0x1] sm:$0x1]
    %vm304 = vcmp.gt.f32.partialorder %v302, 0.0
    %vm305 = vcmp.gt.f32.partialorder %v303, 0.0
    %v306 = vsel %vm301, 1, 0
    %vm307 = vcmp.eq.s32.totalorder %v306, 1
    %v308 = vsel %vm304, 1, 0
    %v309 = vsel %vm305, 1, 0
    %v310 = vlaneseq
    %v311 = vshrl.u32 %v310, 7
    %v312 = vsub.s32 0, %v311
    %v313 = vrot.slane %v308, %v312
    %v314 = vlaneseq
    %v315 = vshrl.u32 %v314, 7
    %v316 = vsub.s32 0, %v315
    %v317 = vrot.slane %v309, %v316
    %vm318 = vcmp.eq.s32.totalorder %v313, 1
    %vm319 = vcmp.eq.s32.totalorder %v317, 1
    %vm320 = vmand %vm307, %vm318
    %vm321 = vmand %vm307, %vm319
    %v322 = vsel %vm320, 0.0, -1e+09
    %v323 = vsel %vm321, 0.0, -1e+09
    %v324 = vld [vmem:[%s5] sm:$0x1]
    %v325 = vld [vmem:[%s5 + $0x1] sm:$0x1]
    %vm326 = vcmp.gt.f32.partialorder %v324, 0.0
    %vm327 = vcmp.gt.f32.partialorder %v325, 0.0
    %v328 = vsel %vm326, 0.0, -1e+09
    %v329 = vsel %vm327, 0.0, -1e+09
    %v330 = vld [vmem:[%s49] sm:$0x1]
    %v331 = vld [vmem:[%s51] sm:$0x1]
    %vm332 = vcmask 261120
    %v333 = vsel %vm332, %v293, 0.0
    %334 = vadd.xlane.f32.xlu0 %v333
    %v335 = vpop.xlane.xlu0 %334
    %v336 = vsel %vm332, %v294, 0.0
    %337 = vadd.xlane.f32.xlu0 %v336
    %v338 = vpop.xlane.xlu0 %337
    %v339 = vrcp.pop 32.0
    %v340 = vmul.f32 %v335, %v339
    %v341 = vmul.f32 %v338, %v339
    %v342 = vsub.f32 %v293, %v340
    %v343 = vsub.f32 %v294, %v341
    %v344 = vmul.f32 %v342, %v342
    %v345 = vmul.f32 %v343, %v343
    %v346 = vsel %vm332, %v344, 0.0
    %347 = vadd.xlane.f32.xlu0 %v346
    %v348 = vpop.xlane.xlu0 %347
    %v349 = vsel %vm332, %v345, 0.0
    %350 = vadd.xlane.f32.xlu0 %v349
    %v351 = vpop.xlane.xlu0 %350
    %v352 = vmul.f32 %v348, %v339
    %v353 = vmul.f32 %v351, %v339
    %v355 = vlaneseq
    %v356 = vshrl.u32 %v355, 7
    %v357 = vsub.s32 0, %v356
    %v358 = vrot.slane %v330, %v357
    %v360 = vmul.f32 %v358, %v342
    %v361 = vmul.f32 %v358, %v343
    %v362 = vadd.f32 %v352, 1e-06
    %v363 = vadd.f32 %v353, 1e-06
    %v364 = vrsqrt.pop %v362
    %v365 = vrsqrt.pop %v363
    %v366 = vmul.f32 %v360, %v364
    %v367 = vmul.f32 %v361, %v365
    %v369 = vlaneseq
    %v370 = vshrl.u32 %v369, 7
    %v371 = vsub.s32 0, %v370
    %v372 = vrot.slane %v331, %v371
    %v374 = vadd.f32 %v366, %v372
    %v375 = vadd.f32 %v367, %v372
    %v376 = vld [vmem:[%s9] sm:$0xff]
    %v377 = vld [vmem:[%s9 + $0x8] sm:$0xff]
    %v378 = vld [vmem:[%s9 + $0x10] sm:$0xff]
    %v379 = vld [vmem:[%s9 + $0x18] sm:$0xff]
    %v380 = vld [vmem:[%s11] sm:$0x1]
    %v381 = vld [vmem:[%s13] sm:$0xff]
    %v382 = vld [vmem:[%s13 + $0x8] sm:$0xff]
    %v383 = vld [vmem:[%s13 + $0x10] sm:$0xff]
    %v384 = vld [vmem:[%s13 + $0x18] sm:$0xff]
    %v385 = vld [vmem:[%s15] sm:$0x1]
    %v386 = vld [vmem:[%s17] sm:$0xff]
    %v387 = vld [vmem:[%s17 + $0x8] sm:$0xff]
    %v388 = vld [vmem:[%s17 + $0x10] sm:$0xff]
    %v389 = vld [vmem:[%s17 + $0x18] sm:$0xff]
    %v390 = vld [vmem:[%s19] sm:$0x1]
    %v391 = vld [vmem:[#allocation7] sm:$0xff]
    %v392 = vld [vmem:[#allocation7 + $0x8] sm:$0xff]
    %v393 = vld [vmem:[#allocation7 + $0x10] sm:$0xff]
    %v394 = vld [vmem:[#allocation7 + $0x18] sm:$0xff]
    %v395 = vld [vmem:[%s23] sm:$0x1]
    %v397 = vlaneseq
    %v398 = vshrl.u32 %v397, 7
    %v399 = vsub.s32 0, %v398
    %v400 = vrot.slane %v380, %v399
    %v403 = vsel %vm332, %v374, 0
    %v406 = vsel %vm332, %v375, 0
    %408 = vmatprep.subr.mxu0 0.0
    %409 = vmatpush1.msra.mxu0 0.0
    %410 = vmatprep.subr.mxu0 0.0
    %411 = vmatpush1.msra.mxu0 0.0
    %412 = vmatprep.subr.mxu0 0.0
    %413 = vmatpush1.msra.mxu0 0.0
    %414 = vmatprep.subr.mxu0 0.0
    %415 = vmatpush1.msra.mxu0 0.0
    %416 = vmatprep.subr.mxu0 0.0
    %417 = vmatpush1.msra.mxu0 0.0
    %418 = vmatprep.subr.mxu0 0.0
    %419 = vmatpush1.msra.mxu0 0.0
    %420 = vmatprep.subr.mxu0 0.0
    %421 = vmatpush1.msra.mxu0 0.0
    %422 = vmatprep.subr.mxu0 0.0
    %423 = vmatpush1.msra.mxu0 0.0
    %424 = vmatprep.subr.mxu0 0.0
    %425 = vmatpush1.msra.mxu0 0.0
    %426 = vmatprep.subr.mxu0 0.0
    %427 = vmatpush1.msra.mxu0 0.0
    %428 = vmatprep.subr.mxu0 0.0
    %429 = vmatpush1.msra.mxu0 0.0
    %430 = vmatprep.subr.mxu0 0.0
    %431 = vmatpush1.msra.mxu0 0.0
    %432 = vmatprep.subr.mxu0 0.0
    %433 = vmatpush1.msra.mxu0 %v379
    %434 = vmatprep.subr.mxu0 0.0
    %435 = vmatpush1.msra.mxu0 %v378
    %436 = vmatprep.subr.mxu0 0.0
    %437 = vmatpush1.msra.mxu0 %v377
    %438 = vmatprep.subr.mxu0 0.0
    %439 = vmatpush1.msra.mxu0 %v376
    %440 = vmatprep.subr.mxu0 0.0
    %441 = vmatpush2.msra.mxu0 0.0
    %442 = vmatprep.subr.mxu0 0.0
    %443 = vmatpush2.msra.mxu0 0.0
    %444 = vmatprep.subr.mxu0 0.0
    %445 = vmatpush2.msra.mxu0 0.0
    %446 = vmatprep.subr.mxu0 0.0
    %447 = vmatpush2.msra.mxu0 0.0
    %448 = vmatprep.subr.mxu0 0.0
    %449 = vmatpush2.msra.mxu0 0.0
    %450 = vmatprep.subr.mxu0 0.0
    %451 = vmatpush2.msra.mxu0 0.0
    %452 = vmatprep.subr.mxu0 0.0
    %453 = vmatpush2.msra.mxu0 0.0
    %454 = vmatprep.subr.mxu0 0.0
    %455 = vmatpush2.msra.mxu0 0.0
    %456 = vmatprep.subr.mxu0 0.0
    %457 = vmatpush2.msra.mxu0 0.0
    %458 = vmatprep.subr.mxu0 0.0
    %459 = vmatpush2.msra.mxu0 0.0
    %460 = vmatprep.subr.mxu0 0.0
    %461 = vmatpush2.msra.mxu0 0.0
    %462 = vmatprep.subr.mxu0 0.0
    %463 = vmatpush2.msra.mxu0 0.0
    %464 = vmatprep.subr.mxu0 0.0
    %465 = vmatpush2.msra.mxu0 0.0
    %466 = vmatprep.subr.mxu0 0.0
    %467 = vmatpush2.msra.mxu0 0.0
    %468 = vmatprep.subr.mxu0 0.0
    %469 = vmatpush2.msra.mxu0 0.0
    %470 = vmatprep.subr.mxu0 0.0
    %471 = vmatpush2.msra.mxu0 0.0
    %472 = vmatprep.mubr.f32.mxu0 0.0
    %473 = vmatmul.mubr.f32.gmra.mxu0 %v403
    %v474 = vpop.f32.mrf.mxu0
    %v475 = vadd.f32 %v400, %v474
    %v476 = vpop.f32.mrf.mxu0
    %477 = vmatprep.mubr.f32.mxu0 0.0
    %478 = vmatmul.mubr.f32.gmra.mxu0 %v406
    %v479 = vpop.f32.mrf.mxu0
    %v480 = vadd.f32 %v400, %v479
    %v481 = vpop.f32.mrf.mxu0
    %482 = vdwg.mxu0
    %v483 = vmul.f32 %v475, 0.35355338
    %v484 = vmul.f32 %v480, 0.35355338
    %v486 = vlaneseq
    %v487 = vshrl.u32 %v486, 7
    %v488 = vsub.s32 0, %v487
    %v489 = vrot.slane %v385, %v488
    %491 = vmatprep.subr.mxu0 0.0
    %492 = vmatpush1.msra.mxu0 0.0
    %493 = vmatprep.subr.mxu0 0.0
    %494 = vmatpush1.msra.mxu0 0.0
    %495 = vmatprep.subr.mxu0 0.0
    %496 = vmatpush1.msra.mxu0 0.0
    %497 = vmatprep.subr.mxu0 0.0
    %498 = vmatpush1.msra.mxu0 0.0
    %499 = vmatprep.subr.mxu0 0.0
    %500 = vmatpush1.msra.mxu0 0.0
    %501 = vmatprep.subr.mxu0 0.0
    %502 = vmatpush1.msra.mxu0 0.0
    %503 = vmatprep.subr.mxu0 0.0
    %504 = vmatpush1.msra.mxu0 0.0
    %505 = vmatprep.subr.mxu0 0.0
    %506 = vmatpush1.msra.mxu0 0.0
    %507 = vmatprep.subr.mxu0 0.0
    %508 = vmatpush1.msra.mxu0 0.0
    %509 = vmatprep.subr.mxu0 0.0
    %510 = vmatpush1.msra.mxu0 0.0
    %511 = vmatprep.subr.mxu0 0.0
    %512 = vmatpush1.msra.mxu0 0.0
    %513 = vmatprep.subr.mxu0 0.0
    %514 = vmatpush1.msra.mxu0 0.0
    %515 = vmatprep.subr.mxu0 0.0
    %516 = vmatpush1.msra.mxu0 %v384
    %517 = vmatprep.subr.mxu0 0.0
    %518 = vmatpush1.msra.mxu0 %v383
    %519 = vmatprep.subr.mxu0 0.0
    %520 = vmatpush1.msra.mxu0 %v382
    %521 = vmatprep.subr.mxu0 0.0
    %522 = vmatpush1.msra.mxu0 %v381
    %523 = vmatprep.subr.mxu0 0.0
    %524 = vmatpush2.msra.mxu0 0.0
    %525 = vmatprep.subr.mxu0 0.0
    %526 = vmatpush2.msra.mxu0 0.0
    %527 = vmatprep.subr.mxu0 0.0
    %528 = vmatpush2.msra.mxu0 0.0
    %529 = vmatprep.subr.mxu0 0.0
    %530 = vmatpush2.msra.mxu0 0.0
    %531 = vmatprep.subr.mxu0 0.0
    %532 = vmatpush2.msra.mxu0 0.0
    %533 = vmatprep.subr.mxu0 0.0
    %534 = vmatpush2.msra.mxu0 0.0
    %535 = vmatprep.subr.mxu0 0.0
    %536 = vmatpush2.msra.mxu0 0.0
    %537 = vmatprep.subr.mxu0 0.0
    %538 = vmatpush2.msra.mxu0 0.0
    %539 = vmatprep.subr.mxu0 0.0
    %540 = vmatpush2.msra.mxu0 0.0
    %541 = vmatprep.subr.mxu0 0.0
    %542 = vmatpush2.msra.mxu0 0.0
    %543 = vmatprep.subr.mxu0 0.0
    %544 = vmatpush2.msra.mxu0 0.0
    %545 = vmatprep.subr.mxu0 0.0
    %546 = vmatpush2.msra.mxu0 0.0
    %547 = vmatprep.subr.mxu0 0.0
    %548 = vmatpush2.msra.mxu0 0.0
    %549 = vmatprep.subr.mxu0 0.0
    %550 = vmatpush2.msra.mxu0 0.0
    %551 = vmatprep.subr.mxu0 0.0
    %552 = vmatpush2.msra.mxu0 0.0
    %553 = vmatprep.subr.mxu0 0.0
    %554 = vmatpush2.msra.mxu0 0.0
    %555 = vmatprep.mubr.f32.mxu0 0.0
    %556 = vmatmul.mubr.f32.gmra.mxu0 %v403
    %v557 = vpop.f32.mrf.mxu0
    %v558 = vadd.f32 %v489, %v557
    %v559 = vpop.f32.mrf.mxu0
    %560 = vmatprep.mubr.f32.mxu0 0.0
    %561 = vmatmul.mubr.f32.gmra.mxu0 %v406
    %v562 = vpop.f32.mrf.mxu0
    %v563 = vadd.f32 %v489, %v562
    %v564 = vpop.f32.mrf.mxu0
    %565 = vdwg.mxu0
    %v567 = vlaneseq
    %v568 = vshrl.u32 %v567, 7
    %v569 = vsub.s32 0, %v568
    %v570 = vrot.slane %v390, %v569
    %572 = vmatprep.subr.mxu0 0.0
    %573 = vmatpush1.msra.mxu0 0.0
    %574 = vmatprep.subr.mxu0 0.0
    %575 = vmatpush1.msra.mxu0 0.0
    %576 = vmatprep.subr.mxu0 0.0
    %577 = vmatpush1.msra.mxu0 0.0
    %578 = vmatprep.subr.mxu0 0.0
    %579 = vmatpush1.msra.mxu0 0.0
    %580 = vmatprep.subr.mxu0 0.0
    %581 = vmatpush1.msra.mxu0 0.0
    %582 = vmatprep.subr.mxu0 0.0
    %583 = vmatpush1.msra.mxu0 0.0
    %584 = vmatprep.subr.mxu0 0.0
    %585 = vmatpush1.msra.mxu0 0.0
    %586 = vmatprep.subr.mxu0 0.0
    %587 = vmatpush1.msra.mxu0 0.0
    %588 = vmatprep.subr.mxu0 0.0
    %589 = vmatpush1.msra.mxu0 0.0
    %590 = vmatprep.subr.mxu0 0.0
    %591 = vmatpush1.msra.mxu0 0.0
    %592 = vmatprep.subr.mxu0 0.0
    %593 = vmatpush1.msra.mxu0 0.0
    %594 = vmatprep.subr.mxu0 0.0
    %595 = vmatpush1.msra.mxu0 0.0
    %596 = vmatprep.subr.mxu0 0.0
    %597 = vmatpush1.msra.mxu0 %v389
    %598 = vmatprep.subr.mxu0 0.0
    %599 = vmatpush1.msra.mxu0 %v388
    %600 = vmatprep.subr.mxu0 0.0
    %601 = vmatpush1.msra.mxu0 %v387
    %602 = vmatprep.subr.mxu0 0.0
    %603 = vmatpush1.msra.mxu0 %v386
    %604 = vmatprep.subr.mxu0 0.0
    %605 = vmatpush2.msra.mxu0 0.0
    %606 = vmatprep.subr.mxu0 0.0
    %607 = vmatpush2.msra.mxu0 0.0
    %608 = vmatprep.subr.mxu0 0.0
    %609 = vmatpush2.msra.mxu0 0.0
    %610 = vmatprep.subr.mxu0 0.0
    %611 = vmatpush2.msra.mxu0 0.0
    %612 = vmatprep.subr.mxu0 0.0
    %613 = vmatpush2.msra.mxu0 0.0
    %614 = vmatprep.subr.mxu0 0.0
    %615 = vmatpush2.msra.mxu0 0.0
    %616 = vmatprep.subr.mxu0 0.0
    %617 = vmatpush2.msra.mxu0 0.0
    %618 = vmatprep.subr.mxu0 0.0
    %619 = vmatpush2.msra.mxu0 0.0
    %620 = vmatprep.subr.mxu0 0.0
    %621 = vmatpush2.msra.mxu0 0.0
    %622 = vmatprep.subr.mxu0 0.0
    %623 = vmatpush2.msra.mxu0 0.0
    %624 = vmatprep.subr.mxu0 0.0
    %625 = vmatpush2.msra.mxu0 0.0
    %626 = vmatprep.subr.mxu0 0.0
    %627 = vmatpush2.msra.mxu0 0.0
    %628 = vmatprep.subr.mxu0 0.0
    %629 = vmatpush2.msra.mxu0 0.0
    %630 = vmatprep.subr.mxu0 0.0
    %631 = vmatpush2.msra.mxu0 0.0
    %632 = vmatprep.subr.mxu0 0.0
    %633 = vmatpush2.msra.mxu0 0.0
    %634 = vmatprep.subr.mxu0 0.0
    %635 = vmatpush2.msra.mxu0 0.0
    %636 = vmatprep.mubr.f32.mxu0 0.0
    %637 = vmatmul.mubr.f32.gmra.mxu0 %v403
    %v638 = vpop.f32.mrf.mxu0
    %v639 = vadd.f32 %v570, %v638
    %v640 = vpop.f32.mrf.mxu0
    %641 = vmatprep.mubr.f32.mxu0 0.0
    %642 = vmatmul.mubr.f32.gmra.mxu0 %v406
    %v643 = vpop.f32.mrf.mxu0
    %v644 = vadd.f32 %v570, %v643
    %v645 = vpop.f32.mrf.mxu0
    %646 = vdwg.mxu0
    %649 = vrot.lane.b32.xlu0 %v483, 120
    %v650 = vpop.permute.xlu0 %649
    %651 = vrot.lane.b32.xlu0 %v484, 120
    %v652 = vpop.permute.xlu0 %651
    %655 = vrot.lane.b32.xlu0 %v483, 112
    %v656 = vpop.permute.xlu0 %655
    %657 = vrot.lane.b32.xlu0 %v484, 112
    %v658 = vpop.permute.xlu0 %657
    %661 = vrot.lane.b32.xlu0 %v483, 104
    %v662 = vpop.permute.xlu0 %661
    %663 = vrot.lane.b32.xlu0 %v484, 104
    %v664 = vpop.permute.xlu0 %663
    %v667 = vcombine.low %v483, %v656
    %v668 = vcombine.high %v483, %v656
    %v670 = vunpack.c.l.s4 1983009808
    %v671 = vunpack.c.0.s8 %v670
    %v672 = vlaneseq
    %v673 = vshrl.u32 %v672, 7
    %v674 = vsub.s32 %v671, %v673
    %v675 = vrot.slane %v667, %v674
    %v677 = vunpack.c.l.s4 1983009808
    %v678 = vunpack.c.0.s8 %v677
    %v679 = vlaneseq
    %v680 = vshrl.u32 %v679, 7
    %v681 = vsub.s32 %v678, %v680
    %v682 = vrot.slane %v668, %v681
    %v683 = vcombine.low %v650, %v662
    %v684 = vcombine.high %v650, %v662
    %v686 = vunpack.c.l.s4 1983009808
    %v687 = vunpack.c.0.s8 %v686
    %v688 = vlaneseq
    %v689 = vshrl.u32 %v688, 7
    %v690 = vsub.s32 %v687, %v689
    %v691 = vrot.slane %v683, %v690
    %v693 = vunpack.c.l.s4 1983009808
    %v694 = vunpack.c.0.s8 %v693
    %v695 = vlaneseq
    %v696 = vshrl.u32 %v695, 7
    %v697 = vsub.s32 %v694, %v696
    %v698 = vrot.slane %v684, %v697
    %v699 = vcombine.low %v675, %v691
    %v700 = vcombine.high %v675, %v691
    %v702 = vunpack.c.l.s4 1934713408
    %v703 = vunpack.c.0.s8 %v702
    %v704 = vlaneseq
    %v705 = vshrl.u32 %v704, 7
    %v706 = vsub.s32 %v703, %v705
    %v707 = vrot.slane %v699, %v706
    %v709 = vunpack.c.l.s4 1934713408
    %v710 = vunpack.c.0.s8 %v709
    %v711 = vlaneseq
    %v712 = vshrl.u32 %v711, 7
    %v713 = vsub.s32 %v710, %v712
    %v714 = vrot.slane %v700, %v713
    %v715 = vcombine.low %v682, %v698
    %v716 = vcombine.high %v682, %v698
    %v718 = vunpack.c.l.s4 1934713408
    %v719 = vunpack.c.0.s8 %v718
    %v720 = vlaneseq
    %v721 = vshrl.u32 %v720, 7
    %v722 = vsub.s32 %v719, %v721
    %v723 = vrot.slane %v715, %v722
    %v725 = vunpack.c.l.s4 1934713408
    %v726 = vunpack.c.0.s8 %v725
    %v727 = vlaneseq
    %v728 = vshrl.u32 %v727, 7
    %v729 = vsub.s32 %v726, %v728
    %v730 = vrot.slane %v716, %v729
    %v731 = vcombine.high %v707, 0.0
    %v732 = vcombine.high %v714, 0.0
    %v733 = vcombine.high %v723, 0.0
    %v734 = vcombine.high %v730, 0.0
    %v735 = vcombine.low %v484, %v658
    %v736 = vcombine.high %v484, %v658
    %v738 = vunpack.c.l.s4 1983009808
    %v739 = vunpack.c.0.s8 %v738
    %v740 = vlaneseq
    %v741 = vshrl.u32 %v740, 7
    %v742 = vsub.s32 %v739, %v741
    %v743 = vrot.slane %v735, %v742
    %v745 = vunpack.c.l.s4 1983009808
    %v746 = vunpack.c.0.s8 %v745
    %v747 = vlaneseq
    %v748 = vshrl.u32 %v747, 7
    %v749 = vsub.s32 %v746, %v748
    %v750 = vrot.slane %v736, %v749
    %v751 = vcombine.low %v652, %v664
    %v752 = vcombine.high %v652, %v664
    %v754 = vunpack.c.l.s4 1983009808
    %v755 = vunpack.c.0.s8 %v754
    %v756 = vlaneseq
    %v757 = vshrl.u32 %v756, 7
    %v758 = vsub.s32 %v755, %v757
    %v759 = vrot.slane %v751, %v758
    %v761 = vunpack.c.l.s4 1983009808
    %v762 = vunpack.c.0.s8 %v761
    %v763 = vlaneseq
    %v764 = vshrl.u32 %v763, 7
    %v765 = vsub.s32 %v762, %v764
    %v766 = vrot.slane %v752, %v765
    %v767 = vcombine.low %v743, %v759
    %v768 = vcombine.high %v743, %v759
    %v770 = vunpack.c.l.s4 1934713408
    %v771 = vunpack.c.0.s8 %v770
    %v772 = vlaneseq
    %v773 = vshrl.u32 %v772, 7
    %v774 = vsub.s32 %v771, %v773
    %v775 = vrot.slane %v767, %v774
    %v777 = vunpack.c.l.s4 1934713408
    %v778 = vunpack.c.0.s8 %v777
    %v779 = vlaneseq
    %v780 = vshrl.u32 %v779, 7
    %v781 = vsub.s32 %v778, %v780
    %v782 = vrot.slane %v768, %v781
    %v783 = vcombine.low %v750, %v766
    %v784 = vcombine.high %v750, %v766
    %v786 = vunpack.c.l.s4 1934713408
    %v787 = vunpack.c.0.s8 %v786
    %v788 = vlaneseq
    %v789 = vshrl.u32 %v788, 7
    %v790 = vsub.s32 %v787, %v789
    %v791 = vrot.slane %v783, %v790
    %v793 = vunpack.c.l.s4 1934713408
    %v794 = vunpack.c.0.s8 %v793
    %v795 = vlaneseq
    %v796 = vshrl.u32 %v795, 7
    %v797 = vsub.s32 %v794, %v796
    %v798 = vrot.slane %v784, %v797
    %v799 = vcombine.high %v775, 0.0
    %v800 = vcombine.high %v782, 0.0
    %v801 = vcombine.high %v791, 0.0
    %v802 = vcombine.high %v798, 0.0
    %v803 = vcombine.low %v707, %v714
    %v805 = vunpack.c.l.s4 1983009808
    %v806 = vunpack.c.0.s8 %v805
    %v807 = vlaneseq
    %v808 = vshrl.u32 %v807, 7
    %v809 = vsub.s32 %v806, %v808
    %v810 = vrot.slane %v803, %v809
    %v811 = vcombine.low %v731, %v732
    %v813 = vunpack.c.l.s4 1983009808
    %v814 = vunpack.c.0.s8 %v813
    %v815 = vlaneseq
    %v816 = vshrl.u32 %v815, 7
    %v817 = vsub.s32 %v814, %v816
    %v818 = vrot.slane %v811, %v817
    %v819 = vcombine.low %v723, %v730
    %v821 = vunpack.c.l.s4 1983009808
    %v822 = vunpack.c.0.s8 %v821
    %v823 = vlaneseq
    %v824 = vshrl.u32 %v823, 7
    %v825 = vsub.s32 %v822, %v824
    %v826 = vrot.slane %v819, %v825
    %v827 = vcombine.low %v733, %v734
    %v829 = vunpack.c.l.s4 1983009808
    %v830 = vunpack.c.0.s8 %v829
    %v831 = vlaneseq
    %v832 = vshrl.u32 %v831, 7
    %v833 = vsub.s32 %v830, %v832
    %v834 = vrot.slane %v827, %v833
    %v835 = vcombine.low %v810, %v818
    %v836 = vcombine.high %v810, %v818
    %v838 = vunpack.c.l.s4 1934713408
    %v839 = vunpack.c.0.s8 %v838
    %v840 = vlaneseq
    %v841 = vshrl.u32 %v840, 7
    %v842 = vsub.s32 %v839, %v841
    %v843 = vrot.slane %v835, %v842
    %v845 = vunpack.c.l.s4 1934713408
    %v846 = vunpack.c.0.s8 %v845
    %v847 = vlaneseq
    %v848 = vshrl.u32 %v847, 7
    %v849 = vsub.s32 %v846, %v848
    %v850 = vrot.slane %v836, %v849
    %v851 = vcombine.low %v826, %v834
    %v852 = vcombine.high %v826, %v834
    %v854 = vunpack.c.l.s4 1934713408
    %v855 = vunpack.c.0.s8 %v854
    %v856 = vlaneseq
    %v857 = vshrl.u32 %v856, 7
    %v858 = vsub.s32 %v855, %v857
    %v859 = vrot.slane %v851, %v858
    %v861 = vunpack.c.l.s4 1934713408
    %v862 = vunpack.c.0.s8 %v861
    %v863 = vlaneseq
    %v864 = vshrl.u32 %v863, 7
    %v865 = vsub.s32 %v862, %v864
    %v866 = vrot.slane %v852, %v865
    %v867 = vcombine.low %v843, %v859
    %v868 = vcombine.high %v843, %v859
    %v869 = vcombine.low %v850, %v866
    %v870 = vcombine.high %v850, %v866
    %v871 = vcombine.low %v775, %v782
    %v873 = vunpack.c.l.s4 1983009808
    %v874 = vunpack.c.0.s8 %v873
    %v875 = vlaneseq
    %v876 = vshrl.u32 %v875, 7
    %v877 = vsub.s32 %v874, %v876
    %v878 = vrot.slane %v871, %v877
    %v879 = vcombine.low %v799, %v800
    %v881 = vunpack.c.l.s4 1983009808
    %v882 = vunpack.c.0.s8 %v881
    %v883 = vlaneseq
    %v884 = vshrl.u32 %v883, 7
    %v885 = vsub.s32 %v882, %v884
    %v886 = vrot.slane %v879, %v885
    %v887 = vcombine.low %v791, %v798
    %v889 = vunpack.c.l.s4 1983009808
    %v890 = vunpack.c.0.s8 %v889
    %v891 = vlaneseq
    %v892 = vshrl.u32 %v891, 7
    %v893 = vsub.s32 %v890, %v892
    %v894 = vrot.slane %v887, %v893
    %v895 = vcombine.low %v801, %v802
    %v897 = vunpack.c.l.s4 1983009808
    %v898 = vunpack.c.0.s8 %v897
    %v899 = vlaneseq
    %v900 = vshrl.u32 %v899, 7
    %v901 = vsub.s32 %v898, %v900
    %v902 = vrot.slane %v895, %v901
    %v903 = vcombine.low %v878, %v886
    %v904 = vcombine.high %v878, %v886
    %v906 = vunpack.c.l.s4 1934713408
    %v907 = vunpack.c.0.s8 %v906
    %v908 = vlaneseq
    %v909 = vshrl.u32 %v908, 7
    %v910 = vsub.s32 %v907, %v909
    %v911 = vrot.slane %v903, %v910
    %v913 = vunpack.c.l.s4 1934713408
    %v914 = vunpack.c.0.s8 %v913
    %v915 = vlaneseq
    %v916 = vshrl.u32 %v915, 7
    %v917 = vsub.s32 %v914, %v916
    %v918 = vrot.slane %v904, %v917
    %v919 = vcombine.low %v894, %v902
    %v920 = vcombine.high %v894, %v902
    %v922 = vunpack.c.l.s4 1934713408
    %v923 = vunpack.c.0.s8 %v922
    %v924 = vlaneseq
    %v925 = vshrl.u32 %v924, 7
    %v926 = vsub.s32 %v923, %v925
    %v927 = vrot.slane %v919, %v926
    %v929 = vunpack.c.l.s4 1934713408
    %v930 = vunpack.c.0.s8 %v929
    %v931 = vlaneseq
    %v932 = vshrl.u32 %v931, 7
    %v933 = vsub.s32 %v930, %v932
    %v934 = vrot.slane %v920, %v933
    %v935 = vcombine.low %v911, %v927
    %v936 = vcombine.high %v911, %v927
    %v937 = vcombine.low %v918, %v934
    %v938 = vcombine.high %v918, %v934
    %941 = vrot.lane.b32.xlu0 %v558, 120
    %v942 = vpop.permute.xlu0 %941
    %943 = vrot.lane.b32.xlu0 %v563, 120
    %v944 = vpop.permute.xlu0 %943
    %947 = vrot.lane.b32.xlu0 %v558, 112
    %v948 = vpop.permute.xlu0 %947
    %949 = vrot.lane.b32.xlu0 %v563, 112
    %v950 = vpop.permute.xlu0 %949
    %953 = vrot.lane.b32.xlu0 %v558, 104
    %v954 = vpop.permute.xlu0 %953
    %955 = vrot.lane.b32.xlu0 %v563, 104
    %v956 = vpop.permute.xlu0 %955
    %v959 = vcombine.low %v558, %v948
    %v960 = vcombine.high %v558, %v948
    %v962 = vunpack.c.l.s4 1983009808
    %v963 = vunpack.c.0.s8 %v962
    %v964 = vlaneseq
    %v965 = vshrl.u32 %v964, 7
    %v966 = vsub.s32 %v963, %v965
    %v967 = vrot.slane %v959, %v966
    %v969 = vunpack.c.l.s4 1983009808
    %v970 = vunpack.c.0.s8 %v969
    %v971 = vlaneseq
    %v972 = vshrl.u32 %v971, 7
    %v973 = vsub.s32 %v970, %v972
    %v974 = vrot.slane %v960, %v973
    %v975 = vcombine.low %v942, %v954
    %v976 = vcombine.high %v942, %v954
    %v978 = vunpack.c.l.s4 1983009808
    %v979 = vunpack.c.0.s8 %v978
    %v980 = vlaneseq
    %v981 = vshrl.u32 %v980, 7
    %v982 = vsub.s32 %v979, %v981
    %v983 = vrot.slane %v975, %v982
    %v985 = vunpack.c.l.s4 1983009808
    %v986 = vunpack.c.0.s8 %v985
    %v987 = vlaneseq
    %v988 = vshrl.u32 %v987, 7
    %v989 = vsub.s32 %v986, %v988
    %v990 = vrot.slane %v976, %v989
    %v991 = vcombine.low %v967, %v983
    %v992 = vcombine.high %v967, %v983
    %v994 = vunpack.c.l.s4 1934713408
    %v995 = vunpack.c.0.s8 %v994
    %v996 = vlaneseq
    %v997 = vshrl.u32 %v996, 7
    %v998 = vsub.s32 %v995, %v997
    %v999 = vrot.slane %v991, %v998
    %v1001 = vunpack.c.l.s4 1934713408
    %v1002 = vunpack.c.0.s8 %v1001
    %v1003 = vlaneseq
    %v1004 = vshrl.u32 %v1003, 7
    %v1005 = vsub.s32 %v1002, %v1004
    %v1006 = vrot.slane %v992, %v1005
    %v1007 = vcombine.low %v974, %v990
    %v1008 = vcombine.high %v974, %v990
    %v1010 = vunpack.c.l.s4 1934713408
    %v1011 = vunpack.c.0.s8 %v1010
    %v1012 = vlaneseq
    %v1013 = vshrl.u32 %v1012, 7
    %v1014 = vsub.s32 %v1011, %v1013
    %v1015 = vrot.slane %v1007, %v1014
    %v1017 = vunpack.c.l.s4 1934713408
    %v1018 = vunpack.c.0.s8 %v1017
    %v1019 = vlaneseq
    %v1020 = vshrl.u32 %v1019, 7
    %v1021 = vsub.s32 %v1018, %v1020
    %v1022 = vrot.slane %v1008, %v1021
    %v1023 = vcombine.high %v999, 0.0
    %v1024 = vcombine.high %v1006, 0.0
    %v1025 = vcombine.high %v1015, 0.0
    %v1026 = vcombine.high %v1022, 0.0
    %v1027 = vcombine.low %v563, %v950
    %v1028 = vcombine.high %v563, %v950
    %v1030 = vunpack.c.l.s4 1983009808
    %v1031 = vunpack.c.0.s8 %v1030
    %v1032 = vlaneseq
    %v1033 = vshrl.u32 %v1032, 7
    %v1034 = vsub.s32 %v1031, %v1033
    %v1035 = vrot.slane %v1027, %v1034
    %v1037 = vunpack.c.l.s4 1983009808
    %v1038 = vunpack.c.0.s8 %v1037
    %v1039 = vlaneseq
    %v1040 = vshrl.u32 %v1039, 7
    %v1041 = vsub.s32 %v1038, %v1040
    %v1042 = vrot.slane %v1028, %v1041
    %v1043 = vcombine.low %v944, %v956
    %v1044 = vcombine.high %v944, %v956
    %v1046 = vunpack.c.l.s4 1983009808
    %v1047 = vunpack.c.0.s8 %v1046
    %v1048 = vlaneseq
    %v1049 = vshrl.u32 %v1048, 7
    %v1050 = vsub.s32 %v1047, %v1049
    %v1051 = vrot.slane %v1043, %v1050
    %v1053 = vunpack.c.l.s4 1983009808
    %v1054 = vunpack.c.0.s8 %v1053
    %v1055 = vlaneseq
    %v1056 = vshrl.u32 %v1055, 7
    %v1057 = vsub.s32 %v1054, %v1056
    %v1058 = vrot.slane %v1044, %v1057
    %v1059 = vcombine.low %v1035, %v1051
    %v1060 = vcombine.high %v1035, %v1051
    %v1062 = vunpack.c.l.s4 1934713408
    %v1063 = vunpack.c.0.s8 %v1062
    %v1064 = vlaneseq
    %v1065 = vshrl.u32 %v1064, 7
    %v1066 = vsub.s32 %v1063, %v1065
    %v1067 = vrot.slane %v1059, %v1066
    %v1069 = vunpack.c.l.s4 1934713408
    %v1070 = vunpack.c.0.s8 %v1069
    %v1071 = vlaneseq
    %v1072 = vshrl.u32 %v1071, 7
    %v1073 = vsub.s32 %v1070, %v1072
    %v1074 = vrot.slane %v1060, %v1073
    %v1075 = vcombine.low %v1042, %v1058
    %v1076 = vcombine.high %v1042, %v1058
    %v1078 = vunpack.c.l.s4 1934713408
    %v1079 = vunpack.c.0.s8 %v1078
    %v1080 = vlaneseq
    %v1081 = vshrl.u32 %v1080, 7
    %v1082 = vsub.s32 %v1079, %v1081
    %v1083 = vrot.slane %v1075, %v1082
    %v1085 = vunpack.c.l.s4 1934713408
    %v1086 = vunpack.c.0.s8 %v1085
    %v1087 = vlaneseq
    %v1088 = vshrl.u32 %v1087, 7
    %v1089 = vsub.s32 %v1086, %v1088
    %v1090 = vrot.slane %v1076, %v1089
    %v1091 = vcombine.high %v1067, 0.0
    %v1092 = vcombine.high %v1074, 0.0
    %v1093 = vcombine.high %v1083, 0.0
    %v1094 = vcombine.high %v1090, 0.0
    %v1095 = vcombine.low %v999, %v1006
    %v1097 = vunpack.c.l.s4 1983009808
    %v1098 = vunpack.c.0.s8 %v1097
    %v1099 = vlaneseq
    %v1100 = vshrl.u32 %v1099, 7
    %v1101 = vsub.s32 %v1098, %v1100
    %v1102 = vrot.slane %v1095, %v1101
    %v1103 = vcombine.low %v1023, %v1024
    %v1105 = vunpack.c.l.s4 1983009808
    %v1106 = vunpack.c.0.s8 %v1105
    %v1107 = vlaneseq
    %v1108 = vshrl.u32 %v1107, 7
    %v1109 = vsub.s32 %v1106, %v1108
    %v1110 = vrot.slane %v1103, %v1109
    %v1111 = vcombine.low %v1015, %v1022
    %v1113 = vunpack.c.l.s4 1983009808
    %v1114 = vunpack.c.0.s8 %v1113
    %v1115 = vlaneseq
    %v1116 = vshrl.u32 %v1115, 7
    %v1117 = vsub.s32 %v1114, %v1116
    %v1118 = vrot.slane %v1111, %v1117
    %v1119 = vcombine.low %v1025, %v1026
    %v1121 = vunpack.c.l.s4 1983009808
    %v1122 = vunpack.c.0.s8 %v1121
    %v1123 = vlaneseq
    %v1124 = vshrl.u32 %v1123, 7
    %v1125 = vsub.s32 %v1122, %v1124
    %v1126 = vrot.slane %v1119, %v1125
    %v1127 = vcombine.low %v1102, %v1110
    %v1128 = vcombine.high %v1102, %v1110
    %v1130 = vunpack.c.l.s4 1934713408
    %v1131 = vunpack.c.0.s8 %v1130
    %v1132 = vlaneseq
    %v1133 = vshrl.u32 %v1132, 7
    %v1134 = vsub.s32 %v1131, %v1133
    %v1135 = vrot.slane %v1127, %v1134
    %v1137 = vunpack.c.l.s4 1934713408
    %v1138 = vunpack.c.0.s8 %v1137
    %v1139 = vlaneseq
    %v1140 = vshrl.u32 %v1139, 7
    %v1141 = vsub.s32 %v1138, %v1140
    %v1142 = vrot.slane %v1128, %v1141
    %v1143 = vcombine.low %v1118, %v1126
    %v1144 = vcombine.high %v1118, %v1126
    %v1146 = vunpack.c.l.s4 1934713408
    %v1147 = vunpack.c.0.s8 %v1146
    %v1148 = vlaneseq
    %v1149 = vshrl.u32 %v1148, 7
    %v1150 = vsub.s32 %v1147, %v1149
    %v1151 = vrot.slane %v1143, %v1150
    %v1153 = vunpack.c.l.s4 1934713408
    %v1154 = vunpack.c.0.s8 %v1153
    %v1155 = vlaneseq
    %v1156 = vshrl.u32 %v1155, 7
    %v1157 = vsub.s32 %v1154, %v1156
    %v1158 = vrot.slane %v1144, %v1157
    %v1159 = vcombine.low %v1135, %v1151
    %v1160 = vcombine.high %v1135, %v1151
    %v1161 = vcombine.low %v1142, %v1158
    %v1162 = vcombine.high %v1142, %v1158
    %v1163 = vcombine.low %v1067, %v1074
    %v1165 = vunpack.c.l.s4 1983009808
    %v1166 = vunpack.c.0.s8 %v1165
    %v1167 = vlaneseq
    %v1168 = vshrl.u32 %v1167, 7
    %v1169 = vsub.s32 %v1166, %v1168
    %v1170 = vrot.slane %v1163, %v1169
    %v1171 = vcombine.low %v1091, %v1092
    %v1173 = vunpack.c.l.s4 1983009808
    %v1174 = vunpack.c.0.s8 %v1173
    %v1175 = vlaneseq
    %v1176 = vshrl.u32 %v1175, 7
    %v1177 = vsub.s32 %v1174, %v1176
    %v1178 = vrot.slane %v1171, %v1177
    %v1179 = vcombine.low %v1083, %v1090
    %v1181 = vunpack.c.l.s4 1983009808
    %v1182 = vunpack.c.0.s8 %v1181
    %v1183 = vlaneseq
    %v1184 = vshrl.u32 %v1183, 7
    %v1185 = vsub.s32 %v1182, %v1184
    %v1186 = vrot.slane %v1179, %v1185
    %v1187 = vcombine.low %v1093, %v1094
    %v1189 = vunpack.c.l.s4 1983009808
    %v1190 = vunpack.c.0.s8 %v1189
    %v1191 = vlaneseq
    %v1192 = vshrl.u32 %v1191, 7
    %v1193 = vsub.s32 %v1190, %v1192
    %v1194 = vrot.slane %v1187, %v1193
    %v1195 = vcombine.low %v1170, %v1178
    %v1196 = vcombine.high %v1170, %v1178
    %v1198 = vunpack.c.l.s4 1934713408
    %v1199 = vunpack.c.0.s8 %v1198
    %v1200 = vlaneseq
    %v1201 = vshrl.u32 %v1200, 7
    %v1202 = vsub.s32 %v1199, %v1201
    %v1203 = vrot.slane %v1195, %v1202
    %v1205 = vunpack.c.l.s4 1934713408
    %v1206 = vunpack.c.0.s8 %v1205
    %v1207 = vlaneseq
    %v1208 = vshrl.u32 %v1207, 7
    %v1209 = vsub.s32 %v1206, %v1208
    %v1210 = vrot.slane %v1196, %v1209
    %v1211 = vcombine.low %v1186, %v1194
    %v1212 = vcombine.high %v1186, %v1194
    %v1214 = vunpack.c.l.s4 1934713408
    %v1215 = vunpack.c.0.s8 %v1214
    %v1216 = vlaneseq
    %v1217 = vshrl.u32 %v1216, 7
    %v1218 = vsub.s32 %v1215, %v1217
    %v1219 = vrot.slane %v1211, %v1218
    %v1221 = vunpack.c.l.s4 1934713408
    %v1222 = vunpack.c.0.s8 %v1221
    %v1223 = vlaneseq
    %v1224 = vshrl.u32 %v1223, 7
    %v1225 = vsub.s32 %v1222, %v1224
    %v1226 = vrot.slane %v1212, %v1225
    %v1227 = vcombine.low %v1203, %v1219
    %v1228 = vcombine.high %v1203, %v1219
    %v1229 = vcombine.low %v1210, %v1226
    %v1230 = vcombine.high %v1210, %v1226
    %1233 = vrot.lane.b32.xlu0 %v639, 120
    %v1234 = vpop.permute.xlu0 %1233
    %1235 = vrot.lane.b32.xlu0 %v644, 120
    %v1236 = vpop.permute.xlu0 %1235
    %1239 = vrot.lane.b32.xlu0 %v639, 112
    %v1240 = vpop.permute.xlu0 %1239
    %1241 = vrot.lane.b32.xlu0 %v644, 112
    %v1242 = vpop.permute.xlu0 %1241
    %1245 = vrot.lane.b32.xlu0 %v639, 104
    %v1246 = vpop.permute.xlu0 %1245
    %1247 = vrot.lane.b32.xlu0 %v644, 104
    %v1248 = vpop.permute.xlu0 %1247
    %v1251 = vcombine.low %v639, %v1240
    %v1252 = vcombine.high %v639, %v1240
    %v1254 = vunpack.c.l.s4 1983009808
    %v1255 = vunpack.c.0.s8 %v1254
    %v1256 = vlaneseq
    %v1257 = vshrl.u32 %v1256, 7
    %v1258 = vsub.s32 %v1255, %v1257
    %v1259 = vrot.slane %v1251, %v1258
    %v1261 = vunpack.c.l.s4 1983009808
    %v1262 = vunpack.c.0.s8 %v1261
    %v1263 = vlaneseq
    %v1264 = vshrl.u32 %v1263, 7
    %v1265 = vsub.s32 %v1262, %v1264
    %v1266 = vrot.slane %v1252, %v1265
    %v1267 = vcombine.low %v1234, %v1246
    %v1268 = vcombine.high %v1234, %v1246
    %v1270 = vunpack.c.l.s4 1983009808
    %v1271 = vunpack.c.0.s8 %v1270
    %v1272 = vlaneseq
    %v1273 = vshrl.u32 %v1272, 7
    %v1274 = vsub.s32 %v1271, %v1273
    %v1275 = vrot.slane %v1267, %v1274
    %v1277 = vunpack.c.l.s4 1983009808
    %v1278 = vunpack.c.0.s8 %v1277
    %v1279 = vlaneseq
    %v1280 = vshrl.u32 %v1279, 7
    %v1281 = vsub.s32 %v1278, %v1280
    %v1282 = vrot.slane %v1268, %v1281
    %v1283 = vcombine.low %v1259, %v1275
    %v1284 = vcombine.high %v1259, %v1275
    %v1286 = vunpack.c.l.s4 1934713408
    %v1287 = vunpack.c.0.s8 %v1286
    %v1288 = vlaneseq
    %v1289 = vshrl.u32 %v1288, 7
    %v1290 = vsub.s32 %v1287, %v1289
    %v1291 = vrot.slane %v1283, %v1290
    %v1293 = vunpack.c.l.s4 1934713408
    %v1294 = vunpack.c.0.s8 %v1293
    %v1295 = vlaneseq
    %v1296 = vshrl.u32 %v1295, 7
    %v1297 = vsub.s32 %v1294, %v1296
    %v1298 = vrot.slane %v1284, %v1297
    %v1299 = vcombine.low %v1266, %v1282
    %v1300 = vcombine.high %v1266, %v1282
    %v1302 = vunpack.c.l.s4 1934713408
    %v1303 = vunpack.c.0.s8 %v1302
    %v1304 = vlaneseq
    %v1305 = vshrl.u32 %v1304, 7
    %v1306 = vsub.s32 %v1303, %v1305
    %v1307 = vrot.slane %v1299, %v1306
    %v1309 = vunpack.c.l.s4 1934713408
    %v1310 = vunpack.c.0.s8 %v1309
    %v1311 = vlaneseq
    %v1312 = vshrl.u32 %v1311, 7
    %v1313 = vsub.s32 %v1310, %v1312
    %v1314 = vrot.slane %v1300, %v1313
    %v1315 = vcombine.high %v1291, 0.0
    %v1316 = vcombine.high %v1298, 0.0
    %v1317 = vcombine.high %v1307, 0.0
    %v1318 = vcombine.high %v1314, 0.0
    %v1319 = vcombine.low %v644, %v1242
    %v1320 = vcombine.high %v644, %v1242
    %v1322 = vunpack.c.l.s4 1983009808
    %v1323 = vunpack.c.0.s8 %v1322
    %v1324 = vlaneseq
    %v1325 = vshrl.u32 %v1324, 7
    %v1326 = vsub.s32 %v1323, %v1325
    %v1327 = vrot.slane %v1319, %v1326
    %v1329 = vunpack.c.l.s4 1983009808
    %v1330 = vunpack.c.0.s8 %v1329
    %v1331 = vlaneseq
    %v1332 = vshrl.u32 %v1331, 7
    %v1333 = vsub.s32 %v1330, %v1332
    %v1334 = vrot.slane %v1320, %v1333
    %v1335 = vcombine.low %v1236, %v1248
    %v1336 = vcombine.high %v1236, %v1248
    %v1338 = vunpack.c.l.s4 1983009808
    %v1339 = vunpack.c.0.s8 %v1338
    %v1340 = vlaneseq
    %v1341 = vshrl.u32 %v1340, 7
    %v1342 = vsub.s32 %v1339, %v1341
    %v1343 = vrot.slane %v1335, %v1342
    %v1345 = vunpack.c.l.s4 1983009808
    %v1346 = vunpack.c.0.s8 %v1345
    %v1347 = vlaneseq
    %v1348 = vshrl.u32 %v1347, 7
    %v1349 = vsub.s32 %v1346, %v1348
    %v1350 = vrot.slane %v1336, %v1349
    %v1351 = vcombine.low %v1327, %v1343
    %v1352 = vcombine.high %v1327, %v1343
    %v1354 = vunpack.c.l.s4 1934713408
    %v1355 = vunpack.c.0.s8 %v1354
    %v1356 = vlaneseq
    %v1357 = vshrl.u32 %v1356, 7
    %v1358 = vsub.s32 %v1355, %v1357
    %v1359 = vrot.slane %v1351, %v1358
    %v1361 = vunpack.c.l.s4 1934713408
    %v1362 = vunpack.c.0.s8 %v1361
    %v1363 = vlaneseq
    %v1364 = vshrl.u32 %v1363, 7
    %v1365 = vsub.s32 %v1362, %v1364
    %v1366 = vrot.slane %v1352, %v1365
    %v1367 = vcombine.low %v1334, %v1350
    %v1368 = vcombine.high %v1334, %v1350
    %v1370 = vunpack.c.l.s4 1934713408
    %v1371 = vunpack.c.0.s8 %v1370
    %v1372 = vlaneseq
    %v1373 = vshrl.u32 %v1372, 7
    %v1374 = vsub.s32 %v1371, %v1373
    %v1375 = vrot.slane %v1367, %v1374
    %v1377 = vunpack.c.l.s4 1934713408
    %v1378 = vunpack.c.0.s8 %v1377
    %v1379 = vlaneseq
    %v1380 = vshrl.u32 %v1379, 7
    %v1381 = vsub.s32 %v1378, %v1380
    %v1382 = vrot.slane %v1368, %v1381
    %v1383 = vcombine.high %v1359, 0.0
    %v1384 = vcombine.high %v1366, 0.0
    %v1385 = vcombine.high %v1375, 0.0
    %v1386 = vcombine.high %v1382, 0.0
    %v1387 = vcombine.low %v1291, %v1298
    %v1389 = vunpack.c.l.s4 1983009808
    %v1390 = vunpack.c.0.s8 %v1389
    %v1391 = vlaneseq
    %v1392 = vshrl.u32 %v1391, 7
    %v1393 = vsub.s32 %v1390, %v1392
    %v1394 = vrot.slane %v1387, %v1393
    %v1395 = vcombine.low %v1315, %v1316
    %v1397 = vunpack.c.l.s4 1983009808
    %v1398 = vunpack.c.0.s8 %v1397
    %v1399 = vlaneseq
    %v1400 = vshrl.u32 %v1399, 7
    %v1401 = vsub.s32 %v1398, %v1400
    %v1402 = vrot.slane %v1395, %v1401
    %v1403 = vcombine.low %v1307, %v1314
    %v1405 = vunpack.c.l.s4 1983009808
    %v1406 = vunpack.c.0.s8 %v1405
    %v1407 = vlaneseq
    %v1408 = vshrl.u32 %v1407, 7
    %v1409 = vsub.s32 %v1406, %v1408
    %v1410 = vrot.slane %v1403, %v1409
    %v1411 = vcombine.low %v1317, %v1318
    %v1413 = vunpack.c.l.s4 1983009808
    %v1414 = vunpack.c.0.s8 %v1413
    %v1415 = vlaneseq
    %v1416 = vshrl.u32 %v1415, 7
    %v1417 = vsub.s32 %v1414, %v1416
    %v1418 = vrot.slane %v1411, %v1417
    %v1419 = vcombine.low %v1394, %v1402
    %v1420 = vcombine.high %v1394, %v1402
    %v1422 = vunpack.c.l.s4 1934713408
    %v1423 = vunpack.c.0.s8 %v1422
    %v1424 = vlaneseq
    %v1425 = vshrl.u32 %v1424, 7
    %v1426 = vsub.s32 %v1423, %v1425
    %v1427 = vrot.slane %v1419, %v1426
    %v1429 = vunpack.c.l.s4 1934713408
    %v1430 = vunpack.c.0.s8 %v1429
    %v1431 = vlaneseq
    %v1432 = vshrl.u32 %v1431, 7
    %v1433 = vsub.s32 %v1430, %v1432
    %v1434 = vrot.slane %v1420, %v1433
    %v1435 = vcombine.low %v1410, %v1418
    %v1436 = vcombine.high %v1410, %v1418
    %v1438 = vunpack.c.l.s4 1934713408
    %v1439 = vunpack.c.0.s8 %v1438
    %v1440 = vlaneseq
    %v1441 = vshrl.u32 %v1440, 7
    %v1442 = vsub.s32 %v1439, %v1441
    %v1443 = vrot.slane %v1435, %v1442
    %v1445 = vunpack.c.l.s4 1934713408
    %v1446 = vunpack.c.0.s8 %v1445
    %v1447 = vlaneseq
    %v1448 = vshrl.u32 %v1447, 7
    %v1449 = vsub.s32 %v1446, %v1448
    %v1450 = vrot.slane %v1436, %v1449
    %v1451 = vcombine.low %v1427, %v1443
    %v1452 = vcombine.high %v1427, %v1443
    %v1453 = vcombine.low %v1434, %v1450
    %v1454 = vcombine.high %v1434, %v1450
    %v1455 = vcombine.low %v1359, %v1366
    %v1457 = vunpack.c.l.s4 1983009808
    %v1458 = vunpack.c.0.s8 %v1457
    %v1459 = vlaneseq
    %v1460 = vshrl.u32 %v1459, 7
    %v1461 = vsub.s32 %v1458, %v1460
    %v1462 = vrot.slane %v1455, %v1461
    %v1463 = vcombine.low %v1383, %v1384
    %v1465 = vunpack.c.l.s4 1983009808
    %v1466 = vunpack.c.0.s8 %v1465
    %v1467 = vlaneseq
    %v1468 = vshrl.u32 %v1467, 7
    %v1469 = vsub.s32 %v1466, %v1468
    %v1470 = vrot.slane %v1463, %v1469
    %v1471 = vcombine.low %v1375, %v1382
    %v1473 = vunpack.c.l.s4 1983009808
    %v1474 = vunpack.c.0.s8 %v1473
    %v1475 = vlaneseq
    %v1476 = vshrl.u32 %v1475, 7
    %v1477 = vsub.s32 %v1474, %v1476
    %v1478 = vrot.slane %v1471, %v1477
    %v1479 = vcombine.low %v1385, %v1386
    %v1481 = vunpack.c.l.s4 1983009808
    %v1482 = vunpack.c.0.s8 %v1481
    %v1483 = vlaneseq
    %v1484 = vshrl.u32 %v1483, 7
    %v1485 = vsub.s32 %v1482, %v1484
    %v1486 = vrot.slane %v1479, %v1485
    %v1487 = vcombine.low %v1462, %v1470
    %v1488 = vcombine.high %v1462, %v1470
    %v1490 = vunpack.c.l.s4 1934713408
    %v1491 = vunpack.c.0.s8 %v1490
    %v1492 = vlaneseq
    %v1493 = vshrl.u32 %v1492, 7
    %v1494 = vsub.s32 %v1491, %v1493
    %v1495 = vrot.slane %v1487, %v1494
    %v1497 = vunpack.c.l.s4 1934713408
    %v1498 = vunpack.c.0.s8 %v1497
    %v1499 = vlaneseq
    %v1500 = vshrl.u32 %v1499, 7
    %v1501 = vsub.s32 %v1498, %v1500
    %v1502 = vrot.slane %v1488, %v1501
    %v1503 = vcombine.low %v1478, %v1486
    %v1504 = vcombine.high %v1478, %v1486
    %v1506 = vunpack.c.l.s4 1934713408
    %v1507 = vunpack.c.0.s8 %v1506
    %v1508 = vlaneseq
    %v1509 = vshrl.u32 %v1508, 7
    %v1510 = vsub.s32 %v1507, %v1509
    %v1511 = vrot.slane %v1503, %v1510
    %v1513 = vunpack.c.l.s4 1934713408
    %v1514 = vunpack.c.0.s8 %v1513
    %v1515 = vlaneseq
    %v1516 = vshrl.u32 %v1515, 7
    %v1517 = vsub.s32 %v1514, %v1516
    %v1518 = vrot.slane %v1504, %v1517
    %v1519 = vcombine.low %v1495, %v1511
    %v1520 = vcombine.high %v1495, %v1511
    %v1521 = vcombine.low %v1502, %v1518
    %v1522 = vcombine.high %v1502, %v1518
    %vm1523 = vcmask 64512
    %v1525 = vsel %vm1523, %v867, 0
    %v1528 = vsel %vm1523, %v1159, 0
    %1530 = vmatprep.subr.mxu0 0.0
    %1531 = vmatpush1.xpose.msra.mxu0 0.0
    %1532 = vmatprep.subr.mxu0 0.0
    %1533 = vmatpush1.xpose.msra.mxu0 0.0
    %1534 = vmatprep.subr.mxu0 0.0
    %1535 = vmatpush1.xpose.msra.mxu0 0.0
    %1536 = vmatprep.subr.mxu0 0.0
    %1537 = vmatpush1.xpose.msra.mxu0 0.0
    %1538 = vmatprep.subr.mxu0 0.0
    %1539 = vmatpush1.xpose.msra.mxu0 0.0
    %1540 = vmatprep.subr.mxu0 0.0
    %1541 = vmatpush1.xpose.msra.mxu0 0.0
    %1542 = vmatprep.subr.mxu0 0.0
    %1543 = vmatpush1.xpose.msra.mxu0 0.0
    %1544 = vmatprep.subr.mxu0 0.0
    %1545 = vmatpush1.xpose.msra.mxu0 0.0
    %1546 = vmatprep.subr.mxu0 0.0
    %1547 = vmatpush1.xpose.msra.mxu0 0.0
    %1548 = vmatprep.subr.mxu0 0.0
    %1549 = vmatpush1.xpose.msra.mxu0 0.0
    %1550 = vmatprep.subr.mxu0 0.0
    %1551 = vmatpush1.xpose.msra.mxu0 0.0
    %1552 = vmatprep.subr.mxu0 0.0
    %1553 = vmatpush1.xpose.msra.mxu0 0.0
    %1554 = vmatprep.subr.mxu0 0.0
    %1555 = vmatpush1.xpose.msra.mxu0 0.0
    %1556 = vmatprep.subr.mxu0 0.0
    %1557 = vmatpush1.xpose.msra.mxu0 0.0
    %1558 = vmatprep.subr.mxu0 0.0
    %1559 = vmatpush1.xpose.msra.mxu0 0.0
    %1560 = vmatprep.subr.mxu0 0.0
    %1561 = vmatpush1.xpose.msra.mxu0 %v1528
    %1562 = vmatprep.subr.mxu0 0.0
    %1563 = vmatpush2.xpose.msra.mxu0 0.0
    %1564 = vmatprep.subr.mxu0 0.0
    %1565 = vmatpush2.xpose.msra.mxu0 0.0
    %1566 = vmatprep.subr.mxu0 0.0
    %1567 = vmatpush2.xpose.msra.mxu0 0.0
    %1568 = vmatprep.subr.mxu0 0.0
    %1569 = vmatpush2.xpose.msra.mxu0 0.0
    %1570 = vmatprep.subr.mxu0 0.0
    %1571 = vmatpush2.xpose.msra.mxu0 0.0
    %1572 = vmatprep.subr.mxu0 0.0
    %1573 = vmatpush2.xpose.msra.mxu0 0.0
    %1574 = vmatprep.subr.mxu0 0.0
    %1575 = vmatpush2.xpose.msra.mxu0 0.0
    %1576 = vmatprep.subr.mxu0 0.0
    %1577 = vmatpush2.xpose.msra.mxu0 0.0
    %1578 = vmatprep.subr.mxu0 0.0
    %1579 = vmatpush2.xpose.msra.mxu0 0.0
    %1580 = vmatprep.subr.mxu0 0.0
    %1581 = vmatpush2.xpose.msra.mxu0 0.0
    %1582 = vmatprep.subr.mxu0 0.0
    %1583 = vmatpush2.xpose.msra.mxu0 0.0
    %1584 = vmatprep.subr.mxu0 0.0
    %1585 = vmatpush2.xpose.msra.mxu0 0.0
    %1586 = vmatprep.subr.mxu0 0.0
    %1587 = vmatpush2.xpose.msra.mxu0 0.0
    %1588 = vmatprep.subr.mxu0 0.0
    %1589 = vmatpush2.xpose.msra.mxu0 0.0
    %1590 = vmatprep.subr.mxu0 0.0
    %1591 = vmatpush2.xpose.msra.mxu0 0.0
    %1592 = vmatprep.subr.mxu0 0.0
    %1593 = vmatpush2.xpose.msra.mxu0 0.0
    %1594 = vmatprep.mubr.f32.mxu0 0.0
    %1595 = vmatmul.mubr.f32.gmra.mxu0 %v1525
    %v1596 = vpop.f32.mrf.mxu0
    %v1597 = vadd.f32 0.0, %v1596
    %v1598 = vpop.f32.mrf.mxu0
    %1599 = vdwg.mxu0
    %v1601 = vsel %vm1523, %v868, 0
    %v1604 = vsel %vm1523, %v1160, 0
    %1606 = vmatprep.subr.mxu0 0.0
    %1607 = vmatpush1.xpose.msra.mxu0 0.0
    %1608 = vmatprep.subr.mxu0 0.0
    %1609 = vmatpush1.xpose.msra.mxu0 0.0
    %1610 = vmatprep.subr.mxu0 0.0
    %1611 = vmatpush1.xpose.msra.mxu0 0.0
    %1612 = vmatprep.subr.mxu0 0.0
    %1613 = vmatpush1.xpose.msra.mxu0 0.0
    %1614 = vmatprep.subr.mxu0 0.0
    %1615 = vmatpush1.xpose.msra.mxu0 0.0
    %1616 = vmatprep.subr.mxu0 0.0
    %1617 = vmatpush1.xpose.msra.mxu0 0.0
    %1618 = vmatprep.subr.mxu0 0.0
    %1619 = vmatpush1.xpose.msra.mxu0 0.0
    %1620 = vmatprep.subr.mxu0 0.0
    %1621 = vmatpush1.xpose.msra.mxu0 0.0
    %1622 = vmatprep.subr.mxu0 0.0
    %1623 = vmatpush1.xpose.msra.mxu0 0.0
    %1624 = vmatprep.subr.mxu0 0.0
    %1625 = vmatpush1.xpose.msra.mxu0 0.0
    %1626 = vmatprep.subr.mxu0 0.0
    %1627 = vmatpush1.xpose.msra.mxu0 0.0
    %1628 = vmatprep.subr.mxu0 0.0
    %1629 = vmatpush1.xpose.msra.mxu0 0.0
    %1630 = vmatprep.subr.mxu0 0.0
    %1631 = vmatpush1.xpose.msra.mxu0 0.0
    %1632 = vmatprep.subr.mxu0 0.0
    %1633 = vmatpush1.xpose.msra.mxu0 0.0
    %1634 = vmatprep.subr.mxu0 0.0
    %1635 = vmatpush1.xpose.msra.mxu0 0.0
    %1636 = vmatprep.subr.mxu0 0.0
    %1637 = vmatpush1.xpose.msra.mxu0 %v1604
    %1638 = vmatprep.subr.mxu0 0.0
    %1639 = vmatpush2.xpose.msra.mxu0 0.0
    %1640 = vmatprep.subr.mxu0 0.0
    %1641 = vmatpush2.xpose.msra.mxu0 0.0
    %1642 = vmatprep.subr.mxu0 0.0
    %1643 = vmatpush2.xpose.msra.mxu0 0.0
    %1644 = vmatprep.subr.mxu0 0.0
    %1645 = vmatpush2.xpose.msra.mxu0 0.0
    %1646 = vmatprep.subr.mxu0 0.0
    %1647 = vmatpush2.xpose.msra.mxu0 0.0
    %1648 = vmatprep.subr.mxu0 0.0
    %1649 = vmatpush2.xpose.msra.mxu0 0.0
    %1650 = vmatprep.subr.mxu0 0.0
    %1651 = vmatpush2.xpose.msra.mxu0 0.0
    %1652 = vmatprep.subr.mxu0 0.0
    %1653 = vmatpush2.xpose.msra.mxu0 0.0
    %1654 = vmatprep.subr.mxu0 0.0
    %1655 = vmatpush2.xpose.msra.mxu0 0.0
    %1656 = vmatprep.subr.mxu0 0.0
    %1657 = vmatpush2.xpose.msra.mxu0 0.0
    %1658 = vmatprep.subr.mxu0 0.0
    %1659 = vmatpush2.xpose.msra.mxu0 0.0
    %1660 = vmatprep.subr.mxu0 0.0
    %1661 = vmatpush2.xpose.msra.mxu0 0.0
    %1662 = vmatprep.subr.mxu0 0.0
    %1663 = vmatpush2.xpose.msra.mxu0 0.0
    %1664 = vmatprep.subr.mxu0 0.0
    %1665 = vmatpush2.xpose.msra.mxu0 0.0
    %1666 = vmatprep.subr.mxu0 0.0
    %1667 = vmatpush2.xpose.msra.mxu0 0.0
    %1668 = vmatprep.subr.mxu0 0.0
    %1669 = vmatpush2.xpose.msra.mxu0 0.0
    %1670 = vmatprep.mubr.f32.mxu0 0.0
    %1671 = vmatmul.mubr.f32.gmra.mxu0 %v1601
    %v1672 = vpop.f32.mrf.mxu0
    %v1673 = vadd.f32 0.0, %v1672
    %v1674 = vpop.f32.mrf.mxu0
    %1675 = vdwg.mxu0
    %v1677 = vsel %vm1523, %v869, 0
    %v1680 = vsel %vm1523, %v1161, 0
    %1682 = vmatprep.subr.mxu0 0.0
    %1683 = vmatpush1.xpose.msra.mxu0 0.0
    %1684 = vmatprep.subr.mxu0 0.0
    %1685 = vmatpush1.xpose.msra.mxu0 0.0
    %1686 = vmatprep.subr.mxu0 0.0
    %1687 = vmatpush1.xpose.msra.mxu0 0.0
    %1688 = vmatprep.subr.mxu0 0.0
    %1689 = vmatpush1.xpose.msra.mxu0 0.0
    %1690 = vmatprep.subr.mxu0 0.0
    %1691 = vmatpush1.xpose.msra.mxu0 0.0
    %1692 = vmatprep.subr.mxu0 0.0
    %1693 = vmatpush1.xpose.msra.mxu0 0.0
    %1694 = vmatprep.subr.mxu0 0.0
    %1695 = vmatpush1.xpose.msra.mxu0 0.0
    %1696 = vmatprep.subr.mxu0 0.0
    %1697 = vmatpush1.xpose.msra.mxu0 0.0
    %1698 = vmatprep.subr.mxu0 0.0
    %1699 = vmatpush1.xpose.msra.mxu0 0.0
    %1700 = vmatprep.subr.mxu0 0.0
    %1701 = vmatpush1.xpose.msra.mxu0 0.0
    %1702 = vmatprep.subr.mxu0 0.0
    %1703 = vmatpush1.xpose.msra.mxu0 0.0
    %1704 = vmatprep.subr.mxu0 0.0
    %1705 = vmatpush1.xpose.msra.mxu0 0.0
    %1706 = vmatprep.subr.mxu0 0.0
    %1707 = vmatpush1.xpose.msra.mxu0 0.0
    %1708 = vmatprep.subr.mxu0 0.0
    %1709 = vmatpush1.xpose.msra.mxu0 0.0
    %1710 = vmatprep.subr.mxu0 0.0
    %1711 = vmatpush1.xpose.msra.mxu0 0.0
    %1712 = vmatprep.subr.mxu0 0.0
    %1713 = vmatpush1.xpose.msra.mxu0 %v1680
    %1714 = vmatprep.subr.mxu0 0.0
    %1715 = vmatpush2.xpose.msra.mxu0 0.0
    %1716 = vmatprep.subr.mxu0 0.0
    %1717 = vmatpush2.xpose.msra.mxu0 0.0
    %1718 = vmatprep.subr.mxu0 0.0
    %1719 = vmatpush2.xpose.msra.mxu0 0.0
    %1720 = vmatprep.subr.mxu0 0.0
    %1721 = vmatpush2.xpose.msra.mxu0 0.0
    %1722 = vmatprep.subr.mxu0 0.0
    %1723 = vmatpush2.xpose.msra.mxu0 0.0
    %1724 = vmatprep.subr.mxu0 0.0
    %1725 = vmatpush2.xpose.msra.mxu0 0.0
    %1726 = vmatprep.subr.mxu0 0.0
    %1727 = vmatpush2.xpose.msra.mxu0 0.0
    %1728 = vmatprep.subr.mxu0 0.0
    %1729 = vmatpush2.xpose.msra.mxu0 0.0
    %1730 = vmatprep.subr.mxu0 0.0
    %1731 = vmatpush2.xpose.msra.mxu0 0.0
    %1732 = vmatprep.subr.mxu0 0.0
    %1733 = vmatpush2.xpose.msra.mxu0 0.0
    %1734 = vmatprep.subr.mxu0 0.0
    %1735 = vmatpush2.xpose.msra.mxu0 0.0
    %1736 = vmatprep.subr.mxu0 0.0
    %1737 = vmatpush2.xpose.msra.mxu0 0.0
    %1738 = vmatprep.subr.mxu0 0.0
    %1739 = vmatpush2.xpose.msra.mxu0 0.0
    %1740 = vmatprep.subr.mxu0 0.0
    %1741 = vmatpush2.xpose.msra.mxu0 0.0
    %1742 = vmatprep.subr.mxu0 0.0
    %1743 = vmatpush2.xpose.msra.mxu0 0.0
    %1744 = vmatprep.subr.mxu0 0.0
    %1745 = vmatpush2.xpose.msra.mxu0 0.0
    %1746 = vmatprep.mubr.f32.mxu0 0.0
    %1747 = vmatmul.mubr.f32.gmra.mxu0 %v1677
    %v1748 = vpop.f32.mrf.mxu0
    %v1749 = vadd.f32 0.0, %v1748
    %v1750 = vpop.f32.mrf.mxu0
    %1751 = vdwg.mxu0
    %v1753 = vsel %vm1523, %v870, 0
    %v1756 = vsel %vm1523, %v1162, 0
    %1758 = vmatprep.subr.mxu0 0.0
    %1759 = vmatpush1.xpose.msra.mxu0 0.0
    %1760 = vmatprep.subr.mxu0 0.0
    %1761 = vmatpush1.xpose.msra.mxu0 0.0
    %1762 = vmatprep.subr.mxu0 0.0
    %1763 = vmatpush1.xpose.msra.mxu0 0.0
    %1764 = vmatprep.subr.mxu0 0.0
    %1765 = vmatpush1.xpose.msra.mxu0 0.0
    %1766 = vmatprep.subr.mxu0 0.0
    %1767 = vmatpush1.xpose.msra.mxu0 0.0
    %1768 = vmatprep.subr.mxu0 0.0
    %1769 = vmatpush1.xpose.msra.mxu0 0.0
    %1770 = vmatprep.subr.mxu0 0.0
    %1771 = vmatpush1.xpose.msra.mxu0 0.0
    %1772 = vmatprep.subr.mxu0 0.0
    %1773 = vmatpush1.xpose.msra.mxu0 0.0
    %1774 = vmatprep.subr.mxu0 0.0
    %1775 = vmatpush1.xpose.msra.mxu0 0.0
    %1776 = vmatprep.subr.mxu0 0.0
    %1777 = vmatpush1.xpose.msra.mxu0 0.0
    %1778 = vmatprep.subr.mxu0 0.0
    %1779 = vmatpush1.xpose.msra.mxu0 0.0
    %1780 = vmatprep.subr.mxu0 0.0
    %1781 = vmatpush1.xpose.msra.mxu0 0.0
    %1782 = vmatprep.subr.mxu0 0.0
    %1783 = vmatpush1.xpose.msra.mxu0 0.0
    %1784 = vmatprep.subr.mxu0 0.0
    %1785 = vmatpush1.xpose.msra.mxu0 0.0
    %1786 = vmatprep.subr.mxu0 0.0
    %1787 = vmatpush1.xpose.msra.mxu0 0.0
    %1788 = vmatprep.subr.mxu0 0.0
    %1789 = vmatpush1.xpose.msra.mxu0 %v1756
    %1790 = vmatprep.subr.mxu0 0.0
    %1791 = vmatpush2.xpose.msra.mxu0 0.0
    %1792 = vmatprep.subr.mxu0 0.0
    %1793 = vmatpush2.xpose.msra.mxu0 0.0
    %1794 = vmatprep.subr.mxu0 0.0
    %1795 = vmatpush2.xpose.msra.mxu0 0.0
    %1796 = vmatprep.subr.mxu0 0.0
    %1797 = vmatpush2.xpose.msra.mxu0 0.0
    %1798 = vmatprep.subr.mxu0 0.0
    %1799 = vmatpush2.xpose.msra.mxu0 0.0
    %1800 = vmatprep.subr.mxu0 0.0
    %1801 = vmatpush2.xpose.msra.mxu0 0.0
    %1802 = vmatprep.subr.mxu0 0.0
    %1803 = vmatpush2.xpose.msra.mxu0 0.0
    %1804 = vmatprep.subr.mxu0 0.0
    %1805 = vmatpush2.xpose.msra.mxu0 0.0
    %1806 = vmatprep.subr.mxu0 0.0
    %1807 = vmatpush2.xpose.msra.mxu0 0.0
    %1808 = vmatprep.subr.mxu0 0.0
    %1809 = vmatpush2.xpose.msra.mxu0 0.0
    %1810 = vmatprep.subr.mxu0 0.0
    %1811 = vmatpush2.xpose.msra.mxu0 0.0
    %1812 = vmatprep.subr.mxu0 0.0
    %1813 = vmatpush2.xpose.msra.mxu0 0.0
    %1814 = vmatprep.subr.mxu0 0.0
    %1815 = vmatpush2.xpose.msra.mxu0 0.0
    %1816 = vmatprep.subr.mxu0 0.0
    %1817 = vmatpush2.xpose.msra.mxu0 0.0
    %1818 = vmatprep.subr.mxu0 0.0
    %1819 = vmatpush2.xpose.msra.mxu0 0.0
    %1820 = vmatprep.subr.mxu0 0.0
    %1821 = vmatpush2.xpose.msra.mxu0 0.0
    %1822 = vmatprep.mubr.f32.mxu0 0.0
    %1823 = vmatmul.mubr.f32.gmra.mxu0 %v1753
    %v1824 = vpop.f32.mrf.mxu0
    %v1825 = vadd.f32 0.0, %v1824
    %v1826 = vpop.f32.mrf.mxu0
    %1827 = vdwg.mxu0
    %v1829 = vsel %vm1523, %v935, 0
    %v1832 = vsel %vm1523, %v1227, 0
    %1834 = vmatprep.subr.mxu0 0.0
    %1835 = vmatpush1.xpose.msra.mxu0 0.0
    %1836 = vmatprep.subr.mxu0 0.0
    %1837 = vmatpush1.xpose.msra.mxu0 0.0
    %1838 = vmatprep.subr.mxu0 0.0
    %1839 = vmatpush1.xpose.msra.mxu0 0.0
    %1840 = vmatprep.subr.mxu0 0.0
    %1841 = vmatpush1.xpose.msra.mxu0 0.0
    %1842 = vmatprep.subr.mxu0 0.0
    %1843 = vmatpush1.xpose.msra.mxu0 0.0
    %1844 = vmatprep.subr.mxu0 0.0
    %1845 = vmatpush1.xpose.msra.mxu0 0.0
    %1846 = vmatprep.subr.mxu0 0.0
    %1847 = vmatpush1.xpose.msra.mxu0 0.0
    %1848 = vmatprep.subr.mxu0 0.0
    %1849 = vmatpush1.xpose.msra.mxu0 0.0
    %1850 = vmatprep.subr.mxu0 0.0
    %1851 = vmatpush1.xpose.msra.mxu0 0.0
    %1852 = vmatprep.subr.mxu0 0.0
    %1853 = vmatpush1.xpose.msra.mxu0 0.0
    %1854 = vmatprep.subr.mxu0 0.0
    %1855 = vmatpush1.xpose.msra.mxu0 0.0
    %1856 = vmatprep.subr.mxu0 0.0
    %1857 = vmatpush1.xpose.msra.mxu0 0.0
    %1858 = vmatprep.subr.mxu0 0.0
    %1859 = vmatpush1.xpose.msra.mxu0 0.0
    %1860 = vmatprep.subr.mxu0 0.0
    %1861 = vmatpush1.xpose.msra.mxu0 0.0
    %1862 = vmatprep.subr.mxu0 0.0
    %1863 = vmatpush1.xpose.msra.mxu0 0.0
    %1864 = vmatprep.subr.mxu0 0.0
    %1865 = vmatpush1.xpose.msra.mxu0 %v1832
    %1866 = vmatprep.subr.mxu0 0.0
    %1867 = vmatpush2.xpose.msra.mxu0 0.0
    %1868 = vmatprep.subr.mxu0 0.0
    %1869 = vmatpush2.xpose.msra.mxu0 0.0
    %1870 = vmatprep.subr.mxu0 0.0
    %1871 = vmatpush2.xpose.msra.mxu0 0.0
    %1872 = vmatprep.subr.mxu0 0.0
    %1873 = vmatpush2.xpose.msra.mxu0 0.0
    %1874 = vmatprep.subr.mxu0 0.0
    %1875 = vmatpush2.xpose.msra.mxu0 0.0
    %1876 = vmatprep.subr.mxu0 0.0
    %1877 = vmatpush2.xpose.msra.mxu0 0.0
    %1878 = vmatprep.subr.mxu0 0.0
    %1879 = vmatpush2.xpose.msra.mxu0 0.0
    %1880 = vmatprep.subr.mxu0 0.0
    %1881 = vmatpush2.xpose.msra.mxu0 0.0
    %1882 = vmatprep.subr.mxu0 0.0
    %1883 = vmatpush2.xpose.msra.mxu0 0.0
    %1884 = vmatprep.subr.mxu0 0.0
    %1885 = vmatpush2.xpose.msra.mxu0 0.0
    %1886 = vmatprep.subr.mxu0 0.0
    %1887 = vmatpush2.xpose.msra.mxu0 0.0
    %1888 = vmatprep.subr.mxu0 0.0
    %1889 = vmatpush2.xpose.msra.mxu0 0.0
    %1890 = vmatprep.subr.mxu0 0.0
    %1891 = vmatpush2.xpose.msra.mxu0 0.0
    %1892 = vmatprep.subr.mxu0 0.0
    %1893 = vmatpush2.xpose.msra.mxu0 0.0
    %1894 = vmatprep.subr.mxu0 0.0
    %1895 = vmatpush2.xpose.msra.mxu0 0.0
    %1896 = vmatprep.subr.mxu0 0.0
    %1897 = vmatpush2.xpose.msra.mxu0 0.0
    %1898 = vmatprep.mubr.f32.mxu0 0.0
    %1899 = vmatmul.mubr.f32.gmra.mxu0 %v1829
    %v1900 = vpop.f32.mrf.mxu0
    %v1901 = vadd.f32 0.0, %v1900
    %v1902 = vpop.f32.mrf.mxu0
    %1903 = vdwg.mxu0
    %v1905 = vsel %vm1523, %v936, 0
    %v1908 = vsel %vm1523, %v1228, 0
    %1910 = vmatprep.subr.mxu0 0.0
    %1911 = vmatpush1.xpose.msra.mxu0 0.0
    %1912 = vmatprep.subr.mxu0 0.0
    %1913 = vmatpush1.xpose.msra.mxu0 0.0
    %1914 = vmatprep.subr.mxu0 0.0
    %1915 = vmatpush1.xpose.msra.mxu0 0.0
    %1916 = vmatprep.subr.mxu0 0.0
    %1917 = vmatpush1.xpose.msra.mxu0 0.0
    %1918 = vmatprep.subr.mxu0 0.0
    %1919 = vmatpush1.xpose.msra.mxu0 0.0
    %1920 = vmatprep.subr.mxu0 0.0
    %1921 = vmatpush1.xpose.msra.mxu0 0.0
    %1922 = vmatprep.subr.mxu0 0.0
    %1923 = vmatpush1.xpose.msra.mxu0 0.0
    %1924 = vmatprep.subr.mxu0 0.0
    %1925 = vmatpush1.xpose.msra.mxu0 0.0
    %1926 = vmatprep.subr.mxu0 0.0
    %1927 = vmatpush1.xpose.msra.mxu0 0.0
    %1928 = vmatprep.subr.mxu0 0.0
    %1929 = vmatpush1.xpose.msra.mxu0 0.0
    %1930 = vmatprep.subr.mxu0 0.0
    %1931 = vmatpush1.xpose.msra.mxu0 0.0
    %1932 = vmatprep.subr.mxu0 0.0
    %1933 = vmatpush1.xpose.msra.mxu0 0.0
    %1934 = vmatprep.subr.mxu0 0.0
    %1935 = vmatpush1.xpose.msra.mxu0 0.0
    %1936 = vmatprep.subr.mxu0 0.0
    %1937 = vmatpush1.xpose.msra.mxu0 0.0
    %1938 = vmatprep.subr.mxu0 0.0
    %1939 = vmatpush1.xpose.msra.mxu0 0.0
    %1940 = vmatprep.subr.mxu0 0.0
    %1941 = vmatpush1.xpose.msra.mxu0 %v1908
    %1942 = vmatprep.subr.mxu0 0.0
    %1943 = vmatpush2.xpose.msra.mxu0 0.0
    %1944 = vmatprep.subr.mxu0 0.0
    %1945 = vmatpush2.xpose.msra.mxu0 0.0
    %1946 = vmatprep.subr.mxu0 0.0
    %1947 = vmatpush2.xpose.msra.mxu0 0.0
    %1948 = vmatprep.subr.mxu0 0.0
    %1949 = vmatpush2.xpose.msra.mxu0 0.0
    %1950 = vmatprep.subr.mxu0 0.0
    %1951 = vmatpush2.xpose.msra.mxu0 0.0
    %1952 = vmatprep.subr.mxu0 0.0
    %1953 = vmatpush2.xpose.msra.mxu0 0.0
    %1954 = vmatprep.subr.mxu0 0.0
    %1955 = vmatpush2.xpose.msra.mxu0 0.0
    %1956 = vmatprep.subr.mxu0 0.0
    %1957 = vmatpush2.xpose.msra.mxu0 0.0
    %1958 = vmatprep.subr.mxu0 0.0
    %1959 = vmatpush2.xpose.msra.mxu0 0.0
    %1960 = vmatprep.subr.mxu0 0.0
    %1961 = vmatpush2.xpose.msra.mxu0 0.0
    %1962 = vmatprep.subr.mxu0 0.0
    %1963 = vmatpush2.xpose.msra.mxu0 0.0
    %1964 = vmatprep.subr.mxu0 0.0
    %1965 = vmatpush2.xpose.msra.mxu0 0.0
    %1966 = vmatprep.subr.mxu0 0.0
    %1967 = vmatpush2.xpose.msra.mxu0 0.0
    %1968 = vmatprep.subr.mxu0 0.0
    %1969 = vmatpush2.xpose.msra.mxu0 0.0
    %1970 = vmatprep.subr.mxu0 0.0
    %1971 = vmatpush2.xpose.msra.mxu0 0.0
    %1972 = vmatprep.subr.mxu0 0.0
    %1973 = vmatpush2.xpose.msra.mxu0 0.0
    %1974 = vmatprep.mubr.f32.mxu0 0.0
    %1975 = vmatmul.mubr.f32.gmra.mxu0 %v1905
    %v1976 = vpop.f32.mrf.mxu0
    %v1977 = vadd.f32 0.0, %v1976
    %v1978 = vpop.f32.mrf.mxu0
    %1979 = vdwg.mxu0
    %v1981 = vsel %vm1523, %v937, 0
    %v1984 = vsel %vm1523, %v1229, 0
    %1986 = vmatprep.subr.mxu0 0.0
    %1987 = vmatpush1.xpose.msra.mxu0 0.0
    %1988 = vmatprep.subr.mxu0 0.0
    %1989 = vmatpush1.xpose.msra.mxu0 0.0
    %1990 = vmatprep.subr.mxu0 0.0
    %1991 = vmatpush1.xpose.msra.mxu0 0.0
    %1992 = vmatprep.subr.mxu0 0.0
    %1993 = vmatpush1.xpose.msra.mxu0 0.0
    %1994 = vmatprep.subr.mxu0 0.0
    %1995 = vmatpush1.xpose.msra.mxu0 0.0
    %1996 = vmatprep.subr.mxu0 0.0
    %1997 = vmatpush1.xpose.msra.mxu0 0.0
    %1998 = vmatprep.subr.mxu0 0.0
    %1999 = vmatpush1.xpose.msra.mxu0 0.0
    %2000 = vmatprep.subr.mxu0 0.0
    %2001 = vmatpush1.xpose.msra.mxu0 0.0
    %2002 = vmatprep.subr.mxu0 0.0
    %2003 = vmatpush1.xpose.msra.mxu0 0.0
    %2004 = vmatprep.subr.mxu0 0.0
    %2005 = vmatpush1.xpose.msra.mxu0 0.0
    %2006 = vmatprep.subr.mxu0 0.0
    %2007 = vmatpush1.xpose.msra.mxu0 0.0
    %2008 = vmatprep.subr.mxu0 0.0
    %2009 = vmatpush1.xpose.msra.mxu0 0.0
    %2010 = vmatprep.subr.mxu0 0.0
    %2011 = vmatpush1.xpose.msra.mxu0 0.0
    %2012 = vmatprep.subr.mxu0 0.0
    %2013 = vmatpush1.xpose.msra.mxu0 0.0
    %2014 = vmatprep.subr.mxu0 0.0
    %2015 = vmatpush1.xpose.msra.mxu0 0.0
    %2016 = vmatprep.subr.mxu0 0.0
    %2017 = vmatpush1.xpose.msra.mxu0 %v1984
    %2018 = vmatprep.subr.mxu0 0.0
    %2019 = vmatpush2.xpose.msra.mxu0 0.0
    %2020 = vmatprep.subr.mxu0 0.0
    %2021 = vmatpush2.xpose.msra.mxu0 0.0
    %2022 = vmatprep.subr.mxu0 0.0
    %2023 = vmatpush2.xpose.msra.mxu0 0.0
    %2024 = vmatprep.subr.mxu0 0.0
    %2025 = vmatpush2.xpose.msra.mxu0 0.0
    %2026 = vmatprep.subr.mxu0 0.0
    %2027 = vmatpush2.xpose.msra.mxu0 0.0
    %2028 = vmatprep.subr.mxu0 0.0
    %2029 = vmatpush2.xpose.msra.mxu0 0.0
    %2030 = vmatprep.subr.mxu0 0.0
    %2031 = vmatpush2.xpose.msra.mxu0 0.0
    %2032 = vmatprep.subr.mxu0 0.0
    %2033 = vmatpush2.xpose.msra.mxu0 0.0
    %2034 = vmatprep.subr.mxu0 0.0
    %2035 = vmatpush2.xpose.msra.mxu0 0.0
    %2036 = vmatprep.subr.mxu0 0.0
    %2037 = vmatpush2.xpose.msra.mxu0 0.0
    %2038 = vmatprep.subr.mxu0 0.0
    %2039 = vmatpush2.xpose.msra.mxu0 0.0
    %2040 = vmatprep.subr.mxu0 0.0
    %2041 = vmatpush2.xpose.msra.mxu0 0.0
    %2042 = vmatprep.subr.mxu0 0.0
    %2043 = vmatpush2.xpose.msra.mxu0 0.0
    %2044 = vmatprep.subr.mxu0 0.0
    %2045 = vmatpush2.xpose.msra.mxu0 0.0
    %2046 = vmatprep.subr.mxu0 0.0
    %2047 = vmatpush2.xpose.msra.mxu0 0.0
    %2048 = vmatprep.subr.mxu0 0.0
    %2049 = vmatpush2.xpose.msra.mxu0 0.0
    %2050 = vmatprep.mubr.f32.mxu0 0.0
    %2051 = vmatmul.mubr.f32.gmra.mxu0 %v1981
    %v2052 = vpop.f32.mrf.mxu0
    %v2053 = vadd.f32 0.0, %v2052
    %v2054 = vpop.f32.mrf.mxu0
    %2055 = vdwg.mxu0
    %v2057 = vsel %vm1523, %v938, 0
    %v2060 = vsel %vm1523, %v1230, 0
    %2062 = vmatprep.subr.mxu0 0.0
    %2063 = vmatpush1.xpose.msra.mxu0 0.0
    %2064 = vmatprep.subr.mxu0 0.0
    %2065 = vmatpush1.xpose.msra.mxu0 0.0
    %2066 = vmatprep.subr.mxu0 0.0
    %2067 = vmatpush1.xpose.msra.mxu0 0.0
    %2068 = vmatprep.subr.mxu0 0.0
    %2069 = vmatpush1.xpose.msra.mxu0 0.0
    %2070 = vmatprep.subr.mxu0 0.0
    %2071 = vmatpush1.xpose.msra.mxu0 0.0
    %2072 = vmatprep.subr.mxu0 0.0
    %2073 = vmatpush1.xpose.msra.mxu0 0.0
    %2074 = vmatprep.subr.mxu0 0.0
    %2075 = vmatpush1.xpose.msra.mxu0 0.0
    %2076 = vmatprep.subr.mxu0 0.0
    %2077 = vmatpush1.xpose.msra.mxu0 0.0
    %2078 = vmatprep.subr.mxu0 0.0
    %2079 = vmatpush1.xpose.msra.mxu0 0.0
    %2080 = vmatprep.subr.mxu0 0.0
    %2081 = vmatpush1.xpose.msra.mxu0 0.0
    %2082 = vmatprep.subr.mxu0 0.0
    %2083 = vmatpush1.xpose.msra.mxu0 0.0
    %2084 = vmatprep.subr.mxu0 0.0
    %2085 = vmatpush1.xpose.msra.mxu0 0.0
    %2086 = vmatprep.subr.mxu0 0.0
    %2087 = vmatpush1.xpose.msra.mxu0 0.0
    %2088 = vmatprep.subr.mxu0 0.0
    %2089 = vmatpush1.xpose.msra.mxu0 0.0
    %2090 = vmatprep.subr.mxu0 0.0
    %2091 = vmatpush1.xpose.msra.mxu0 0.0
    %2092 = vmatprep.subr.mxu0 0.0
    %2093 = vmatpush1.xpose.msra.mxu0 %v2060
    %2094 = vmatprep.subr.mxu0 0.0
    %2095 = vmatpush2.xpose.msra.mxu0 0.0
    %2096 = vmatprep.subr.mxu0 0.0
    %2097 = vmatpush2.xpose.msra.mxu0 0.0
    %2098 = vmatprep.subr.mxu0 0.0
    %2099 = vmatpush2.xpose.msra.mxu0 0.0
    %2100 = vmatprep.subr.mxu0 0.0
    %2101 = vmatpush2.xpose.msra.mxu0 0.0
    %2102 = vmatprep.subr.mxu0 0.0
    %2103 = vmatpush2.xpose.msra.mxu0 0.0
    %2104 = vmatprep.subr.mxu0 0.0
    %2105 = vmatpush2.xpose.msra.mxu0 0.0
    %2106 = vmatprep.subr.mxu0 0.0
    %2107 = vmatpush2.xpose.msra.mxu0 0.0
    %2108 = vmatprep.subr.mxu0 0.0
    %2109 = vmatpush2.xpose.msra.mxu0 0.0
    %2110 = vmatprep.subr.mxu0 0.0
    %2111 = vmatpush2.xpose.msra.mxu0 0.0
    %2112 = vmatprep.subr.mxu0 0.0
    %2113 = vmatpush2.xpose.msra.mxu0 0.0
    %2114 = vmatprep.subr.mxu0 0.0
    %2115 = vmatpush2.xpose.msra.mxu0 0.0
    %2116 = vmatprep.subr.mxu0 0.0
    %2117 = vmatpush2.xpose.msra.mxu0 0.0
    %2118 = vmatprep.subr.mxu0 0.0
    %2119 = vmatpush2.xpose.msra.mxu0 0.0
    %2120 = vmatprep.subr.mxu0 0.0
    %2121 = vmatpush2.xpose.msra.mxu0 0.0
    %2122 = vmatprep.subr.mxu0 0.0
    %2123 = vmatpush2.xpose.msra.mxu0 0.0
    %2124 = vmatprep.subr.mxu0 0.0
    %2125 = vmatpush2.xpose.msra.mxu0 0.0
    %2126 = vmatprep.mubr.f32.mxu0 0.0
    %2127 = vmatmul.mubr.f32.gmra.mxu0 %v2057
    %v2128 = vpop.f32.mrf.mxu0
    %v2129 = vadd.f32 0.0, %v2128
    %v2130 = vpop.f32.mrf.mxu0
    %2131 = vdwg.mxu0
    %v2132 = vadd.f32 %v1597, %v322
    %v2133 = vadd.f32 %v1673, %v322
    %v2134 = vadd.f32 %v1749, %v322
    %v2135 = vadd.f32 %v1825, %v322
    %v2136 = vadd.f32 %v1901, %v323
    %v2137 = vadd.f32 %v1977, %v323
    %v2138 = vadd.f32 %v2053, %v323
    %v2139 = vadd.f32 %v2129, %v323
    %v2140 = vsel %vm1523, %v2132, -inf
    %2141 = vmax.xlane.f32.xlu0 %v2140
    %v2142 = vpop.xlane.xlu0 %2141
    %v2143 = vsel %vm1523, %v2133, -inf
    %2144 = vmax.xlane.f32.xlu0 %v2143
    %v2145 = vpop.xlane.xlu0 %2144
    %v2146 = vsel %vm1523, %v2134, -inf
    %2147 = vmax.xlane.f32.xlu0 %v2146
    %v2148 = vpop.xlane.xlu0 %2147
    %v2149 = vsel %vm1523, %v2135, -inf
    %2150 = vmax.xlane.f32.xlu0 %v2149
    %v2151 = vpop.xlane.xlu0 %2150
    %v2152 = vsel %vm1523, %v2136, -inf
    %2153 = vmax.xlane.f32.xlu0 %v2152
    %v2154 = vpop.xlane.xlu0 %2153
    %v2155 = vsel %vm1523, %v2137, -inf
    %2156 = vmax.xlane.f32.xlu0 %v2155
    %v2157 = vpop.xlane.xlu0 %2156
    %v2158 = vsel %vm1523, %v2138, -inf
    %2159 = vmax.xlane.f32.xlu0 %v2158
    %v2160 = vpop.xlane.xlu0 %2159
    %v2161 = vsel %vm1523, %v2139, -inf
    %2162 = vmax.xlane.f32.xlu0 %v2161
    %v2163 = vpop.xlane.xlu0 %2162
    %v2164 = vsub.f32 %v2132, %v2142
    %v2165 = vsub.f32 %v2133, %v2145
    %v2166 = vsub.f32 %v2134, %v2148
    %v2167 = vsub.f32 %v2135, %v2151
    %v2168 = vsub.f32 %v2136, %v2154
    %v2169 = vsub.f32 %v2137, %v2157
    %v2170 = vsub.f32 %v2138, %v2160
    %v2171 = vsub.f32 %v2139, %v2163
    %v2172 = vmul.f32 %v2164, 1.442695
    %v2173 = vpow.pop %v2172
    %v2174 = vmul.f32 %v2165, 1.442695
    %v2175 = vpow.pop %v2174
    %v2176 = vmul.f32 %v2166, 1.442695
    %v2177 = vpow.pop %v2176
    %v2178 = vmul.f32 %v2167, 1.442695
    %v2179 = vpow.pop %v2178
    %v2180 = vmul.f32 %v2168, 1.442695
    %v2181 = vpow.pop %v2180
    %v2182 = vmul.f32 %v2169, 1.442695
    %v2183 = vpow.pop %v2182
    %v2184 = vmul.f32 %v2170, 1.442695
    %v2185 = vpow.pop %v2184
    %v2186 = vmul.f32 %v2171, 1.442695
    %v2187 = vpow.pop %v2186
    %v2188 = vsel %vm1523, %v2173, 0.0
    %2189 = vadd.xlane.f32.xlu0 %v2188
    %v2190 = vpop.xlane.xlu0 %2189
    %v2191 = vsel %vm1523, %v2175, 0.0
    %2192 = vadd.xlane.f32.xlu0 %v2191
    %v2193 = vpop.xlane.xlu0 %2192
    %v2194 = vsel %vm1523, %v2177, 0.0
    %2195 = vadd.xlane.f32.xlu0 %v2194
    %v2196 = vpop.xlane.xlu0 %2195
    %v2197 = vsel %vm1523, %v2179, 0.0
    %2198 = vadd.xlane.f32.xlu0 %v2197
    %v2199 = vpop.xlane.xlu0 %2198
    %v2200 = vsel %vm1523, %v2181, 0.0
    %2201 = vadd.xlane.f32.xlu0 %v2200
    %v2202 = vpop.xlane.xlu0 %2201
    %v2203 = vsel %vm1523, %v2183, 0.0
    %2204 = vadd.xlane.f32.xlu0 %v2203
    %v2205 = vpop.xlane.xlu0 %2204
    %v2206 = vsel %vm1523, %v2185, 0.0
    %2207 = vadd.xlane.f32.xlu0 %v2206
    %v2208 = vpop.xlane.xlu0 %2207
    %v2209 = vsel %vm1523, %v2187, 0.0
    %2210 = vadd.xlane.f32.xlu0 %v2209
    %v2211 = vpop.xlane.xlu0 %2210
    %v2212 = vrcp.pop %v2190
    %v2213 = vrcp.pop %v2193
    %v2214 = vrcp.pop %v2196
    %v2215 = vrcp.pop %v2199
    %v2216 = vrcp.pop %v2202
    %v2217 = vrcp.pop %v2205
    %v2218 = vrcp.pop %v2208
    %v2219 = vrcp.pop %v2211
    %v2220 = vmul.f32 %v2173, %v2212
    %v2221 = vmul.f32 %v2175, %v2213
    %v2222 = vmul.f32 %v2177, %v2214
    %v2223 = vmul.f32 %v2179, %v2215
    %v2224 = vmul.f32 %v2181, %v2216
    %v2225 = vmul.f32 %v2183, %v2217
    %v2226 = vmul.f32 %v2185, %v2218
    %v2227 = vmul.f32 %v2187, %v2219
    %v2229 = vsel %vm1523, %v2220, 0
    %2231 = vmatprep.subr.mxu0 0.0
    %2232 = vmatpush1.msra.mxu0 0.0
    %2233 = vmatprep.subr.mxu0 0.0
    %2234 = vmatpush1.msra.mxu0 0.0
    %2235 = vmatprep.subr.mxu0 0.0
    %2236 = vmatpush1.msra.mxu0 0.0
    %2237 = vmatprep.subr.mxu0 0.0
    %2238 = vmatpush1.msra.mxu0 0.0
    %2239 = vmatprep.subr.mxu0 0.0
    %2240 = vmatpush1.msra.mxu0 0.0
    %2241 = vmatprep.subr.mxu0 0.0
    %2242 = vmatpush1.msra.mxu0 0.0
    %2243 = vmatprep.subr.mxu0 0.0
    %2244 = vmatpush1.msra.mxu0 0.0
    %2245 = vmatprep.subr.mxu0 0.0
    %2246 = vmatpush1.msra.mxu0 0.0
    %2247 = vmatprep.subr.mxu0 0.0
    %2248 = vmatpush1.msra.mxu0 0.0
    %2249 = vmatprep.subr.mxu0 0.0
    %2250 = vmatpush1.msra.mxu0 0.0
    %2251 = vmatprep.subr.mxu0 0.0
    %2252 = vmatpush1.msra.mxu0 0.0
    %2253 = vmatprep.subr.mxu0 0.0
    %2254 = vmatpush1.msra.mxu0 0.0
    %2255 = vmatprep.subr.mxu0 0.0
    %2256 = vmatpush1.msra.mxu0 0.0
    %2257 = vmatprep.subr.mxu0 0.0
    %2258 = vmatpush1.msra.mxu0 0.0
    %2259 = vmatprep.subr.mxu0 0.0
    %2260 = vmatpush1.msra.mxu0 0.0
    %2261 = vmatprep.subr.mxu0 0.0
    %2262 = vmatpush1.msra.mxu0 %v1451
    %2263 = vmatprep.subr.mxu0 0.0
    %2264 = vmatpush2.msra.mxu0 0.0
    %2265 = vmatprep.subr.mxu0 0.0
    %2266 = vmatpush2.msra.mxu0 0.0
    %2267 = vmatprep.subr.mxu0 0.0
    %2268 = vmatpush2.msra.mxu0 0.0
    %2269 = vmatprep.subr.mxu0 0.0
    %2270 = vmatpush2.msra.mxu0 0.0
    %2271 = vmatprep.subr.mxu0 0.0
    %2272 = vmatpush2.msra.mxu0 0.0
    %2273 = vmatprep.subr.mxu0 0.0
    %2274 = vmatpush2.msra.mxu0 0.0
    %2275 = vmatprep.subr.mxu0 0.0
    %2276 = vmatpush2.msra.mxu0 0.0
    %2277 = vmatprep.subr.mxu0 0.0
    %2278 = vmatpush2.msra.mxu0 0.0
    %2279 = vmatprep.subr.mxu0 0.0
    %2280 = vmatpush2.msra.mxu0 0.0
    %2281 = vmatprep.subr.mxu0 0.0
    %2282 = vmatpush2.msra.mxu0 0.0
    %2283 = vmatprep.subr.mxu0 0.0
    %2284 = vmatpush2.msra.mxu0 0.0
    %2285 = vmatprep.subr.mxu0 0.0
    %2286 = vmatpush2.msra.mxu0 0.0
    %2287 = vmatprep.subr.mxu0 0.0
    %2288 = vmatpush2.msra.mxu0 0.0
    %2289 = vmatprep.subr.mxu0 0.0
    %2290 = vmatpush2.msra.mxu0 0.0
    %2291 = vmatprep.subr.mxu0 0.0
    %2292 = vmatpush2.msra.mxu0 0.0
    %2293 = vmatprep.subr.mxu0 0.0
    %2294 = vmatpush2.msra.mxu0 0.0
    %2295 = vmatprep.mubr.f32.mxu0 0.0
    %2296 = vmatmul.mubr.f32.gmra.mxu0 %v2229
    %v2297 = vpop.f32.mrf.mxu0
    %v2298 = vadd.f32 0.0, %v2297
    %v2299 = vpop.f32.mrf.mxu0
    %2300 = vdwg.mxu0
    %v2302 = vsel %vm1523, %v2221, 0
    %2304 = vmatprep.subr.mxu0 0.0
    %2305 = vmatpush1.msra.mxu0 0.0
    %2306 = vmatprep.subr.mxu0 0.0
    %2307 = vmatpush1.msra.mxu0 0.0
    %2308 = vmatprep.subr.mxu0 0.0
    %2309 = vmatpush1.msra.mxu0 0.0
    %2310 = vmatprep.subr.mxu0 0.0
    %2311 = vmatpush1.msra.mxu0 0.0
    %2312 = vmatprep.subr.mxu0 0.0
    %2313 = vmatpush1.msra.mxu0 0.0
    %2314 = vmatprep.subr.mxu0 0.0
    %2315 = vmatpush1.msra.mxu0 0.0
    %2316 = vmatprep.subr.mxu0 0.0
    %2317 = vmatpush1.msra.mxu0 0.0
    %2318 = vmatprep.subr.mxu0 0.0
    %2319 = vmatpush1.msra.mxu0 0.0
    %2320 = vmatprep.subr.mxu0 0.0
    %2321 = vmatpush1.msra.mxu0 0.0
    %2322 = vmatprep.subr.mxu0 0.0
    %2323 = vmatpush1.msra.mxu0 0.0
    %2324 = vmatprep.subr.mxu0 0.0
    %2325 = vmatpush1.msra.mxu0 0.0
    %2326 = vmatprep.subr.mxu0 0.0
    %2327 = vmatpush1.msra.mxu0 0.0
    %2328 = vmatprep.subr.mxu0 0.0
    %2329 = vmatpush1.msra.mxu0 0.0
    %2330 = vmatprep.subr.mxu0 0.0
    %2331 = vmatpush1.msra.mxu0 0.0
    %2332 = vmatprep.subr.mxu0 0.0
    %2333 = vmatpush1.msra.mxu0 0.0
    %2334 = vmatprep.subr.mxu0 0.0
    %2335 = vmatpush1.msra.mxu0 %v1452
    %2336 = vmatprep.subr.mxu0 0.0
    %2337 = vmatpush2.msra.mxu0 0.0
    %2338 = vmatprep.subr.mxu0 0.0
    %2339 = vmatpush2.msra.mxu0 0.0
    %2340 = vmatprep.subr.mxu0 0.0
    %2341 = vmatpush2.msra.mxu0 0.0
    %2342 = vmatprep.subr.mxu0 0.0
    %2343 = vmatpush2.msra.mxu0 0.0
    %2344 = vmatprep.subr.mxu0 0.0
    %2345 = vmatpush2.msra.mxu0 0.0
    %2346 = vmatprep.subr.mxu0 0.0
    %2347 = vmatpush2.msra.mxu0 0.0
    %2348 = vmatprep.subr.mxu0 0.0
    %2349 = vmatpush2.msra.mxu0 0.0
    %2350 = vmatprep.subr.mxu0 0.0
    %2351 = vmatpush2.msra.mxu0 0.0
    %2352 = vmatprep.subr.mxu0 0.0
    %2353 = vmatpush2.msra.mxu0 0.0
    %2354 = vmatprep.subr.mxu0 0.0
    %2355 = vmatpush2.msra.mxu0 0.0
    %2356 = vmatprep.subr.mxu0 0.0
    %2357 = vmatpush2.msra.mxu0 0.0
    %2358 = vmatprep.subr.mxu0 0.0
    %2359 = vmatpush2.msra.mxu0 0.0
    %2360 = vmatprep.subr.mxu0 0.0
    %2361 = vmatpush2.msra.mxu0 0.0
    %2362 = vmatprep.subr.mxu0 0.0
    %2363 = vmatpush2.msra.mxu0 0.0
    %2364 = vmatprep.subr.mxu0 0.0
    %2365 = vmatpush2.msra.mxu0 0.0
    %2366 = vmatprep.subr.mxu0 0.0
    %2367 = vmatpush2.msra.mxu0 0.0
    %2368 = vmatprep.mubr.f32.mxu0 0.0
    %2369 = vmatmul.mubr.f32.gmra.mxu0 %v2302
    %v2370 = vpop.f32.mrf.mxu0
    %v2371 = vadd.f32 0.0, %v2370
    %v2372 = vpop.f32.mrf.mxu0
    %2373 = vdwg.mxu0
    %v2375 = vsel %vm1523, %v2222, 0
    %2377 = vmatprep.subr.mxu0 0.0
    %2378 = vmatpush1.msra.mxu0 0.0
    %2379 = vmatprep.subr.mxu0 0.0
    %2380 = vmatpush1.msra.mxu0 0.0
    %2381 = vmatprep.subr.mxu0 0.0
    %2382 = vmatpush1.msra.mxu0 0.0
    %2383 = vmatprep.subr.mxu0 0.0
    %2384 = vmatpush1.msra.mxu0 0.0
    %2385 = vmatprep.subr.mxu0 0.0
    %2386 = vmatpush1.msra.mxu0 0.0
    %2387 = vmatprep.subr.mxu0 0.0
    %2388 = vmatpush1.msra.mxu0 0.0
    %2389 = vmatprep.subr.mxu0 0.0
    %2390 = vmatpush1.msra.mxu0 0.0
    %2391 = vmatprep.subr.mxu0 0.0
    %2392 = vmatpush1.msra.mxu0 0.0
    %2393 = vmatprep.subr.mxu0 0.0
    %2394 = vmatpush1.msra.mxu0 0.0
    %2395 = vmatprep.subr.mxu0 0.0
    %2396 = vmatpush1.msra.mxu0 0.0
    %2397 = vmatprep.subr.mxu0 0.0
    %2398 = vmatpush1.msra.mxu0 0.0
    %2399 = vmatprep.subr.mxu0 0.0
    %2400 = vmatpush1.msra.mxu0 0.0
    %2401 = vmatprep.subr.mxu0 0.0
    %2402 = vmatpush1.msra.mxu0 0.0
    %2403 = vmatprep.subr.mxu0 0.0
    %2404 = vmatpush1.msra.mxu0 0.0
    %2405 = vmatprep.subr.mxu0 0.0
    %2406 = vmatpush1.msra.mxu0 0.0
    %2407 = vmatprep.subr.mxu0 0.0
    %2408 = vmatpush1.msra.mxu0 %v1453
    %2409 = vmatprep.subr.mxu0 0.0
    %2410 = vmatpush2.msra.mxu0 0.0
    %2411 = vmatprep.subr.mxu0 0.0
    %2412 = vmatpush2.msra.mxu0 0.0
    %2413 = vmatprep.subr.mxu0 0.0
    %2414 = vmatpush2.msra.mxu0 0.0
    %2415 = vmatprep.subr.mxu0 0.0
    %2416 = vmatpush2.msra.mxu0 0.0
    %2417 = vmatprep.subr.mxu0 0.0
    %2418 = vmatpush2.msra.mxu0 0.0
    %2419 = vmatprep.subr.mxu0 0.0
    %2420 = vmatpush2.msra.mxu0 0.0
    %2421 = vmatprep.subr.mxu0 0.0
    %2422 = vmatpush2.msra.mxu0 0.0
    %2423 = vmatprep.subr.mxu0 0.0
    %2424 = vmatpush2.msra.mxu0 0.0
    %2425 = vmatprep.subr.mxu0 0.0
    %2426 = vmatpush2.msra.mxu0 0.0
    %2427 = vmatprep.subr.mxu0 0.0
    %2428 = vmatpush2.msra.mxu0 0.0
    %2429 = vmatprep.subr.mxu0 0.0
    %2430 = vmatpush2.msra.mxu0 0.0
    %2431 = vmatprep.subr.mxu0 0.0
    %2432 = vmatpush2.msra.mxu0 0.0
    %2433 = vmatprep.subr.mxu0 0.0
    %2434 = vmatpush2.msra.mxu0 0.0
    %2435 = vmatprep.subr.mxu0 0.0
    %2436 = vmatpush2.msra.mxu0 0.0
    %2437 = vmatprep.subr.mxu0 0.0
    %2438 = vmatpush2.msra.mxu0 0.0
    %2439 = vmatprep.subr.mxu0 0.0
    %2440 = vmatpush2.msra.mxu0 0.0
    %2441 = vmatprep.mubr.f32.mxu0 0.0
    %2442 = vmatmul.mubr.f32.gmra.mxu0 %v2375
    %v2443 = vpop.f32.mrf.mxu0
    %v2444 = vadd.f32 0.0, %v2443
    %v2445 = vpop.f32.mrf.mxu0
    %2446 = vdwg.mxu0
    %v2448 = vsel %vm1523, %v2223, 0
    %2450 = vmatprep.subr.mxu0 0.0
    %2451 = vmatpush1.msra.mxu0 0.0
    %2452 = vmatprep.subr.mxu0 0.0
    %2453 = vmatpush1.msra.mxu0 0.0
    %2454 = vmatprep.subr.mxu0 0.0
    %2455 = vmatpush1.msra.mxu0 0.0
    %2456 = vmatprep.subr.mxu0 0.0
    %2457 = vmatpush1.msra.mxu0 0.0
    %2458 = vmatprep.subr.mxu0 0.0
    %2459 = vmatpush1.msra.mxu0 0.0
    %2460 = vmatprep.subr.mxu0 0.0
    %2461 = vmatpush1.msra.mxu0 0.0
    %2462 = vmatprep.subr.mxu0 0.0
    %2463 = vmatpush1.msra.mxu0 0.0
    %2464 = vmatprep.subr.mxu0 0.0
    %2465 = vmatpush1.msra.mxu0 0.0
    %2466 = vmatprep.subr.mxu0 0.0
    %2467 = vmatpush1.msra.mxu0 0.0
    %2468 = vmatprep.subr.mxu0 0.0
    %2469 = vmatpush1.msra.mxu0 0.0
    %2470 = vmatprep.subr.mxu0 0.0
    %2471 = vmatpush1.msra.mxu0 0.0
    %2472 = vmatprep.subr.mxu0 0.0
    %2473 = vmatpush1.msra.mxu0 0.0
    %2474 = vmatprep.subr.mxu0 0.0
    %2475 = vmatpush1.msra.mxu0 0.0
    %2476 = vmatprep.subr.mxu0 0.0
    %2477 = vmatpush1.msra.mxu0 0.0
    %2478 = vmatprep.subr.mxu0 0.0
    %2479 = vmatpush1.msra.mxu0 0.0
    %2480 = vmatprep.subr.mxu0 0.0
    %2481 = vmatpush1.msra.mxu0 %v1454
    %2482 = vmatprep.subr.mxu0 0.0
    %2483 = vmatpush2.msra.mxu0 0.0
    %2484 = vmatprep.subr.mxu0 0.0
    %2485 = vmatpush2.msra.mxu0 0.0
    %2486 = vmatprep.subr.mxu0 0.0
    %2487 = vmatpush2.msra.mxu0 0.0
    %2488 = vmatprep.subr.mxu0 0.0
    %2489 = vmatpush2.msra.mxu0 0.0
    %2490 = vmatprep.subr.mxu0 0.0
    %2491 = vmatpush2.msra.mxu0 0.0
    %2492 = vmatprep.subr.mxu0 0.0
    %2493 = vmatpush2.msra.mxu0 0.0
    %2494 = vmatprep.subr.mxu0 0.0
    %2495 = vmatpush2.msra.mxu0 0.0
    %2496 = vmatprep.subr.mxu0 0.0
    %2497 = vmatpush2.msra.mxu0 0.0
    %2498 = vmatprep.subr.mxu0 0.0
    %2499 = vmatpush2.msra.mxu0 0.0
    %2500 = vmatprep.subr.mxu0 0.0
    %2501 = vmatpush2.msra.mxu0 0.0
    %2502 = vmatprep.subr.mxu0 0.0
    %2503 = vmatpush2.msra.mxu0 0.0
    %2504 = vmatprep.subr.mxu0 0.0
    %2505 = vmatpush2.msra.mxu0 0.0
    %2506 = vmatprep.subr.mxu0 0.0
    %2507 = vmatpush2.msra.mxu0 0.0
    %2508 = vmatprep.subr.mxu0 0.0
    %2509 = vmatpush2.msra.mxu0 0.0
    %2510 = vmatprep.subr.mxu0 0.0
    %2511 = vmatpush2.msra.mxu0 0.0
    %2512 = vmatprep.subr.mxu0 0.0
    %2513 = vmatpush2.msra.mxu0 0.0
    %2514 = vmatprep.mubr.f32.mxu0 0.0
    %2515 = vmatmul.mubr.f32.gmra.mxu0 %v2448
    %v2516 = vpop.f32.mrf.mxu0
    %v2517 = vadd.f32 0.0, %v2516
    %v2518 = vpop.f32.mrf.mxu0
    %2519 = vdwg.mxu0
    %v2521 = vsel %vm1523, %v2224, 0
    %2523 = vmatprep.subr.mxu0 0.0
    %2524 = vmatpush1.msra.mxu0 0.0
    %2525 = vmatprep.subr.mxu0 0.0
    %2526 = vmatpush1.msra.mxu0 0.0
    %2527 = vmatprep.subr.mxu0 0.0
    %2528 = vmatpush1.msra.mxu0 0.0
    %2529 = vmatprep.subr.mxu0 0.0
    %2530 = vmatpush1.msra.mxu0 0.0
    %2531 = vmatprep.subr.mxu0 0.0
    %2532 = vmatpush1.msra.mxu0 0.0
    %2533 = vmatprep.subr.mxu0 0.0
    %2534 = vmatpush1.msra.mxu0 0.0
    %2535 = vmatprep.subr.mxu0 0.0
    %2536 = vmatpush1.msra.mxu0 0.0
    %2537 = vmatprep.subr.mxu0 0.0
    %2538 = vmatpush1.msra.mxu0 0.0
    %2539 = vmatprep.subr.mxu0 0.0
    %2540 = vmatpush1.msra.mxu0 0.0
    %2541 = vmatprep.subr.mxu0 0.0
    %2542 = vmatpush1.msra.mxu0 0.0
    %2543 = vmatprep.subr.mxu0 0.0
    %2544 = vmatpush1.msra.mxu0 0.0
    %2545 = vmatprep.subr.mxu0 0.0
    %2546 = vmatpush1.msra.mxu0 0.0
    %2547 = vmatprep.subr.mxu0 0.0
    %2548 = vmatpush1.msra.mxu0 0.0
    %2549 = vmatprep.subr.mxu0 0.0
    %2550 = vmatpush1.msra.mxu0 0.0
    %2551 = vmatprep.subr.mxu0 0.0
    %2552 = vmatpush1.msra.mxu0 0.0
    %2553 = vmatprep.subr.mxu0 0.0
    %2554 = vmatpush1.msra.mxu0 %v1519
    %2555 = vmatprep.subr.mxu0 0.0
    %2556 = vmatpush2.msra.mxu0 0.0
    %2557 = vmatprep.subr.mxu0 0.0
    %2558 = vmatpush2.msra.mxu0 0.0
    %2559 = vmatprep.subr.mxu0 0.0
    %2560 = vmatpush2.msra.mxu0 0.0
    %2561 = vmatprep.subr.mxu0 0.0
    %2562 = vmatpush2.msra.mxu0 0.0
    %2563 = vmatprep.subr.mxu0 0.0
    %2564 = vmatpush2.msra.mxu0 0.0
    %2565 = vmatprep.subr.mxu0 0.0
    %2566 = vmatpush2.msra.mxu0 0.0
    %2567 = vmatprep.subr.mxu0 0.0
    %2568 = vmatpush2.msra.mxu0 0.0
    %2569 = vmatprep.subr.mxu0 0.0
    %2570 = vmatpush2.msra.mxu0 0.0
    %2571 = vmatprep.subr.mxu0 0.0
    %2572 = vmatpush2.msra.mxu0 0.0
    %2573 = vmatprep.subr.mxu0 0.0
    %2574 = vmatpush2.msra.mxu0 0.0
    %2575 = vmatprep.subr.mxu0 0.0
    %2576 = vmatpush2.msra.mxu0 0.0
    %2577 = vmatprep.subr.mxu0 0.0
    %2578 = vmatpush2.msra.mxu0 0.0
    %2579 = vmatprep.subr.mxu0 0.0
    %2580 = vmatpush2.msra.mxu0 0.0
    %2581 = vmatprep.subr.mxu0 0.0
    %2582 = vmatpush2.msra.mxu0 0.0
    %2583 = vmatprep.subr.mxu0 0.0
    %2584 = vmatpush2.msra.mxu0 0.0
    %2585 = vmatprep.subr.mxu0 0.0
    %2586 = vmatpush2.msra.mxu0 0.0
    %2587 = vmatprep.mubr.f32.mxu0 0.0
    %2588 = vmatmul.mubr.f32.gmra.mxu0 %v2521
    %v2589 = vpop.f32.mrf.mxu0
    %v2590 = vadd.f32 0.0, %v2589
    %v2591 = vpop.f32.mrf.mxu0
    %2592 = vdwg.mxu0
    %v2594 = vsel %vm1523, %v2225, 0
    %2596 = vmatprep.subr.mxu0 0.0
    %2597 = vmatpush1.msra.mxu0 0.0
    %2598 = vmatprep.subr.mxu0 0.0
    %2599 = vmatpush1.msra.mxu0 0.0
    %2600 = vmatprep.subr.mxu0 0.0
    %2601 = vmatpush1.msra.mxu0 0.0
    %2602 = vmatprep.subr.mxu0 0.0
    %2603 = vmatpush1.msra.mxu0 0.0
    %2604 = vmatprep.subr.mxu0 0.0
    %2605 = vmatpush1.msra.mxu0 0.0
    %2606 = vmatprep.subr.mxu0 0.0
    %2607 = vmatpush1.msra.mxu0 0.0
    %2608 = vmatprep.subr.mxu0 0.0
    %2609 = vmatpush1.msra.mxu0 0.0
    %2610 = vmatprep.subr.mxu0 0.0
    %2611 = vmatpush1.msra.mxu0 0.0
    %2612 = vmatprep.subr.mxu0 0.0
    %2613 = vmatpush1.msra.mxu0 0.0
    %2614 = vmatprep.subr.mxu0 0.0
    %2615 = vmatpush1.msra.mxu0 0.0
    %2616 = vmatprep.subr.mxu0 0.0
    %2617 = vmatpush1.msra.mxu0 0.0
    %2618 = vmatprep.subr.mxu0 0.0
    %2619 = vmatpush1.msra.mxu0 0.0
    %2620 = vmatprep.subr.mxu0 0.0
    %2621 = vmatpush1.msra.mxu0 0.0
    %2622 = vmatprep.subr.mxu0 0.0
    %2623 = vmatpush1.msra.mxu0 0.0
    %2624 = vmatprep.subr.mxu0 0.0
    %2625 = vmatpush1.msra.mxu0 0.0
    %2626 = vmatprep.subr.mxu0 0.0
    %2627 = vmatpush1.msra.mxu0 %v1520
    %2628 = vmatprep.subr.mxu0 0.0
    %2629 = vmatpush2.msra.mxu0 0.0
    %2630 = vmatprep.subr.mxu0 0.0
    %2631 = vmatpush2.msra.mxu0 0.0
    %2632 = vmatprep.subr.mxu0 0.0
    %2633 = vmatpush2.msra.mxu0 0.0
    %2634 = vmatprep.subr.mxu0 0.0
    %2635 = vmatpush2.msra.mxu0 0.0
    %2636 = vmatprep.subr.mxu0 0.0
    %2637 = vmatpush2.msra.mxu0 0.0
    %2638 = vmatprep.subr.mxu0 0.0
    %2639 = vmatpush2.msra.mxu0 0.0
    %2640 = vmatprep.subr.mxu0 0.0
    %2641 = vmatpush2.msra.mxu0 0.0
    %2642 = vmatprep.subr.mxu0 0.0
    %2643 = vmatpush2.msra.mxu0 0.0
    %2644 = vmatprep.subr.mxu0 0.0
    %2645 = vmatpush2.msra.mxu0 0.0
    %2646 = vmatprep.subr.mxu0 0.0
    %2647 = vmatpush2.msra.mxu0 0.0
    %2648 = vmatprep.subr.mxu0 0.0
    %2649 = vmatpush2.msra.mxu0 0.0
    %2650 = vmatprep.subr.mxu0 0.0
    %2651 = vmatpush2.msra.mxu0 0.0
    %2652 = vmatprep.subr.mxu0 0.0
    %2653 = vmatpush2.msra.mxu0 0.0
    %2654 = vmatprep.subr.mxu0 0.0
    %2655 = vmatpush2.msra.mxu0 0.0
    %2656 = vmatprep.subr.mxu0 0.0
    %2657 = vmatpush2.msra.mxu0 0.0
    %2658 = vmatprep.subr.mxu0 0.0
    %2659 = vmatpush2.msra.mxu0 0.0
    %2660 = vmatprep.mubr.f32.mxu0 0.0
    %2661 = vmatmul.mubr.f32.gmra.mxu0 %v2594
    %v2662 = vpop.f32.mrf.mxu0
    %v2663 = vadd.f32 0.0, %v2662
    %v2664 = vpop.f32.mrf.mxu0
    %2665 = vdwg.mxu0
    %v2667 = vsel %vm1523, %v2226, 0
    %2669 = vmatprep.subr.mxu0 0.0
    %2670 = vmatpush1.msra.mxu0 0.0
    %2671 = vmatprep.subr.mxu0 0.0
    %2672 = vmatpush1.msra.mxu0 0.0
    %2673 = vmatprep.subr.mxu0 0.0
    %2674 = vmatpush1.msra.mxu0 0.0
    %2675 = vmatprep.subr.mxu0 0.0
    %2676 = vmatpush1.msra.mxu0 0.0
    %2677 = vmatprep.subr.mxu0 0.0
    %2678 = vmatpush1.msra.mxu0 0.0
    %2679 = vmatprep.subr.mxu0 0.0
    %2680 = vmatpush1.msra.mxu0 0.0
    %2681 = vmatprep.subr.mxu0 0.0
    %2682 = vmatpush1.msra.mxu0 0.0
    %2683 = vmatprep.subr.mxu0 0.0
    %2684 = vmatpush1.msra.mxu0 0.0
    %2685 = vmatprep.subr.mxu0 0.0
    %2686 = vmatpush1.msra.mxu0 0.0
    %2687 = vmatprep.subr.mxu0 0.0
    %2688 = vmatpush1.msra.mxu0 0.0
    %2689 = vmatprep.subr.mxu0 0.0
    %2690 = vmatpush1.msra.mxu0 0.0
    %2691 = vmatprep.subr.mxu0 0.0
    %2692 = vmatpush1.msra.mxu0 0.0
    %2693 = vmatprep.subr.mxu0 0.0
    %2694 = vmatpush1.msra.mxu0 0.0
    %2695 = vmatprep.subr.mxu0 0.0
    %2696 = vmatpush1.msra.mxu0 0.0
    %2697 = vmatprep.subr.mxu0 0.0
    %2698 = vmatpush1.msra.mxu0 0.0
    %2699 = vmatprep.subr.mxu0 0.0
    %2700 = vmatpush1.msra.mxu0 %v1521
    %2701 = vmatprep.subr.mxu0 0.0
    %2702 = vmatpush2.msra.mxu0 0.0
    %2703 = vmatprep.subr.mxu0 0.0
    %2704 = vmatpush2.msra.mxu0 0.0
    %2705 = vmatprep.subr.mxu0 0.0
    %2706 = vmatpush2.msra.mxu0 0.0
    %2707 = vmatprep.subr.mxu0 0.0
    %2708 = vmatpush2.msra.mxu0 0.0
    %2709 = vmatprep.subr.mxu0 0.0
    %2710 = vmatpush2.msra.mxu0 0.0
    %2711 = vmatprep.subr.mxu0 0.0
    %2712 = vmatpush2.msra.mxu0 0.0
    %2713 = vmatprep.subr.mxu0 0.0
    %2714 = vmatpush2.msra.mxu0 0.0
    %2715 = vmatprep.subr.mxu0 0.0
    %2716 = vmatpush2.msra.mxu0 0.0
    %2717 = vmatprep.subr.mxu0 0.0
    %2718 = vmatpush2.msra.mxu0 0.0
    %2719 = vmatprep.subr.mxu0 0.0
    %2720 = vmatpush2.msra.mxu0 0.0
    %2721 = vmatprep.subr.mxu0 0.0
    %2722 = vmatpush2.msra.mxu0 0.0
    %2723 = vmatprep.subr.mxu0 0.0
    %2724 = vmatpush2.msra.mxu0 0.0
    %2725 = vmatprep.subr.mxu0 0.0
    %2726 = vmatpush2.msra.mxu0 0.0
    %2727 = vmatprep.subr.mxu0 0.0
    %2728 = vmatpush2.msra.mxu0 0.0
    %2729 = vmatprep.subr.mxu0 0.0
    %2730 = vmatpush2.msra.mxu0 0.0
    %2731 = vmatprep.subr.mxu0 0.0
    %2732 = vmatpush2.msra.mxu0 0.0
    %2733 = vmatprep.mubr.f32.mxu0 0.0
    %2734 = vmatmul.mubr.f32.gmra.mxu0 %v2667
    %v2735 = vpop.f32.mrf.mxu0
    %v2736 = vadd.f32 0.0, %v2735
    %v2737 = vpop.f32.mrf.mxu0
    %2738 = vdwg.mxu0
    %v2740 = vsel %vm1523, %v2227, 0
    %2742 = vmatprep.subr.mxu0 0.0
    %2743 = vmatpush1.msra.mxu0 0.0
    %2744 = vmatprep.subr.mxu0 0.0
    %2745 = vmatpush1.msra.mxu0 0.0
    %2746 = vmatprep.subr.mxu0 0.0
    %2747 = vmatpush1.msra.mxu0 0.0
    %2748 = vmatprep.subr.mxu0 0.0
    %2749 = vmatpush1.msra.mxu0 0.0
    %2750 = vmatprep.subr.mxu0 0.0
    %2751 = vmatpush1.msra.mxu0 0.0
    %2752 = vmatprep.subr.mxu0 0.0
    %2753 = vmatpush1.msra.mxu0 0.0
    %2754 = vmatprep.subr.mxu0 0.0
    %2755 = vmatpush1.msra.mxu0 0.0
    %2756 = vmatprep.subr.mxu0 0.0
    %2757 = vmatpush1.msra.mxu0 0.0
    %2758 = vmatprep.subr.mxu0 0.0
    %2759 = vmatpush1.msra.mxu0 0.0
    %2760 = vmatprep.subr.mxu0 0.0
    %2761 = vmatpush1.msra.mxu0 0.0
    %2762 = vmatprep.subr.mxu0 0.0
    %2763 = vmatpush1.msra.mxu0 0.0
    %2764 = vmatprep.subr.mxu0 0.0
    %2765 = vmatpush1.msra.mxu0 0.0
    %2766 = vmatprep.subr.mxu0 0.0
    %2767 = vmatpush1.msra.mxu0 0.0
    %2768 = vmatprep.subr.mxu0 0.0
    %2769 = vmatpush1.msra.mxu0 0.0
    %2770 = vmatprep.subr.mxu0 0.0
    %2771 = vmatpush1.msra.mxu0 0.0
    %2772 = vmatprep.subr.mxu0 0.0
    %2773 = vmatpush1.msra.mxu0 %v1522
    %2774 = vmatprep.subr.mxu0 0.0
    %2775 = vmatpush2.msra.mxu0 0.0
    %2776 = vmatprep.subr.mxu0 0.0
    %2777 = vmatpush2.msra.mxu0 0.0
    %2778 = vmatprep.subr.mxu0 0.0
    %2779 = vmatpush2.msra.mxu0 0.0
    %2780 = vmatprep.subr.mxu0 0.0
    %2781 = vmatpush2.msra.mxu0 0.0
    %2782 = vmatprep.subr.mxu0 0.0
    %2783 = vmatpush2.msra.mxu0 0.0
    %2784 = vmatprep.subr.mxu0 0.0
    %2785 = vmatpush2.msra.mxu0 0.0
    %2786 = vmatprep.subr.mxu0 0.0
    %2787 = vmatpush2.msra.mxu0 0.0
    %2788 = vmatprep.subr.mxu0 0.0
    %2789 = vmatpush2.msra.mxu0 0.0
    %2790 = vmatprep.subr.mxu0 0.0
    %2791 = vmatpush2.msra.mxu0 0.0
    %2792 = vmatprep.subr.mxu0 0.0
    %2793 = vmatpush2.msra.mxu0 0.0
    %2794 = vmatprep.subr.mxu0 0.0
    %2795 = vmatpush2.msra.mxu0 0.0
    %2796 = vmatprep.subr.mxu0 0.0
    %2797 = vmatpush2.msra.mxu0 0.0
    %2798 = vmatprep.subr.mxu0 0.0
    %2799 = vmatpush2.msra.mxu0 0.0
    %2800 = vmatprep.subr.mxu0 0.0
    %2801 = vmatpush2.msra.mxu0 0.0
    %2802 = vmatprep.subr.mxu0 0.0
    %2803 = vmatpush2.msra.mxu0 0.0
    %2804 = vmatprep.subr.mxu0 0.0
    %2805 = vmatpush2.msra.mxu0 0.0
    %2806 = vmatprep.mubr.f32.mxu0 0.0
    %2807 = vmatmul.mubr.f32.gmra.mxu0 %v2740
    %v2808 = vpop.f32.mrf.mxu0
    %v2809 = vadd.f32 0.0, %v2808
    %v2810 = vpop.f32.mrf.mxu0
    %2811 = vdwg.mxu0
    %v2812 = vcombine.low %v2298, %v2444
    %v2813 = vcombine.high %v2298, %v2444
    %v2815 = vunpack.c.l.s4 1983009808
    %v2816 = vunpack.c.0.s8 %v2815
    %v2817 = vlaneseq
    %v2818 = vshrl.u32 %v2817, 7
    %v2819 = vsub.s32 %v2816, %v2818
    %v2820 = vrot.slane %v2812, %v2819
    %v2822 = vunpack.c.l.s4 1983009808
    %v2823 = vunpack.c.0.s8 %v2822
    %v2824 = vlaneseq
    %v2825 = vshrl.u32 %v2824, 7
    %v2826 = vsub.s32 %v2823, %v2825
    %v2827 = vrot.slane %v2813, %v2826
    %v2828 = vcombine.low %v2371, %v2517
    %v2829 = vcombine.high %v2371, %v2517
    %v2831 = vunpack.c.l.s4 1983009808
    %v2832 = vunpack.c.0.s8 %v2831
    %v2833 = vlaneseq
    %v2834 = vshrl.u32 %v2833, 7
    %v2835 = vsub.s32 %v2832, %v2834
    %v2836 = vrot.slane %v2828, %v2835
    %v2838 = vunpack.c.l.s4 1983009808
    %v2839 = vunpack.c.0.s8 %v2838
    %v2840 = vlaneseq
    %v2841 = vshrl.u32 %v2840, 7
    %v2842 = vsub.s32 %v2839, %v2841
    %v2843 = vrot.slane %v2829, %v2842
    %v2844 = vcombine.low %v2820, %v2836
    %v2845 = vcombine.high %v2820, %v2836
    %v2847 = vunpack.c.l.s4 1934713408
    %v2848 = vunpack.c.0.s8 %v2847
    %v2849 = vlaneseq
    %v2850 = vshrl.u32 %v2849, 7
    %v2851 = vsub.s32 %v2848, %v2850
    %v2852 = vrot.slane %v2844, %v2851
    %v2854 = vunpack.c.l.s4 1934713408
    %v2855 = vunpack.c.0.s8 %v2854
    %v2856 = vlaneseq
    %v2857 = vshrl.u32 %v2856, 7
    %v2858 = vsub.s32 %v2855, %v2857
    %v2859 = vrot.slane %v2845, %v2858
    %v2860 = vcombine.low %v2827, %v2843
    %v2861 = vcombine.high %v2827, %v2843
    %v2863 = vunpack.c.l.s4 1934713408
    %v2864 = vunpack.c.0.s8 %v2863
    %v2865 = vlaneseq
    %v2866 = vshrl.u32 %v2865, 7
    %v2867 = vsub.s32 %v2864, %v2866
    %v2868 = vrot.slane %v2860, %v2867
    %v2870 = vunpack.c.l.s4 1934713408
    %v2871 = vunpack.c.0.s8 %v2870
    %v2872 = vlaneseq
    %v2873 = vshrl.u32 %v2872, 7
    %v2874 = vsub.s32 %v2871, %v2873
    %v2875 = vrot.slane %v2861, %v2874
    %v2876 = vcombine.high %v2852, 0.0
    %v2877 = vcombine.high %v2859, 0.0
    %v2878 = vcombine.high %v2868, 0.0
    %v2879 = vcombine.high %v2875, 0.0
    %v2880 = vcombine.low %v2590, %v2736
    %v2881 = vcombine.high %v2590, %v2736
    %v2883 = vunpack.c.l.s4 1983009808
    %v2884 = vunpack.c.0.s8 %v2883
    %v2885 = vlaneseq
    %v2886 = vshrl.u32 %v2885, 7
    %v2887 = vsub.s32 %v2884, %v2886
    %v2888 = vrot.slane %v2880, %v2887
    %v2890 = vunpack.c.l.s4 1983009808
    %v2891 = vunpack.c.0.s8 %v2890
    %v2892 = vlaneseq
    %v2893 = vshrl.u32 %v2892, 7
    %v2894 = vsub.s32 %v2891, %v2893
    %v2895 = vrot.slane %v2881, %v2894
    %v2896 = vcombine.low %v2663, %v2809
    %v2897 = vcombine.high %v2663, %v2809
    %v2899 = vunpack.c.l.s4 1983009808
    %v2900 = vunpack.c.0.s8 %v2899
    %v2901 = vlaneseq
    %v2902 = vshrl.u32 %v2901, 7
    %v2903 = vsub.s32 %v2900, %v2902
    %v2904 = vrot.slane %v2896, %v2903
    %v2906 = vunpack.c.l.s4 1983009808
    %v2907 = vunpack.c.0.s8 %v2906
    %v2908 = vlaneseq
    %v2909 = vshrl.u32 %v2908, 7
    %v2910 = vsub.s32 %v2907, %v2909
    %v2911 = vrot.slane %v2897, %v2910
    %v2912 = vcombine.low %v2888, %v2904
    %v2913 = vcombine.high %v2888, %v2904
    %v2915 = vunpack.c.l.s4 1934713408
    %v2916 = vunpack.c.0.s8 %v2915
    %v2917 = vlaneseq
    %v2918 = vshrl.u32 %v2917, 7
    %v2919 = vsub.s32 %v2916, %v2918
    %v2920 = vrot.slane %v2912, %v2919
    %v2922 = vunpack.c.l.s4 1934713408
    %v2923 = vunpack.c.0.s8 %v2922
    %v2924 = vlaneseq
    %v2925 = vshrl.u32 %v2924, 7
    %v2926 = vsub.s32 %v2923, %v2925
    %v2927 = vrot.slane %v2913, %v2926
    %v2928 = vcombine.low %v2895, %v2911
    %v2929 = vcombine.high %v2895, %v2911
    %v2931 = vunpack.c.l.s4 1934713408
    %v2932 = vunpack.c.0.s8 %v2931
    %v2933 = vlaneseq
    %v2934 = vshrl.u32 %v2933, 7
    %v2935 = vsub.s32 %v2932, %v2934
    %v2936 = vrot.slane %v2928, %v2935
    %v2938 = vunpack.c.l.s4 1934713408
    %v2939 = vunpack.c.0.s8 %v2938
    %v2940 = vlaneseq
    %v2941 = vshrl.u32 %v2940, 7
    %v2942 = vsub.s32 %v2939, %v2941
    %v2943 = vrot.slane %v2929, %v2942
    %v2944 = vcombine.high %v2920, 0.0
    %v2945 = vcombine.high %v2927, 0.0
    %v2946 = vcombine.high %v2936, 0.0
    %v2947 = vcombine.high %v2943, 0.0
    %v2948 = vcombine.low %v2852, %v2859
    %v2950 = vunpack.c.l.s4 1983009808
    %v2951 = vunpack.c.0.s8 %v2950
    %v2952 = vlaneseq
    %v2953 = vshrl.u32 %v2952, 7
    %v2954 = vsub.s32 %v2951, %v2953
    %v2955 = vrot.slane %v2948, %v2954
    %v2956 = vcombine.low %v2876, %v2877
    %v2958 = vunpack.c.l.s4 1983009808
    %v2959 = vunpack.c.0.s8 %v2958
    %v2960 = vlaneseq
    %v2961 = vshrl.u32 %v2960, 7
    %v2962 = vsub.s32 %v2959, %v2961
    %v2963 = vrot.slane %v2956, %v2962
    %v2964 = vcombine.low %v2868, %v2875
    %v2966 = vunpack.c.l.s4 1983009808
    %v2967 = vunpack.c.0.s8 %v2966
    %v2968 = vlaneseq
    %v2969 = vshrl.u32 %v2968, 7
    %v2970 = vsub.s32 %v2967, %v2969
    %v2971 = vrot.slane %v2964, %v2970
    %v2972 = vcombine.low %v2878, %v2879
    %v2974 = vunpack.c.l.s4 1983009808
    %v2975 = vunpack.c.0.s8 %v2974
    %v2976 = vlaneseq
    %v2977 = vshrl.u32 %v2976, 7
    %v2978 = vsub.s32 %v2975, %v2977
    %v2979 = vrot.slane %v2972, %v2978
    %v2980 = vcombine.low %v2955, %v2963
    %v2981 = vcombine.high %v2955, %v2963
    %v2983 = vunpack.c.l.s4 1934713408
    %v2984 = vunpack.c.0.s8 %v2983
    %v2985 = vlaneseq
    %v2986 = vshrl.u32 %v2985, 7
    %v2987 = vsub.s32 %v2984, %v2986
    %v2988 = vrot.slane %v2980, %v2987
    %v2990 = vunpack.c.l.s4 1934713408
    %v2991 = vunpack.c.0.s8 %v2990
    %v2992 = vlaneseq
    %v2993 = vshrl.u32 %v2992, 7
    %v2994 = vsub.s32 %v2991, %v2993
    %v2995 = vrot.slane %v2981, %v2994
    %v2996 = vcombine.low %v2971, %v2979
    %v2997 = vcombine.high %v2971, %v2979
    %v2999 = vunpack.c.l.s4 1934713408
    %v3000 = vunpack.c.0.s8 %v2999
    %v3001 = vlaneseq
    %v3002 = vshrl.u32 %v3001, 7
    %v3003 = vsub.s32 %v3000, %v3002
    %v3004 = vrot.slane %v2996, %v3003
    %v3006 = vunpack.c.l.s4 1934713408
    %v3007 = vunpack.c.0.s8 %v3006
    %v3008 = vlaneseq
    %v3009 = vshrl.u32 %v3008, 7
    %v3010 = vsub.s32 %v3007, %v3009
    %v3011 = vrot.slane %v2997, %v3010
    %v3012 = vcombine.low %v2988, %v3004
    %v3013 = vcombine.high %v2988, %v3004
    %v3014 = vcombine.low %v2995, %v3011
    %v3015 = vcombine.high %v2995, %v3011
    %v3016 = vcombine.low %v2920, %v2927
    %v3018 = vunpack.c.l.s4 1983009808
    %v3019 = vunpack.c.0.s8 %v3018
    %v3020 = vlaneseq
    %v3021 = vshrl.u32 %v3020, 7
    %v3022 = vsub.s32 %v3019, %v3021
    %v3023 = vrot.slane %v3016, %v3022
    %v3024 = vcombine.low %v2944, %v2945
    %v3026 = vunpack.c.l.s4 1983009808
    %v3027 = vunpack.c.0.s8 %v3026
    %v3028 = vlaneseq
    %v3029 = vshrl.u32 %v3028, 7
    %v3030 = vsub.s32 %v3027, %v3029
    %v3031 = vrot.slane %v3024, %v3030
    %v3032 = vcombine.low %v2936, %v2943
    %v3034 = vunpack.c.l.s4 1983009808
    %v3035 = vunpack.c.0.s8 %v3034
    %v3036 = vlaneseq
    %v3037 = vshrl.u32 %v3036, 7
    %v3038 = vsub.s32 %v3035, %v3037
    %v3039 = vrot.slane %v3032, %v3038
    %v3040 = vcombine.low %v2946, %v2947
    %v3042 = vunpack.c.l.s4 1983009808
    %v3043 = vunpack.c.0.s8 %v3042
    %v3044 = vlaneseq
    %v3045 = vshrl.u32 %v3044, 7
    %v3046 = vsub.s32 %v3043, %v3045
    %v3047 = vrot.slane %v3040, %v3046
    %v3048 = vcombine.low %v3023, %v3031
    %v3049 = vcombine.high %v3023, %v3031
    %v3051 = vunpack.c.l.s4 1934713408
    %v3052 = vunpack.c.0.s8 %v3051
    %v3053 = vlaneseq
    %v3054 = vshrl.u32 %v3053, 7
    %v3055 = vsub.s32 %v3052, %v3054
    %v3056 = vrot.slane %v3048, %v3055
    %v3058 = vunpack.c.l.s4 1934713408
    %v3059 = vunpack.c.0.s8 %v3058
    %v3060 = vlaneseq
    %v3061 = vshrl.u32 %v3060, 7
    %v3062 = vsub.s32 %v3059, %v3061
    %v3063 = vrot.slane %v3049, %v3062
    %v3064 = vcombine.low %v3039, %v3047
    %v3065 = vcombine.high %v3039, %v3047
    %v3067 = vunpack.c.l.s4 1934713408
    %v3068 = vunpack.c.0.s8 %v3067
    %v3069 = vlaneseq
    %v3070 = vshrl.u32 %v3069, 7
    %v3071 = vsub.s32 %v3068, %v3070
    %v3072 = vrot.slane %v3064, %v3071
    %v3074 = vunpack.c.l.s4 1934713408
    %v3075 = vunpack.c.0.s8 %v3074
    %v3076 = vlaneseq
    %v3077 = vshrl.u32 %v3076, 7
    %v3078 = vsub.s32 %v3075, %v3077
    %v3079 = vrot.slane %v3065, %v3078
    %v3080 = vcombine.low %v3056, %v3072
    %v3081 = vcombine.high %v3056, %v3072
    %v3082 = vcombine.low %v3063, %v3079
    %v3083 = vcombine.high %v3063, %v3079
    %3086 = vrot.lane.b32.xlu0 %v3013, 8
    %v3087 = vpop.permute.xlu0 %3086
    %3088 = vrot.lane.b32.xlu0 %v3081, 8
    %v3089 = vpop.permute.xlu0 %3088
    %3094 = vrot.lane.b32.xlu0 %v3014, 16
    %v3095 = vpop.permute.xlu0 %3094
    %3096 = vrot.lane.b32.xlu0 %v3082, 16
    %v3097 = vpop.permute.xlu0 %3096
    %3102 = vrot.lane.b32.xlu0 %v3015, 24
    %v3103 = vpop.permute.xlu0 %3102
    %3104 = vrot.lane.b32.xlu0 %v3083, 24
    %v3105 = vpop.permute.xlu0 %3104
    %v3108 = vsel %vm1523, %v3012, %v3087
    %v3109 = vsel %vm1523, %v3080, %v3089
    %vm3110 = vcmask 130048
    %v3111 = vsel %vm3110, %v3108, %v3095
    %v3112 = vsel %vm3110, %v3109, %v3097
    %vm3113 = vcmask 195584
    %v3114 = vsel %vm3113, %v3111, %v3103
    %v3115 = vsel %vm3113, %v3112, %v3105
    %v3117 = vlaneseq
    %v3118 = vshrl.u32 %v3117, 7
    %v3119 = vsub.s32 0, %v3118
    %v3120 = vrot.slane %v395, %v3119
    %v3123 = vsel %vm332, %v3114, 0
    %v3126 = vsel %vm332, %v3115, 0
    %3128 = vmatprep.subr.mxu0 0.0
    %3129 = vmatpush1.msra.mxu0 0.0
    %3130 = vmatprep.subr.mxu0 0.0
    %3131 = vmatpush1.msra.mxu0 0.0
    %3132 = vmatprep.subr.mxu0 0.0
    %3133 = vmatpush1.msra.mxu0 0.0
    %3134 = vmatprep.subr.mxu0 0.0
    %3135 = vmatpush1.msra.mxu0 0.0
    %3136 = vmatprep.subr.mxu0 0.0
    %3137 = vmatpush1.msra.mxu0 0.0
    %3138 = vmatprep.subr.mxu0 0.0
    %3139 = vmatpush1.msra.mxu0 0.0
    %3140 = vmatprep.subr.mxu0 0.0
    %3141 = vmatpush1.msra.mxu0 0.0
    %3142 = vmatprep.subr.mxu0 0.0
    %3143 = vmatpush1.msra.mxu0 0.0
    %3144 = vmatprep.subr.mxu0 0.0
    %3145 = vmatpush1.msra.mxu0 0.0
    %3146 = vmatprep.subr.mxu0 0.0
    %3147 = vmatpush1.msra.mxu0 0.0
    %3148 = vmatprep.subr.mxu0 0.0
    %3149 = vmatpush1.msra.mxu0 0.0
    %3150 = vmatprep.subr.mxu0 0.0
    %3151 = vmatpush1.msra.mxu0 0.0
    %3152 = vmatprep.subr.mxu0 0.0
    %3153 = vmatpush1.msra.mxu0 %v394
    %3154 = vmatprep.subr.mxu0 0.0
    %3155 = vmatpush1.msra.mxu0 %v393
    %3156 = vmatprep.subr.mxu0 0.0
    %3157 = vmatpush1.msra.mxu0 %v392
    %3158 = vmatprep.subr.mxu0 0.0
    %3159 = vmatpush1.msra.mxu0 %v391
    %3160 = vmatprep.subr.mxu0 0.0
    %3161 = vmatpush2.msra.mxu0 0.0
    %3162 = vmatprep.subr.mxu0 0.0
    %3163 = vmatpush2.msra.mxu0 0.0
    %3164 = vmatprep.subr.mxu0 0.0
    %3165 = vmatpush2.msra.mxu0 0.0
    %3166 = vmatprep.subr.mxu0 0.0
    %3167 = vmatpush2.msra.mxu0 0.0
    %3168 = vmatprep.subr.mxu0 0.0
    %3169 = vmatpush2.msra.mxu0 0.0
    %3170 = vmatprep.subr.mxu0 0.0
    %3171 = vmatpush2.msra.mxu0 0.0
    %3172 = vmatprep.subr.mxu0 0.0
    %3173 = vmatpush2.msra.mxu0 0.0
    %3174 = vmatprep.subr.mxu0 0.0
    %3175 = vmatpush2.msra.mxu0 0.0
    %3176 = vmatprep.subr.mxu0 0.0
    %3177 = vmatpush2.msra.mxu0 0.0
    %3178 = vmatprep.subr.mxu0 0.0
    %3179 = vmatpush2.msra.mxu0 0.0
    %3180 = vmatprep.subr.mxu0 0.0
    %3181 = vmatpush2.msra.mxu0 0.0
    %3182 = vmatprep.subr.mxu0 0.0
    %3183 = vmatpush2.msra.mxu0 0.0
    %3184 = vmatprep.subr.mxu0 0.0
    %3185 = vmatpush2.msra.mxu0 0.0
    %3186 = vmatprep.subr.mxu0 0.0
    %3187 = vmatpush2.msra.mxu0 0.0
    %3188 = vmatprep.subr.mxu0 0.0
    %3189 = vmatpush2.msra.mxu0 0.0
    %3190 = vmatprep.subr.mxu0 0.0
    %3191 = vmatpush2.msra.mxu0 0.0
    %3192 = vmatprep.mubr.f32.mxu0 0.0
    %3193 = vmatmul.mubr.f32.gmra.mxu0 %v3123
    %v3194 = vpop.f32.mrf.mxu0
    %v3195 = vadd.f32 %v3120, %v3194
    %v3196 = vpop.f32.mrf.mxu0
    %3197 = vmatprep.mubr.f32.mxu0 0.0
    %3198 = vmatmul.mubr.f32.gmra.mxu0 %v3126
    %v3199 = vpop.f32.mrf.mxu0
    %v3200 = vadd.f32 %v3120, %v3199
    %v3201 = vpop.f32.mrf.mxu0
    %3202 = vdwg.mxu0
    %v3203 = vadd.f32 %v293, %v3195
    %v3204 = vadd.f32 %v294, %v3200
    %v3205 = vld [vmem:[%s53] sm:$0x1]
    %v3206 = vld [vmem:[%s55] sm:$0x1]
    %v3207 = vsel %vm332, %v3203, 0.0
    %3208 = vadd.xlane.f32.xlu0 %v3207
    %v3209 = vpop.xlane.xlu0 %3208
    %v3210 = vsel %vm332, %v3204, 0.0
    %3211 = vadd.xlane.f32.xlu0 %v3210
    %v3212 = vpop.xlane.xlu0 %3211
    %v3213 = vmul.f32 %v3209, %v339
    %v3214 = vmul.f32 %v3212, %v339
    %v3215 = vsub.f32 %v3203, %v3213
    %v3216 = vsub.f32 %v3204, %v3214
    %v3217 = vmul.f32 %v3215, %v3215
    %v3218 = vmul.f32 %v3216, %v3216
    %v3219 = vsel %vm332, %v3217, 0.0
    %3220 = vadd.xlane.f32.xlu0 %v3219
    %v3221 = vpop.xlane.xlu0 %3220
    %v3222 = vsel %vm332, %v3218, 0.0
    %3223 = vadd.xlane.f32.xlu0 %v3222
    %v3224 = vpop.xlane.xlu0 %3223
    %v3225 = vmul.f32 %v3221, %v339
    %v3226 = vmul.f32 %v3224, %v339
    %v3228 = vlaneseq
    %v3229 = vshrl.u32 %v3228, 7
    %v3230 = vsub.s32 0, %v3229
    %v3231 = vrot.slane %v3205, %v3230
    %v3233 = vmul.f32 %v3231, %v3215
    %v3234 = vmul.f32 %v3231, %v3216
    %v3235 = vadd.f32 %v3225, 1e-06
    %v3236 = vadd.f32 %v3226, 1e-06
    %v3237 = vrsqrt.pop %v3235
    %v3238 = vrsqrt.pop %v3236
    %v3239 = vmul.f32 %v3233, %v3237
    %v3240 = vmul.f32 %v3234, %v3238
    %v3242 = vlaneseq
    %v3243 = vshrl.u32 %v3242, 7
    %v3244 = vsub.s32 0, %v3243
    %v3245 = vrot.slane %v3206, %v3244
    %v3247 = vadd.f32 %v3239, %v3245
    %v3248 = vadd.f32 %v3240, %v3245
    %v3249 = vld [vmem:[#allocation8] sm:$0xff]
    %v3250 = vld [vmem:[#allocation8 + $0x8] sm:$0xff]
    %v3251 = vld [vmem:[#allocation8 + $0x10] sm:$0xff]
    %v3252 = vld [vmem:[#allocation8 + $0x18] sm:$0xff]
    %v3253 = vld [vmem:[#allocation10] sm:$0x1]
    %v3254 = vld [vmem:[#allocation11] sm:$0xff]
    %v3255 = vld [vmem:[#allocation11 + $0x8] sm:$0xff]
    %v3256 = vld [vmem:[#allocation11 + $0x10] sm:$0xff]
    %v3257 = vld [vmem:[#allocation11 + $0x18] sm:$0xff]
    %v3258 = vld [vmem:[#allocation13] sm:$0x1]
    %v3259 = vld [vmem:[#allocation14] sm:$0xff]
    %v3260 = vld [vmem:[#allocation14 + $0x8] sm:$0xff]
    %v3261 = vld [vmem:[#allocation14 + $0x10] sm:$0xff]
    %v3262 = vld [vmem:[#allocation14 + $0x18] sm:$0xff]
    %v3263 = vld [vmem:[#allocation16] sm:$0x1]
    %v3264 = vld [vmem:[#allocation17] sm:$0xff]
    %v3265 = vld [vmem:[#allocation17 + $0x8] sm:$0xff]
    %v3266 = vld [vmem:[#allocation17 + $0x10] sm:$0xff]
    %v3267 = vld [vmem:[#allocation17 + $0x18] sm:$0xff]
    %v3268 = vld [vmem:[#allocation19] sm:$0x1]
    %v3270 = vlaneseq
    %v3271 = vshrl.u32 %v3270, 7
    %v3272 = vsub.s32 0, %v3271
    %v3273 = vrot.slane %v3253, %v3272
    %v3276 = vsel %vm332, %v3247, 0
    %v3279 = vsel %vm332, %v3248, 0
    %3281 = vmatprep.subr.mxu0 0.0
    %3282 = vmatpush1.msra.mxu0 0.0
    %3283 = vmatprep.subr.mxu0 0.0
    %3284 = vmatpush1.msra.mxu0 0.0
    %3285 = vmatprep.subr.mxu0 0.0
    %3286 = vmatpush1.msra.mxu0 0.0
    %3287 = vmatprep.subr.mxu0 0.0
    %3288 = vmatpush1.msra.mxu0 0.0
    %3289 = vmatprep.subr.mxu0 0.0
    %3290 = vmatpush1.msra.mxu0 0.0
    %3291 = vmatprep.subr.mxu0 0.0
    %3292 = vmatpush1.msra.mxu0 0.0
    %3293 = vmatprep.subr.mxu0 0.0
    %3294 = vmatpush1.msra.mxu0 0.0
    %3295 = vmatprep.subr.mxu0 0.0
    %3296 = vmatpush1.msra.mxu0 0.0
    %3297 = vmatprep.subr.mxu0 0.0
    %3298 = vmatpush1.msra.mxu0 0.0
    %3299 = vmatprep.subr.mxu0 0.0
    %3300 = vmatpush1.msra.mxu0 0.0
    %3301 = vmatprep.subr.mxu0 0.0
    %3302 = vmatpush1.msra.mxu0 0.0
    %3303 = vmatprep.subr.mxu0 0.0
    %3304 = vmatpush1.msra.mxu0 0.0
    %3305 = vmatprep.subr.mxu0 0.0
    %3306 = vmatpush1.msra.mxu0 %v3252
    %3307 = vmatprep.subr.mxu0 0.0
    %3308 = vmatpush1.msra.mxu0 %v3251
    %3309 = vmatprep.subr.mxu0 0.0
    %3310 = vmatpush1.msra.mxu0 %v3250
    %3311 = vmatprep.subr.mxu0 0.0
    %3312 = vmatpush1.msra.mxu0 %v3249
    %3313 = vmatprep.subr.mxu0 0.0
    %3314 = vmatpush2.msra.mxu0 0.0
    %3315 = vmatprep.subr.mxu0 0.0
    %3316 = vmatpush2.msra.mxu0 0.0
    %3317 = vmatprep.subr.mxu0 0.0
    %3318 = vmatpush2.msra.mxu0 0.0
    %3319 = vmatprep.subr.mxu0 0.0
    %3320 = vmatpush2.msra.mxu0 0.0
    %3321 = vmatprep.subr.mxu0 0.0
    %3322 = vmatpush2.msra.mxu0 0.0
    %3323 = vmatprep.subr.mxu0 0.0
    %3324 = vmatpush2.msra.mxu0 0.0
    %3325 = vmatprep.subr.mxu0 0.0
    %3326 = vmatpush2.msra.mxu0 0.0
    %3327 = vmatprep.subr.mxu0 0.0
    %3328 = vmatpush2.msra.mxu0 0.0
    %3329 = vmatprep.subr.mxu0 0.0
    %3330 = vmatpush2.msra.mxu0 0.0
    %3331 = vmatprep.subr.mxu0 0.0
    %3332 = vmatpush2.msra.mxu0 0.0
    %3333 = vmatprep.subr.mxu0 0.0
    %3334 = vmatpush2.msra.mxu0 0.0
    %3335 = vmatprep.subr.mxu0 0.0
    %3336 = vmatpush2.msra.mxu0 0.0
    %3337 = vmatprep.subr.mxu0 0.0
    %3338 = vmatpush2.msra.mxu0 0.0
    %3339 = vmatprep.subr.mxu0 0.0
    %3340 = vmatpush2.msra.mxu0 0.0
    %3341 = vmatprep.subr.mxu0 0.0
    %3342 = vmatpush2.msra.mxu0 0.0
    %3343 = vmatprep.subr.mxu0 0.0
    %3344 = vmatpush2.msra.mxu0 0.0
    %3345 = vmatprep.mubr.f32.mxu0 0.0
    %3346 = vmatmul.mubr.f32.gmra.mxu0 %v3276
    %v3347 = vpop.f32.mrf.mxu0
    %v3348 = vadd.f32 %v3273, %v3347
    %v3349 = vpop.f32.mrf.mxu0
    %3350 = vmatprep.mubr.f32.mxu0 0.0
    %3351 = vmatmul.mubr.f32.gmra.mxu0 %v3279
    %v3352 = vpop.f32.mrf.mxu0
    %v3353 = vadd.f32 %v3273, %v3352
    %v3354 = vpop.f32.mrf.mxu0
    %3355 = vdwg.mxu0
    %v3356 = vmul.f32 %v3348, 0.35355338
    %v3357 = vmul.f32 %v3353, 0.35355338
    %v3359 = vlaneseq
    %v3360 = vshrl.u32 %v3359, 7
    %v3361 = vsub.s32 0, %v3360
    %v3362 = vrot.slane %v3258, %v3361
    %v3365 = vsel %vm332, %v295, 0
    %v3368 = vsel %vm332, %v296, 0
    %3370 = vmatprep.subr.mxu0 0.0
    %3371 = vmatpush1.msra.mxu0 0.0
    %3372 = vmatprep.subr.mxu0 0.0
    %3373 = vmatpush1.msra.mxu0 0.0
    %3374 = vmatprep.subr.mxu0 0.0
    %3375 = vmatpush1.msra.mxu0 0.0
    %3376 = vmatprep.subr.mxu0 0.0
    %3377 = vmatpush1.msra.mxu0 0.0
    %3378 = vmatprep.subr.mxu0 0.0
    %3379 = vmatpush1.msra.mxu0 0.0
    %3380 = vmatprep.subr.mxu0 0.0
    %3381 = vmatpush1.msra.mxu0 0.0
    %3382 = vmatprep.subr.mxu0 0.0
    %3383 = vmatpush1.msra.mxu0 0.0
    %3384 = vmatprep.subr.mxu0 0.0
    %3385 = vmatpush1.msra.mxu0 0.0
    %3386 = vmatprep.subr.mxu0 0.0
    %3387 = vmatpush1.msra.mxu0 0.0
    %3388 = vmatprep.subr.mxu0 0.0
    %3389 = vmatpush1.msra.mxu0 0.0
    %3390 = vmatprep.subr.mxu0 0.0
    %3391 = vmatpush1.msra.mxu0 0.0
    %3392 = vmatprep.subr.mxu0 0.0
    %3393 = vmatpush1.msra.mxu0 0.0
    %3394 = vmatprep.subr.mxu0 0.0
    %3395 = vmatpush1.msra.mxu0 %v3257
    %3396 = vmatprep.subr.mxu0 0.0
    %3397 = vmatpush1.msra.mxu0 %v3256
    %3398 = vmatprep.subr.mxu0 0.0
    %3399 = vmatpush1.msra.mxu0 %v3255
    %3400 = vmatprep.subr.mxu0 0.0
    %3401 = vmatpush1.msra.mxu0 %v3254
    %3402 = vmatprep.subr.mxu0 0.0
    %3403 = vmatpush2.msra.mxu0 0.0
    %3404 = vmatprep.subr.mxu0 0.0
    %3405 = vmatpush2.msra.mxu0 0.0
    %3406 = vmatprep.subr.mxu0 0.0
    %3407 = vmatpush2.msra.mxu0 0.0
    %3408 = vmatprep.subr.mxu0 0.0
    %3409 = vmatpush2.msra.mxu0 0.0
    %3410 = vmatprep.subr.mxu0 0.0
    %3411 = vmatpush2.msra.mxu0 0.0
    %3412 = vmatprep.subr.mxu0 0.0
    %3413 = vmatpush2.msra.mxu0 0.0
    %3414 = vmatprep.subr.mxu0 0.0
    %3415 = vmatpush2.msra.mxu0 0.0
    %3416 = vmatprep.subr.mxu0 0.0
    %3417 = vmatpush2.msra.mxu0 0.0
    %3418 = vmatprep.subr.mxu0 0.0
    %3419 = vmatpush2.msra.mxu0 0.0
    %3420 = vmatprep.subr.mxu0 0.0
    %3421 = vmatpush2.msra.mxu0 0.0
    %3422 = vmatprep.subr.mxu0 0.0
    %3423 = vmatpush2.msra.mxu0 0.0
    %3424 = vmatprep.subr.mxu0 0.0
    %3425 = vmatpush2.msra.mxu0 0.0
    %3426 = vmatprep.subr.mxu0 0.0
    %3427 = vmatpush2.msra.mxu0 0.0
    %3428 = vmatprep.subr.mxu0 0.0
    %3429 = vmatpush2.msra.mxu0 0.0
    %3430 = vmatprep.subr.mxu0 0.0
    %3431 = vmatpush2.msra.mxu0 0.0
    %3432 = vmatprep.subr.mxu0 0.0
    %3433 = vmatpush2.msra.mxu0 0.0
    %3434 = vmatprep.mubr.f32.mxu0 0.0
    %3435 = vmatmul.mubr.f32.gmra.mxu0 %v3365
    %v3436 = vpop.f32.mrf.mxu0
    %v3437 = vadd.f32 %v3362, %v3436
    %v3438 = vpop.f32.mrf.mxu0
    %3439 = vmatprep.mubr.f32.mxu0 0.0
    %3440 = vmatmul.mubr.f32.gmra.mxu0 %v3368
    %v3441 = vpop.f32.mrf.mxu0
    %v3442 = vadd.f32 %v3362, %v3441
    %v3443 = vpop.f32.mrf.mxu0
    %3444 = vdwg.mxu0
    %v3446 = vlaneseq
    %v3447 = vshrl.u32 %v3446, 7
    %v3448 = vsub.s32 0, %v3447
    %v3449 = vrot.slane %v3263, %v3448
    %3451 = vmatprep.subr.mxu0 0.0
    %3452 = vmatpush1.msra.mxu0 0.0
    %3453 = vmatprep.subr.mxu0 0.0
    %3454 = vmatpush1.msra.mxu0 0.0
    %3455 = vmatprep.subr.mxu0 0.0
    %3456 = vmatpush1.msra.mxu0 0.0
    %3457 = vmatprep.subr.mxu0 0.0
    %3458 = vmatpush1.msra.mxu0 0.0
    %3459 = vmatprep.subr.mxu0 0.0
    %3460 = vmatpush1.msra.mxu0 0.0
    %3461 = vmatprep.subr.mxu0 0.0
    %3462 = vmatpush1.msra.mxu0 0.0
    %3463 = vmatprep.subr.mxu0 0.0
    %3464 = vmatpush1.msra.mxu0 0.0
    %3465 = vmatprep.subr.mxu0 0.0
    %3466 = vmatpush1.msra.mxu0 0.0
    %3467 = vmatprep.subr.mxu0 0.0
    %3468 = vmatpush1.msra.mxu0 0.0
    %3469 = vmatprep.subr.mxu0 0.0
    %3470 = vmatpush1.msra.mxu0 0.0
    %3471 = vmatprep.subr.mxu0 0.0
    %3472 = vmatpush1.msra.mxu0 0.0
    %3473 = vmatprep.subr.mxu0 0.0
    %3474 = vmatpush1.msra.mxu0 0.0
    %3475 = vmatprep.subr.mxu0 0.0
    %3476 = vmatpush1.msra.mxu0 %v3262
    %3477 = vmatprep.subr.mxu0 0.0
    %3478 = vmatpush1.msra.mxu0 %v3261
    %3479 = vmatprep.subr.mxu0 0.0
    %3480 = vmatpush1.msra.mxu0 %v3260
    %3481 = vmatprep.subr.mxu0 0.0
    %3482 = vmatpush1.msra.mxu0 %v3259
    %3483 = vmatprep.subr.mxu0 0.0
    %3484 = vmatpush2.msra.mxu0 0.0
    %3485 = vmatprep.subr.mxu0 0.0
    %3486 = vmatpush2.msra.mxu0 0.0
    %3487 = vmatprep.subr.mxu0 0.0
    %3488 = vmatpush2.msra.mxu0 0.0
    %3489 = vmatprep.subr.mxu0 0.0
    %3490 = vmatpush2.msra.mxu0 0.0
    %3491 = vmatprep.subr.mxu0 0.0
    %3492 = vmatpush2.msra.mxu0 0.0
    %3493 = vmatprep.subr.mxu0 0.0
    %3494 = vmatpush2.msra.mxu0 0.0
    %3495 = vmatprep.subr.mxu0 0.0
    %3496 = vmatpush2.msra.mxu0 0.0
    %3497 = vmatprep.subr.mxu0 0.0
    %3498 = vmatpush2.msra.mxu0 0.0
    %3499 = vmatprep.subr.mxu0 0.0
    %3500 = vmatpush2.msra.mxu0 0.0
    %3501 = vmatprep.subr.mxu0 0.0
    %3502 = vmatpush2.msra.mxu0 0.0
    %3503 = vmatprep.subr.mxu0 0.0
    %3504 = vmatpush2.msra.mxu0 0.0
    %3505 = vmatprep.subr.mxu0 0.0
    %3506 = vmatpush2.msra.mxu0 0.0
    %3507 = vmatprep.subr.mxu0 0.0
    %3508 = vmatpush2.msra.mxu0 0.0
    %3509 = vmatprep.subr.mxu0 0.0
    %3510 = vmatpush2.msra.mxu0 0.0
    %3511 = vmatprep.subr.mxu0 0.0
    %3512 = vmatpush2.msra.mxu0 0.0
    %3513 = vmatprep.subr.mxu0 0.0
    %3514 = vmatpush2.msra.mxu0 0.0
    %3515 = vmatprep.mubr.f32.mxu0 0.0
    %3516 = vmatmul.mubr.f32.gmra.mxu0 %v3365
    %v3517 = vpop.f32.mrf.mxu0
    %v3518 = vadd.f32 %v3449, %v3517
    %v3519 = vpop.f32.mrf.mxu0
    %3520 = vmatprep.mubr.f32.mxu0 0.0
    %3521 = vmatmul.mubr.f32.gmra.mxu0 %v3368
    %v3522 = vpop.f32.mrf.mxu0
    %v3523 = vadd.f32 %v3449, %v3522
    %v3524 = vpop.f32.mrf.mxu0
    %3525 = vdwg.mxu0
    %3528 = vrot.lane.b32.xlu0 %v3356, 120
    %v3529 = vpop.permute.xlu0 %3528
    %3530 = vrot.lane.b32.xlu0 %v3357, 120
    %v3531 = vpop.permute.xlu0 %3530
    %3534 = vrot.lane.b32.xlu0 %v3356, 112
    %v3535 = vpop.permute.xlu0 %3534
    %3536 = vrot.lane.b32.xlu0 %v3357, 112
    %v3537 = vpop.permute.xlu0 %3536
    %3540 = vrot.lane.b32.xlu0 %v3356, 104
    %v3541 = vpop.permute.xlu0 %3540
    %3542 = vrot.lane.b32.xlu0 %v3357, 104
    %v3543 = vpop.permute.xlu0 %3542
    %v3546 = vcombine.low %v3356, %v3535
    %v3547 = vcombine.high %v3356, %v3535
    %v3549 = vunpack.c.l.s4 1983009808
    %v3550 = vunpack.c.0.s8 %v3549
    %v3551 = vlaneseq
    %v3552 = vshrl.u32 %v3551, 7
    %v3553 = vsub.s32 %v3550, %v3552
    %v3554 = vrot.slane %v3546, %v3553
    %v3556 = vunpack.c.l.s4 1983009808
    %v3557 = vunpack.c.0.s8 %v3556
    %v3558 = vlaneseq
    %v3559 = vshrl.u32 %v3558, 7
    %v3560 = vsub.s32 %v3557, %v3559
    %v3561 = vrot.slane %v3547, %v3560
    %v3562 = vcombine.low %v3529, %v3541
    %v3563 = vcombine.high %v3529, %v3541
    %v3565 = vunpack.c.l.s4 1983009808
    %v3566 = vunpack.c.0.s8 %v3565
    %v3567 = vlaneseq
    %v3568 = vshrl.u32 %v3567, 7
    %v3569 = vsub.s32 %v3566, %v3568
    %v3570 = vrot.slane %v3562, %v3569
    %v3572 = vunpack.c.l.s4 1983009808
    %v3573 = vunpack.c.0.s8 %v3572
    %v3574 = vlaneseq
    %v3575 = vshrl.u32 %v3574, 7
    %v3576 = vsub.s32 %v3573, %v3575
    %v3577 = vrot.slane %v3563, %v3576
    %v3578 = vcombine.low %v3554, %v3570
    %v3579 = vcombine.high %v3554, %v3570
    %v3581 = vunpack.c.l.s4 1934713408
    %v3582 = vunpack.c.0.s8 %v3581
    %v3583 = vlaneseq
    %v3584 = vshrl.u32 %v3583, 7
    %v3585 = vsub.s32 %v3582, %v3584
    %v3586 = vrot.slane %v3578, %v3585
    %v3588 = vunpack.c.l.s4 1934713408
    %v3589 = vunpack.c.0.s8 %v3588
    %v3590 = vlaneseq
    %v3591 = vshrl.u32 %v3590, 7
    %v3592 = vsub.s32 %v3589, %v3591
    %v3593 = vrot.slane %v3579, %v3592
    %v3594 = vcombine.low %v3561, %v3577
    %v3595 = vcombine.high %v3561, %v3577
    %v3597 = vunpack.c.l.s4 1934713408
    %v3598 = vunpack.c.0.s8 %v3597
    %v3599 = vlaneseq
    %v3600 = vshrl.u32 %v3599, 7
    %v3601 = vsub.s32 %v3598, %v3600
    %v3602 = vrot.slane %v3594, %v3601
    %v3604 = vunpack.c.l.s4 1934713408
    %v3605 = vunpack.c.0.s8 %v3604
    %v3606 = vlaneseq
    %v3607 = vshrl.u32 %v3606, 7
    %v3608 = vsub.s32 %v3605, %v3607
    %v3609 = vrot.slane %v3595, %v3608
    %v3610 = vcombine.high %v3586, 0.0
    %v3611 = vcombine.high %v3593, 0.0
    %v3612 = vcombine.high %v3602, 0.0
    %v3613 = vcombine.high %v3609, 0.0
    %v3614 = vcombine.low %v3357, %v3537
    %v3615 = vcombine.high %v3357, %v3537
    %v3617 = vunpack.c.l.s4 1983009808
    %v3618 = vunpack.c.0.s8 %v3617
    %v3619 = vlaneseq
    %v3620 = vshrl.u32 %v3619, 7
    %v3621 = vsub.s32 %v3618, %v3620
    %v3622 = vrot.slane %v3614, %v3621
    %v3624 = vunpack.c.l.s4 1983009808
    %v3625 = vunpack.c.0.s8 %v3624
    %v3626 = vlaneseq
    %v3627 = vshrl.u32 %v3626, 7
    %v3628 = vsub.s32 %v3625, %v3627
    %v3629 = vrot.slane %v3615, %v3628
    %v3630 = vcombine.low %v3531, %v3543
    %v3631 = vcombine.high %v3531, %v3543
    %v3633 = vunpack.c.l.s4 1983009808
    %v3634 = vunpack.c.0.s8 %v3633
    %v3635 = vlaneseq
    %v3636 = vshrl.u32 %v3635, 7
    %v3637 = vsub.s32 %v3634, %v3636
    %v3638 = vrot.slane %v3630, %v3637
    %v3640 = vunpack.c.l.s4 1983009808
    %v3641 = vunpack.c.0.s8 %v3640
    %v3642 = vlaneseq
    %v3643 = vshrl.u32 %v3642, 7
    %v3644 = vsub.s32 %v3641, %v3643
    %v3645 = vrot.slane %v3631, %v3644
    %v3646 = vcombine.low %v3622, %v3638
    %v3647 = vcombine.high %v3622, %v3638
    %v3649 = vunpack.c.l.s4 1934713408
    %v3650 = vunpack.c.0.s8 %v3649
    %v3651 = vlaneseq
    %v3652 = vshrl.u32 %v3651, 7
    %v3653 = vsub.s32 %v3650, %v3652
    %v3654 = vrot.slane %v3646, %v3653
    %v3656 = vunpack.c.l.s4 1934713408
    %v3657 = vunpack.c.0.s8 %v3656
    %v3658 = vlaneseq
    %v3659 = vshrl.u32 %v3658, 7
    %v3660 = vsub.s32 %v3657, %v3659
    %v3661 = vrot.slane %v3647, %v3660
    %v3662 = vcombine.low %v3629, %v3645
    %v3663 = vcombine.high %v3629, %v3645
    %v3665 = vunpack.c.l.s4 1934713408
    %v3666 = vunpack.c.0.s8 %v3665
    %v3667 = vlaneseq
    %v3668 = vshrl.u32 %v3667, 7
    %v3669 = vsub.s32 %v3666, %v3668
    %v3670 = vrot.slane %v3662, %v3669
    %v3672 = vunpack.c.l.s4 1934713408
    %v3673 = vunpack.c.0.s8 %v3672
    %v3674 = vlaneseq
    %v3675 = vshrl.u32 %v3674, 7
    %v3676 = vsub.s32 %v3673, %v3675
    %v3677 = vrot.slane %v3663, %v3676
    %v3678 = vcombine.high %v3654, 0.0
    %v3679 = vcombine.high %v3661, 0.0
    %v3680 = vcombine.high %v3670, 0.0
    %v3681 = vcombine.high %v3677, 0.0
    %v3682 = vcombine.low %v3586, %v3593
    %v3684 = vunpack.c.l.s4 1983009808
    %v3685 = vunpack.c.0.s8 %v3684
    %v3686 = vlaneseq
    %v3687 = vshrl.u32 %v3686, 7
    %v3688 = vsub.s32 %v3685, %v3687
    %v3689 = vrot.slane %v3682, %v3688
    %v3690 = vcombine.low %v3610, %v3611
    %v3692 = vunpack.c.l.s4 1983009808
    %v3693 = vunpack.c.0.s8 %v3692
    %v3694 = vlaneseq
    %v3695 = vshrl.u32 %v3694, 7
    %v3696 = vsub.s32 %v3693, %v3695
    %v3697 = vrot.slane %v3690, %v3696
    %v3698 = vcombine.low %v3602, %v3609
    %v3700 = vunpack.c.l.s4 1983009808
    %v3701 = vunpack.c.0.s8 %v3700
    %v3702 = vlaneseq
    %v3703 = vshrl.u32 %v3702, 7
    %v3704 = vsub.s32 %v3701, %v3703
    %v3705 = vrot.slane %v3698, %v3704
    %v3706 = vcombine.low %v3612, %v3613
    %v3708 = vunpack.c.l.s4 1983009808
    %v3709 = vunpack.c.0.s8 %v3708
    %v3710 = vlaneseq
    %v3711 = vshrl.u32 %v3710, 7
    %v3712 = vsub.s32 %v3709, %v3711
    %v3713 = vrot.slane %v3706, %v3712
    %v3714 = vcombine.low %v3689, %v3697
    %v3715 = vcombine.high %v3689, %v3697
    %v3717 = vunpack.c.l.s4 1934713408
    %v3718 = vunpack.c.0.s8 %v3717
    %v3719 = vlaneseq
    %v3720 = vshrl.u32 %v3719, 7
    %v3721 = vsub.s32 %v3718, %v3720
    %v3722 = vrot.slane %v3714, %v3721
    %v3724 = vunpack.c.l.s4 1934713408
    %v3725 = vunpack.c.0.s8 %v3724
    %v3726 = vlaneseq
    %v3727 = vshrl.u32 %v3726, 7
    %v3728 = vsub.s32 %v3725, %v3727
    %v3729 = vrot.slane %v3715, %v3728
    %v3730 = vcombine.low %v3705, %v3713
    %v3731 = vcombine.high %v3705, %v3713
    %v3733 = vunpack.c.l.s4 1934713408
    %v3734 = vunpack.c.0.s8 %v3733
    %v3735 = vlaneseq
    %v3736 = vshrl.u32 %v3735, 7
    %v3737 = vsub.s32 %v3734, %v3736
    %v3738 = vrot.slane %v3730, %v3737
    %v3740 = vunpack.c.l.s4 1934713408
    %v3741 = vunpack.c.0.s8 %v3740
    %v3742 = vlaneseq
    %v3743 = vshrl.u32 %v3742, 7
    %v3744 = vsub.s32 %v3741, %v3743
    %v3745 = vrot.slane %v3731, %v3744
    %v3746 = vcombine.low %v3722, %v3738
    %v3747 = vcombine.high %v3722, %v3738
    %v3748 = vcombine.low %v3729, %v3745
    %v3749 = vcombine.high %v3729, %v3745
    %v3750 = vcombine.low %v3654, %v3661
    %v3752 = vunpack.c.l.s4 1983009808
    %v3753 = vunpack.c.0.s8 %v3752
    %v3754 = vlaneseq
    %v3755 = vshrl.u32 %v3754, 7
    %v3756 = vsub.s32 %v3753, %v3755
    %v3757 = vrot.slane %v3750, %v3756
    %v3758 = vcombine.low %v3678, %v3679
    %v3760 = vunpack.c.l.s4 1983009808
    %v3761 = vunpack.c.0.s8 %v3760
    %v3762 = vlaneseq
    %v3763 = vshrl.u32 %v3762, 7
    %v3764 = vsub.s32 %v3761, %v3763
    %v3765 = vrot.slane %v3758, %v3764
    %v3766 = vcombine.low %v3670, %v3677
    %v3768 = vunpack.c.l.s4 1983009808
    %v3769 = vunpack.c.0.s8 %v3768
    %v3770 = vlaneseq
    %v3771 = vshrl.u32 %v3770, 7
    %v3772 = vsub.s32 %v3769, %v3771
    %v3773 = vrot.slane %v3766, %v3772
    %v3774 = vcombine.low %v3680, %v3681
    %v3776 = vunpack.c.l.s4 1983009808
    %v3777 = vunpack.c.0.s8 %v3776
    %v3778 = vlaneseq
    %v3779 = vshrl.u32 %v3778, 7
    %v3780 = vsub.s32 %v3777, %v3779
    %v3781 = vrot.slane %v3774, %v3780
    %v3782 = vcombine.low %v3757, %v3765
    %v3783 = vcombine.high %v3757, %v3765
    %v3785 = vunpack.c.l.s4 1934713408
    %v3786 = vunpack.c.0.s8 %v3785
    %v3787 = vlaneseq
    %v3788 = vshrl.u32 %v3787, 7
    %v3789 = vsub.s32 %v3786, %v3788
    %v3790 = vrot.slane %v3782, %v3789
    %v3792 = vunpack.c.l.s4 1934713408
    %v3793 = vunpack.c.0.s8 %v3792
    %v3794 = vlaneseq
    %v3795 = vshrl.u32 %v3794, 7
    %v3796 = vsub.s32 %v3793, %v3795
    %v3797 = vrot.slane %v3783, %v3796
    %v3798 = vcombine.low %v3773, %v3781
    %v3799 = vcombine.high %v3773, %v3781
    %v3801 = vunpack.c.l.s4 1934713408
    %v3802 = vunpack.c.0.s8 %v3801
    %v3803 = vlaneseq
    %v3804 = vshrl.u32 %v3803, 7
    %v3805 = vsub.s32 %v3802, %v3804
    %v3806 = vrot.slane %v3798, %v3805
    %v3808 = vunpack.c.l.s4 1934713408
    %v3809 = vunpack.c.0.s8 %v3808
    %v3810 = vlaneseq
    %v3811 = vshrl.u32 %v3810, 7
    %v3812 = vsub.s32 %v3809, %v3811
    %v3813 = vrot.slane %v3799, %v3812
    %v3814 = vcombine.low %v3790, %v3806
    %v3815 = vcombine.high %v3790, %v3806
    %v3816 = vcombine.low %v3797, %v3813
    %v3817 = vcombine.high %v3797, %v3813
    %3820 = vrot.lane.b32.xlu0 %v3437, 120
    %v3821 = vpop.permute.xlu0 %3820
    %3822 = vrot.lane.b32.xlu0 %v3442, 120
    %v3823 = vpop.permute.xlu0 %3822
    %3826 = vrot.lane.b32.xlu0 %v3437, 112
    %v3827 = vpop.permute.xlu0 %3826
    %3828 = vrot.lane.b32.xlu0 %v3442, 112
    %v3829 = vpop.permute.xlu0 %3828
    %3832 = vrot.lane.b32.xlu0 %v3437, 104
    %v3833 = vpop.permute.xlu0 %3832
    %3834 = vrot.lane.b32.xlu0 %v3442, 104
    %v3835 = vpop.permute.xlu0 %3834
    %v3838 = vcombine.low %v3437, %v3827
    %v3839 = vcombine.high %v3437, %v3827
    %v3841 = vunpack.c.l.s4 1983009808
    %v3842 = vunpack.c.0.s8 %v3841
    %v3843 = vlaneseq
    %v3844 = vshrl.u32 %v3843, 7
    %v3845 = vsub.s32 %v3842, %v3844
    %v3846 = vrot.slane %v3838, %v3845
    %v3848 = vunpack.c.l.s4 1983009808
    %v3849 = vunpack.c.0.s8 %v3848
    %v3850 = vlaneseq
    %v3851 = vshrl.u32 %v3850, 7
    %v3852 = vsub.s32 %v3849, %v3851
    %v3853 = vrot.slane %v3839, %v3852
    %v3854 = vcombine.low %v3821, %v3833
    %v3855 = vcombine.high %v3821, %v3833
    %v3857 = vunpack.c.l.s4 1983009808
    %v3858 = vunpack.c.0.s8 %v3857
    %v3859 = vlaneseq
    %v3860 = vshrl.u32 %v3859, 7
    %v3861 = vsub.s32 %v3858, %v3860
    %v3862 = vrot.slane %v3854, %v3861
    %v3864 = vunpack.c.l.s4 1983009808
    %v3865 = vunpack.c.0.s8 %v3864
    %v3866 = vlaneseq
    %v3867 = vshrl.u32 %v3866, 7
    %v3868 = vsub.s32 %v3865, %v3867
    %v3869 = vrot.slane %v3855, %v3868
    %v3870 = vcombine.low %v3846, %v3862
    %v3871 = vcombine.high %v3846, %v3862
    %v3873 = vunpack.c.l.s4 1934713408
    %v3874 = vunpack.c.0.s8 %v3873
    %v3875 = vlaneseq
    %v3876 = vshrl.u32 %v3875, 7
    %v3877 = vsub.s32 %v3874, %v3876
    %v3878 = vrot.slane %v3870, %v3877
    %v3880 = vunpack.c.l.s4 1934713408
    %v3881 = vunpack.c.0.s8 %v3880
    %v3882 = vlaneseq
    %v3883 = vshrl.u32 %v3882, 7
    %v3884 = vsub.s32 %v3881, %v3883
    %v3885 = vrot.slane %v3871, %v3884
    %v3886 = vcombine.low %v3853, %v3869
    %v3887 = vcombine.high %v3853, %v3869
    %v3889 = vunpack.c.l.s4 1934713408
    %v3890 = vunpack.c.0.s8 %v3889
    %v3891 = vlaneseq
    %v3892 = vshrl.u32 %v3891, 7
    %v3893 = vsub.s32 %v3890, %v3892
    %v3894 = vrot.slane %v3886, %v3893
    %v3896 = vunpack.c.l.s4 1934713408
    %v3897 = vunpack.c.0.s8 %v3896
    %v3898 = vlaneseq
    %v3899 = vshrl.u32 %v3898, 7
    %v3900 = vsub.s32 %v3897, %v3899
    %v3901 = vrot.slane %v3887, %v3900
    %v3902 = vcombine.high %v3878, 0.0
    %v3903 = vcombine.high %v3885, 0.0
    %v3904 = vcombine.high %v3894, 0.0
    %v3905 = vcombine.high %v3901, 0.0
    %v3906 = vcombine.low %v3442, %v3829
    %v3907 = vcombine.high %v3442, %v3829
    %v3909 = vunpack.c.l.s4 1983009808
    %v3910 = vunpack.c.0.s8 %v3909
    %v3911 = vlaneseq
    %v3912 = vshrl.u32 %v3911, 7
    %v3913 = vsub.s32 %v3910, %v3912
    %v3914 = vrot.slane %v3906, %v3913
    %v3916 = vunpack.c.l.s4 1983009808
    %v3917 = vunpack.c.0.s8 %v3916
    %v3918 = vlaneseq
    %v3919 = vshrl.u32 %v3918, 7
    %v3920 = vsub.s32 %v3917, %v3919
    %v3921 = vrot.slane %v3907, %v3920
    %v3922 = vcombine.low %v3823, %v3835
    %v3923 = vcombine.high %v3823, %v3835
    %v3925 = vunpack.c.l.s4 1983009808
    %v3926 = vunpack.c.0.s8 %v3925
    %v3927 = vlaneseq
    %v3928 = vshrl.u32 %v3927, 7
    %v3929 = vsub.s32 %v3926, %v3928
    %v3930 = vrot.slane %v3922, %v3929
    %v3932 = vunpack.c.l.s4 1983009808
    %v3933 = vunpack.c.0.s8 %v3932
    %v3934 = vlaneseq
    %v3935 = vshrl.u32 %v3934, 7
    %v3936 = vsub.s32 %v3933, %v3935
    %v3937 = vrot.slane %v3923, %v3936
    %v3938 = vcombine.low %v3914, %v3930
    %v3939 = vcombine.high %v3914, %v3930
    %v3941 = vunpack.c.l.s4 1934713408
    %v3942 = vunpack.c.0.s8 %v3941
    %v3943 = vlaneseq
    %v3944 = vshrl.u32 %v3943, 7
    %v3945 = vsub.s32 %v3942, %v3944
    %v3946 = vrot.slane %v3938, %v3945
    %v3948 = vunpack.c.l.s4 1934713408
    %v3949 = vunpack.c.0.s8 %v3948
    %v3950 = vlaneseq
    %v3951 = vshrl.u32 %v3950, 7
    %v3952 = vsub.s32 %v3949, %v3951
    %v3953 = vrot.slane %v3939, %v3952
    %v3954 = vcombine.low %v3921, %v3937
    %v3955 = vcombine.high %v3921, %v3937
    %v3957 = vunpack.c.l.s4 1934713408
    %v3958 = vunpack.c.0.s8 %v3957
    %v3959 = vlaneseq
    %v3960 = vshrl.u32 %v3959, 7
    %v3961 = vsub.s32 %v3958, %v3960
    %v3962 = vrot.slane %v3954, %v3961
    %v3964 = vunpack.c.l.s4 1934713408
    %v3965 = vunpack.c.0.s8 %v3964
    %v3966 = vlaneseq
    %v3967 = vshrl.u32 %v3966, 7
    %v3968 = vsub.s32 %v3965, %v3967
    %v3969 = vrot.slane %v3955, %v3968
    %v3970 = vcombine.high %v3946, 0.0
    %v3971 = vcombine.high %v3953, 0.0
    %v3972 = vcombine.high %v3962, 0.0
    %v3973 = vcombine.high %v3969, 0.0
    %v3974 = vcombine.low %v3878, %v3885
    %v3976 = vunpack.c.l.s4 1983009808
    %v3977 = vunpack.c.0.s8 %v3976
    %v3978 = vlaneseq
    %v3979 = vshrl.u32 %v3978, 7
    %v3980 = vsub.s32 %v3977, %v3979
    %v3981 = vrot.slane %v3974, %v3980
    %v3982 = vcombine.low %v3902, %v3903
    %v3984 = vunpack.c.l.s4 1983009808
    %v3985 = vunpack.c.0.s8 %v3984
    %v3986 = vlaneseq
    %v3987 = vshrl.u32 %v3986, 7
    %v3988 = vsub.s32 %v3985, %v3987
    %v3989 = vrot.slane %v3982, %v3988
    %v3990 = vcombine.low %v3894, %v3901
    %v3992 = vunpack.c.l.s4 1983009808
    %v3993 = vunpack.c.0.s8 %v3992
    %v3994 = vlaneseq
    %v3995 = vshrl.u32 %v3994, 7
    %v3996 = vsub.s32 %v3993, %v3995
    %v3997 = vrot.slane %v3990, %v3996
    %v3998 = vcombine.low %v3904, %v3905
    %v4000 = vunpack.c.l.s4 1983009808
    %v4001 = vunpack.c.0.s8 %v4000
    %v4002 = vlaneseq
    %v4003 = vshrl.u32 %v4002, 7
    %v4004 = vsub.s32 %v4001, %v4003
    %v4005 = vrot.slane %v3998, %v4004
    %v4006 = vcombine.low %v3981, %v3989
    %v4007 = vcombine.high %v3981, %v3989
    %v4009 = vunpack.c.l.s4 1934713408
    %v4010 = vunpack.c.0.s8 %v4009
    %v4011 = vlaneseq
    %v4012 = vshrl.u32 %v4011, 7
    %v4013 = vsub.s32 %v4010, %v4012
    %v4014 = vrot.slane %v4006, %v4013
    %v4016 = vunpack.c.l.s4 1934713408
    %v4017 = vunpack.c.0.s8 %v4016
    %v4018 = vlaneseq
    %v4019 = vshrl.u32 %v4018, 7
    %v4020 = vsub.s32 %v4017, %v4019
    %v4021 = vrot.slane %v4007, %v4020
    %v4022 = vcombine.low %v3997, %v4005
    %v4023 = vcombine.high %v3997, %v4005
    %v4025 = vunpack.c.l.s4 1934713408
    %v4026 = vunpack.c.0.s8 %v4025
    %v4027 = vlaneseq
    %v4028 = vshrl.u32 %v4027, 7
    %v4029 = vsub.s32 %v4026, %v4028
    %v4030 = vrot.slane %v4022, %v4029
    %v4032 = vunpack.c.l.s4 1934713408
    %v4033 = vunpack.c.0.s8 %v4032
    %v4034 = vlaneseq
    %v4035 = vshrl.u32 %v4034, 7
    %v4036 = vsub.s32 %v4033, %v4035
    %v4037 = vrot.slane %v4023, %v4036
    %v4038 = vcombine.low %v4014, %v4030
    %v4039 = vcombine.high %v4014, %v4030
    %v4040 = vcombine.low %v4021, %v4037
    %v4041 = vcombine.high %v4021, %v4037
    %v4042 = vcombine.low %v3946, %v3953
    %v4044 = vunpack.c.l.s4 1983009808
    %v4045 = vunpack.c.0.s8 %v4044
    %v4046 = vlaneseq
    %v4047 = vshrl.u32 %v4046, 7
    %v4048 = vsub.s32 %v4045, %v4047
    %v4049 = vrot.slane %v4042, %v4048
    %v4050 = vcombine.low %v3970, %v3971
    %v4052 = vunpack.c.l.s4 1983009808
    %v4053 = vunpack.c.0.s8 %v4052
    %v4054 = vlaneseq
    %v4055 = vshrl.u32 %v4054, 7
    %v4056 = vsub.s32 %v4053, %v4055
    %v4057 = vrot.slane %v4050, %v4056
    %v4058 = vcombine.low %v3962, %v3969
    %v4060 = vunpack.c.l.s4 1983009808
    %v4061 = vunpack.c.0.s8 %v4060
    %v4062 = vlaneseq
    %v4063 = vshrl.u32 %v4062, 7
    %v4064 = vsub.s32 %v4061, %v4063
    %v4065 = vrot.slane %v4058, %v4064
    %v4066 = vcombine.low %v3972, %v3973
    %v4068 = vunpack.c.l.s4 1983009808
    %v4069 = vunpack.c.0.s8 %v4068
    %v4070 = vlaneseq
    %v4071 = vshrl.u32 %v4070, 7
    %v4072 = vsub.s32 %v4069, %v4071
    %v4073 = vrot.slane %v4066, %v4072
    %v4074 = vcombine.low %v4049, %v4057
    %v4075 = vcombine.high %v4049, %v4057
    %v4077 = vunpack.c.l.s4 1934713408
    %v4078 = vunpack.c.0.s8 %v4077
    %v4079 = vlaneseq
    %v4080 = vshrl.u32 %v4079, 7
    %v4081 = vsub.s32 %v4078, %v4080
    %v4082 = vrot.slane %v4074, %v4081
    %v4084 = vunpack.c.l.s4 1934713408
    %v4085 = vunpack.c.0.s8 %v4084
    %v4086 = vlaneseq
    %v4087 = vshrl.u32 %v4086, 7
    %v4088 = vsub.s32 %v4085, %v4087
    %v4089 = vrot.slane %v4075, %v4088
    %v4090 = vcombine.low %v4065, %v4073
    %v4091 = vcombine.high %v4065, %v4073
    %v4093 = vunpack.c.l.s4 1934713408
    %v4094 = vunpack.c.0.s8 %v4093
    %v4095 = vlaneseq
    %v4096 = vshrl.u32 %v4095, 7
    %v4097 = vsub.s32 %v4094, %v4096
    %v4098 = vrot.slane %v4090, %v4097
    %v4100 = vunpack.c.l.s4 1934713408
    %v4101 = vunpack.c.0.s8 %v4100
    %v4102 = vlaneseq
    %v4103 = vshrl.u32 %v4102, 7
    %v4104 = vsub.s32 %v4101, %v4103
    %v4105 = vrot.slane %v4091, %v4104
    %v4106 = vcombine.low %v4082, %v4098
    %v4107 = vcombine.high %v4082, %v4098
    %v4108 = vcombine.low %v4089, %v4105
    %v4109 = vcombine.high %v4089, %v4105
    %4112 = vrot.lane.b32.xlu0 %v3518, 120
    %v4113 = vpop.permute.xlu0 %4112
    %4114 = vrot.lane.b32.xlu0 %v3523, 120
    %v4115 = vpop.permute.xlu0 %4114
    %4118 = vrot.lane.b32.xlu0 %v3518, 112
    %v4119 = vpop.permute.xlu0 %4118
    %4120 = vrot.lane.b32.xlu0 %v3523, 112
    %v4121 = vpop.permute.xlu0 %4120
    %4124 = vrot.lane.b32.xlu0 %v3518, 104
    %v4125 = vpop.permute.xlu0 %4124
    %4126 = vrot.lane.b32.xlu0 %v3523, 104
    %v4127 = vpop.permute.xlu0 %4126
    %v4130 = vcombine.low %v3518, %v4119
    %v4131 = vcombine.high %v3518, %v4119
    %v4133 = vunpack.c.l.s4 1983009808
    %v4134 = vunpack.c.0.s8 %v4133
    %v4135 = vlaneseq
    %v4136 = vshrl.u32 %v4135, 7
    %v4137 = vsub.s32 %v4134, %v4136
    %v4138 = vrot.slane %v4130, %v4137
    %v4140 = vunpack.c.l.s4 1983009808
    %v4141 = vunpack.c.0.s8 %v4140
    %v4142 = vlaneseq
    %v4143 = vshrl.u32 %v4142, 7
    %v4144 = vsub.s32 %v4141, %v4143
    %v4145 = vrot.slane %v4131, %v4144
    %v4146 = vcombine.low %v4113, %v4125
    %v4147 = vcombine.high %v4113, %v4125
    %v4149 = vunpack.c.l.s4 1983009808
    %v4150 = vunpack.c.0.s8 %v4149
    %v4151 = vlaneseq
    %v4152 = vshrl.u32 %v4151, 7
    %v4153 = vsub.s32 %v4150, %v4152
    %v4154 = vrot.slane %v4146, %v4153
    %v4156 = vunpack.c.l.s4 1983009808
    %v4157 = vunpack.c.0.s8 %v4156
    %v4158 = vlaneseq
    %v4159 = vshrl.u32 %v4158, 7
    %v4160 = vsub.s32 %v4157, %v4159
    %v4161 = vrot.slane %v4147, %v4160
    %v4162 = vcombine.low %v4138, %v4154
    %v4163 = vcombine.high %v4138, %v4154
    %v4165 = vunpack.c.l.s4 1934713408
    %v4166 = vunpack.c.0.s8 %v4165
    %v4167 = vlaneseq
    %v4168 = vshrl.u32 %v4167, 7
    %v4169 = vsub.s32 %v4166, %v4168
    %v4170 = vrot.slane %v4162, %v4169
    %v4172 = vunpack.c.l.s4 1934713408
    %v4173 = vunpack.c.0.s8 %v4172
    %v4174 = vlaneseq
    %v4175 = vshrl.u32 %v4174, 7
    %v4176 = vsub.s32 %v4173, %v4175
    %v4177 = vrot.slane %v4163, %v4176
    %v4178 = vcombine.low %v4145, %v4161
    %v4179 = vcombine.high %v4145, %v4161
    %v4181 = vunpack.c.l.s4 1934713408
    %v4182 = vunpack.c.0.s8 %v4181
    %v4183 = vlaneseq
    %v4184 = vshrl.u32 %v4183, 7
    %v4185 = vsub.s32 %v4182, %v4184
    %v4186 = vrot.slane %v4178, %v4185
    %v4188 = vunpack.c.l.s4 1934713408
    %v4189 = vunpack.c.0.s8 %v4188
    %v4190 = vlaneseq
    %v4191 = vshrl.u32 %v4190, 7
    %v4192 = vsub.s32 %v4189, %v4191
    %v4193 = vrot.slane %v4179, %v4192
    %v4194 = vcombine.high %v4170, 0.0
    %v4195 = vcombine.high %v4177, 0.0
    %v4196 = vcombine.high %v4186, 0.0
    %v4197 = vcombine.high %v4193, 0.0
    %v4198 = vcombine.low %v3523, %v4121
    %v4199 = vcombine.high %v3523, %v4121
    %v4201 = vunpack.c.l.s4 1983009808
    %v4202 = vunpack.c.0.s8 %v4201
    %v4203 = vlaneseq
    %v4204 = vshrl.u32 %v4203, 7
    %v4205 = vsub.s32 %v4202, %v4204
    %v4206 = vrot.slane %v4198, %v4205
    %v4208 = vunpack.c.l.s4 1983009808
    %v4209 = vunpack.c.0.s8 %v4208
    %v4210 = vlaneseq
    %v4211 = vshrl.u32 %v4210, 7
    %v4212 = vsub.s32 %v4209, %v4211
    %v4213 = vrot.slane %v4199, %v4212
    %v4214 = vcombine.low %v4115, %v4127
    %v4215 = vcombine.high %v4115, %v4127
    %v4217 = vunpack.c.l.s4 1983009808
    %v4218 = vunpack.c.0.s8 %v4217
    %v4219 = vlaneseq
    %v4220 = vshrl.u32 %v4219, 7
    %v4221 = vsub.s32 %v4218, %v4220
    %v4222 = vrot.slane %v4214, %v4221
    %v4224 = vunpack.c.l.s4 1983009808
    %v4225 = vunpack.c.0.s8 %v4224
    %v4226 = vlaneseq
    %v4227 = vshrl.u32 %v4226, 7
    %v4228 = vsub.s32 %v4225, %v4227
    %v4229 = vrot.slane %v4215, %v4228
    %v4230 = vcombine.low %v4206, %v4222
    %v4231 = vcombine.high %v4206, %v4222
    %v4233 = vunpack.c.l.s4 1934713408
    %v4234 = vunpack.c.0.s8 %v4233
    %v4235 = vlaneseq
    %v4236 = vshrl.u32 %v4235, 7
    %v4237 = vsub.s32 %v4234, %v4236
    %v4238 = vrot.slane %v4230, %v4237
    %v4240 = vunpack.c.l.s4 1934713408
    %v4241 = vunpack.c.0.s8 %v4240
    %v4242 = vlaneseq
    %v4243 = vshrl.u32 %v4242, 7
    %v4244 = vsub.s32 %v4241, %v4243
    %v4245 = vrot.slane %v4231, %v4244
    %v4246 = vcombine.low %v4213, %v4229
    %v4247 = vcombine.high %v4213, %v4229
    %v4249 = vunpack.c.l.s4 1934713408
    %v4250 = vunpack.c.0.s8 %v4249
    %v4251 = vlaneseq
    %v4252 = vshrl.u32 %v4251, 7
    %v4253 = vsub.s32 %v4250, %v4252
    %v4254 = vrot.slane %v4246, %v4253
    %v4256 = vunpack.c.l.s4 1934713408
    %v4257 = vunpack.c.0.s8 %v4256
    %v4258 = vlaneseq
    %v4259 = vshrl.u32 %v4258, 7
    %v4260 = vsub.s32 %v4257, %v4259
    %v4261 = vrot.slane %v4247, %v4260
    %v4262 = vcombine.high %v4238, 0.0
    %v4263 = vcombine.high %v4245, 0.0
    %v4264 = vcombine.high %v4254, 0.0
    %v4265 = vcombine.high %v4261, 0.0
    %v4266 = vcombine.low %v4170, %v4177
    %v4268 = vunpack.c.l.s4 1983009808
    %v4269 = vunpack.c.0.s8 %v4268
    %v4270 = vlaneseq
    %v4271 = vshrl.u32 %v4270, 7
    %v4272 = vsub.s32 %v4269, %v4271
    %v4273 = vrot.slane %v4266, %v4272
    %v4274 = vcombine.low %v4194, %v4195
    %v4276 = vunpack.c.l.s4 1983009808
    %v4277 = vunpack.c.0.s8 %v4276
    %v4278 = vlaneseq
    %v4279 = vshrl.u32 %v4278, 7
    %v4280 = vsub.s32 %v4277, %v4279
    %v4281 = vrot.slane %v4274, %v4280
    %v4282 = vcombine.low %v4186, %v4193
    %v4284 = vunpack.c.l.s4 1983009808
    %v4285 = vunpack.c.0.s8 %v4284
    %v4286 = vlaneseq
    %v4287 = vshrl.u32 %v4286, 7
    %v4288 = vsub.s32 %v4285, %v4287
    %v4289 = vrot.slane %v4282, %v4288
    %v4290 = vcombine.low %v4196, %v4197
    %v4292 = vunpack.c.l.s4 1983009808
    %v4293 = vunpack.c.0.s8 %v4292
    %v4294 = vlaneseq
    %v4295 = vshrl.u32 %v4294, 7
    %v4296 = vsub.s32 %v4293, %v4295
    %v4297 = vrot.slane %v4290, %v4296
    %v4298 = vcombine.low %v4273, %v4281
    %v4299 = vcombine.high %v4273, %v4281
    %v4301 = vunpack.c.l.s4 1934713408
    %v4302 = vunpack.c.0.s8 %v4301
    %v4303 = vlaneseq
    %v4304 = vshrl.u32 %v4303, 7
    %v4305 = vsub.s32 %v4302, %v4304
    %v4306 = vrot.slane %v4298, %v4305
    %v4308 = vunpack.c.l.s4 1934713408
    %v4309 = vunpack.c.0.s8 %v4308
    %v4310 = vlaneseq
    %v4311 = vshrl.u32 %v4310, 7
    %v4312 = vsub.s32 %v4309, %v4311
    %v4313 = vrot.slane %v4299, %v4312
    %v4314 = vcombine.low %v4289, %v4297
    %v4315 = vcombine.high %v4289, %v4297
    %v4317 = vunpack.c.l.s4 1934713408
    %v4318 = vunpack.c.0.s8 %v4317
    %v4319 = vlaneseq
    %v4320 = vshrl.u32 %v4319, 7
    %v4321 = vsub.s32 %v4318, %v4320
    %v4322 = vrot.slane %v4314, %v4321
    %v4324 = vunpack.c.l.s4 1934713408
    %v4325 = vunpack.c.0.s8 %v4324
    %v4326 = vlaneseq
    %v4327 = vshrl.u32 %v4326, 7
    %v4328 = vsub.s32 %v4325, %v4327
    %v4329 = vrot.slane %v4315, %v4328
    %v4330 = vcombine.low %v4306, %v4322
    %v4331 = vcombine.high %v4306, %v4322
    %v4332 = vcombine.low %v4313, %v4329
    %v4333 = vcombine.high %v4313, %v4329
    %v4334 = vcombine.low %v4238, %v4245
    %v4336 = vunpack.c.l.s4 1983009808
    %v4337 = vunpack.c.0.s8 %v4336
    %v4338 = vlaneseq
    %v4339 = vshrl.u32 %v4338, 7
    %v4340 = vsub.s32 %v4337, %v4339
    %v4341 = vrot.slane %v4334, %v4340
    %v4342 = vcombine.low %v4262, %v4263
    %v4344 = vunpack.c.l.s4 1983009808
    %v4345 = vunpack.c.0.s8 %v4344
    %v4346 = vlaneseq
    %v4347 = vshrl.u32 %v4346, 7
    %v4348 = vsub.s32 %v4345, %v4347
    %v4349 = vrot.slane %v4342, %v4348
    %v4350 = vcombine.low %v4254, %v4261
    %v4352 = vunpack.c.l.s4 1983009808
    %v4353 = vunpack.c.0.s8 %v4352
    %v4354 = vlaneseq
    %v4355 = vshrl.u32 %v4354, 7
    %v4356 = vsub.s32 %v4353, %v4355
    %v4357 = vrot.slane %v4350, %v4356
    %v4358 = vcombine.low %v4264, %v4265
    %v4360 = vunpack.c.l.s4 1983009808
    %v4361 = vunpack.c.0.s8 %v4360
    %v4362 = vlaneseq
    %v4363 = vshrl.u32 %v4362, 7
    %v4364 = vsub.s32 %v4361, %v4363
    %v4365 = vrot.slane %v4358, %v4364
    %v4366 = vcombine.low %v4341, %v4349
    %v4367 = vcombine.high %v4341, %v4349
    %v4369 = vunpack.c.l.s4 1934713408
    %v4370 = vunpack.c.0.s8 %v4369
    %v4371 = vlaneseq
    %v4372 = vshrl.u32 %v4371, 7
    %v4373 = vsub.s32 %v4370, %v4372
    %v4374 = vrot.slane %v4366, %v4373
    %v4376 = vunpack.c.l.s4 1934713408
    %v4377 = vunpack.c.0.s8 %v4376
    %v4378 = vlaneseq
    %v4379 = vshrl.u32 %v4378, 7
    %v4380 = vsub.s32 %v4377, %v4379
    %v4381 = vrot.slane %v4367, %v4380
    %v4382 = vcombine.low %v4357, %v4365
    %v4383 = vcombine.high %v4357, %v4365
    %v4385 = vunpack.c.l.s4 1934713408
    %v4386 = vunpack.c.0.s8 %v4385
    %v4387 = vlaneseq
    %v4388 = vshrl.u32 %v4387, 7
    %v4389 = vsub.s32 %v4386, %v4388
    %v4390 = vrot.slane %v4382, %v4389
    %v4392 = vunpack.c.l.s4 1934713408
    %v4393 = vunpack.c.0.s8 %v4392
    %v4394 = vlaneseq
    %v4395 = vshrl.u32 %v4394, 7
    %v4396 = vsub.s32 %v4393, %v4395
    %v4397 = vrot.slane %v4383, %v4396
    %v4398 = vcombine.low %v4374, %v4390
    %v4399 = vcombine.high %v4374, %v4390
    %v4400 = vcombine.low %v4381, %v4397
    %v4401 = vcombine.high %v4381, %v4397
    %v4403 = vsel %vm1523, %v3746, 0
    %v4406 = vsel %vm1523, %v4038, 0
    %4408 = vmatprep.subr.mxu0 0.0
    %4409 = vmatpush1.xpose.msra.mxu0 0.0
    %4410 = vmatprep.subr.mxu0 0.0
    %4411 = vmatpush1.xpose.msra.mxu0 0.0
    %4412 = vmatprep.subr.mxu0 0.0
    %4413 = vmatpush1.xpose.msra.mxu0 0.0
    %4414 = vmatprep.subr.mxu0 0.0
    %4415 = vmatpush1.xpose.msra.mxu0 0.0
    %4416 = vmatprep.subr.mxu0 0.0
    %4417 = vmatpush1.xpose.msra.mxu0 0.0
    %4418 = vmatprep.subr.mxu0 0.0
    %4419 = vmatpush1.xpose.msra.mxu0 0.0
    %4420 = vmatprep.subr.mxu0 0.0
    %4421 = vmatpush1.xpose.msra.mxu0 0.0
    %4422 = vmatprep.subr.mxu0 0.0
    %4423 = vmatpush1.xpose.msra.mxu0 0.0
    %4424 = vmatprep.subr.mxu0 0.0
    %4425 = vmatpush1.xpose.msra.mxu0 0.0
    %4426 = vmatprep.subr.mxu0 0.0
    %4427 = vmatpush1.xpose.msra.mxu0 0.0
    %4428 = vmatprep.subr.mxu0 0.0
    %4429 = vmatpush1.xpose.msra.mxu0 0.0
    %4430 = vmatprep.subr.mxu0 0.0
    %4431 = vmatpush1.xpose.msra.mxu0 0.0
    %4432 = vmatprep.subr.mxu0 0.0
    %4433 = vmatpush1.xpose.msra.mxu0 0.0
    %4434 = vmatprep.subr.mxu0 0.0
    %4435 = vmatpush1.xpose.msra.mxu0 0.0
    %4436 = vmatprep.subr.mxu0 0.0
    %4437 = vmatpush1.xpose.msra.mxu0 0.0
    %4438 = vmatprep.subr.mxu0 0.0
    %4439 = vmatpush1.xpose.msra.mxu0 %v4406
    %4440 = vmatprep.subr.mxu0 0.0
    %4441 = vmatpush2.xpose.msra.mxu0 0.0
    %4442 = vmatprep.subr.mxu0 0.0
    %4443 = vmatpush2.xpose.msra.mxu0 0.0
    %4444 = vmatprep.subr.mxu0 0.0
    %4445 = vmatpush2.xpose.msra.mxu0 0.0
    %4446 = vmatprep.subr.mxu0 0.0
    %4447 = vmatpush2.xpose.msra.mxu0 0.0
    %4448 = vmatprep.subr.mxu0 0.0
    %4449 = vmatpush2.xpose.msra.mxu0 0.0
    %4450 = vmatprep.subr.mxu0 0.0
    %4451 = vmatpush2.xpose.msra.mxu0 0.0
    %4452 = vmatprep.subr.mxu0 0.0
    %4453 = vmatpush2.xpose.msra.mxu0 0.0
    %4454 = vmatprep.subr.mxu0 0.0
    %4455 = vmatpush2.xpose.msra.mxu0 0.0
    %4456 = vmatprep.subr.mxu0 0.0
    %4457 = vmatpush2.xpose.msra.mxu0 0.0
    %4458 = vmatprep.subr.mxu0 0.0
    %4459 = vmatpush2.xpose.msra.mxu0 0.0
    %4460 = vmatprep.subr.mxu0 0.0
    %4461 = vmatpush2.xpose.msra.mxu0 0.0
    %4462 = vmatprep.subr.mxu0 0.0
    %4463 = vmatpush2.xpose.msra.mxu0 0.0
    %4464 = vmatprep.subr.mxu0 0.0
    %4465 = vmatpush2.xpose.msra.mxu0 0.0
    %4466 = vmatprep.subr.mxu0 0.0
    %4467 = vmatpush2.xpose.msra.mxu0 0.0
    %4468 = vmatprep.subr.mxu0 0.0
    %4469 = vmatpush2.xpose.msra.mxu0 0.0
    %4470 = vmatprep.subr.mxu0 0.0
    %4471 = vmatpush2.xpose.msra.mxu0 0.0
    %4472 = vmatprep.mubr.f32.mxu0 0.0
    %4473 = vmatmul.mubr.f32.gmra.mxu0 %v4403
    %v4474 = vpop.f32.mrf.mxu0
    %v4475 = vadd.f32 0.0, %v4474
    %v4476 = vpop.f32.mrf.mxu0
    %4477 = vdwg.mxu0
    %v4479 = vsel %vm1523, %v3747, 0
    %v4482 = vsel %vm1523, %v4039, 0
    %4484 = vmatprep.subr.mxu0 0.0
    %4485 = vmatpush1.xpose.msra.mxu0 0.0
    %4486 = vmatprep.subr.mxu0 0.0
    %4487 = vmatpush1.xpose.msra.mxu0 0.0
    %4488 = vmatprep.subr.mxu0 0.0
    %4489 = vmatpush1.xpose.msra.mxu0 0.0
    %4490 = vmatprep.subr.mxu0 0.0
    %4491 = vmatpush1.xpose.msra.mxu0 0.0
    %4492 = vmatprep.subr.mxu0 0.0
    %4493 = vmatpush1.xpose.msra.mxu0 0.0
    %4494 = vmatprep.subr.mxu0 0.0
    %4495 = vmatpush1.xpose.msra.mxu0 0.0
    %4496 = vmatprep.subr.mxu0 0.0
    %4497 = vmatpush1.xpose.msra.mxu0 0.0
    %4498 = vmatprep.subr.mxu0 0.0
    %4499 = vmatpush1.xpose.msra.mxu0 0.0
    %4500 = vmatprep.subr.mxu0 0.0
    %4501 = vmatpush1.xpose.msra.mxu0 0.0
    %4502 = vmatprep.subr.mxu0 0.0
    %4503 = vmatpush1.xpose.msra.mxu0 0.0
    %4504 = vmatprep.subr.mxu0 0.0
    %4505 = vmatpush1.xpose.msra.mxu0 0.0
    %4506 = vmatprep.subr.mxu0 0.0
    %4507 = vmatpush1.xpose.msra.mxu0 0.0
    %4508 = vmatprep.subr.mxu0 0.0
    %4509 = vmatpush1.xpose.msra.mxu0 0.0
    %4510 = vmatprep.subr.mxu0 0.0
    %4511 = vmatpush1.xpose.msra.mxu0 0.0
    %4512 = vmatprep.subr.mxu0 0.0
    %4513 = vmatpush1.xpose.msra.mxu0 0.0
    %4514 = vmatprep.subr.mxu0 0.0
    %4515 = vmatpush1.xpose.msra.mxu0 %v4482
    %4516 = vmatprep.subr.mxu0 0.0
    %4517 = vmatpush2.xpose.msra.mxu0 0.0
    %4518 = vmatprep.subr.mxu0 0.0
    %4519 = vmatpush2.xpose.msra.mxu0 0.0
    %4520 = vmatprep.subr.mxu0 0.0
    %4521 = vmatpush2.xpose.msra.mxu0 0.0
    %4522 = vmatprep.subr.mxu0 0.0
    %4523 = vmatpush2.xpose.msra.mxu0 0.0
    %4524 = vmatprep.subr.mxu0 0.0
    %4525 = vmatpush2.xpose.msra.mxu0 0.0
    %4526 = vmatprep.subr.mxu0 0.0
    %4527 = vmatpush2.xpose.msra.mxu0 0.0
    %4528 = vmatprep.subr.mxu0 0.0
    %4529 = vmatpush2.xpose.msra.mxu0 0.0
    %4530 = vmatprep.subr.mxu0 0.0
    %4531 = vmatpush2.xpose.msra.mxu0 0.0
    %4532 = vmatprep.subr.mxu0 0.0
    %4533 = vmatpush2.xpose.msra.mxu0 0.0
    %4534 = vmatprep.subr.mxu0 0.0
    %4535 = vmatpush2.xpose.msra.mxu0 0.0
    %4536 = vmatprep.subr.mxu0 0.0
    %4537 = vmatpush2.xpose.msra.mxu0 0.0
    %4538 = vmatprep.subr.mxu0 0.0
    %4539 = vmatpush2.xpose.msra.mxu0 0.0
    %4540 = vmatprep.subr.mxu0 0.0
    %4541 = vmatpush2.xpose.msra.mxu0 0.0
    %4542 = vmatprep.subr.mxu0 0.0
    %4543 = vmatpush2.xpose.msra.mxu0 0.0
    %4544 = vmatprep.subr.mxu0 0.0
    %4545 = vmatpush2.xpose.msra.mxu0 0.0
    %4546 = vmatprep.subr.mxu0 0.0
    %4547 = vmatpush2.xpose.msra.mxu0 0.0
    %4548 = vmatprep.mubr.f32.mxu0 0.0
    %4549 = vmatmul.mubr.f32.gmra.mxu0 %v4479
    %v4550 = vpop.f32.mrf.mxu0
    %v4551 = vadd.f32 0.0, %v4550
    %v4552 = vpop.f32.mrf.mxu0
    %4553 = vdwg.mxu0
    %v4555 = vsel %vm1523, %v3748, 0
    %v4558 = vsel %vm1523, %v4040, 0
    %4560 = vmatprep.subr.mxu0 0.0
    %4561 = vmatpush1.xpose.msra.mxu0 0.0
    %4562 = vmatprep.subr.mxu0 0.0
    %4563 = vmatpush1.xpose.msra.mxu0 0.0
    %4564 = vmatprep.subr.mxu0 0.0
    %4565 = vmatpush1.xpose.msra.mxu0 0.0
    %4566 = vmatprep.subr.mxu0 0.0
    %4567 = vmatpush1.xpose.msra.mxu0 0.0
    %4568 = vmatprep.subr.mxu0 0.0
    %4569 = vmatpush1.xpose.msra.mxu0 0.0
    %4570 = vmatprep.subr.mxu0 0.0
    %4571 = vmatpush1.xpose.msra.mxu0 0.0
    %4572 = vmatprep.subr.mxu0 0.0
    %4573 = vmatpush1.xpose.msra.mxu0 0.0
    %4574 = vmatprep.subr.mxu0 0.0
    %4575 = vmatpush1.xpose.msra.mxu0 0.0
    %4576 = vmatprep.subr.mxu0 0.0
    %4577 = vmatpush1.xpose.msra.mxu0 0.0
    %4578 = vmatprep.subr.mxu0 0.0
    %4579 = vmatpush1.xpose.msra.mxu0 0.0
    %4580 = vmatprep.subr.mxu0 0.0
    %4581 = vmatpush1.xpose.msra.mxu0 0.0
    %4582 = vmatprep.subr.mxu0 0.0
    %4583 = vmatpush1.xpose.msra.mxu0 0.0
    %4584 = vmatprep.subr.mxu0 0.0
    %4585 = vmatpush1.xpose.msra.mxu0 0.0
    %4586 = vmatprep.subr.mxu0 0.0
    %4587 = vmatpush1.xpose.msra.mxu0 0.0
    %4588 = vmatprep.subr.mxu0 0.0
    %4589 = vmatpush1.xpose.msra.mxu0 0.0
    %4590 = vmatprep.subr.mxu0 0.0
    %4591 = vmatpush1.xpose.msra.mxu0 %v4558
    %4592 = vmatprep.subr.mxu0 0.0
    %4593 = vmatpush2.xpose.msra.mxu0 0.0
    %4594 = vmatprep.subr.mxu0 0.0
    %4595 = vmatpush2.xpose.msra.mxu0 0.0
    %4596 = vmatprep.subr.mxu0 0.0
    %4597 = vmatpush2.xpose.msra.mxu0 0.0
    %4598 = vmatprep.subr.mxu0 0.0
    %4599 = vmatpush2.xpose.msra.mxu0 0.0
    %4600 = vmatprep.subr.mxu0 0.0
    %4601 = vmatpush2.xpose.msra.mxu0 0.0
    %4602 = vmatprep.subr.mxu0 0.0
    %4603 = vmatpush2.xpose.msra.mxu0 0.0
    %4604 = vmatprep.subr.mxu0 0.0
    %4605 = vmatpush2.xpose.msra.mxu0 0.0
    %4606 = vmatprep.subr.mxu0 0.0
    %4607 = vmatpush2.xpose.msra.mxu0 0.0
    %4608 = vmatprep.subr.mxu0 0.0
    %4609 = vmatpush2.xpose.msra.mxu0 0.0
    %4610 = vmatprep.subr.mxu0 0.0
    %4611 = vmatpush2.xpose.msra.mxu0 0.0
    %4612 = vmatprep.subr.mxu0 0.0
    %4613 = vmatpush2.xpose.msra.mxu0 0.0
    %4614 = vmatprep.subr.mxu0 0.0
    %4615 = vmatpush2.xpose.msra.mxu0 0.0
    %4616 = vmatprep.subr.mxu0 0.0
    %4617 = vmatpush2.xpose.msra.mxu0 0.0
    %4618 = vmatprep.subr.mxu0 0.0
    %4619 = vmatpush2.xpose.msra.mxu0 0.0
    %4620 = vmatprep.subr.mxu0 0.0
    %4621 = vmatpush2.xpose.msra.mxu0 0.0
    %4622 = vmatprep.subr.mxu0 0.0
    %4623 = vmatpush2.xpose.msra.mxu0 0.0
    %4624 = vmatprep.mubr.f32.mxu0 0.0
    %4625 = vmatmul.mubr.f32.gmra.mxu0 %v4555
    %v4626 = vpop.f32.mrf.mxu0
    %v4627 = vadd.f32 0.0, %v4626
    %v4628 = vpop.f32.mrf.mxu0
    %4629 = vdwg.mxu0
    %v4631 = vsel %vm1523, %v3749, 0
    %v4634 = vsel %vm1523, %v4041, 0
    %4636 = vmatprep.subr.mxu0 0.0
    %4637 = vmatpush1.xpose.msra.mxu0 0.0
    %4638 = vmatprep.subr.mxu0 0.0
    %4639 = vmatpush1.xpose.msra.mxu0 0.0
    %4640 = vmatprep.subr.mxu0 0.0
    %4641 = vmatpush1.xpose.msra.mxu0 0.0
    %4642 = vmatprep.subr.mxu0 0.0
    %4643 = vmatpush1.xpose.msra.mxu0 0.0
    %4644 = vmatprep.subr.mxu0 0.0
    %4645 = vmatpush1.xpose.msra.mxu0 0.0
    %4646 = vmatprep.subr.mxu0 0.0
    %4647 = vmatpush1.xpose.msra.mxu0 0.0
    %4648 = vmatprep.subr.mxu0 0.0
    %4649 = vmatpush1.xpose.msra.mxu0 0.0
    %4650 = vmatprep.subr.mxu0 0.0
    %4651 = vmatpush1.xpose.msra.mxu0 0.0
    %4652 = vmatprep.subr.mxu0 0.0
    %4653 = vmatpush1.xpose.msra.mxu0 0.0
    %4654 = vmatprep.subr.mxu0 0.0
    %4655 = vmatpush1.xpose.msra.mxu0 0.0
    %4656 = vmatprep.subr.mxu0 0.0
    %4657 = vmatpush1.xpose.msra.mxu0 0.0
    %4658 = vmatprep.subr.mxu0 0.0
    %4659 = vmatpush1.xpose.msra.mxu0 0.0
    %4660 = vmatprep.subr.mxu0 0.0
    %4661 = vmatpush1.xpose.msra.mxu0 0.0
    %4662 = vmatprep.subr.mxu0 0.0
    %4663 = vmatpush1.xpose.msra.mxu0 0.0
    %4664 = vmatprep.subr.mxu0 0.0
    %4665 = vmatpush1.xpose.msra.mxu0 0.0
    %4666 = vmatprep.subr.mxu0 0.0
    %4667 = vmatpush1.xpose.msra.mxu0 %v4634
    %4668 = vmatprep.subr.mxu0 0.0
    %4669 = vmatpush2.xpose.msra.mxu0 0.0
    %4670 = vmatprep.subr.mxu0 0.0
    %4671 = vmatpush2.xpose.msra.mxu0 0.0
    %4672 = vmatprep.subr.mxu0 0.0
    %4673 = vmatpush2.xpose.msra.mxu0 0.0
    %4674 = vmatprep.subr.mxu0 0.0
    %4675 = vmatpush2.xpose.msra.mxu0 0.0
    %4676 = vmatprep.subr.mxu0 0.0
    %4677 = vmatpush2.xpose.msra.mxu0 0.0
    %4678 = vmatprep.subr.mxu0 0.0
    %4679 = vmatpush2.xpose.msra.mxu0 0.0
    %4680 = vmatprep.subr.mxu0 0.0
    %4681 = vmatpush2.xpose.msra.mxu0 0.0
    %4682 = vmatprep.subr.mxu0 0.0
    %4683 = vmatpush2.xpose.msra.mxu0 0.0
    %4684 = vmatprep.subr.mxu0 0.0
    %4685 = vmatpush2.xpose.msra.mxu0 0.0
    %4686 = vmatprep.subr.mxu0 0.0
    %4687 = vmatpush2.xpose.msra.mxu0 0.0
    %4688 = vmatprep.subr.mxu0 0.0
    %4689 = vmatpush2.xpose.msra.mxu0 0.0
    %4690 = vmatprep.subr.mxu0 0.0
    %4691 = vmatpush2.xpose.msra.mxu0 0.0
    %4692 = vmatprep.subr.mxu0 0.0
    %4693 = vmatpush2.xpose.msra.mxu0 0.0
    %4694 = vmatprep.subr.mxu0 0.0
    %4695 = vmatpush2.xpose.msra.mxu0 0.0
    %4696 = vmatprep.subr.mxu0 0.0
    %4697 = vmatpush2.xpose.msra.mxu0 0.0
    %4698 = vmatprep.subr.mxu0 0.0
    %4699 = vmatpush2.xpose.msra.mxu0 0.0
    %4700 = vmatprep.mubr.f32.mxu0 0.0
    %4701 = vmatmul.mubr.f32.gmra.mxu0 %v4631
    %v4702 = vpop.f32.mrf.mxu0
    %v4703 = vadd.f32 0.0, %v4702
    %v4704 = vpop.f32.mrf.mxu0
    %4705 = vdwg.mxu0
    %v4707 = vsel %vm1523, %v3814, 0
    %v4710 = vsel %vm1523, %v4106, 0
    %4712 = vmatprep.subr.mxu0 0.0
    %4713 = vmatpush1.xpose.msra.mxu0 0.0
    %4714 = vmatprep.subr.mxu0 0.0
    %4715 = vmatpush1.xpose.msra.mxu0 0.0
    %4716 = vmatprep.subr.mxu0 0.0
    %4717 = vmatpush1.xpose.msra.mxu0 0.0
    %4718 = vmatprep.subr.mxu0 0.0
    %4719 = vmatpush1.xpose.msra.mxu0 0.0
    %4720 = vmatprep.subr.mxu0 0.0
    %4721 = vmatpush1.xpose.msra.mxu0 0.0
    %4722 = vmatprep.subr.mxu0 0.0
    %4723 = vmatpush1.xpose.msra.mxu0 0.0
    %4724 = vmatprep.subr.mxu0 0.0
    %4725 = vmatpush1.xpose.msra.mxu0 0.0
    %4726 = vmatprep.subr.mxu0 0.0
    %4727 = vmatpush1.xpose.msra.mxu0 0.0
    %4728 = vmatprep.subr.mxu0 0.0
    %4729 = vmatpush1.xpose.msra.mxu0 0.0
    %4730 = vmatprep.subr.mxu0 0.0
    %4731 = vmatpush1.xpose.msra.mxu0 0.0
    %4732 = vmatprep.subr.mxu0 0.0
    %4733 = vmatpush1.xpose.msra.mxu0 0.0
    %4734 = vmatprep.subr.mxu0 0.0
    %4735 = vmatpush1.xpose.msra.mxu0 0.0
    %4736 = vmatprep.subr.mxu0 0.0
    %4737 = vmatpush1.xpose.msra.mxu0 0.0
    %4738 = vmatprep.subr.mxu0 0.0
    %4739 = vmatpush1.xpose.msra.mxu0 0.0
    %4740 = vmatprep.subr.mxu0 0.0
    %4741 = vmatpush1.xpose.msra.mxu0 0.0
    %4742 = vmatprep.subr.mxu0 0.0
    %4743 = vmatpush1.xpose.msra.mxu0 %v4710
    %4744 = vmatprep.subr.mxu0 0.0
    %4745 = vmatpush2.xpose.msra.mxu0 0.0
    %4746 = vmatprep.subr.mxu0 0.0
    %4747 = vmatpush2.xpose.msra.mxu0 0.0
    %4748 = vmatprep.subr.mxu0 0.0
    %4749 = vmatpush2.xpose.msra.mxu0 0.0
    %4750 = vmatprep.subr.mxu0 0.0
    %4751 = vmatpush2.xpose.msra.mxu0 0.0
    %4752 = vmatprep.subr.mxu0 0.0
    %4753 = vmatpush2.xpose.msra.mxu0 0.0
    %4754 = vmatprep.subr.mxu0 0.0
    %4755 = vmatpush2.xpose.msra.mxu0 0.0
    %4756 = vmatprep.subr.mxu0 0.0
    %4757 = vmatpush2.xpose.msra.mxu0 0.0
    %4758 = vmatprep.subr.mxu0 0.0
    %4759 = vmatpush2.xpose.msra.mxu0 0.0
    %4760 = vmatprep.subr.mxu0 0.0
    %4761 = vmatpush2.xpose.msra.mxu0 0.0
    %4762 = vmatprep.subr.mxu0 0.0
    %4763 = vmatpush2.xpose.msra.mxu0 0.0
    %4764 = vmatprep.subr.mxu0 0.0
    %4765 = vmatpush2.xpose.msra.mxu0 0.0
    %4766 = vmatprep.subr.mxu0 0.0
    %4767 = vmatpush2.xpose.msra.mxu0 0.0
    %4768 = vmatprep.subr.mxu0 0.0
    %4769 = vmatpush2.xpose.msra.mxu0 0.0
    %4770 = vmatprep.subr.mxu0 0.0
    %4771 = vmatpush2.xpose.msra.mxu0 0.0
    %4772 = vmatprep.subr.mxu0 0.0
    %4773 = vmatpush2.xpose.msra.mxu0 0.0
    %4774 = vmatprep.subr.mxu0 0.0
    %4775 = vmatpush2.xpose.msra.mxu0 0.0
    %4776 = vmatprep.mubr.f32.mxu0 0.0
    %4777 = vmatmul.mubr.f32.gmra.mxu0 %v4707
    %v4778 = vpop.f32.mrf.mxu0
    %v4779 = vadd.f32 0.0, %v4778
    %v4780 = vpop.f32.mrf.mxu0
    %4781 = vdwg.mxu0
    %v4783 = vsel %vm1523, %v3815, 0
    %v4786 = vsel %vm1523, %v4107, 0
    %4788 = vmatprep.subr.mxu0 0.0
    %4789 = vmatpush1.xpose.msra.mxu0 0.0
    %4790 = vmatprep.subr.mxu0 0.0
    %4791 = vmatpush1.xpose.msra.mxu0 0.0
    %4792 = vmatprep.subr.mxu0 0.0
    %4793 = vmatpush1.xpose.msra.mxu0 0.0
    %4794 = vmatprep.subr.mxu0 0.0
    %4795 = vmatpush1.xpose.msra.mxu0 0.0
    %4796 = vmatprep.subr.mxu0 0.0
    %4797 = vmatpush1.xpose.msra.mxu0 0.0
    %4798 = vmatprep.subr.mxu0 0.0
    %4799 = vmatpush1.xpose.msra.mxu0 0.0
    %4800 = vmatprep.subr.mxu0 0.0
    %4801 = vmatpush1.xpose.msra.mxu0 0.0
    %4802 = vmatprep.subr.mxu0 0.0
    %4803 = vmatpush1.xpose.msra.mxu0 0.0
    %4804 = vmatprep.subr.mxu0 0.0
    %4805 = vmatpush1.xpose.msra.mxu0 0.0
    %4806 = vmatprep.subr.mxu0 0.0
    %4807 = vmatpush1.xpose.msra.mxu0 0.0
    %4808 = vmatprep.subr.mxu0 0.0
    %4809 = vmatpush1.xpose.msra.mxu0 0.0
    %4810 = vmatprep.subr.mxu0 0.0
    %4811 = vmatpush1.xpose.msra.mxu0 0.0
    %4812 = vmatprep.subr.mxu0 0.0
    %4813 = vmatpush1.xpose.msra.mxu0 0.0
    %4814 = vmatprep.subr.mxu0 0.0
    %4815 = vmatpush1.xpose.msra.mxu0 0.0
    %4816 = vmatprep.subr.mxu0 0.0
    %4817 = vmatpush1.xpose.msra.mxu0 0.0
    %4818 = vmatprep.subr.mxu0 0.0
    %4819 = vmatpush1.xpose.msra.mxu0 %v4786
    %4820 = vmatprep.subr.mxu0 0.0
    %4821 = vmatpush2.xpose.msra.mxu0 0.0
    %4822 = vmatprep.subr.mxu0 0.0
    %4823 = vmatpush2.xpose.msra.mxu0 0.0
    %4824 = vmatprep.subr.mxu0 0.0
    %4825 = vmatpush2.xpose.msra.mxu0 0.0
    %4826 = vmatprep.subr.mxu0 0.0
    %4827 = vmatpush2.xpose.msra.mxu0 0.0
    %4828 = vmatprep.subr.mxu0 0.0
    %4829 = vmatpush2.xpose.msra.mxu0 0.0
    %4830 = vmatprep.subr.mxu0 0.0
    %4831 = vmatpush2.xpose.msra.mxu0 0.0
    %4832 = vmatprep.subr.mxu0 0.0
    %4833 = vmatpush2.xpose.msra.mxu0 0.0
    %4834 = vmatprep.subr.mxu0 0.0
    %4835 = vmatpush2.xpose.msra.mxu0 0.0
    %4836 = vmatprep.subr.mxu0 0.0
    %4837 = vmatpush2.xpose.msra.mxu0 0.0
    %4838 = vmatprep.subr.mxu0 0.0
    %4839 = vmatpush2.xpose.msra.mxu0 0.0
    %4840 = vmatprep.subr.mxu0 0.0
    %4841 = vmatpush2.xpose.msra.mxu0 0.0
    %4842 = vmatprep.subr.mxu0 0.0
    %4843 = vmatpush2.xpose.msra.mxu0 0.0
    %4844 = vmatprep.subr.mxu0 0.0
    %4845 = vmatpush2.xpose.msra.mxu0 0.0
    %4846 = vmatprep.subr.mxu0 0.0
    %4847 = vmatpush2.xpose.msra.mxu0 0.0
    %4848 = vmatprep.subr.mxu0 0.0
    %4849 = vmatpush2.xpose.msra.mxu0 0.0
    %4850 = vmatprep.subr.mxu0 0.0
    %4851 = vmatpush2.xpose.msra.mxu0 0.0
    %4852 = vmatprep.mubr.f32.mxu0 0.0
    %4853 = vmatmul.mubr.f32.gmra.mxu0 %v4783
    %v4854 = vpop.f32.mrf.mxu0
    %v4855 = vadd.f32 0.0, %v4854
    %v4856 = vpop.f32.mrf.mxu0
    %4857 = vdwg.mxu0
    %v4859 = vsel %vm1523, %v3816, 0
    %v4862 = vsel %vm1523, %v4108, 0
    %4864 = vmatprep.subr.mxu0 0.0
    %4865 = vmatpush1.xpose.msra.mxu0 0.0
    %4866 = vmatprep.subr.mxu0 0.0
    %4867 = vmatpush1.xpose.msra.mxu0 0.0
    %4868 = vmatprep.subr.mxu0 0.0
    %4869 = vmatpush1.xpose.msra.mxu0 0.0
    %4870 = vmatprep.subr.mxu0 0.0
    %4871 = vmatpush1.xpose.msra.mxu0 0.0
    %4872 = vmatprep.subr.mxu0 0.0
    %4873 = vmatpush1.xpose.msra.mxu0 0.0
    %4874 = vmatprep.subr.mxu0 0.0
    %4875 = vmatpush1.xpose.msra.mxu0 0.0
    %4876 = vmatprep.subr.mxu0 0.0
    %4877 = vmatpush1.xpose.msra.mxu0 0.0
    %4878 = vmatprep.subr.mxu0 0.0
    %4879 = vmatpush1.xpose.msra.mxu0 0.0
    %4880 = vmatprep.subr.mxu0 0.0
    %4881 = vmatpush1.xpose.msra.mxu0 0.0
    %4882 = vmatprep.subr.mxu0 0.0
    %4883 = vmatpush1.xpose.msra.mxu0 0.0
    %4884 = vmatprep.subr.mxu0 0.0
    %4885 = vmatpush1.xpose.msra.mxu0 0.0
    %4886 = vmatprep.subr.mxu0 0.0
    %4887 = vmatpush1.xpose.msra.mxu0 0.0
    %4888 = vmatprep.subr.mxu0 0.0
    %4889 = vmatpush1.xpose.msra.mxu0 0.0
    %4890 = vmatprep.subr.mxu0 0.0
    %4891 = vmatpush1.xpose.msra.mxu0 0.0
    %4892 = vmatprep.subr.mxu0 0.0
    %4893 = vmatpush1.xpose.msra.mxu0 0.0
    %4894 = vmatprep.subr.mxu0 0.0
    %4895 = vmatpush1.xpose.msra.mxu0 %v4862
    %4896 = vmatprep.subr.mxu0 0.0
    %4897 = vmatpush2.xpose.msra.mxu0 0.0
    %4898 = vmatprep.subr.mxu0 0.0
    %4899 = vmatpush2.xpose.msra.mxu0 0.0
    %4900 = vmatprep.subr.mxu0 0.0
    %4901 = vmatpush2.xpose.msra.mxu0 0.0
    %4902 = vmatprep.subr.mxu0 0.0
    %4903 = vmatpush2.xpose.msra.mxu0 0.0
    %4904 = vmatprep.subr.mxu0 0.0
    %4905 = vmatpush2.xpose.msra.mxu0 0.0
    %4906 = vmatprep.subr.mxu0 0.0
    %4907 = vmatpush2.xpose.msra.mxu0 0.0
    %4908 = vmatprep.subr.mxu0 0.0
    %4909 = vmatpush2.xpose.msra.mxu0 0.0
    %4910 = vmatprep.subr.mxu0 0.0
    %4911 = vmatpush2.xpose.msra.mxu0 0.0
    %4912 = vmatprep.subr.mxu0 0.0
    %4913 = vmatpush2.xpose.msra.mxu0 0.0
    %4914 = vmatprep.subr.mxu0 0.0
    %4915 = vmatpush2.xpose.msra.mxu0 0.0
    %4916 = vmatprep.subr.mxu0 0.0
    %4917 = vmatpush2.xpose.msra.mxu0 0.0
    %4918 = vmatprep.subr.mxu0 0.0
    %4919 = vmatpush2.xpose.msra.mxu0 0.0
    %4920 = vmatprep.subr.mxu0 0.0
    %4921 = vmatpush2.xpose.msra.mxu0 0.0
    %4922 = vmatprep.subr.mxu0 0.0
    %4923 = vmatpush2.xpose.msra.mxu0 0.0
    %4924 = vmatprep.subr.mxu0 0.0
    %4925 = vmatpush2.xpose.msra.mxu0 0.0
    %4926 = vmatprep.subr.mxu0 0.0
    %4927 = vmatpush2.xpose.msra.mxu0 0.0
    %4928 = vmatprep.mubr.f32.mxu0 0.0
    %4929 = vmatmul.mubr.f32.gmra.mxu0 %v4859
    %v4930 = vpop.f32.mrf.mxu0
    %v4931 = vadd.f32 0.0, %v4930
    %v4932 = vpop.f32.mrf.mxu0
    %4933 = vdwg.mxu0
    %v4935 = vsel %vm1523, %v3817, 0
    %v4938 = vsel %vm1523, %v4109, 0
    %4940 = vmatprep.subr.mxu0 0.0
    %4941 = vmatpush1.xpose.msra.mxu0 0.0
    %4942 = vmatprep.subr.mxu0 0.0
    %4943 = vmatpush1.xpose.msra.mxu0 0.0
    %4944 = vmatprep.subr.mxu0 0.0
    %4945 = vmatpush1.xpose.msra.mxu0 0.0
    %4946 = vmatprep.subr.mxu0 0.0
    %4947 = vmatpush1.xpose.msra.mxu0 0.0
    %4948 = vmatprep.subr.mxu0 0.0
    %4949 = vmatpush1.xpose.msra.mxu0 0.0
    %4950 = vmatprep.subr.mxu0 0.0
    %4951 = vmatpush1.xpose.msra.mxu0 0.0
    %4952 = vmatprep.subr.mxu0 0.0
    %4953 = vmatpush1.xpose.msra.mxu0 0.0
    %4954 = vmatprep.subr.mxu0 0.0
    %4955 = vmatpush1.xpose.msra.mxu0 0.0
    %4956 = vmatprep.subr.mxu0 0.0
    %4957 = vmatpush1.xpose.msra.mxu0 0.0
    %4958 = vmatprep.subr.mxu0 0.0
    %4959 = vmatpush1.xpose.msra.mxu0 0.0
    %4960 = vmatprep.subr.mxu0 0.0
    %4961 = vmatpush1.xpose.msra.mxu0 0.0
    %4962 = vmatprep.subr.mxu0 0.0
    %4963 = vmatpush1.xpose.msra.mxu0 0.0
    %4964 = vmatprep.subr.mxu0 0.0
    %4965 = vmatpush1.xpose.msra.mxu0 0.0
    %4966 = vmatprep.subr.mxu0 0.0
    %4967 = vmatpush1.xpose.msra.mxu0 0.0
    %4968 = vmatprep.subr.mxu0 0.0
    %4969 = vmatpush1.xpose.msra.mxu0 0.0
    %4970 = vmatprep.subr.mxu0 0.0
    %4971 = vmatpush1.xpose.msra.mxu0 %v4938
    %4972 = vmatprep.subr.mxu0 0.0
    %4973 = vmatpush2.xpose.msra.mxu0 0.0
    %4974 = vmatprep.subr.mxu0 0.0
    %4975 = vmatpush2.xpose.msra.mxu0 0.0
    %4976 = vmatprep.subr.mxu0 0.0
    %4977 = vmatpush2.xpose.msra.mxu0 0.0
    %4978 = vmatprep.subr.mxu0 0.0
    %4979 = vmatpush2.xpose.msra.mxu0 0.0
    %4980 = vmatprep.subr.mxu0 0.0
    %4981 = vmatpush2.xpose.msra.mxu0 0.0
    %4982 = vmatprep.subr.mxu0 0.0
    %4983 = vmatpush2.xpose.msra.mxu0 0.0
    %4984 = vmatprep.subr.mxu0 0.0
    %4985 = vmatpush2.xpose.msra.mxu0 0.0
    %4986 = vmatprep.subr.mxu0 0.0
    %4987 = vmatpush2.xpose.msra.mxu0 0.0
    %4988 = vmatprep.subr.mxu0 0.0
    %4989 = vmatpush2.xpose.msra.mxu0 0.0
    %4990 = vmatprep.subr.mxu0 0.0
    %4991 = vmatpush2.xpose.msra.mxu0 0.0
    %4992 = vmatprep.subr.mxu0 0.0
    %4993 = vmatpush2.xpose.msra.mxu0 0.0
    %4994 = vmatprep.subr.mxu0 0.0
    %4995 = vmatpush2.xpose.msra.mxu0 0.0
    %4996 = vmatprep.subr.mxu0 0.0
    %4997 = vmatpush2.xpose.msra.mxu0 0.0
    %4998 = vmatprep.subr.mxu0 0.0
    %4999 = vmatpush2.xpose.msra.mxu0 0.0
    %5000 = vmatprep.subr.mxu0 0.0
    %5001 = vmatpush2.xpose.msra.mxu0 0.0
    %5002 = vmatprep.subr.mxu0 0.0
    %5003 = vmatpush2.xpose.msra.mxu0 0.0
    %5004 = vmatprep.mubr.f32.mxu0 0.0
    %5005 = vmatmul.mubr.f32.gmra.mxu0 %v4935
    %v5006 = vpop.f32.mrf.mxu0
    %v5007 = vadd.f32 0.0, %v5006
    %v5008 = vpop.f32.mrf.mxu0
    %5009 = vdwg.mxu0
    %v5012 = vlaneseq
    %v5013 = vshrl.u32 %v5012, 7
    %v5014 = vsub.s32 0, %v5013
    %v5015 = vrot.slane %v328, %v5014
    %v5016 = vlaneseq
    %v5017 = vshrl.u32 %v5016, 7
    %v5018 = vsub.s32 0, %v5017
    %v5019 = vrot.slane %v329, %v5018
    %v5022 = vadd.f32 %v4475, %v5015
    %v5023 = vadd.f32 %v4551, %v5015
    %v5024 = vadd.f32 %v4627, %v5015
    %v5025 = vadd.f32 %v4703, %v5015
    %v5026 = vadd.f32 %v4779, %v5019
    %v5027 = vadd.f32 %v4855, %v5019
    %v5028 = vadd.f32 %v4931, %v5019
    %v5029 = vadd.f32 %v5007, %v5019
    %v5030 = vsel %vm1523, %v5022, -inf
    %5031 = vmax.xlane.f32.xlu0 %v5030
    %v5032 = vpop.xlane.xlu0 %5031
    %v5033 = vsel %vm1523, %v5023, -inf
    %5034 = vmax.xlane.f32.xlu0 %v5033
    %v5035 = vpop.xlane.xlu0 %5034
    %v5036 = vsel %vm1523, %v5024, -inf
    %5037 = vmax.xlane.f32.xlu0 %v5036
    %v5038 = vpop.xlane.xlu0 %5037
    %v5039 = vsel %vm1523, %v5025, -inf
    %5040 = vmax.xlane.f32.xlu0 %v5039
    %v5041 = vpop.xlane.xlu0 %5040
    %v5042 = vsel %vm1523, %v5026, -inf
    %5043 = vmax.xlane.f32.xlu0 %v5042
    %v5044 = vpop.xlane.xlu0 %5043
    %v5045 = vsel %vm1523, %v5027, -inf
    %5046 = vmax.xlane.f32.xlu0 %v5045
    %v5047 = vpop.xlane.xlu0 %5046
    %v5048 = vsel %vm1523, %v5028, -inf
    %5049 = vmax.xlane.f32.xlu0 %v5048
    %v5050 = vpop.xlane.xlu0 %5049
    %v5051 = vsel %vm1523, %v5029, -inf
    %5052 = vmax.xlane.f32.xlu0 %v5051
    %v5053 = vpop.xlane.xlu0 %5052
    %v5054 = vsub.f32 %v5022, %v5032
    %v5055 = vsub.f32 %v5023, %v5035
    %v5056 = vsub.f32 %v5024, %v5038
    %v5057 = vsub.f32 %v5025, %v5041
    %v5058 = vsub.f32 %v5026, %v5044
    %v5059 = vsub.f32 %v5027, %v5047
    %v5060 = vsub.f32 %v5028, %v5050
    %v5061 = vsub.f32 %v5029, %v5053
    %v5062 = vmul.f32 %v5054, 1.442695
    %v5063 = vpow.pop %v5062
    %v5064 = vmul.f32 %v5055, 1.442695
    %v5065 = vpow.pop %v5064
    %v5066 = vmul.f32 %v5056, 1.442695
    %v5067 = vpow.pop %v5066
    %v5068 = vmul.f32 %v5057, 1.442695
    %v5069 = vpow.pop %v5068
    %v5070 = vmul.f32 %v5058, 1.442695
    %v5071 = vpow.pop %v5070
    %v5072 = vmul.f32 %v5059, 1.442695
    %v5073 = vpow.pop %v5072
    %v5074 = vmul.f32 %v5060, 1.442695
    %v5075 = vpow.pop %v5074
    %v5076 = vmul.f32 %v5061, 1.442695
    %v5077 = vpow.pop %v5076
    %v5078 = vsel %vm1523, %v5063, 0.0
    %5079 = vadd.xlane.f32.xlu0 %v5078
    %v5080 = vpop.xlane.xlu0 %5079
    %v5081 = vsel %vm1523, %v5065, 0.0
    %5082 = vadd.xlane.f32.xlu0 %v5081
    %v5083 = vpop.xlane.xlu0 %5082
    %v5084 = vsel %vm1523, %v5067, 0.0
    %5085 = vadd.xlane.f32.xlu0 %v5084
    %v5086 = vpop.xlane.xlu0 %5085
    %v5087 = vsel %vm1523, %v5069, 0.0
    %5088 = vadd.xlane.f32.xlu0 %v5087
    %v5089 = vpop.xlane.xlu0 %5088
    %v5090 = vsel %vm1523, %v5071, 0.0
    %5091 = vadd.xlane.f32.xlu0 %v5090
    %v5092 = vpop.xlane.xlu0 %5091
    %v5093 = vsel %vm1523, %v5073, 0.0
    %5094 = vadd.xlane.f32.xlu0 %v5093
    %v5095 = vpop.xlane.xlu0 %5094
    %v5096 = vsel %vm1523, %v5075, 0.0
    %5097 = vadd.xlane.f32.xlu0 %v5096
    %v5098 = vpop.xlane.xlu0 %5097
    %v5099 = vsel %vm1523, %v5077, 0.0
    %5100 = vadd.xlane.f32.xlu0 %v5099
    %v5101 = vpop.xlane.xlu0 %5100
    %v5102 = vrcp.pop %v5080
    %v5103 = vrcp.pop %v5083
    %v5104 = vrcp.pop %v5086
    %v5105 = vrcp.pop %v5089
    %v5106 = vrcp.pop %v5092
    %v5107 = vrcp.pop %v5095
    %v5108 = vrcp.pop %v5098
    %v5109 = vrcp.pop %v5101
    %v5110 = vmul.f32 %v5063, %v5102
    %v5111 = vmul.f32 %v5065, %v5103
    %v5112 = vmul.f32 %v5067, %v5104
    %v5113 = vmul.f32 %v5069, %v5105
    %v5114 = vmul.f32 %v5071, %v5106
    %v5115 = vmul.f32 %v5073, %v5107
    %v5116 = vmul.f32 %v5075, %v5108
    %v5117 = vmul.f32 %v5077, %v5109
    %v5119 = vsel %vm1523, %v5110, 0
    %5121 = vmatprep.subr.mxu0 0.0
    %5122 = vmatpush1.msra.mxu0 0.0
    %5123 = vmatprep.subr.mxu0 0.0
    %5124 = vmatpush1.msra.mxu0 0.0
    %5125 = vmatprep.subr.mxu0 0.0
    %5126 = vmatpush1.msra.mxu0 0.0
    %5127 = vmatprep.subr.mxu0 0.0
    %5128 = vmatpush1.msra.mxu0 0.0
    %5129 = vmatprep.subr.mxu0 0.0
    %5130 = vmatpush1.msra.mxu0 0.0
    %5131 = vmatprep.subr.mxu0 0.0
    %5132 = vmatpush1.msra.mxu0 0.0
    %5133 = vmatprep.subr.mxu0 0.0
    %5134 = vmatpush1.msra.mxu0 0.0
    %5135 = vmatprep.subr.mxu0 0.0
    %5136 = vmatpush1.msra.mxu0 0.0
    %5137 = vmatprep.subr.mxu0 0.0
    %5138 = vmatpush1.msra.mxu0 0.0
    %5139 = vmatprep.subr.mxu0 0.0
    %5140 = vmatpush1.msra.mxu0 0.0
    %5141 = vmatprep.subr.mxu0 0.0
    %5142 = vmatpush1.msra.mxu0 0.0
    %5143 = vmatprep.subr.mxu0 0.0
    %5144 = vmatpush1.msra.mxu0 0.0
    %5145 = vmatprep.subr.mxu0 0.0
    %5146 = vmatpush1.msra.mxu0 0.0
    %5147 = vmatprep.subr.mxu0 0.0
    %5148 = vmatpush1.msra.mxu0 0.0
    %5149 = vmatprep.subr.mxu0 0.0
    %5150 = vmatpush1.msra.mxu0 0.0
    %5151 = vmatprep.subr.mxu0 0.0
    %5152 = vmatpush1.msra.mxu0 %v4330
    %5153 = vmatprep.subr.mxu0 0.0
    %5154 = vmatpush2.msra.mxu0 0.0
    %5155 = vmatprep.subr.mxu0 0.0
    %5156 = vmatpush2.msra.mxu0 0.0
    %5157 = vmatprep.subr.mxu0 0.0
    %5158 = vmatpush2.msra.mxu0 0.0
    %5159 = vmatprep.subr.mxu0 0.0
    %5160 = vmatpush2.msra.mxu0 0.0
    %5161 = vmatprep.subr.mxu0 0.0
    %5162 = vmatpush2.msra.mxu0 0.0
    %5163 = vmatprep.subr.mxu0 0.0
    %5164 = vmatpush2.msra.mxu0 0.0
    %5165 = vmatprep.subr.mxu0 0.0
    %5166 = vmatpush2.msra.mxu0 0.0
    %5167 = vmatprep.subr.mxu0 0.0
    %5168 = vmatpush2.msra.mxu0 0.0
    %5169 = vmatprep.subr.mxu0 0.0
    %5170 = vmatpush2.msra.mxu0 0.0
    %5171 = vmatprep.subr.mxu0 0.0
    %5172 = vmatpush2.msra.mxu0 0.0
    %5173 = vmatprep.subr.mxu0 0.0
    %5174 = vmatpush2.msra.mxu0 0.0
    %5175 = vmatprep.subr.mxu0 0.0
    %5176 = vmatpush2.msra.mxu0 0.0
    %5177 = vmatprep.subr.mxu0 0.0
    %5178 = vmatpush2.msra.mxu0 0.0
    %5179 = vmatprep.subr.mxu0 0.0
    %5180 = vmatpush2.msra.mxu0 0.0
    %5181 = vmatprep.subr.mxu0 0.0
    %5182 = vmatpush2.msra.mxu0 0.0
    %5183 = vmatprep.subr.mxu0 0.0
    %5184 = vmatpush2.msra.mxu0 0.0
    %5185 = vmatprep.mubr.f32.mxu0 0.0
    %5186 = vmatmul.mubr.f32.gmra.mxu0 %v5119
    %v5187 = vpop.f32.mrf.mxu0
    %v5188 = vadd.f32 0.0, %v5187
    %v5189 = vpop.f32.mrf.mxu0
    %5190 = vdwg.mxu0
    %v5192 = vsel %vm1523, %v5111, 0
    %5194 = vmatprep.subr.mxu0 0.0
    %5195 = vmatpush1.msra.mxu0 0.0
    %5196 = vmatprep.subr.mxu0 0.0
    %5197 = vmatpush1.msra.mxu0 0.0
    %5198 = vmatprep.subr.mxu0 0.0
    %5199 = vmatpush1.msra.mxu0 0.0
    %5200 = vmatprep.subr.mxu0 0.0
    %5201 = vmatpush1.msra.mxu0 0.0
    %5202 = vmatprep.subr.mxu0 0.0
    %5203 = vmatpush1.msra.mxu0 0.0
    %5204 = vmatprep.subr.mxu0 0.0
    %5205 = vmatpush1.msra.mxu0 0.0
    %5206 = vmatprep.subr.mxu0 0.0
    %5207 = vmatpush1.msra.mxu0 0.0
    %5208 = vmatprep.subr.mxu0 0.0
    %5209 = vmatpush1.msra.mxu0 0.0
    %5210 = vmatprep.subr.mxu0 0.0
    %5211 = vmatpush1.msra.mxu0 0.0
    %5212 = vmatprep.subr.mxu0 0.0
    %5213 = vmatpush1.msra.mxu0 0.0
    %5214 = vmatprep.subr.mxu0 0.0
    %5215 = vmatpush1.msra.mxu0 0.0
    %5216 = vmatprep.subr.mxu0 0.0
    %5217 = vmatpush1.msra.mxu0 0.0
    %5218 = vmatprep.subr.mxu0 0.0
    %5219 = vmatpush1.msra.mxu0 0.0
    %5220 = vmatprep.subr.mxu0 0.0
    %5221 = vmatpush1.msra.mxu0 0.0
    %5222 = vmatprep.subr.mxu0 0.0
    %5223 = vmatpush1.msra.mxu0 0.0
    %5224 = vmatprep.subr.mxu0 0.0
    %5225 = vmatpush1.msra.mxu0 %v4331
    %5226 = vmatprep.subr.mxu0 0.0
    %5227 = vmatpush2.msra.mxu0 0.0
    %5228 = vmatprep.subr.mxu0 0.0
    %5229 = vmatpush2.msra.mxu0 0.0
    %5230 = vmatprep.subr.mxu0 0.0
    %5231 = vmatpush2.msra.mxu0 0.0
    %5232 = vmatprep.subr.mxu0 0.0
    %5233 = vmatpush2.msra.mxu0 0.0
    %5234 = vmatprep.subr.mxu0 0.0
    %5235 = vmatpush2.msra.mxu0 0.0
    %5236 = vmatprep.subr.mxu0 0.0
    %5237 = vmatpush2.msra.mxu0 0.0
    %5238 = vmatprep.subr.mxu0 0.0
    %5239 = vmatpush2.msra.mxu0 0.0
    %5240 = vmatprep.subr.mxu0 0.0
    %5241 = vmatpush2.msra.mxu0 0.0
    %5242 = vmatprep.subr.mxu0 0.0
    %5243 = vmatpush2.msra.mxu0 0.0
    %5244 = vmatprep.subr.mxu0 0.0
    %5245 = vmatpush2.msra.mxu0 0.0
    %5246 = vmatprep.subr.mxu0 0.0
    %5247 = vmatpush2.msra.mxu0 0.0
    %5248 = vmatprep.subr.mxu0 0.0
    %5249 = vmatpush2.msra.mxu0 0.0
    %5250 = vmatprep.subr.mxu0 0.0
    %5251 = vmatpush2.msra.mxu0 0.0
    %5252 = vmatprep.subr.mxu0 0.0
    %5253 = vmatpush2.msra.mxu0 0.0
    %5254 = vmatprep.subr.mxu0 0.0
    %5255 = vmatpush2.msra.mxu0 0.0
    %5256 = vmatprep.subr.mxu0 0.0
    %5257 = vmatpush2.msra.mxu0 0.0
    %5258 = vmatprep.mubr.f32.mxu0 0.0
    %5259 = vmatmul.mubr.f32.gmra.mxu0 %v5192
    %v5260 = vpop.f32.mrf.mxu0
    %v5261 = vadd.f32 0.0, %v5260
    %v5262 = vpop.f32.mrf.mxu0
    %5263 = vdwg.mxu0
    %v5265 = vsel %vm1523, %v5112, 0
    %5267 = vmatprep.subr.mxu0 0.0
    %5268 = vmatpush1.msra.mxu0 0.0
    %5269 = vmatprep.subr.mxu0 0.0
    %5270 = vmatpush1.msra.mxu0 0.0
    %5271 = vmatprep.subr.mxu0 0.0
    %5272 = vmatpush1.msra.mxu0 0.0
    %5273 = vmatprep.subr.mxu0 0.0
    %5274 = vmatpush1.msra.mxu0 0.0
    %5275 = vmatprep.subr.mxu0 0.0
    %5276 = vmatpush1.msra.mxu0 0.0
    %5277 = vmatprep.subr.mxu0 0.0
    %5278 = vmatpush1.msra.mxu0 0.0
    %5279 = vmatprep.subr.mxu0 0.0
    %5280 = vmatpush1.msra.mxu0 0.0
    %5281 = vmatprep.subr.mxu0 0.0
    %5282 = vmatpush1.msra.mxu0 0.0
    %5283 = vmatprep.subr.mxu0 0.0
    %5284 = vmatpush1.msra.mxu0 0.0
    %5285 = vmatprep.subr.mxu0 0.0
    %5286 = vmatpush1.msra.mxu0 0.0
    %5287 = vmatprep.subr.mxu0 0.0
    %5288 = vmatpush1.msra.mxu0 0.0
    %5289 = vmatprep.subr.mxu0 0.0
    %5290 = vmatpush1.msra.mxu0 0.0
    %5291 = vmatprep.subr.mxu0 0.0
    %5292 = vmatpush1.msra.mxu0 0.0
    %5293 = vmatprep.subr.mxu0 0.0
    %5294 = vmatpush1.msra.mxu0 0.0
    %5295 = vmatprep.subr.mxu0 0.0
    %5296 = vmatpush1.msra.mxu0 0.0
    %5297 = vmatprep.subr.mxu0 0.0
    %5298 = vmatpush1.msra.mxu0 %v4332
    %5299 = vmatprep.subr.mxu0 0.0
    %5300 = vmatpush2.msra.mxu0 0.0
    %5301 = vmatprep.subr.mxu0 0.0
    %5302 = vmatpush2.msra.mxu0 0.0
    %5303 = vmatprep.subr.mxu0 0.0
    %5304 = vmatpush2.msra.mxu0 0.0
    %5305 = vmatprep.subr.mxu0 0.0
    %5306 = vmatpush2.msra.mxu0 0.0
    %5307 = vmatprep.subr.mxu0 0.0
    %5308 = vmatpush2.msra.mxu0 0.0
    %5309 = vmatprep.subr.mxu0 0.0
    %5310 = vmatpush2.msra.mxu0 0.0
    %5311 = vmatprep.subr.mxu0 0.0
    %5312 = vmatpush2.msra.mxu0 0.0
    %5313 = vmatprep.subr.mxu0 0.0
    %5314 = vmatpush2.msra.mxu0 0.0
    %5315 = vmatprep.subr.mxu0 0.0
    %5316 = vmatpush2.msra.mxu0 0.0
    %5317 = vmatprep.subr.mxu0 0.0
    %5318 = vmatpush2.msra.mxu0 0.0
    %5319 = vmatprep.subr.mxu0 0.0
    %5320 = vmatpush2.msra.mxu0 0.0
    %5321 = vmatprep.subr.mxu0 0.0
    %5322 = vmatpush2.msra.mxu0 0.0
    %5323 = vmatprep.subr.mxu0 0.0
    %5324 = vmatpush2.msra.mxu0 0.0
    %5325 = vmatprep.subr.mxu0 0.0
    %5326 = vmatpush2.msra.mxu0 0.0
    %5327 = vmatprep.subr.mxu0 0.0
    %5328 = vmatpush2.msra.mxu0 0.0
    %5329 = vmatprep.subr.mxu0 0.0
    %5330 = vmatpush2.msra.mxu0 0.0
    %5331 = vmatprep.mubr.f32.mxu0 0.0
    %5332 = vmatmul.mubr.f32.gmra.mxu0 %v5265
    %v5333 = vpop.f32.mrf.mxu0
    %v5334 = vadd.f32 0.0, %v5333
    %v5335 = vpop.f32.mrf.mxu0
    %5336 = vdwg.mxu0
    %v5338 = vsel %vm1523, %v5113, 0
    %5340 = vmatprep.subr.mxu0 0.0
    %5341 = vmatpush1.msra.mxu0 0.0
    %5342 = vmatprep.subr.mxu0 0.0
    %5343 = vmatpush1.msra.mxu0 0.0
    %5344 = vmatprep.subr.mxu0 0.0
    %5345 = vmatpush1.msra.mxu0 0.0
    %5346 = vmatprep.subr.mxu0 0.0
    %5347 = vmatpush1.msra.mxu0 0.0
    %5348 = vmatprep.subr.mxu0 0.0
    %5349 = vmatpush1.msra.mxu0 0.0
    %5350 = vmatprep.subr.mxu0 0.0
    %5351 = vmatpush1.msra.mxu0 0.0
    %5352 = vmatprep.subr.mxu0 0.0
    %5353 = vmatpush1.msra.mxu0 0.0
    %5354 = vmatprep.subr.mxu0 0.0
    %5355 = vmatpush1.msra.mxu0 0.0
    %5356 = vmatprep.subr.mxu0 0.0
    %5357 = vmatpush1.msra.mxu0 0.0
    %5358 = vmatprep.subr.mxu0 0.0
    %5359 = vmatpush1.msra.mxu0 0.0
    %5360 = vmatprep.subr.mxu0 0.0
    %5361 = vmatpush1.msra.mxu0 0.0
    %5362 = vmatprep.subr.mxu0 0.0
    %5363 = vmatpush1.msra.mxu0 0.0
    %5364 = vmatprep.subr.mxu0 0.0
    %5365 = vmatpush1.msra.mxu0 0.0
    %5366 = vmatprep.subr.mxu0 0.0
    %5367 = vmatpush1.msra.mxu0 0.0
    %5368 = vmatprep.subr.mxu0 0.0
    %5369 = vmatpush1.msra.mxu0 0.0
    %5370 = vmatprep.subr.mxu0 0.0
    %5371 = vmatpush1.msra.mxu0 %v4333
    %5372 = vmatprep.subr.mxu0 0.0
    %5373 = vmatpush2.msra.mxu0 0.0
    %5374 = vmatprep.subr.mxu0 0.0
    %5375 = vmatpush2.msra.mxu0 0.0
    %5376 = vmatprep.subr.mxu0 0.0
    %5377 = vmatpush2.msra.mxu0 0.0
    %5378 = vmatprep.subr.mxu0 0.0
    %5379 = vmatpush2.msra.mxu0 0.0
    %5380 = vmatprep.subr.mxu0 0.0
    %5381 = vmatpush2.msra.mxu0 0.0
    %5382 = vmatprep.subr.mxu0 0.0
    %5383 = vmatpush2.msra.mxu0 0.0
    %5384 = vmatprep.subr.mxu0 0.0
    %5385 = vmatpush2.msra.mxu0 0.0
    %5386 = vmatprep.subr.mxu0 0.0
    %5387 = vmatpush2.msra.mxu0 0.0
    %5388 = vmatprep.subr.mxu0 0.0
    %5389 = vmatpush2.msra.mxu0 0.0
    %5390 = vmatprep.subr.mxu0 0.0
    %5391 = vmatpush2.msra.mxu0 0.0
    %5392 = vmatprep.subr.mxu0 0.0
    %5393 = vmatpush2.msra.mxu0 0.0
    %5394 = vmatprep.subr.mxu0 0.0
    %5395 = vmatpush2.msra.mxu0 0.0
    %5396 = vmatprep.subr.mxu0 0.0
    %5397 = vmatpush2.msra.mxu0 0.0
    %5398 = vmatprep.subr.mxu0 0.0
    %5399 = vmatpush2.msra.mxu0 0.0
    %5400 = vmatprep.subr.mxu0 0.0
    %5401 = vmatpush2.msra.mxu0 0.0
    %5402 = vmatprep.subr.mxu0 0.0
    %5403 = vmatpush2.msra.mxu0 0.0
    %5404 = vmatprep.mubr.f32.mxu0 0.0
    %5405 = vmatmul.mubr.f32.gmra.mxu0 %v5338
    %v5406 = vpop.f32.mrf.mxu0
    %v5407 = vadd.f32 0.0, %v5406
    %v5408 = vpop.f32.mrf.mxu0
    %5409 = vdwg.mxu0
    %v5411 = vsel %vm1523, %v5114, 0
    %5413 = vmatprep.subr.mxu0 0.0
    %5414 = vmatpush1.msra.mxu0 0.0
    %5415 = vmatprep.subr.mxu0 0.0
    %5416 = vmatpush1.msra.mxu0 0.0
    %5417 = vmatprep.subr.mxu0 0.0
    %5418 = vmatpush1.msra.mxu0 0.0
    %5419 = vmatprep.subr.mxu0 0.0
    %5420 = vmatpush1.msra.mxu0 0.0
    %5421 = vmatprep.subr.mxu0 0.0
    %5422 = vmatpush1.msra.mxu0 0.0
    %5423 = vmatprep.subr.mxu0 0.0
    %5424 = vmatpush1.msra.mxu0 0.0
    %5425 = vmatprep.subr.mxu0 0.0
    %5426 = vmatpush1.msra.mxu0 0.0
    %5427 = vmatprep.subr.mxu0 0.0
    %5428 = vmatpush1.msra.mxu0 0.0
    %5429 = vmatprep.subr.mxu0 0.0
    %5430 = vmatpush1.msra.mxu0 0.0
    %5431 = vmatprep.subr.mxu0 0.0
    %5432 = vmatpush1.msra.mxu0 0.0
    %5433 = vmatprep.subr.mxu0 0.0
    %5434 = vmatpush1.msra.mxu0 0.0
    %5435 = vmatprep.subr.mxu0 0.0
    %5436 = vmatpush1.msra.mxu0 0.0
    %5437 = vmatprep.subr.mxu0 0.0
    %5438 = vmatpush1.msra.mxu0 0.0
    %5439 = vmatprep.subr.mxu0 0.0
    %5440 = vmatpush1.msra.mxu0 0.0
    %5441 = vmatprep.subr.mxu0 0.0
    %5442 = vmatpush1.msra.mxu0 0.0
    %5443 = vmatprep.subr.mxu0 0.0
    %5444 = vmatpush1.msra.mxu0 %v4398
    %5445 = vmatprep.subr.mxu0 0.0
    %5446 = vmatpush2.msra.mxu0 0.0
    %5447 = vmatprep.subr.mxu0 0.0
    %5448 = vmatpush2.msra.mxu0 0.0
    %5449 = vmatprep.subr.mxu0 0.0
    %5450 = vmatpush2.msra.mxu0 0.0
    %5451 = vmatprep.subr.mxu0 0.0
    %5452 = vmatpush2.msra.mxu0 0.0
    %5453 = vmatprep.subr.mxu0 0.0
    %5454 = vmatpush2.msra.mxu0 0.0
    %5455 = vmatprep.subr.mxu0 0.0
    %5456 = vmatpush2.msra.mxu0 0.0
    %5457 = vmatprep.subr.mxu0 0.0
    %5458 = vmatpush2.msra.mxu0 0.0
    %5459 = vmatprep.subr.mxu0 0.0
    %5460 = vmatpush2.msra.mxu0 0.0
    %5461 = vmatprep.subr.mxu0 0.0
    %5462 = vmatpush2.msra.mxu0 0.0
    %5463 = vmatprep.subr.mxu0 0.0
    %5464 = vmatpush2.msra.mxu0 0.0
    %5465 = vmatprep.subr.mxu0 0.0
    %5466 = vmatpush2.msra.mxu0 0.0
    %5467 = vmatprep.subr.mxu0 0.0
    %5468 = vmatpush2.msra.mxu0 0.0
    %5469 = vmatprep.subr.mxu0 0.0
    %5470 = vmatpush2.msra.mxu0 0.0
    %5471 = vmatprep.subr.mxu0 0.0
    %5472 = vmatpush2.msra.mxu0 0.0
    %5473 = vmatprep.subr.mxu0 0.0
    %5474 = vmatpush2.msra.mxu0 0.0
    %5475 = vmatprep.subr.mxu0 0.0
    %5476 = vmatpush2.msra.mxu0 0.0
    %5477 = vmatprep.mubr.f32.mxu0 0.0
    %5478 = vmatmul.mubr.f32.gmra.mxu0 %v5411
    %v5479 = vpop.f32.mrf.mxu0
    %v5480 = vadd.f32 0.0, %v5479
    %v5481 = vpop.f32.mrf.mxu0
    %5482 = vdwg.mxu0
    %v5484 = vsel %vm1523, %v5115, 0
    %5486 = vmatprep.subr.mxu0 0.0
    %5487 = vmatpush1.msra.mxu0 0.0
    %5488 = vmatprep.subr.mxu0 0.0
    %5489 = vmatpush1.msra.mxu0 0.0
    %5490 = vmatprep.subr.mxu0 0.0
    %5491 = vmatpush1.msra.mxu0 0.0
    %5492 = vmatprep.subr.mxu0 0.0
    %5493 = vmatpush1.msra.mxu0 0.0
    %5494 = vmatprep.subr.mxu0 0.0
    %5495 = vmatpush1.msra.mxu0 0.0
    %5496 = vmatprep.subr.mxu0 0.0
    %5497 = vmatpush1.msra.mxu0 0.0
    %5498 = vmatprep.subr.mxu0 0.0
    %5499 = vmatpush1.msra.mxu0 0.0
    %5500 = vmatprep.subr.mxu0 0.0
    %5501 = vmatpush1.msra.mxu0 0.0
    %5502 = vmatprep.subr.mxu0 0.0
    %5503 = vmatpush1.msra.mxu0 0.0
    %5504 = vmatprep.subr.mxu0 0.0
    %5505 = vmatpush1.msra.mxu0 0.0
    %5506 = vmatprep.subr.mxu0 0.0
    %5507 = vmatpush1.msra.mxu0 0.0
    %5508 = vmatprep.subr.mxu0 0.0
    %5509 = vmatpush1.msra.mxu0 0.0
    %5510 = vmatprep.subr.mxu0 0.0
    %5511 = vmatpush1.msra.mxu0 0.0
    %5512 = vmatprep.subr.mxu0 0.0
    %5513 = vmatpush1.msra.mxu0 0.0
    %5514 = vmatprep.subr.mxu0 0.0
    %5515 = vmatpush1.msra.mxu0 0.0
    %5516 = vmatprep.subr.mxu0 0.0
    %5517 = vmatpush1.msra.mxu0 %v4399
    %5518 = vmatprep.subr.mxu0 0.0
    %5519 = vmatpush2.msra.mxu0 0.0
    %5520 = vmatprep.subr.mxu0 0.0
    %5521 = vmatpush2.msra.mxu0 0.0
    %5522 = vmatprep.subr.mxu0 0.0
    %5523 = vmatpush2.msra.mxu0 0.0
    %5524 = vmatprep.subr.mxu0 0.0
    %5525 = vmatpush2.msra.mxu0 0.0
    %5526 = vmatprep.subr.mxu0 0.0
    %5527 = vmatpush2.msra.mxu0 0.0
    %5528 = vmatprep.subr.mxu0 0.0
    %5529 = vmatpush2.msra.mxu0 0.0
    %5530 = vmatprep.subr.mxu0 0.0
    %5531 = vmatpush2.msra.mxu0 0.0
    %5532 = vmatprep.subr.mxu0 0.0
    %5533 = vmatpush2.msra.mxu0 0.0
    %5534 = vmatprep.subr.mxu0 0.0
    %5535 = vmatpush2.msra.mxu0 0.0
    %5536 = vmatprep.subr.mxu0 0.0
    %5537 = vmatpush2.msra.mxu0 0.0
    %5538 = vmatprep.subr.mxu0 0.0
    %5539 = vmatpush2.msra.mxu0 0.0
    %5540 = vmatprep.subr.mxu0 0.0
    %5541 = vmatpush2.msra.mxu0 0.0
    %5542 = vmatprep.subr.mxu0 0.0
    %5543 = vmatpush2.msra.mxu0 0.0
    %5544 = vmatprep.subr.mxu0 0.0
    %5545 = vmatpush2.msra.mxu0 0.0
    %5546 = vmatprep.subr.mxu0 0.0
    %5547 = vmatpush2.msra.mxu0 0.0
    %5548 = vmatprep.subr.mxu0 0.0
    %5549 = vmatpush2.msra.mxu0 0.0
    %5550 = vmatprep.mubr.f32.mxu0 0.0
    %5551 = vmatmul.mubr.f32.gmra.mxu0 %v5484
    %v5552 = vpop.f32.mrf.mxu0
    %v5553 = vadd.f32 0.0, %v5552
    %v5554 = vpop.f32.mrf.mxu0
    %5555 = vdwg.mxu0
    %v5557 = vsel %vm1523, %v5116, 0
    %5559 = vmatprep.subr.mxu0 0.0
    %5560 = vmatpush1.msra.mxu0 0.0
    %5561 = vmatprep.subr.mxu0 0.0
    %5562 = vmatpush1.msra.mxu0 0.0
    %5563 = vmatprep.subr.mxu0 0.0
    %5564 = vmatpush1.msra.mxu0 0.0
    %5565 = vmatprep.subr.mxu0 0.0
    %5566 = vmatpush1.msra.mxu0 0.0
    %5567 = vmatprep.subr.mxu0 0.0
    %5568 = vmatpush1.msra.mxu0 0.0
    %5569 = vmatprep.subr.mxu0 0.0
    %5570 = vmatpush1.msra.mxu0 0.0
    %5571 = vmatprep.subr.mxu0 0.0
    %5572 = vmatpush1.msra.mxu0 0.0
    %5573 = vmatprep.subr.mxu0 0.0
    %5574 = vmatpush1.msra.mxu0 0.0
    %5575 = vmatprep.subr.mxu0 0.0
    %5576 = vmatpush1.msra.mxu0 0.0
    %5577 = vmatprep.subr.mxu0 0.0
    %5578 = vmatpush1.msra.mxu0 0.0
    %5579 = vmatprep.subr.mxu0 0.0
    %5580 = vmatpush1.msra.mxu0 0.0
    %5581 = vmatprep.subr.mxu0 0.0
    %5582 = vmatpush1.msra.mxu0 0.0
    %5583 = vmatprep.subr.mxu0 0.0
    %5584 = vmatpush1.msra.mxu0 0.0
    %5585 = vmatprep.subr.mxu0 0.0
    %5586 = vmatpush1.msra.mxu0 0.0
    %5587 = vmatprep.subr.mxu0 0.0
    %5588 = vmatpush1.msra.mxu0 0.0
    %5589 = vmatprep.subr.mxu0 0.0
    %5590 = vmatpush1.msra.mxu0 %v4400
    %5591 = vmatprep.subr.mxu0 0.0
    %5592 = vmatpush2.msra.mxu0 0.0
    %5593 = vmatprep.subr.mxu0 0.0
    %5594 = vmatpush2.msra.mxu0 0.0
    %5595 = vmatprep.subr.mxu0 0.0
    %5596 = vmatpush2.msra.mxu0 0.0
    %5597 = vmatprep.subr.mxu0 0.0
    %5598 = vmatpush2.msra.mxu0 0.0
    %5599 = vmatprep.subr.mxu0 0.0
    %5600 = vmatpush2.msra.mxu0 0.0
    %5601 = vmatprep.subr.mxu0 0.0
    %5602 = vmatpush2.msra.mxu0 0.0
    %5603 = vmatprep.subr.mxu0 0.0
    %5604 = vmatpush2.msra.mxu0 0.0
    %5605 = vmatprep.subr.mxu0 0.0
    %5606 = vmatpush2.msra.mxu0 0.0
    %5607 = vmatprep.subr.mxu0 0.0
    %5608 = vmatpush2.msra.mxu0 0.0
    %5609 = vmatprep.subr.mxu0 0.0
    %5610 = vmatpush2.msra.mxu0 0.0
    %5611 = vmatprep.subr.mxu0 0.0
    %5612 = vmatpush2.msra.mxu0 0.0
    %5613 = vmatprep.subr.mxu0 0.0
    %5614 = vmatpush2.msra.mxu0 0.0
    %5615 = vmatprep.subr.mxu0 0.0
    %5616 = vmatpush2.msra.mxu0 0.0
    %5617 = vmatprep.subr.mxu0 0.0
    %5618 = vmatpush2.msra.mxu0 0.0
    %5619 = vmatprep.subr.mxu0 0.0
    %5620 = vmatpush2.msra.mxu0 0.0
    %5621 = vmatprep.subr.mxu0 0.0
    %5622 = vmatpush2.msra.mxu0 0.0
    %5623 = vmatprep.mubr.f32.mxu0 0.0
    %5624 = vmatmul.mubr.f32.gmra.mxu0 %v5557
    %v5625 = vpop.f32.mrf.mxu0
    %v5626 = vadd.f32 0.0, %v5625
    %v5627 = vpop.f32.mrf.mxu0
    %5628 = vdwg.mxu0
    %v5630 = vsel %vm1523, %v5117, 0
    %5632 = vmatprep.subr.mxu0 0.0
    %5633 = vmatpush1.msra.mxu0 0.0
    %5634 = vmatprep.subr.mxu0 0.0
    %5635 = vmatpush1.msra.mxu0 0.0
    %5636 = vmatprep.subr.mxu0 0.0
    %5637 = vmatpush1.msra.mxu0 0.0
    %5638 = vmatprep.subr.mxu0 0.0
    %5639 = vmatpush1.msra.mxu0 0.0
    %5640 = vmatprep.subr.mxu0 0.0
    %5641 = vmatpush1.msra.mxu0 0.0
    %5642 = vmatprep.subr.mxu0 0.0
    %5643 = vmatpush1.msra.mxu0 0.0
    %5644 = vmatprep.subr.mxu0 0.0
    %5645 = vmatpush1.msra.mxu0 0.0
    %5646 = vmatprep.subr.mxu0 0.0
    %5647 = vmatpush1.msra.mxu0 0.0
    %5648 = vmatprep.subr.mxu0 0.0
    %5649 = vmatpush1.msra.mxu0 0.0
    %5650 = vmatprep.subr.mxu0 0.0
    %5651 = vmatpush1.msra.mxu0 0.0
    %5652 = vmatprep.subr.mxu0 0.0
    %5653 = vmatpush1.msra.mxu0 0.0
    %5654 = vmatprep.subr.mxu0 0.0
    %5655 = vmatpush1.msra.mxu0 0.0
    %5656 = vmatprep.subr.mxu0 0.0
    %5657 = vmatpush1.msra.mxu0 0.0
    %5658 = vmatprep.subr.mxu0 0.0
    %5659 = vmatpush1.msra.mxu0 0.0
    %5660 = vmatprep.subr.mxu0 0.0
    %5661 = vmatpush1.msra.mxu0 0.0
    %5662 = vmatprep.subr.mxu0 0.0
    %5663 = vmatpush1.msra.mxu0 %v4401
    %5664 = vmatprep.subr.mxu0 0.0
    %5665 = vmatpush2.msra.mxu0 0.0
    %5666 = vmatprep.subr.mxu0 0.0
    %5667 = vmatpush2.msra.mxu0 0.0
    %5668 = vmatprep.subr.mxu0 0.0
    %5669 = vmatpush2.msra.mxu0 0.0
    %5670 = vmatprep.subr.mxu0 0.0
    %5671 = vmatpush2.msra.mxu0 0.0
    %5672 = vmatprep.subr.mxu0 0.0
    %5673 = vmatpush2.msra.mxu0 0.0
    %5674 = vmatprep.subr.mxu0 0.0
    %5675 = vmatpush2.msra.mxu0 0.0
    %5676 = vmatprep.subr.mxu0 0.0
    %5677 = vmatpush2.msra.mxu0 0.0
    %5678 = vmatprep.subr.mxu0 0.0
    %5679 = vmatpush2.msra.mxu0 0.0
    %5680 = vmatprep.subr.mxu0 0.0
    %5681 = vmatpush2.msra.mxu0 0.0
    %5682 = vmatprep.subr.mxu0 0.0
    %5683 = vmatpush2.msra.mxu0 0.0
    %5684 = vmatprep.subr.mxu0 0.0
    %5685 = vmatpush2.msra.mxu0 0.0
    %5686 = vmatprep.subr.mxu0 0.0
    %5687 = vmatpush2.msra.mxu0 0.0
    %5688 = vmatprep.subr.mxu0 0.0
    %5689 = vmatpush2.msra.mxu0 0.0
    %5690 = vmatprep.subr.mxu0 0.0
    %5691 = vmatpush2.msra.mxu0 0.0
    %5692 = vmatprep.subr.mxu0 0.0
    %5693 = vmatpush2.msra.mxu0 0.0
    %5694 = vmatprep.subr.mxu0 0.0
    %5695 = vmatpush2.msra.mxu0 0.0
    %5696 = vmatprep.mubr.f32.mxu0 0.0
    %5697 = vmatmul.mubr.f32.gmra.mxu0 %v5630
    %v5698 = vpop.f32.mrf.mxu0
    %v5699 = vadd.f32 0.0, %v5698
    %v5700 = vpop.f32.mrf.mxu0
    %5701 = vdwg.mxu0
    %v5702 = vcombine.low %v5188, %v5334
    %v5703 = vcombine.high %v5188, %v5334
    %v5705 = vunpack.c.l.s4 1983009808
    %v5706 = vunpack.c.0.s8 %v5705
    %v5707 = vlaneseq
    %v5708 = vshrl.u32 %v5707, 7
    %v5709 = vsub.s32 %v5706, %v5708
    %v5710 = vrot.slane %v5702, %v5709
    %v5712 = vunpack.c.l.s4 1983009808
    %v5713 = vunpack.c.0.s8 %v5712
    %v5714 = vlaneseq
    %v5715 = vshrl.u32 %v5714, 7
    %v5716 = vsub.s32 %v5713, %v5715
    %v5717 = vrot.slane %v5703, %v5716
    %v5718 = vcombine.low %v5261, %v5407
    %v5719 = vcombine.high %v5261, %v5407
    %v5721 = vunpack.c.l.s4 1983009808
    %v5722 = vunpack.c.0.s8 %v5721
    %v5723 = vlaneseq
    %v5724 = vshrl.u32 %v5723, 7
    %v5725 = vsub.s32 %v5722, %v5724
    %v5726 = vrot.slane %v5718, %v5725
    %v5728 = vunpack.c.l.s4 1983009808
    %v5729 = vunpack.c.0.s8 %v5728
    %v5730 = vlaneseq
    %v5731 = vshrl.u32 %v5730, 7
    %v5732 = vsub.s32 %v5729, %v5731
    %v5733 = vrot.slane %v5719, %v5732
    %v5734 = vcombine.low %v5710, %v5726
    %v5735 = vcombine.high %v5710, %v5726
    %v5737 = vunpack.c.l.s4 1934713408
    %v5738 = vunpack.c.0.s8 %v5737
    %v5739 = vlaneseq
    %v5740 = vshrl.u32 %v5739, 7
    %v5741 = vsub.s32 %v5738, %v5740
    %v5742 = vrot.slane %v5734, %v5741
    %v5744 = vunpack.c.l.s4 1934713408
    %v5745 = vunpack.c.0.s8 %v5744
    %v5746 = vlaneseq
    %v5747 = vshrl.u32 %v5746, 7
    %v5748 = vsub.s32 %v5745, %v5747
    %v5749 = vrot.slane %v5735, %v5748
    %v5750 = vcombine.low %v5717, %v5733
    %v5751 = vcombine.high %v5717, %v5733
    %v5753 = vunpack.c.l.s4 1934713408
    %v5754 = vunpack.c.0.s8 %v5753
    %v5755 = vlaneseq
    %v5756 = vshrl.u32 %v5755, 7
    %v5757 = vsub.s32 %v5754, %v5756
    %v5758 = vrot.slane %v5750, %v5757
    %v5760 = vunpack.c.l.s4 1934713408
    %v5761 = vunpack.c.0.s8 %v5760
    %v5762 = vlaneseq
    %v5763 = vshrl.u32 %v5762, 7
    %v5764 = vsub.s32 %v5761, %v5763
    %v5765 = vrot.slane %v5751, %v5764
    %v5766 = vcombine.high %v5742, 0.0
    %v5767 = vcombine.high %v5749, 0.0
    %v5768 = vcombine.high %v5758, 0.0
    %v5769 = vcombine.high %v5765, 0.0
    %v5770 = vcombine.low %v5480, %v5626
    %v5771 = vcombine.high %v5480, %v5626
    %v5773 = vunpack.c.l.s4 1983009808
    %v5774 = vunpack.c.0.s8 %v5773
    %v5775 = vlaneseq
    %v5776 = vshrl.u32 %v5775, 7
    %v5777 = vsub.s32 %v5774, %v5776
    %v5778 = vrot.slane %v5770, %v5777
    %v5780 = vunpack.c.l.s4 1983009808
    %v5781 = vunpack.c.0.s8 %v5780
    %v5782 = vlaneseq
    %v5783 = vshrl.u32 %v5782, 7
    %v5784 = vsub.s32 %v5781, %v5783
    %v5785 = vrot.slane %v5771, %v5784
    %v5786 = vcombine.low %v5553, %v5699
    %v5787 = vcombine.high %v5553, %v5699
    %v5789 = vunpack.c.l.s4 1983009808
    %v5790 = vunpack.c.0.s8 %v5789
    %v5791 = vlaneseq
    %v5792 = vshrl.u32 %v5791, 7
    %v5793 = vsub.s32 %v5790, %v5792
    %v5794 = vrot.slane %v5786, %v5793
    %v5796 = vunpack.c.l.s4 1983009808
    %v5797 = vunpack.c.0.s8 %v5796
    %v5798 = vlaneseq
    %v5799 = vshrl.u32 %v5798, 7
    %v5800 = vsub.s32 %v5797, %v5799
    %v5801 = vrot.slane %v5787, %v5800
    %v5802 = vcombine.low %v5778, %v5794
    %v5803 = vcombine.high %v5778, %v5794
    %v5805 = vunpack.c.l.s4 1934713408
    %v5806 = vunpack.c.0.s8 %v5805
    %v5807 = vlaneseq
    %v5808 = vshrl.u32 %v5807, 7
    %v5809 = vsub.s32 %v5806, %v5808
    %v5810 = vrot.slane %v5802, %v5809
    %v5812 = vunpack.c.l.s4 1934713408
    %v5813 = vunpack.c.0.s8 %v5812
    %v5814 = vlaneseq
    %v5815 = vshrl.u32 %v5814, 7
    %v5816 = vsub.s32 %v5813, %v5815
    %v5817 = vrot.slane %v5803, %v5816
    %v5818 = vcombine.low %v5785, %v5801
    %v5819 = vcombine.high %v5785, %v5801
    %v5821 = vunpack.c.l.s4 1934713408
    %v5822 = vunpack.c.0.s8 %v5821
    %v5823 = vlaneseq
    %v5824 = vshrl.u32 %v5823, 7
    %v5825 = vsub.s32 %v5822, %v5824
    %v5826 = vrot.slane %v5818, %v5825
    %v5828 = vunpack.c.l.s4 1934713408
    %v5829 = vunpack.c.0.s8 %v5828
    %v5830 = vlaneseq
    %v5831 = vshrl.u32 %v5830, 7
    %v5832 = vsub.s32 %v5829, %v5831
    %v5833 = vrot.slane %v5819, %v5832
    %v5834 = vcombine.high %v5810, 0.0
    %v5835 = vcombine.high %v5817, 0.0
    %v5836 = vcombine.high %v5826, 0.0
    %v5837 = vcombine.high %v5833, 0.0
    %v5838 = vcombine.low %v5742, %v5749
    %v5840 = vunpack.c.l.s4 1983009808
    %v5841 = vunpack.c.0.s8 %v5840
    %v5842 = vlaneseq
    %v5843 = vshrl.u32 %v5842, 7
    %v5844 = vsub.s32 %v5841, %v5843
    %v5845 = vrot.slane %v5838, %v5844
    %v5846 = vcombine.low %v5766, %v5767
    %v5848 = vunpack.c.l.s4 1983009808
    %v5849 = vunpack.c.0.s8 %v5848
    %v5850 = vlaneseq
    %v5851 = vshrl.u32 %v5850, 7
    %v5852 = vsub.s32 %v5849, %v5851
    %v5853 = vrot.slane %v5846, %v5852
    %v5854 = vcombine.low %v5758, %v5765
    %v5856 = vunpack.c.l.s4 1983009808
    %v5857 = vunpack.c.0.s8 %v5856
    %v5858 = vlaneseq
    %v5859 = vshrl.u32 %v5858, 7
    %v5860 = vsub.s32 %v5857, %v5859
    %v5861 = vrot.slane %v5854, %v5860
    %v5862 = vcombine.low %v5768, %v5769
    %v5864 = vunpack.c.l.s4 1983009808
    %v5865 = vunpack.c.0.s8 %v5864
    %v5866 = vlaneseq
    %v5867 = vshrl.u32 %v5866, 7
    %v5868 = vsub.s32 %v5865, %v5867
    %v5869 = vrot.slane %v5862, %v5868
    %v5870 = vcombine.low %v5845, %v5853
    %v5871 = vcombine.high %v5845, %v5853
    %v5873 = vunpack.c.l.s4 1934713408
    %v5874 = vunpack.c.0.s8 %v5873
    %v5875 = vlaneseq
    %v5876 = vshrl.u32 %v5875, 7
    %v5877 = vsub.s32 %v5874, %v5876
    %v5878 = vrot.slane %v5870, %v5877
    %v5880 = vunpack.c.l.s4 1934713408
    %v5881 = vunpack.c.0.s8 %v5880
    %v5882 = vlaneseq
    %v5883 = vshrl.u32 %v5882, 7
    %v5884 = vsub.s32 %v5881, %v5883
    %v5885 = vrot.slane %v5871, %v5884
    %v5886 = vcombine.low %v5861, %v5869
    %v5887 = vcombine.high %v5861, %v5869
    %v5889 = vunpack.c.l.s4 1934713408
    %v5890 = vunpack.c.0.s8 %v5889
    %v5891 = vlaneseq
    %v5892 = vshrl.u32 %v5891, 7
    %v5893 = vsub.s32 %v5890, %v5892
    %v5894 = vrot.slane %v5886, %v5893
    %v5896 = vunpack.c.l.s4 1934713408
    %v5897 = vunpack.c.0.s8 %v5896
    %v5898 = vlaneseq
    %v5899 = vshrl.u32 %v5898, 7
    %v5900 = vsub.s32 %v5897, %v5899
    %v5901 = vrot.slane %v5887, %v5900
    %v5902 = vcombine.low %v5878, %v5894
    %v5903 = vcombine.high %v5878, %v5894
    %v5904 = vcombine.low %v5885, %v5901
    %v5905 = vcombine.high %v5885, %v5901
    %v5906 = vcombine.low %v5810, %v5817
    %v5908 = vunpack.c.l.s4 1983009808
    %v5909 = vunpack.c.0.s8 %v5908
    %v5910 = vlaneseq
    %v5911 = vshrl.u32 %v5910, 7
    %v5912 = vsub.s32 %v5909, %v5911
    %v5913 = vrot.slane %v5906, %v5912
    %v5914 = vcombine.low %v5834, %v5835
    %v5916 = vunpack.c.l.s4 1983009808
    %v5917 = vunpack.c.0.s8 %v5916
    %v5918 = vlaneseq
    %v5919 = vshrl.u32 %v5918, 7
    %v5920 = vsub.s32 %v5917, %v5919
    %v5921 = vrot.slane %v5914, %v5920
    %v5922 = vcombine.low %v5826, %v5833
    %v5924 = vunpack.c.l.s4 1983009808
    %v5925 = vunpack.c.0.s8 %v5924
    %v5926 = vlaneseq
    %v5927 = vshrl.u32 %v5926, 7
    %v5928 = vsub.s32 %v5925, %v5927
    %v5929 = vrot.slane %v5922, %v5928
    %v5930 = vcombine.low %v5836, %v5837
    %v5932 = vunpack.c.l.s4 1983009808
    %v5933 = vunpack.c.0.s8 %v5932
    %v5934 = vlaneseq
    %v5935 = vshrl.u32 %v5934, 7
    %v5936 = vsub.s32 %v5933, %v5935
    %v5937 = vrot.slane %v5930, %v5936
    %v5938 = vcombine.low %v5913, %v5921
    %v5939 = vcombine.high %v5913, %v5921
    %v5941 = vunpack.c.l.s4 1934713408
    %v5942 = vunpack.c.0.s8 %v5941
    %v5943 = vlaneseq
    %v5944 = vshrl.u32 %v5943, 7
    %v5945 = vsub.s32 %v5942, %v5944
    %v5946 = vrot.slane %v5938, %v5945
    %v5948 = vunpack.c.l.s4 1934713408
    %v5949 = vunpack.c.0.s8 %v5948
    %v5950 = vlaneseq
    %v5951 = vshrl.u32 %v5950, 7
    %v5952 = vsub.s32 %v5949, %v5951
    %v5953 = vrot.slane %v5939, %v5952
    %v5954 = vcombine.low %v5929, %v5937
    %v5955 = vcombine.high %v5929, %v5937
    %v5957 = vunpack.c.l.s4 1934713408
    %v5958 = vunpack.c.0.s8 %v5957
    %v5959 = vlaneseq
    %v5960 = vshrl.u32 %v5959, 7
    %v5961 = vsub.s32 %v5958, %v5960
    %v5962 = vrot.slane %v5954, %v5961
    %v5964 = vunpack.c.l.s4 1934713408
    %v5965 = vunpack.c.0.s8 %v5964
    %v5966 = vlaneseq
    %v5967 = vshrl.u32 %v5966, 7
    %v5968 = vsub.s32 %v5965, %v5967
    %v5969 = vrot.slane %v5955, %v5968
    %v5970 = vcombine.low %v5946, %v5962
    %v5971 = vcombine.high %v5946, %v5962
    %v5972 = vcombine.low %v5953, %v5969
    %v5973 = vcombine.high %v5953, %v5969
    %5976 = vrot.lane.b32.xlu0 %v5903, 8
    %v5977 = vpop.permute.xlu0 %5976
    %5978 = vrot.lane.b32.xlu0 %v5971, 8
    %v5979 = vpop.permute.xlu0 %5978
    %5984 = vrot.lane.b32.xlu0 %v5904, 16
    %v5985 = vpop.permute.xlu0 %5984
    %5986 = vrot.lane.b32.xlu0 %v5972, 16
    %v5987 = vpop.permute.xlu0 %5986
    %5992 = vrot.lane.b32.xlu0 %v5905, 24
    %v5993 = vpop.permute.xlu0 %5992
    %5994 = vrot.lane.b32.xlu0 %v5973, 24
    %v5995 = vpop.permute.xlu0 %5994
    %v5998 = vsel %vm1523, %v5902, %v5977
    %v5999 = vsel %vm1523, %v5970, %v5979
    %v6000 = vsel %vm3110, %v5998, %v5985
    %v6001 = vsel %vm3110, %v5999, %v5987
    %v6002 = vsel %vm3113, %v6000, %v5993
    %v6003 = vsel %vm3113, %v6001, %v5995
    %v6005 = vlaneseq
    %v6006 = vshrl.u32 %v6005, 7
    %v6007 = vsub.s32 0, %v6006
    %v6008 = vrot.slane %v3268, %v6007
    %v6011 = vsel %vm332, %v6002, 0
    %v6014 = vsel %vm332, %v6003, 0
    %6016 = vmatprep.subr.mxu0 0.0
    %6017 = vmatpush1.msra.mxu0 0.0
    %6018 = vmatprep.subr.mxu0 0.0
    %6019 = vmatpush1.msra.mxu0 0.0
    %6020 = vmatprep.subr.mxu0 0.0
    %6021 = vmatpush1.msra.mxu0 0.0
    %6022 = vmatprep.subr.mxu0 0.0
    %6023 = vmatpush1.msra.mxu0 0.0
    %6024 = vmatprep.subr.mxu0 0.0
    %6025 = vmatpush1.msra.mxu0 0.0
    %6026 = vmatprep.subr.mxu0 0.0
    %6027 = vmatpush1.msra.mxu0 0.0
    %6028 = vmatprep.subr.mxu0 0.0
    %6029 = vmatpush1.msra.mxu0 0.0
    %6030 = vmatprep.subr.mxu0 0.0
    %6031 = vmatpush1.msra.mxu0 0.0
    %6032 = vmatprep.subr.mxu0 0.0
    %6033 = vmatpush1.msra.mxu0 0.0
    %6034 = vmatprep.subr.mxu0 0.0
    %6035 = vmatpush1.msra.mxu0 0.0
    %6036 = vmatprep.subr.mxu0 0.0
    %6037 = vmatpush1.msra.mxu0 0.0
    %6038 = vmatprep.subr.mxu0 0.0
    %6039 = vmatpush1.msra.mxu0 0.0
    %6040 = vmatprep.subr.mxu0 0.0
    %6041 = vmatpush1.msra.mxu0 %v3267
    %6042 = vmatprep.subr.mxu0 0.0
    %6043 = vmatpush1.msra.mxu0 %v3266
    %6044 = vmatprep.subr.mxu0 0.0
    %6045 = vmatpush1.msra.mxu0 %v3265
    %6046 = vmatprep.subr.mxu0 0.0
    %6047 = vmatpush1.msra.mxu0 %v3264
    %6048 = vmatprep.subr.mxu0 0.0
    %6049 = vmatpush2.msra.mxu0 0.0
    %6050 = vmatprep.subr.mxu0 0.0
    %6051 = vmatpush2.msra.mxu0 0.0
    %6052 = vmatprep.subr.mxu0 0.0
    %6053 = vmatpush2.msra.mxu0 0.0
    %6054 = vmatprep.subr.mxu0 0.0
    %6055 = vmatpush2.msra.mxu0 0.0
    %6056 = vmatprep.subr.mxu0 0.0
    %6057 = vmatpush2.msra.mxu0 0.0
    %6058 = vmatprep.subr.mxu0 0.0
    %6059 = vmatpush2.msra.mxu0 0.0
    %6060 = vmatprep.subr.mxu0 0.0
    %6061 = vmatpush2.msra.mxu0 0.0
    %6062 = vmatprep.subr.mxu0 0.0
    %6063 = vmatpush2.msra.mxu0 0.0
    %6064 = vmatprep.subr.mxu0 0.0
    %6065 = vmatpush2.msra.mxu0 0.0
    %6066 = vmatprep.subr.mxu0 0.0
    %6067 = vmatpush2.msra.mxu0 0.0
    %6068 = vmatprep.subr.mxu0 0.0
    %6069 = vmatpush2.msra.mxu0 0.0
    %6070 = vmatprep.subr.mxu0 0.0
    %6071 = vmatpush2.msra.mxu0 0.0
    %6072 = vmatprep.subr.mxu0 0.0
    %6073 = vmatpush2.msra.mxu0 0.0
    %6074 = vmatprep.subr.mxu0 0.0
    %6075 = vmatpush2.msra.mxu0 0.0
    %6076 = vmatprep.subr.mxu0 0.0
    %6077 = vmatpush2.msra.mxu0 0.0
    %6078 = vmatprep.subr.mxu0 0.0
    %6079 = vmatpush2.msra.mxu0 0.0
    %6080 = vmatprep.mubr.f32.mxu0 0.0
    %6081 = vmatmul.mubr.f32.gmra.mxu0 %v6011
    %v6082 = vpop.f32.mrf.mxu0
    %v6083 = vadd.f32 %v6008, %v6082
    %v6084 = vpop.f32.mrf.mxu0
    %6085 = vmatprep.mubr.f32.mxu0 0.0
    %6086 = vmatmul.mubr.f32.gmra.mxu0 %v6014
    %v6087 = vpop.f32.mrf.mxu0
    %v6088 = vadd.f32 %v6008, %v6087
    %v6089 = vpop.f32.mrf.mxu0
    %6090 = vdwg.mxu0
    %v6091 = vadd.f32 %v3203, %v6083
    %v6092 = vadd.f32 %v3204, %v6088
    %v6093 = vld [vmem:[%s57] sm:$0x1]
    %v6094 = vld [vmem:[%s59] sm:$0x1]
    %v6095 = vsel %vm332, %v6091, 0.0
    %6096 = vadd.xlane.f32.xlu0 %v6095
    %v6097 = vpop.xlane.xlu0 %6096
    %v6098 = vsel %vm332, %v6092, 0.0
    %6099 = vadd.xlane.f32.xlu0 %v6098
    %v6100 = vpop.xlane.xlu0 %6099
    %v6101 = vmul.f32 %v6097, %v339
    %v6102 = vmul.f32 %v6100, %v339
    %v6103 = vsub.f32 %v6091, %v6101
    %v6104 = vsub.f32 %v6092, %v6102
    %v6105 = vmul.f32 %v6103, %v6103
    %v6106 = vmul.f32 %v6104, %v6104
    %v6107 = vsel %vm332, %v6105, 0.0
    %6108 = vadd.xlane.f32.xlu0 %v6107
    %v6109 = vpop.xlane.xlu0 %6108
    %v6110 = vsel %vm332, %v6106, 0.0
    %6111 = vadd.xlane.f32.xlu0 %v6110
    %v6112 = vpop.xlane.xlu0 %6111
    %v6113 = vmul.f32 %v6109, %v339
    %v6114 = vmul.f32 %v6112, %v339
    %v6116 = vlaneseq
    %v6117 = vshrl.u32 %v6116, 7
    %v6118 = vsub.s32 0, %v6117
    %v6119 = vrot.slane %v6093, %v6118
    %v6121 = vmul.f32 %v6119, %v6103
    %v6122 = vmul.f32 %v6119, %v6104
    %v6123 = vadd.f32 %v6113, 1e-06
    %v6124 = vadd.f32 %v6114, 1e-06
    %v6125 = vrsqrt.pop %v6123
    %v6126 = vrsqrt.pop %v6124
    %v6127 = vmul.f32 %v6121, %v6125
    %v6128 = vmul.f32 %v6122, %v6126
    %v6130 = vlaneseq
    %v6131 = vshrl.u32 %v6130, 7
    %v6132 = vsub.s32 0, %v6131
    %v6133 = vrot.slane %v6094, %v6132
    %v6135 = vadd.f32 %v6127, %v6133
    %v6136 = vadd.f32 %v6128, %v6133
    %v6137 = vld [vmem:[#allocation20] sm:$0xff]
    %v6138 = vld [vmem:[#allocation20 + $0x8] sm:$0xff]
    %v6139 = vld [vmem:[#allocation20 + $0x10] sm:$0xff]
    %v6140 = vld [vmem:[#allocation20 + $0x18] sm:$0xff]
    %v6141 = vld [vmem:[#allocation22] sm:$0x1]
    %v6143 = vlaneseq
    %v6144 = vshrl.u32 %v6143, 7
    %v6145 = vsub.s32 0, %v6144
    %v6146 = vrot.slane %v6141, %v6145
    %v6149 = vsel %vm332, %v6135, 0
    %v6152 = vsel %vm332, %v6136, 0
    %6154 = vmatprep.subr.mxu0 0.0
    %6155 = vmatpush1.msra.mxu0 0.0
    %6156 = vmatprep.subr.mxu0 0.0
    %6157 = vmatpush1.msra.mxu0 0.0
    %6158 = vmatprep.subr.mxu0 0.0
    %6159 = vmatpush1.msra.mxu0 0.0
    %6160 = vmatprep.subr.mxu0 0.0
    %6161 = vmatpush1.msra.mxu0 0.0
    %6162 = vmatprep.subr.mxu0 0.0
    %6163 = vmatpush1.msra.mxu0 0.0
    %6164 = vmatprep.subr.mxu0 0.0
    %6165 = vmatpush1.msra.mxu0 0.0
    %6166 = vmatprep.subr.mxu0 0.0
    %6167 = vmatpush1.msra.mxu0 0.0
    %6168 = vmatprep.subr.mxu0 0.0
    %6169 = vmatpush1.msra.mxu0 0.0
    %6170 = vmatprep.subr.mxu0 0.0
    %6171 = vmatpush1.msra.mxu0 0.0
    %6172 = vmatprep.subr.mxu0 0.0
    %6173 = vmatpush1.msra.mxu0 0.0
    %6174 = vmatprep.subr.mxu0 0.0
    %6175 = vmatpush1.msra.mxu0 0.0
    %6176 = vmatprep.subr.mxu0 0.0
    %6177 = vmatpush1.msra.mxu0 0.0
    %6178 = vmatprep.subr.mxu0 0.0
    %6179 = vmatpush1.msra.mxu0 %v6140
    %6180 = vmatprep.subr.mxu0 0.0
    %6181 = vmatpush1.msra.mxu0 %v6139
    %6182 = vmatprep.subr.mxu0 0.0
    %6183 = vmatpush1.msra.mxu0 %v6138
    %6184 = vmatprep.subr.mxu0 0.0
    %6185 = vmatpush1.msra.mxu0 %v6137
    %6186 = vmatprep.subr.mxu0 0.0
    %6187 = vmatpush2.msra.mxu0 0.0
    %6188 = vmatprep.subr.mxu0 0.0
    %6189 = vmatpush2.msra.mxu0 0.0
    %6190 = vmatprep.subr.mxu0 0.0
    %6191 = vmatpush2.msra.mxu0 0.0
    %6192 = vmatprep.subr.mxu0 0.0
    %6193 = vmatpush2.msra.mxu0 0.0
    %6194 = vmatprep.subr.mxu0 0.0
    %6195 = vmatpush2.msra.mxu0 0.0
    %6196 = vmatprep.subr.mxu0 0.0
    %6197 = vmatpush2.msra.mxu0 0.0
    %6198 = vmatprep.subr.mxu0 0.0
    %6199 = vmatpush2.msra.mxu0 0.0
    %6200 = vmatprep.subr.mxu0 0.0
    %6201 = vmatpush2.msra.mxu0 0.0
    %6202 = vmatprep.subr.mxu0 0.0
    %6203 = vmatpush2.msra.mxu0 0.0
    %6204 = vmatprep.subr.mxu0 0.0
    %6205 = vmatpush2.msra.mxu0 0.0
    %6206 = vmatprep.subr.mxu0 0.0
    %6207 = vmatpush2.msra.mxu0 0.0
    %6208 = vmatprep.subr.mxu0 0.0
    %6209 = vmatpush2.msra.mxu0 0.0
    %6210 = vmatprep.subr.mxu0 0.0
    %6211 = vmatpush2.msra.mxu0 0.0
    %6212 = vmatprep.subr.mxu0 0.0
    %6213 = vmatpush2.msra.mxu0 0.0
    %6214 = vmatprep.subr.mxu0 0.0
    %6215 = vmatpush2.msra.mxu0 0.0
    %6216 = vmatprep.subr.mxu0 0.0
    %6217 = vmatpush2.msra.mxu0 0.0
    %6218 = vmatprep.mubr.f32.mxu0 0.0
    %6219 = vmatmul.mubr.f32.gmra.mxu0 %v6149
    %v6220 = vpop.f32.mrf.mxu0
    %v6221 = vadd.f32 %v6146, %v6220
    %v6222 = vpop.f32.mrf.mxu0
    %6223 = vmatprep.mubr.f32.mxu0 0.0
    %6224 = vmatmul.mubr.f32.gmra.mxu0 %v6152
    %v6225 = vpop.f32.mrf.mxu0
    %v6226 = vadd.f32 %v6146, %v6225
    %v6227 = vpop.f32.mrf.mxu0
    %6228 = vdwg.mxu0
    %v6229 = vmax.f32 %v6221, 0.0
    %v6230 = vmax.f32 %v6226, 0.0
    %v6231 = vld [vmem:[%s45] sm:$0xff]
    %v6232 = vld [vmem:[%s45 + $0x8] sm:$0xff]
    %v6233 = vld [vmem:[%s45 + $0x10] sm:$0xff]
    %v6234 = vld [vmem:[%s45 + $0x18] sm:$0xff]
    %v6235 = vld [vmem:[%s45 + $0x20] sm:$0xff]
    %v6236 = vld [vmem:[%s45 + $0x28] sm:$0xff]
    %v6237 = vld [vmem:[%s45 + $0x30] sm:$0xff]
    %v6238 = vld [vmem:[%s45 + $0x38] sm:$0xff]
    %v6239 = vld [vmem:[%s47] sm:$0x1]
    %v6241 = vlaneseq
    %v6242 = vshrl.u32 %v6241, 7
    %v6243 = vsub.s32 0, %v6242
    %v6244 = vrot.slane %v6239, %v6243
    %vm6246 = vcmask 523264
    %v6248 = vsel %vm6246, %v6229, 0
    %v6251 = vsel %vm6246, %v6230, 0
    %6253 = vmatprep.subr.mxu0 0.0
    %6254 = vmatpush1.msra.mxu0 0.0
    %6255 = vmatprep.subr.mxu0 0.0
    %6256 = vmatpush1.msra.mxu0 0.0
    %6257 = vmatprep.subr.mxu0 0.0
    %6258 = vmatpush1.msra.mxu0 0.0
    %6259 = vmatprep.subr.mxu0 0.0
    %6260 = vmatpush1.msra.mxu0 0.0
    %6261 = vmatprep.subr.mxu0 0.0
    %6262 = vmatpush1.msra.mxu0 0.0
    %6263 = vmatprep.subr.mxu0 0.0
    %6264 = vmatpush1.msra.mxu0 0.0
    %6265 = vmatprep.subr.mxu0 0.0
    %6266 = vmatpush1.msra.mxu0 0.0
    %6267 = vmatprep.subr.mxu0 0.0
    %6268 = vmatpush1.msra.mxu0 0.0
    %6269 = vmatprep.subr.mxu0 0.0
    %6270 = vmatpush1.msra.mxu0 %v6238
    %6271 = vmatprep.subr.mxu0 0.0
    %6272 = vmatpush1.msra.mxu0 %v6237
    %6273 = vmatprep.subr.mxu0 0.0
    %6274 = vmatpush1.msra.mxu0 %v6236
    %6275 = vmatprep.subr.mxu0 0.0
    %6276 = vmatpush1.msra.mxu0 %v6235
    %6277 = vmatprep.subr.mxu0 0.0
    %6278 = vmatpush1.msra.mxu0 %v6234
    %6279 = vmatprep.subr.mxu0 0.0
    %6280 = vmatpush1.msra.mxu0 %v6233
    %6281 = vmatprep.subr.mxu0 0.0
    %6282 = vmatpush1.msra.mxu0 %v6232
    %6283 = vmatprep.subr.mxu0 0.0
    %6284 = vmatpush1.msra.mxu0 %v6231
    %6285 = vmatprep.subr.mxu0 0.0
    %6286 = vmatpush2.msra.mxu0 0.0
    %6287 = vmatprep.subr.mxu0 0.0
    %6288 = vmatpush2.msra.mxu0 0.0
    %6289 = vmatprep.subr.mxu0 0.0
    %6290 = vmatpush2.msra.mxu0 0.0
    %6291 = vmatprep.subr.mxu0 0.0
    %6292 = vmatpush2.msra.mxu0 0.0
    %6293 = vmatprep.subr.mxu0 0.0
    %6294 = vmatpush2.msra.mxu0 0.0
    %6295 = vmatprep.subr.mxu0 0.0
    %6296 = vmatpush2.msra.mxu0 0.0
    %6297 = vmatprep.subr.mxu0 0.0
    %6298 = vmatpush2.msra.mxu0 0.0
    %6299 = vmatprep.subr.mxu0 0.0
    %6300 = vmatpush2.msra.mxu0 0.0
    %6301 = vmatprep.subr.mxu0 0.0
    %6302 = vmatpush2.msra.mxu0 0.0
    %6303 = vmatprep.subr.mxu0 0.0
    %6304 = vmatpush2.msra.mxu0 0.0
    %6305 = vmatprep.subr.mxu0 0.0
    %6306 = vmatpush2.msra.mxu0 0.0
    %6307 = vmatprep.subr.mxu0 0.0
    %6308 = vmatpush2.msra.mxu0 0.0
    %6309 = vmatprep.subr.mxu0 0.0
    %6310 = vmatpush2.msra.mxu0 0.0
    %6311 = vmatprep.subr.mxu0 0.0
    %6312 = vmatpush2.msra.mxu0 0.0
    %6313 = vmatprep.subr.mxu0 0.0
    %6314 = vmatpush2.msra.mxu0 0.0
    %6315 = vmatprep.subr.mxu0 0.0
    %6316 = vmatpush2.msra.mxu0 0.0
    %6317 = vmatprep.mubr.f32.mxu0 0.0
    %6318 = vmatmul.mubr.f32.gmra.mxu0 %v6248
    %v6319 = vpop.f32.mrf.mxu0
    %v6320 = vadd.f32 %v6244, %v6319
    %v6321 = vpop.f32.mrf.mxu0
    %6322 = vmatprep.mubr.f32.mxu0 0.0
    %6323 = vmatmul.mubr.f32.gmra.mxu0 %v6251
    %v6324 = vpop.f32.mrf.mxu0
    %v6325 = vadd.f32 %v6244, %v6324
    %v6326 = vpop.f32.mrf.mxu0
    %6327 = vdwg.mxu0
    %v6328 = vadd.f32 %v6091, %v6320
    %v6329 = vadd.f32 %v6092, %v6325
    %6330 = vst.msk [vmem:[#allocation23] sm:$0xff] %vm332, %v6328
    %6331 = vst.msk [vmem:[#allocation23 + $0x8] sm:$0xff] %vm332, %v6329
    // Predicated region
    $region174: #{tpu_custom_call.1} parent=1 // pred_check
      _
    $region175: #{tpu_custom_call.1} parent=1 // pred_check_branch
      %6333 = sbr.rel (0) target = $region177
    $region176: #{tpu_custom_call.1} parent=1 // pred_region
      %s6335 = ssub.s32 256, 256
      %6336 = vsyncadd [#allocation4], %s6335
      %s6337 = sshll.u32 [#allocation23], 4
      %s6338 = int_to_ptr.vmem [resolvable:$true] %s6337
      %6343 = dma.vmem_to_hbm [thread:$0]  %s6338, 256, %s61, [#allocation4], 128, 128, 8
    $region177: #{tpu_custom_call.1} parent=1 // pred_fallthru
      _
    // Predicated region
    $region178: #{tpu_custom_call.1} parent=1 // pred_check
      _
    $region179: #{tpu_custom_call.1} parent=1 // pred_check_branch
      %6345 = sbr.rel (0) target = $region181
    $region180: #{tpu_custom_call.1} parent=1 // pred_region
      %6346 = dma.done [#allocation4], 256
    $region181: #{tpu_custom_call.1} parent=1 // pred_fallthru
      _
    %6347 = vsyncpa [#allocation3], 1
    %6348 = vsyncpa [#allocation6], 1
    %6349 = vsyncpa [#allocation9], 1
    %6350 = vsyncpa [#allocation12], 1
    %6351 = vsyncpa [#allocation15], 1
    %6352 = vsyncpa [#allocation18], 1
    %6353 = vsyncpa [#allocation21], 1
    %6354 = vsyncpa [#allocation4], 1

</llo_original>
